<compile_context>
chip_gen: v5e
topology: v5e:2x2
jax: 0.10.0
libtpu: 0.0.40
codegen_flags: <defaults>
</compile_context>

<pallas_src>
import jax
import jax.numpy as jnp
from jax.experimental import pallas as pl
from jax.experimental.pallas import tpu as pltpu


NA, NC = 3, 2
NO = 5 + NC                 # 7 outputs per anchor
H_IN = W_IN = 32            # input spatial size
H_MID = W_MID = 16          # after conv1 (stride 2)
H_OUT = W_OUT = 8           # after conv2 (stride 2)
HW = H_OUT * W_OUT          # 64


# ----------------------------------------------------------------------------
# In-kernel helpers
# ----------------------------------------------------------------------------
def _silu(v):
    # x * sigmoid(x); approx reciprocal runs on the EUP (free slot vs. VALU).
    return v * pl.reciprocal(1.0 + jnp.exp(-v), approx=True)


def _sigmoid_exact(v):
    # Exact sigmoid for the detection head (per correctness feedback).
    return 1.0 / (1.0 + jnp.exp(-v))


def _mm(x_f32, w_bf16):
    # bf16 x bf16 MXU matmul with f32 accumulation.
    return jnp.dot(x_f32.astype(jnp.bfloat16), w_bf16,
                   preferred_element_type=jnp.float32)


# ----------------------------------------------------------------------------
# Fused whole-network kernel (one grid step == TB images)
# ----------------------------------------------------------------------------
def _yolov5_kernel(p1_ref,                               # (4, TB, 64, 27) conv1 patches
                   w1, b1, w2, b2,                       # conv1 / conv2 (flattened 3x3)
                   wc12, bc12, wb1, bb1, wb2, bb2,       # C3 block
                   wc3a, wc3b, bc3,
                   ws1, bs1, ws20, ws21, ws22, ws23, bs2,  # SPPF (split cv2)
                   wd, bd,                               # detect head
                   o_ref,                                # (TB, 64, 21)
                   a1_buf, patch2, m_buf, patch3, pool_buf):
    TB = o_ref.shape[0]
    M = TB * HW

    # Borders of the patch / pool scratch buffers are never overwritten and the
    # interior write pattern is identical every grid step -> init them once.
    @pl.when(pl.program_id(0) == 0)
    def _init():
        patch2[...] = jnp.zeros_like(patch2)
        patch3[...] = jnp.zeros_like(patch3)
        pool_buf[...] = jnp.full_like(pool_buf, -jnp.inf)

    # ---- conv1: 3x3 stride-2, 3 -> 8, SiLU. One K=27 matmul over the
    #      host-assembled patches (rows are parity-major: (pi, pj, b, oi, oj)).
    p1 = p1_ref[...].reshape(4 * M, 27)
    a1 = _silu(_mm(p1, w1[...]) + b1[...])               # (4*M, 8)
    a1_buf[...] = a1.reshape(4, TB, H_OUT, W_OUT, 8)     # 4 parity planes of 16x16

    # ---- conv2: 3x3 stride-2, 8 -> 16, SiLU. Each of the 9 taps is a
    #      *contiguous* slice of one parity plane (no strided reads); padding
    #      is handled by the pre-zeroed border strips of patch2.
    for di in range(3):
        for dj in range(3):
            t = di * 3 + dj
            pidx = (0 if di == 1 else 1) * 2 + (0 if dj == 1 else 1)
            ilo = 1 if di == 0 else 0
            jlo = 1 if dj == 0 else 0
            patch2[:, ilo:H_OUT, jlo:W_OUT, t * 8:(t + 1) * 8] = \
                a1_buf[pidx, :, 0:H_OUT - ilo, 0:W_OUT - jlo, :]
    x2 = _silu(_mm(patch2[...].reshape(M, 72), w2[...]) + b2[...])   # (M, 16)

    # ---- C3 block: cv1 & cv2 merged into one (16,16) matmul -----------------
    y12 = _silu(_mm(x2, wc12[...]) + bc12[...])          # (M, 16)
    y1 = y12[:, 0:8]                                     # cv1 branch
    y2 = y12[:, 8:16]                                    # cv2 branch

    m0 = _silu(_mm(y1, wb1[...]) + bb1[...])             # bottleneck cv1 (M, 8)

    # bottleneck cv2: 3x3 stride-1, 8 -> 8, as one K=72 matmul
    m_buf[...] = m0.reshape(TB, H_OUT, W_OUT, 8)
    for di in range(3):
        for dj in range(3):
            t = di * 3 + dj
            ilo, ihi = max(0, 1 - di), min(H_OUT, H_OUT + 1 - di)
            jlo, jhi = max(0, 1 - dj), min(W_OUT, W_OUT + 1 - dj)
            si0, sj0 = max(0, di - 1), max(0, dj - 1)
            patch3[:, ilo:ihi, jlo:jhi, t * 8:(t + 1) * 8] = \
                m_buf[:, si0:si0 + (ihi - ilo), sj0:sj0 + (jhi - jlo), :]
    mb = _silu(_mm(patch3[...].reshape(M, 72), wb2[...]) + bb2[...]) + y1

    # cv3 on concat([m, y2]) -> host-split weights (no in-kernel bf16 slicing)
    x3 = _silu(_mm(mb, wc3a[...]) + _mm(y2, wc3b[...]) + bc3[...])    # (M, 16)

    # ---- SPPF: cv1 -> 3x separable 5x5 max-pools -> cv2 ---------------------
    s0 = _silu(_mm(x3, ws1[...]) + bs1[...])             # (M, 8)

    def maxpool5(p):                                     # (M, 8) -> (M, 8)
        pool_buf[:, 2:2 + H_OUT, 2:2 + W_OUT, :] = p.reshape(TB, H_OUT, W_OUT, 8)
        t = pool_buf[:, 0:H_OUT, :, :]                   # vertical 5-max
        for d in range(1, 5):
            t = jnp.maximum(t, pool_buf[:, d:d + H_OUT, :, :])
        o = t[:, :, 0:W_OUT, :]                          # horizontal 5-max
        for d in range(1, 5):
            o = jnp.maximum(o, t[:, :, d:d + W_OUT, :])
        return o.reshape(M, 8)

    q1 = maxpool5(s0)
    q2 = maxpool5(q1)
    q3 = maxpool5(q2)

    # sppf_cv2 on concat([s0, q1, q2, q3]) -> host-split weights
    x4 = _silu(_mm(s0, ws20[...]) + _mm(q1, ws21[...]) +
               _mm(q2, ws22[...]) + _mm(q3, ws23[...]) + bs2[...])    # (M, 16)

    # ---- Detect head: exact sigmoid, one lane-dense (M, 21) store -----------
    d = _sigmoid_exact(_mm(x4, wd[...]) + bd[...])       # (M, 21)
    o_ref[...] = d.reshape(TB, HW, NA * NO)


# ----------------------------------------------------------------------------
# Host-side prolog: stride-2 3x3 patch extraction for conv1 (parity-major rows)
# ----------------------------------------------------------------------------
def _conv1_patches(xpad):
    """(B, 34, 34, 3) padded NHWC -> (4, B, 64, 27) parity-major patches."""
    B = xpad.shape[0]
    taps = [xpad[:, ki:ki + 2 * H_MID:2, kj:kj + 2 * W_MID:2, :]
            for ki in range(3) for kj in range(3)]
    p = jnp.concatenate(taps, axis=-1)                    # (B, 16, 16, 27)
    # conv1 output (2*oi+pi, 2*oj+pj)  ->  row order (pi, pj, b, oi, oj)
    p = p.reshape(B, H_OUT, 2, W_OUT, 2, 27)
    p = p.transpose(2, 4, 0, 1, 3, 5)                     # (pi, pj, b, oi, oj, 27)
    return p.reshape(4, B, HW, 27)


# ----------------------------------------------------------------------------
# Host-side wrapper: single pallas_call, grid over batch tiles
# ----------------------------------------------------------------------------
def yolov5_forward(params, x_nchw, batch_tile=8):
    B = x_nchw.shape[0]
    assert x_nchw.shape[1:] == (3, H_IN, W_IN), x_nchw.shape

    tb = max(1, min(batch_tile, B))
    n_steps = (B + tb - 1) // tb
    Bp = n_steps * tb

    # Tiny XLA prolog (layout plumbing only): NCHW->NHWC, 1px zero pad,
    # stride-2 tap extraction for conv1 (~27 KiB/image).
    x = jnp.transpose(x_nchw, (0, 2, 3, 1)).astype(jnp.float32)
    if Bp != B:
        x = jnp.pad(x, ((0, Bp - B), (0, 0), (0, 0), (0, 0)))
    xpad = jnp.pad(x, ((0, 0), (1, 1), (1, 1), (0, 0)))   # (Bp, 34, 34, 3)
    p1 = _conv1_patches(xpad)                             # (4, Bp, 64, 27)

    def w3(name):        # 3x3 conv weight -> (9*cin, cout) bf16
        w = params[name][0]
        return w.reshape(9 * w.shape[2], w.shape[3]).astype(jnp.bfloat16)

    def w1x1(name):      # 1x1 conv weight -> (cin, cout) bf16
        w = params[name][0]
        return w.reshape(w.shape[2], w.shape[3]).astype(jnp.bfloat16)

    def bias(name):      # -> (1, cout) f32
        return params[name][1].reshape(1, -1).astype(jnp.float32)

    w1, b1 = w3("conv1"), bias("conv1")
    w2, b2 = w3("conv2"), bias("conv2")
    wc12 = jnp.concatenate([w1x1("c3_cv1"), w1x1("c3_cv2")], axis=1)
    bc12 = jnp.concatenate([bias("c3_cv1"), bias("c3_cv2")], axis=1)
    wb1, bb1 = w1x1("c3_b_cv1"), bias("c3_b_cv1")
    wb2, bb2 = w3("c3_b_cv2"), bias("c3_b_cv2")
    wc3, bc3 = w1x1("c3_cv3"), bias("c3_cv3")
    wc3a, wc3b = wc3[0:8, :], wc3[8:16, :]                # host-split (free)
    ws1, bs1 = w1x1("sppf_cv1"), bias("sppf_cv1")
    ws2, bs2 = w1x1("sppf_cv2"), bias("sppf_cv2")
    ws20, ws21, ws22, ws23 = ws2[0:8], ws2[8:16], ws2[16:24], ws2[24:32]
    wd, bd = w1x1("detect"), bias("detect")

    weights = (w1, b1, w2, b2, wc12, bc12, wb1, bb1, wb2, bb2,
               wc3a, wc3b, bc3, ws1, bs1, ws20, ws21, ws22, ws23, bs2, wd, bd)

    in_specs = [pl.BlockSpec((4, tb, HW, 27), lambda g: (0, g, 0, 0))]
    in_specs += [pl.BlockSpec(w.shape, lambda g: (0, 0)) for w in weights]

    out = pl.pallas_call(
        _yolov5_kernel,
        out_shape=jax.ShapeDtypeStruct((Bp, HW, NA * NO), jnp.float32),
        grid_spec=pltpu.PrefetchScalarGridSpec(
            num_scalar_prefetch=0,
            grid=(n_steps,),
            in_specs=in_specs,
            out_specs=pl.BlockSpec((tb, HW, NA * NO), lambda g: (g, 0, 0)),
            scratch_shapes=[
                pltpu.VMEM((4, tb, H_OUT, W_OUT, 8), jnp.float32),   # conv1 parity planes
                pltpu.VMEM((tb, H_OUT, W_OUT, 72), jnp.float32),     # conv2 K=72 patch
                pltpu.VMEM((tb, H_OUT, W_OUT, 8), jnp.float32),      # bottleneck act
                pltpu.VMEM((tb, H_OUT, W_OUT, 72), jnp.float32),     # c3_b_cv2 patch
                pltpu.VMEM((tb, H_OUT + 4, W_OUT + 4, 8), jnp.float32),  # SPPF pool pad
            ]),
        compiler_params=pltpu.CompilerParams(
            dimension_semantics=("arbitrary",)),
    )(p1, *weights)

    # Tiny XLA epilog: (B, HW, NA, NO) -> (B, NA*HW, NO) anchor-major relayout.
    out = out[:B].reshape(B, HW, NA, NO).transpose(0, 2, 1, 3)
    return out.reshape(B, NA * HW, NO)


# ----------------------------------------------------------------------------
# Pure-JAX f32 reference (same synthetic net) for a tolerance check
# ----------------------------------------------------------------------------
def yolov5_reference(params, x_nchw):
    x = jnp.transpose(x_nchw, (0, 2, 3, 1)).astype(jnp.float32)
    silu = lambda v: v * jax.nn.sigmoid(v)

    def conv(v, name, stride):
        w, b = params[name]
        o = jax.lax.conv_general_dilated(
            v, w, window_strides=(stride, stride), padding=((1, 1), (1, 1)),
            dimension_numbers=("NHWC", "HWIO", "NHWC"))
        return o + b

    def conv1x1(v, name):
        w, b = params[name]
        return jnp.einsum("bhwc,cd->bhwd", v,
                          w.reshape(w.shape[2], w.shape[3])) + b

    a1 = silu(conv(x, "conv1", 2))
    x2 = silu(conv(a1, "conv2", 2))
    y1 = silu(conv1x1(x2, "c3_cv1"))
    y2 = silu(conv1x1(x2, "c3_cv2"))
    m = silu(conv1x1(y1, "c3_b_cv1"))
    m = silu(conv(m, "c3_b_cv2", 1)) + y1
    x3 = silu(conv1x1(jnp.concatenate([m, y2], -1), "c3_cv3"))
    s0 = silu(conv1x1(x3, "sppf_cv1"))

    def mp(v):
        return jax.lax.reduce_window(
            v, -jnp.inf, jax.lax.max, (1, 5, 5, 1), (1, 1, 1, 1),
            ((0, 0), (2, 2), (2, 2), (0, 0)))

    q1 = mp(s0); q2 = mp(q1); q3 = mp(q2)
    x4 = silu(conv1x1(jnp.concatenate([s0, q1, q2, q3], -1), "sppf_cv2"))
    d = jax.nn.sigmoid(conv1x1(x4, "detect"))              # (B, 8, 8, 21)
    B = x.shape[0]
    d = d.reshape(B, HW, NA, NO).transpose(0, 2, 1, 3)
    return d.reshape(B, NA * HW, NO)


# ----------------------------------------------------------------------------
# Deterministic parameter construction (tiny YOLOv5s-like net)
# ----------------------------------------------------------------------------
def _make_conv_params(key, kh, kw, cin, cout):
    kw_, kb_ = jax.random.split(key)
    scale = 1.0 / jnp.sqrt(kh * kw * cin)
    w = jax.random.normal(kw_, (kh, kw, cin, cout), jnp.float32) * scale
    b = jax.random.normal(kb_, (cout,), jnp.float32) * 0.01
    return w, b


def init_params(seed=0):
    key = jax.random.PRNGKey(seed)
    ks = jax.random.split(key, 12)
    p = {}
    p["conv1"] = _make_conv_params(ks[0], 3, 3, 3, 8)     # stride 2: 32 -> 16
    p["conv2"] = _make_conv_params(ks[1], 3, 3, 8, 16)    # stride 2: 16 -> 8
    p["c3_cv1"] = _make_conv_params(ks[2], 1, 1, 16, 8)
    p["c3_cv2"] = _make_conv_params(ks[3], 1, 1, 16, 8)
    p["c3_b_cv1"] = _make_conv_params(ks[4], 1, 1, 8, 8)
    p["c3_b_cv2"] = _make_conv_params(ks[5], 3, 3, 8, 8)
    p["c3_cv3"] = _make_conv_params(ks[6], 1, 1, 16, 16)
    p["sppf_cv1"] = _make_conv_params(ks[7], 1, 1, 16, 8)
    p["sppf_cv2"] = _make_conv_params(ks[8], 1, 1, 32, 16)
    p["detect"] = _make_conv_params(ks[9], 1, 1, 16, 21)  # 3 anchors * (5+2)
    return p


# TODO(synk): the real ultralytics YOLOv5 adds anchor/grid box decoding and NMS
# after the head sigmoid; that postprocess (and loading pretrained yolov5s.pt
# weights) is not implemented here.
# ----------------------------------------------------------------------------
if __name__ == "__main__":
    params = init_params(seed=0)

    key = jax.random.PRNGKey(0)
    x = jax.random.normal(key, (2, 3, H_IN, W_IN), jnp.float32)

    out = jax.jit(yolov5_forward)(params, x)
    out = jax.block_until_ready(out)

    assert out.shape == (2, NA * HW, NO), out.shape
    assert bool(jnp.all(jnp.isfinite(out)))

    # Loose tolerance: bf16 MXU inputs + EUP approx reciprocal in hidden SiLUs.
    ref = yolov5_reference(params, x)
    err = float(jnp.max(jnp.abs(out - ref)))
    assert err < 0.1, f"max abs err vs f32 reference: {err}"

    print("KERNEL_OK")
</pallas_src>

<mosaic_0001>
module attributes {stable_mosaic.version = 11 : i64} {
  func.func @_yolov5_kernel(%arg0: i32, %arg1: memref<4x2x64x27xf32, #tpu.memory_space<vmem>>, %arg2: memref<27x8xbf16, #tpu.memory_space<vmem>>, %arg3: memref<1x8xf32, #tpu.memory_space<vmem>>, %arg4: memref<72x16xbf16, #tpu.memory_space<vmem>>, %arg5: memref<1x16xf32, #tpu.memory_space<vmem>>, %arg6: memref<16x16xbf16, #tpu.memory_space<vmem>>, %arg7: memref<1x16xf32, #tpu.memory_space<vmem>>, %arg8: memref<8x8xbf16, #tpu.memory_space<vmem>>, %arg9: memref<1x8xf32, #tpu.memory_space<vmem>>, %arg10: memref<72x8xbf16, #tpu.memory_space<vmem>>, %arg11: memref<1x8xf32, #tpu.memory_space<vmem>>, %arg12: memref<8x16xbf16, #tpu.memory_space<vmem>>, %arg13: memref<8x16xbf16, #tpu.memory_space<vmem>>, %arg14: memref<1x16xf32, #tpu.memory_space<vmem>>, %arg15: memref<16x8xbf16, #tpu.memory_space<vmem>>, %arg16: memref<1x8xf32, #tpu.memory_space<vmem>>, %arg17: memref<8x16xbf16, #tpu.memory_space<vmem>>, %arg18: memref<8x16xbf16, #tpu.memory_space<vmem>>, %arg19: memref<8x16xbf16, #tpu.memory_space<vmem>>, %arg20: memref<8x16xbf16, #tpu.memory_space<vmem>>, %arg21: memref<1x16xf32, #tpu.memory_space<vmem>>, %arg22: memref<16x21xbf16, #tpu.memory_space<vmem>>, %arg23: memref<1x21xf32, #tpu.memory_space<vmem>>, %arg24: memref<2x64x21xf32, #tpu.memory_space<vmem>>, %arg25: memref<4x2x8x8x8xf32, #tpu.memory_space<vmem>>, %arg26: memref<2x8x8x72xf32, #tpu.memory_space<vmem>>, %arg27: memref<2x8x8x8xf32, #tpu.memory_space<vmem>>, %arg28: memref<2x8x8x72xf32, #tpu.memory_space<vmem>>, %arg29: memref<2x12x12x8xf32, #tpu.memory_space<vmem>>) attributes {dimension_semantics = [#tpu.dimension_semantics<arbitrary>], iteration_bounds = array<i64: 1>, scalar_prefetch = 0 : i64, scratch_operands = 5 : i64, tpu.core_type = #tpu.core_type<tc>, window_params = [{transform_indices = @transform_0, window_bounds = array<i64: 4, 2, 64, 27>}, {pipeline_mode = #tpu.pipeline_mode<synchronous>, transform_indices = @transform_1, window_bounds = array<i64: 27, 8>}, {pipeline_mode = #tpu.pipeline_mode<synchronous>, transform_indices = @transform_2, window_bounds = array<i64: 1, 8>}, {pipeline_mode = #tpu.pipeline_mode<synchronous>, transform_indices = @transform_3, window_bounds = array<i64: 72, 16>}, {pipeline_mode = #tpu.pipeline_mode<synchronous>, transform_indices = @transform_4, window_bounds = array<i64: 1, 16>}, {pipeline_mode = #tpu.pipeline_mode<synchronous>, transform_indices = @transform_5, window_bounds = array<i64: 16, 16>}, {pipeline_mode = #tpu.pipeline_mode<synchronous>, transform_indices = @transform_6, window_bounds = array<i64: 1, 16>}, {pipeline_mode = #tpu.pipeline_mode<synchronous>, transform_indices = @transform_7, window_bounds = array<i64: 8, 8>}, {pipeline_mode = #tpu.pipeline_mode<synchronous>, transform_indices = @transform_8, window_bounds = array<i64: 1, 8>}, {pipeline_mode = #tpu.pipeline_mode<synchronous>, transform_indices = @transform_9, window_bounds = array<i64: 72, 8>}, {pipeline_mode = #tpu.pipeline_mode<synchronous>, transform_indices = @transform_10, window_bounds = array<i64: 1, 8>}, {pipeline_mode = #tpu.pipeline_mode<synchronous>, transform_indices = @transform_11, window_bounds = array<i64: 8, 16>}, {pipeline_mode = #tpu.pipeline_mode<synchronous>, transform_indices = @transform_12, window_bounds = array<i64: 8, 16>}, {pipeline_mode = #tpu.pipeline_mode<synchronous>, transform_indices = @transform_13, window_bounds = array<i64: 1, 16>}, {pipeline_mode = #tpu.pipeline_mode<synchronous>, transform_indices = @transform_14, window_bounds = array<i64: 16, 8>}, {pipeline_mode = #tpu.pipeline_mode<synchronous>, transform_indices = @transform_15, window_bounds = array<i64: 1, 8>}, {pipeline_mode = #tpu.pipeline_mode<synchronous>, transform_indices = @transform_16, window_bounds = array<i64: 8, 16>}, {pipeline_mode = #tpu.pipeline_mode<synchronous>, transform_indices = @transform_17, window_bounds = array<i64: 8, 16>}, {pipeline_mode = #tpu.pipeline_mode<synchronous>, transform_indices = @transform_18, window_bounds = array<i64: 8, 16>}, {pipeline_mode = #tpu.pipeline_mode<synchronous>, transform_indices = @transform_19, window_bounds = array<i64: 8, 16>}, {pipeline_mode = #tpu.pipeline_mode<synchronous>, transform_indices = @transform_20, window_bounds = array<i64: 1, 16>}, {pipeline_mode = #tpu.pipeline_mode<synchronous>, transform_indices = @transform_21, window_bounds = array<i64: 16, 21>}, {pipeline_mode = #tpu.pipeline_mode<synchronous>, transform_indices = @transform_22, window_bounds = array<i64: 1, 21>}, {transform_indices = @transform_23, window_bounds = array<i64: 2, 64, 21>}]} {
    %c0_i32 = arith.constant 0 : i32
    %0 = arith.cmpi eq, %arg0, %c0_i32 : i32
    %1 = arith.extui %0 : i1 to i32
    %c0_i32_0 = arith.constant 0 : i32
    %2 = arith.cmpi ne, %1, %c0_i32_0 : i32
    scf.if %2 {
      %cst_312 = arith.constant 0.000000e+00 : f32
      %259 = vector.broadcast %cst_312 : f32 to vector<2x8x8x72xf32>
      %c0_313 = arith.constant 0 : index
      %c0_314 = arith.constant 0 : index
      %c0_315 = arith.constant 0 : index
      %c0_316 = arith.constant 0 : index
      %260 = vector.load %arg26[%c0_313, %c0_314, %c0_315, %c0_316] : memref<2x8x8x72xf32, #tpu.memory_space<vmem>>, vector<2x8x8x72xf32>
      tpu.vector_store %arg26[%c0_313, %c0_314, %c0_315, %c0_316], %259 {strides = array<i32>} : memref<2x8x8x72xf32, #tpu.memory_space<vmem>>, vector<2x8x8x72xf32>,
      %cst_317 = arith.constant 0.000000e+00 : f32
      %261 = vector.broadcast %cst_317 : f32 to vector<2x8x8x72xf32>
      %c0_318 = arith.constant 0 : index
      %c0_319 = arith.constant 0 : index
      %c0_320 = arith.constant 0 : index
      %c0_321 = arith.constant 0 : index
      %262 = vector.load %arg28[%c0_318, %c0_319, %c0_320, %c0_321] : memref<2x8x8x72xf32, #tpu.memory_space<vmem>>, vector<2x8x8x72xf32>
      tpu.vector_store %arg28[%c0_318, %c0_319, %c0_320, %c0_321], %261 {strides = array<i32>} : memref<2x8x8x72xf32, #tpu.memory_space<vmem>>, vector<2x8x8x72xf32>,
      %cst_322 = arith.constant 0xFF800000 : f32
      %263 = vector.broadcast %cst_322 : f32 to vector<2x12x12x8xf32>
      %c0_323 = arith.constant 0 : index
      %c0_324 = arith.constant 0 : index
      %c0_325 = arith.constant 0 : index
      %c0_326 = arith.constant 0 : index
      %264 = vector.load %arg29[%c0_323, %c0_324, %c0_325, %c0_326] : memref<2x12x12x8xf32, #tpu.memory_space<vmem>>, vector<2x12x12x8xf32>
      tpu.vector_store %arg29[%c0_323, %c0_324, %c0_325, %c0_326], %263 {strides = array<i32>} : memref<2x12x12x8xf32, #tpu.memory_space<vmem>>, vector<2x12x12x8xf32>,
    } else {
    }
    %c0 = arith.constant 0 : index
    %c0_1 = arith.constant 0 : index
    %c0_2 = arith.constant 0 : index
    %c0_3 = arith.constant 0 : index
    %3 = vector.load %arg1[%c0, %c0_1, %c0_2, %c0_3] : memref<4x2x64x27xf32, #tpu.memory_space<vmem>>, vector<4x2x64x27xf32>
    %4 = vector.shape_cast %3 : vector<4x2x64x27xf32> to vector<512x27xf32>
    %c0_4 = arith.constant 0 : index
    %c0_5 = arith.constant 0 : index
    %5 = vector.load %arg2[%c0_4, %c0_5] : memref<27x8xbf16, #tpu.memory_space<vmem>>, vector<27x8xbf16>
    %6 = arith.truncf %4 : vector<512x27xf32> to vector<512x27xbf16>
    %cst = arith.constant dense<0.000000e+00> : vector<512x8xf32>
    %7 = tpu.matmul %6, %5, %cst {dimension_numbers = #tpu.dot_dimension_numbers<[1], [0], [0], [1], [0, 0, 1, 1], [], []>} : vector<512x27xbf16>, vector<27x8xbf16>, vector<512x8xf32> -> vector<512x8xf32>
    %c0_6 = arith.constant 0 : index
    %c0_7 = arith.constant 0 : index
    %8 = vector.load %arg3[%c0_6, %c0_7] : memref<1x8xf32, #tpu.memory_space<vmem>>, vector<1x8xf32>
    %9 = vector.broadcast %8 : vector<1x8xf32> to vector<512x8xf32>
    %10 = arith.addf %7, %9 : vector<512x8xf32>
    %cst_8 = arith.constant 0.000000e+00 : f32
    %11 = vector.broadcast %cst_8 : f32 to vector<512x8xf32>
    %12 = arith.subf %11, %10 : vector<512x8xf32>
    %13 = math.exp %12 : vector<512x8xf32>
    %cst_9 = arith.constant 1.000000e+00 : f32
    %14 = vector.broadcast %cst_9 : f32 to vector<512x8xf32>
    %15 = arith.addf %14, %13 : vector<512x8xf32>
    %16 = tpu.reciprocal %15 {approx = true} : vector<512x8xf32> -> vector<512x8xf32>
    %17 = arith.mulf %10, %16 : vector<512x8xf32>
    %18 = vector.shape_cast %17 : vector<512x8xf32> to vector<4x2x8x8x8xf32>
    %c0_10 = arith.constant 0 : index
    %c0_11 = arith.constant 0 : index
    %c0_12 = arith.constant 0 : index
    %c0_13 = arith.constant 0 : index
    %c0_14 = arith.constant 0 : index
    %19 = vector.load %arg25[%c0_10, %c0_11, %c0_12, %c0_13, %c0_14] : memref<4x2x8x8x8xf32, #tpu.memory_space<vmem>>, vector<4x2x8x8x8xf32>
    tpu.vector_store %arg25[%c0_10, %c0_11, %c0_12, %c0_13, %c0_14], %18 {strides = array<i32>} : memref<4x2x8x8x8xf32, #tpu.memory_space<vmem>>, vector<4x2x8x8x8xf32>,
    %c3 = arith.constant 3 : index
    %c0_15 = arith.constant 0 : index
    %c0_16 = arith.constant 0 : index
    %c0_17 = arith.constant 0 : index
    %c0_18 = arith.constant 0 : index
    %20 = vector.load %arg25[%c3, %c0_15, %c0_16, %c0_17, %c0_18] : memref<4x2x8x8x8xf32, #tpu.memory_space<vmem>>, vector<1x2x7x7x8xf32>
    %21 = vector.shape_cast %20 : vector<1x2x7x7x8xf32> to vector<2x7x7x8xf32>
    %c0_19 = arith.constant 0 : index
    %c1 = arith.constant 1 : index
    %c1_20 = arith.constant 1 : index
    %c0_21 = arith.constant 0 : index
    %22 = vector.load %arg26[%c0_19, %c1, %c1_20, %c0_21] : memref<2x8x8x72xf32, #tpu.memory_space<vmem>>, vector<2x7x7x8xf32>
    tpu.vector_store %arg26[%c0_19, %c1, %c1_20, %c0_21], %21 {strides = array<i32>} : memref<2x8x8x72xf32, #tpu.memory_space<vmem>>, vector<2x7x7x8xf32>,
    %c2 = arith.constant 2 : index
    %c0_22 = arith.constant 0 : index
    %c0_23 = arith.constant 0 : index
    %c0_24 = arith.constant 0 : index
    %c0_25 = arith.constant 0 : index
    %23 = vector.load %arg25[%c2, %c0_22, %c0_23, %c0_24, %c0_25] : memref<4x2x8x8x8xf32, #tpu.memory_space<vmem>>, vector<1x2x7x8x8xf32>
    %24 = vector.shape_cast %23 : vector<1x2x7x8x8xf32> to vector<2x7x8x8xf32>
    %c0_26 = arith.constant 0 : index
    %c1_27 = arith.constant 1 : index
    %c0_28 = arith.constant 0 : index
    %c8 = arith.constant 8 : index
    %25 = vector.load %arg26[%c0_26, %c1_27, %c0_28, %c8] : memref<2x8x8x72xf32, #tpu.memory_space<vmem>>, vector<2x7x8x8xf32>
    tpu.vector_store %arg26[%c0_26, %c1_27, %c0_28, %c8], %24 {strides = array<i32>} : memref<2x8x8x72xf32, #tpu.memory_space<vmem>>, vector<2x7x8x8xf32>,
    %c3_29 = arith.constant 3 : index
    %c0_30 = arith.constant 0 : index
    %c0_31 = arith.constant 0 : index
    %c0_32 = arith.constant 0 : index
    %c0_33 = arith.constant 0 : index
    %26 = vector.load %arg25[%c3_29, %c0_30, %c0_31, %c0_32, %c0_33] : memref<4x2x8x8x8xf32, #tpu.memory_space<vmem>>, vector<1x2x7x8x8xf32>
    %27 = vector.shape_cast %26 : vector<1x2x7x8x8xf32> to vector<2x7x8x8xf32>
    %c0_34 = arith.constant 0 : index
    %c1_35 = arith.constant 1 : index
    %c0_36 = arith.constant 0 : index
    %c16 = arith.constant 16 : index
    %28 = vector.load %arg26[%c0_34, %c1_35, %c0_36, %c16] : memref<2x8x8x72xf32, #tpu.memory_space<vmem>>, vector<2x7x8x8xf32>
    tpu.vector_store %arg26[%c0_34, %c1_35, %c0_36, %c16], %27 {strides = array<i32>} : memref<2x8x8x72xf32, #tpu.memory_space<vmem>>, vector<2x7x8x8xf32>,
    %c1_37 = arith.constant 1 : index
    %c0_38 = arith.constant 0 : index
    %c0_39 = arith.constant 0 : index
    %c0_40 = arith.constant 0 : index
    %c0_41 = arith.constant 0 : index
    %29 = vector.load %arg25[%c1_37, %c0_38, %c0_39, %c0_40, %c0_41] : memref<4x2x8x8x8xf32, #tpu.memory_space<vmem>>, vector<1x2x8x7x8xf32>
    %30 = vector.shape_cast %29 : vector<1x2x8x7x8xf32> to vector<2x8x7x8xf32>
    %c0_42 = arith.constant 0 : index
    %c0_43 = arith.constant 0 : index
    %c1_44 = arith.constant 1 : index
    %c24 = arith.constant 24 : index
    %31 = vector.load %arg26[%c0_42, %c0_43, %c1_44, %c24] : memref<2x8x8x72xf32, #tpu.memory_space<vmem>>, vector<2x8x7x8xf32>
    tpu.vector_store %arg26[%c0_42, %c0_43, %c1_44, %c24], %30 {strides = array<i32>} : memref<2x8x8x72xf32, #tpu.memory_space<vmem>>, vector<2x8x7x8xf32>,
    %c0_45 = arith.constant 0 : index
    %c0_46 = arith.constant 0 : index
    %c0_47 = arith.constant 0 : index
    %c0_48 = arith.constant 0 : index
    %c0_49 = arith.constant 0 : index
    %32 = vector.load %arg25[%c0_45, %c0_46, %c0_47, %c0_48, %c0_49] : memref<4x2x8x8x8xf32, #tpu.memory_space<vmem>>, vector<1x2x8x8x8xf32>
    %33 = vector.shape_cast %32 : vector<1x2x8x8x8xf32> to vector<2x8x8x8xf32>
    %c0_50 = arith.constant 0 : index
    %c0_51 = arith.constant 0 : index
    %c0_52 = arith.constant 0 : index
    %c32 = arith.constant 32 : index
    %34 = vector.load %arg26[%c0_50, %c0_51, %c0_52, %c32] : memref<2x8x8x72xf32, #tpu.memory_space<vmem>>, vector<2x8x8x8xf32>
    tpu.vector_store %arg26[%c0_50, %c0_51, %c0_52, %c32], %33 {strides = array<i32>} : memref<2x8x8x72xf32, #tpu.memory_space<vmem>>, vector<2x8x8x8xf32>,
    %c1_53 = arith.constant 1 : index
    %c0_54 = arith.constant 0 : index
    %c0_55 = arith.constant 0 : index
    %c0_56 = arith.constant 0 : index
    %c0_57 = arith.constant 0 : index
    %35 = vector.load %arg25[%c1_53, %c0_54, %c0_55, %c0_56, %c0_57] : memref<4x2x8x8x8xf32, #tpu.memory_space<vmem>>, vector<1x2x8x8x8xf32>
    %36 = vector.shape_cast %35 : vector<1x2x8x8x8xf32> to vector<2x8x8x8xf32>
    %c0_58 = arith.constant 0 : index
    %c0_59 = arith.constant 0 : index
    %c0_60 = arith.constant 0 : index
    %c40 = arith.constant 40 : index
    %37 = vector.load %arg26[%c0_58, %c0_59, %c0_60, %c40] : memref<2x8x8x72xf32, #tpu.memory_space<vmem>>, vector<2x8x8x8xf32>
    tpu.vector_store %arg26[%c0_58, %c0_59, %c0_60, %c40], %36 {strides = array<i32>} : memref<2x8x8x72xf32, #tpu.memory_space<vmem>>, vector<2x8x8x8xf32>,
    %c3_61 = arith.constant 3 : index
    %c0_62 = arith.constant 0 : index
    %c0_63 = arith.constant 0 : index
    %c0_64 = arith.constant 0 : index
    %c0_65 = arith.constant 0 : index
    %38 = vector.load %arg25[%c3_61, %c0_62, %c0_63, %c0_64, %c0_65] : memref<4x2x8x8x8xf32, #tpu.memory_space<vmem>>, vector<1x2x8x7x8xf32>
    %39 = vector.shape_cast %38 : vector<1x2x8x7x8xf32> to vector<2x8x7x8xf32>
    %c0_66 = arith.constant 0 : index
    %c0_67 = arith.constant 0 : index
    %c1_68 = arith.constant 1 : index
    %c48 = arith.constant 48 : index
    %40 = vector.load %arg26[%c0_66, %c0_67, %c1_68, %c48] : memref<2x8x8x72xf32, #tpu.memory_space<vmem>>, vector<2x8x7x8xf32>
    tpu.vector_store %arg26[%c0_66, %c0_67, %c1_68, %c48], %39 {strides = array<i32>} : memref<2x8x8x72xf32, #tpu.memory_space<vmem>>, vector<2x8x7x8xf32>,
    %c2_69 = arith.constant 2 : index
    %c0_70 = arith.constant 0 : index
    %c0_71 = arith.constant 0 : index
    %c0_72 = arith.constant 0 : index
    %c0_73 = arith.constant 0 : index
    %41 = vector.load %arg25[%c2_69, %c0_70, %c0_71, %c0_72, %c0_73] : memref<4x2x8x8x8xf32, #tpu.memory_space<vmem>>, vector<1x2x8x8x8xf32>
    %42 = vector.shape_cast %41 : vector<1x2x8x8x8xf32> to vector<2x8x8x8xf32>
    %c0_74 = arith.constant 0 : index
    %c0_75 = arith.constant 0 : index
    %c0_76 = arith.constant 0 : index
    %c56 = arith.constant 56 : index
    %43 = vector.load %arg26[%c0_74, %c0_75, %c0_76, %c56] : memref<2x8x8x72xf32, #tpu.memory_space<vmem>>, vector<2x8x8x8xf32>
    tpu.vector_store %arg26[%c0_74, %c0_75, %c0_76, %c56], %42 {strides = array<i32>} : memref<2x8x8x72xf32, #tpu.memory_space<vmem>>, vector<2x8x8x8xf32>,
    %c3_77 = arith.constant 3 : index
    %c0_78 = arith.constant 0 : index
    %c0_79 = arith.constant 0 : index
    %c0_80 = arith.constant 0 : index
    %c0_81 = arith.constant 0 : index
    %44 = vector.load %arg25[%c3_77, %c0_78, %c0_79, %c0_80, %c0_81] : memref<4x2x8x8x8xf32, #tpu.memory_space<vmem>>, vector<1x2x8x8x8xf32>
    %45 = vector.shape_cast %44 : vector<1x2x8x8x8xf32> to vector<2x8x8x8xf32>
    %c0_82 = arith.constant 0 : index
    %c0_83 = arith.constant 0 : index
    %c0_84 = arith.constant 0 : index
    %c64 = arith.constant 64 : index
    %46 = vector.load %arg26[%c0_82, %c0_83, %c0_84, %c64] : memref<2x8x8x72xf32, #tpu.memory_space<vmem>>, vector<2x8x8x8xf32>
    tpu.vector_store %arg26[%c0_82, %c0_83, %c0_84, %c64], %45 {strides = array<i32>} : memref<2x8x8x72xf32, #tpu.memory_space<vmem>>, vector<2x8x8x8xf32>,
    %c0_85 = arith.constant 0 : index
    %c0_86 = arith.constant 0 : index
    %c0_87 = arith.constant 0 : index
    %c0_88 = arith.constant 0 : index
    %47 = vector.load %arg26[%c0_85, %c0_86, %c0_87, %c0_88] : memref<2x8x8x72xf32, #tpu.memory_space<vmem>>, vector<2x8x8x72xf32>
    %48 = vector.shape_cast %47 : vector<2x8x8x72xf32> to vector<128x72xf32>
    %c0_89 = arith.constant 0 : index
    %c0_90 = arith.constant 0 : index
    %49 = vector.load %arg4[%c0_89, %c0_90] : memref<72x16xbf16, #tpu.memory_space<vmem>>, vector<72x16xbf16>
    %50 = arith.truncf %48 : vector<128x72xf32> to vector<128x72xbf16>
    %cst_91 = arith.constant dense<0.000000e+00> : vector<128x16xf32>
    %51 = tpu.matmul %50, %49, %cst_91 {dimension_numbers = #tpu.dot_dimension_numbers<[1], [0], [0], [1], [0, 0, 1, 1], [], []>} : vector<128x72xbf16>, vector<72x16xbf16>, vector<128x16xf32> -> vector<128x16xf32>
    %c0_92 = arith.constant 0 : index
    %c0_93 = arith.constant 0 : index
    %52 = vector.load %arg5[%c0_92, %c0_93] : memref<1x16xf32, #tpu.memory_space<vmem>>, vector<1x16xf32>
    %53 = vector.broadcast %52 : vector<1x16xf32> to vector<128x16xf32>
    %54 = arith.addf %51, %53 : vector<128x16xf32>
    %cst_94 = arith.constant 0.000000e+00 : f32
    %55 = vector.broadcast %cst_94 : f32 to vector<128x16xf32>
    %56 = arith.subf %55, %54 : vector<128x16xf32>
    %57 = math.exp %56 : vector<128x16xf32>
    %cst_95 = arith.constant 1.000000e+00 : f32
    %58 = vector.broadcast %cst_95 : f32 to vector<128x16xf32>
    %59 = arith.addf %58, %57 : vector<128x16xf32>
    %60 = tpu.reciprocal %59 {approx = true} : vector<128x16xf32> -> vector<128x16xf32>
    %61 = arith.mulf %54, %60 : vector<128x16xf32>
    %c0_96 = arith.constant 0 : index
    %c0_97 = arith.constant 0 : index
    %62 = vector.load %arg6[%c0_96, %c0_97] : memref<16x16xbf16, #tpu.memory_space<vmem>>, vector<16x16xbf16>
    %63 = arith.truncf %61 : vector<128x16xf32> to vector<128x16xbf16>
    %cst_98 = arith.constant dense<0.000000e+00> : vector<128x16xf32>
    %64 = tpu.matmul %63, %62, %cst_98 {dimension_numbers = #tpu.dot_dimension_numbers<[1], [0], [0], [1], [0, 0, 1, 1], [], []>} : vector<128x16xbf16>, vector<16x16xbf16>, vector<128x16xf32> -> vector<128x16xf32>
    %c0_99 = arith.constant 0 : index
    %c0_100 = arith.constant 0 : index
    %65 = vector.load %arg7[%c0_99, %c0_100] : memref<1x16xf32, #tpu.memory_space<vmem>>, vector<1x16xf32>
    %66 = vector.broadcast %65 : vector<1x16xf32> to vector<128x16xf32>
    %67 = arith.addf %64, %66 : vector<128x16xf32>
    %cst_101 = arith.constant 0.000000e+00 : f32
    %68 = vector.broadcast %cst_101 : f32 to vector<128x16xf32>
    %69 = arith.subf %68, %67 : vector<128x16xf32>
    %70 = math.exp %69 : vector<128x16xf32>
    %cst_102 = arith.constant 1.000000e+00 : f32
    %71 = vector.broadcast %cst_102 : f32 to vector<128x16xf32>
    %72 = arith.addf %71, %70 : vector<128x16xf32>
    %73 = tpu.reciprocal %72 {approx = true} : vector<128x16xf32> -> vector<128x16xf32>
    %74 = arith.mulf %67, %73 : vector<128x16xf32>
    %75 = vector.extract_strided_slice %74 {offsets = [0, 0], sizes = [128, 8], strides = [1, 1]} : vector<128x16xf32> to vector<128x8xf32>
    %76 = vector.extract_strided_slice %74 {offsets = [0, 8], sizes = [128, 8], strides = [1, 1]} : vector<128x16xf32> to vector<128x8xf32>
    %c0_103 = arith.constant 0 : index
    %c0_104 = arith.constant 0 : index
    %77 = vector.load %arg8[%c0_103, %c0_104] : memref<8x8xbf16, #tpu.memory_space<vmem>>, vector<8x8xbf16>
    %78 = arith.truncf %75 : vector<128x8xf32> to vector<128x8xbf16>
    %cst_105 = arith.constant dense<0.000000e+00> : vector<128x8xf32>
    %79 = tpu.matmul %78, %77, %cst_105 {dimension_numbers = #tpu.dot_dimension_numbers<[1], [0], [0], [1], [0, 0, 1, 1], [], []>} : vector<128x8xbf16>, vector<8x8xbf16>, vector<128x8xf32> -> vector<128x8xf32>
    %c0_106 = arith.constant 0 : index
    %c0_107 = arith.constant 0 : index
    %80 = vector.load %arg9[%c0_106, %c0_107] : memref<1x8xf32, #tpu.memory_space<vmem>>, vector<1x8xf32>
    %81 = vector.broadcast %80 : vector<1x8xf32> to vector<128x8xf32>
    %82 = arith.addf %79, %81 : vector<128x8xf32>
    %cst_108 = arith.constant 0.000000e+00 : f32
    %83 = vector.broadcast %cst_108 : f32 to vector<128x8xf32>
    %84 = arith.subf %83, %82 : vector<128x8xf32>
    %85 = math.exp %84 : vector<128x8xf32>
    %cst_109 = arith.constant 1.000000e+00 : f32
    %86 = vector.broadcast %cst_109 : f32 to vector<128x8xf32>
    %87 = arith.addf %86, %85 : vector<128x8xf32>
    %88 = tpu.reciprocal %87 {approx = true} : vector<128x8xf32> -> vector<128x8xf32>
    %89 = arith.mulf %82, %88 : vector<128x8xf32>
    %90 = vector.shape_cast %89 : vector<128x8xf32> to vector<2x8x8x8xf32>
    %c0_110 = arith.constant 0 : index
    %c0_111 = arith.constant 0 : index
    %c0_112 = arith.constant 0 : index
    %c0_113 = arith.constant 0 : index
    %91 = vector.load %arg27[%c0_110, %c0_111, %c0_112, %c0_113] : memref<2x8x8x8xf32, #tpu.memory_space<vmem>>, vector<2x8x8x8xf32>
    tpu.vector_store %arg27[%c0_110, %c0_111, %c0_112, %c0_113], %90 {strides = array<i32>} : memref<2x8x8x8xf32, #tpu.memory_space<vmem>>, vector<2x8x8x8xf32>,
    %c0_114 = arith.constant 0 : index
    %c0_115 = arith.constant 0 : index
    %c0_116 = arith.constant 0 : index
    %c0_117 = arith.constant 0 : index
    %92 = vector.load %arg27[%c0_114, %c0_115, %c0_116, %c0_117] : memref<2x8x8x8xf32, #tpu.memory_space<vmem>>, vector<2x7x7x8xf32>
    %c0_118 = arith.constant 0 : index
    %c1_119 = arith.constant 1 : index
    %c1_120 = arith.constant 1 : index
    %c0_121 = arith.constant 0 : index
    %93 = vector.load %arg28[%c0_118, %c1_119, %c1_120, %c0_121] : memref<2x8x8x72xf32, #tpu.memory_space<vmem>>, vector<2x7x7x8xf32>
    tpu.vector_store %arg28[%c0_118, %c1_119, %c1_120, %c0_121], %92 {strides = array<i32>} : memref<2x8x8x72xf32, #tpu.memory_space<vmem>>, vector<2x7x7x8xf32>,
    %c0_122 = arith.constant 0 : index
    %c0_123 = arith.constant 0 : index
    %c0_124 = arith.constant 0 : index
    %c0_125 = arith.constant 0 : index
    %94 = vector.load %arg27[%c0_122, %c0_123, %c0_124, %c0_125] : memref<2x8x8x8xf32, #tpu.memory_space<vmem>>, vector<2x7x8x8xf32>
    %c0_126 = arith.constant 0 : index
    %c1_127 = arith.constant 1 : index
    %c0_128 = arith.constant 0 : index
    %c8_129 = arith.constant 8 : index
    %95 = vector.load %arg28[%c0_126, %c1_127, %c0_128, %c8_129] : memref<2x8x8x72xf32, #tpu.memory_space<vmem>>, vector<2x7x8x8xf32>
    tpu.vector_store %arg28[%c0_126, %c1_127, %c0_128, %c8_129], %94 {strides = array<i32>} : memref<2x8x8x72xf32, #tpu.memory_space<vmem>>, vector<2x7x8x8xf32>,
    %c0_130 = arith.constant 0 : index
    %c0_131 = arith.constant 0 : index
    %c1_132 = arith.constant 1 : index
    %c0_133 = arith.constant 0 : index
    %96 = vector.load %arg27[%c0_130, %c0_131, %c1_132, %c0_133] : memref<2x8x8x8xf32, #tpu.memory_space<vmem>>, vector<2x7x7x8xf32>
    %c0_134 = arith.constant 0 : index
    %c1_135 = arith.constant 1 : index
    %c0_136 = arith.constant 0 : index
    %c16_137 = arith.constant 16 : index
    %97 = vector.load %arg28[%c0_134, %c1_135, %c0_136, %c16_137] : memref<2x8x8x72xf32, #tpu.memory_space<vmem>>, vector<2x7x7x8xf32>
    tpu.vector_store %arg28[%c0_134, %c1_135, %c0_136, %c16_137], %96 {strides = array<i32>} : memref<2x8x8x72xf32, #tpu.memory_space<vmem>>, vector<2x7x7x8xf32>,
    %c0_138 = arith.constant 0 : index
    %c0_139 = arith.constant 0 : index
    %c0_140 = arith.constant 0 : index
    %c0_141 = arith.constant 0 : index
    %98 = vector.load %arg27[%c0_138, %c0_139, %c0_140, %c0_141] : memref<2x8x8x8xf32, #tpu.memory_space<vmem>>, vector<2x8x7x8xf32>
    %c0_142 = arith.constant 0 : index
    %c0_143 = arith.constant 0 : index
    %c1_144 = arith.constant 1 : index
    %c24_145 = arith.constant 24 : index
    %99 = vector.load %arg28[%c0_142, %c0_143, %c1_144, %c24_145] : memref<2x8x8x72xf32, #tpu.memory_space<vmem>>, vector<2x8x7x8xf32>
    tpu.vector_store %arg28[%c0_142, %c0_143, %c1_144, %c24_145], %98 {strides = array<i32>} : memref<2x8x8x72xf32, #tpu.memory_space<vmem>>, vector<2x8x7x8xf32>,
    %c0_146 = arith.constant 0 : index
    %c0_147 = arith.constant 0 : index
    %c0_148 = arith.constant 0 : index
    %c0_149 = arith.constant 0 : index
    %100 = vector.load %arg27[%c0_146, %c0_147, %c0_148, %c0_149] : memref<2x8x8x8xf32, #tpu.memory_space<vmem>>, vector<2x8x8x8xf32>
    %c0_150 = arith.constant 0 : index
    %c0_151 = arith.constant 0 : index
    %c0_152 = arith.constant 0 : index
    %c32_153 = arith.constant 32 : index
    %101 = vector.load %arg28[%c0_150, %c0_151, %c0_152, %c32_153] : memref<2x8x8x72xf32, #tpu.memory_space<vmem>>, vector<2x8x8x8xf32>
    tpu.vector_store %arg28[%c0_150, %c0_151, %c0_152, %c32_153], %100 {strides = array<i32>} : memref<2x8x8x72xf32, #tpu.memory_space<vmem>>, vector<2x8x8x8xf32>,
    %c0_154 = arith.constant 0 : index
    %c0_155 = arith.constant 0 : index
    %c1_156 = arith.constant 1 : index
    %c0_157 = arith.constant 0 : index
    %102 = vector.load %arg27[%c0_154, %c0_155, %c1_156, %c0_157] : memref<2x8x8x8xf32, #tpu.memory_space<vmem>>, vector<2x8x7x8xf32>
    %c0_158 = arith.constant 0 : index
    %c0_159 = arith.constant 0 : index
    %c0_160 = arith.constant 0 : index
    %c40_161 = arith.constant 40 : index
    %103 = vector.load %arg28[%c0_158, %c0_159, %c0_160, %c40_161] : memref<2x8x8x72xf32, #tpu.memory_space<vmem>>, vector<2x8x7x8xf32>
    tpu.vector_store %arg28[%c0_158, %c0_159, %c0_160, %c40_161], %102 {strides = array<i32>} : memref<2x8x8x72xf32, #tpu.memory_space<vmem>>, vector<2x8x7x8xf32>,
    %c0_162 = arith.constant 0 : index
    %c1_163 = arith.constant 1 : index
    %c0_164 = arith.constant 0 : index
    %c0_165 = arith.constant 0 : index
    %104 = vector.load %arg27[%c0_162, %c1_163, %c0_164, %c0_165] : memref<2x8x8x8xf32, #tpu.memory_space<vmem>>, vector<2x7x7x8xf32>
    %c0_166 = arith.constant 0 : index
    %c0_167 = arith.constant 0 : index
    %c1_168 = arith.constant 1 : index
    %c48_169 = arith.constant 48 : index
    %105 = vector.load %arg28[%c0_166, %c0_167, %c1_168, %c48_169] : memref<2x8x8x72xf32, #tpu.memory_space<vmem>>, vector<2x7x7x8xf32>
    tpu.vector_store %arg28[%c0_166, %c0_167, %c1_168, %c48_169], %104 {strides = array<i32>} : memref<2x8x8x72xf32, #tpu.memory_space<vmem>>, vector<2x7x7x8xf32>,
    %c0_170 = arith.constant 0 : index
    %c1_171 = arith.constant 1 : index
    %c0_172 = arith.constant 0 : index
    %c0_173 = arith.constant 0 : index
    %106 = vector.load %arg27[%c0_170, %c1_171, %c0_172, %c0_173] : memref<2x8x8x8xf32, #tpu.memory_space<vmem>>, vector<2x7x8x8xf32>
    %c0_174 = arith.constant 0 : index
    %c0_175 = arith.constant 0 : index
    %c0_176 = arith.constant 0 : index
    %c56_177 = arith.constant 56 : index
    %107 = vector.load %arg28[%c0_174, %c0_175, %c0_176, %c56_177] : memref<2x8x8x72xf32, #tpu.memory_space<vmem>>, vector<2x7x8x8xf32>
    tpu.vector_store %arg28[%c0_174, %c0_175, %c0_176, %c56_177], %106 {strides = array<i32>} : memref<2x8x8x72xf32, #tpu.memory_space<vmem>>, vector<2x7x8x8xf32>,
    %c0_178 = arith.constant 0 : index
    %c1_179 = arith.constant 1 : index
    %c1_180 = arith.constant 1 : index
    %c0_181 = arith.constant 0 : index
    %108 = vector.load %arg27[%c0_178, %c1_179, %c1_180, %c0_181] : memref<2x8x8x8xf32, #tpu.memory_space<vmem>>, vector<2x7x7x8xf32>
    %c0_182 = arith.constant 0 : index
    %c0_183 = arith.constant 0 : index
    %c0_184 = arith.constant 0 : index
    %c64_185 = arith.constant 64 : index
    %109 = vector.load %arg28[%c0_182, %c0_183, %c0_184, %c64_185] : memref<2x8x8x72xf32, #tpu.memory_space<vmem>>, vector<2x7x7x8xf32>
    tpu.vector_store %arg28[%c0_182, %c0_183, %c0_184, %c64_185], %108 {strides = array<i32>} : memref<2x8x8x72xf32, #tpu.memory_space<vmem>>, vector<2x7x7x8xf32>,
    %c0_186 = arith.constant 0 : index
    %c0_187 = arith.constant 0 : index
    %c0_188 = arith.constant 0 : index
    %c0_189 = arith.constant 0 : index
    %110 = vector.load %arg28[%c0_186, %c0_187, %c0_188, %c0_189] : memref<2x8x8x72xf32, #tpu.memory_space<vmem>>, vector<2x8x8x72xf32>
    %111 = vector.shape_cast %110 : vector<2x8x8x72xf32> to vector<128x72xf32>
    %c0_190 = arith.constant 0 : index
    %c0_191 = arith.constant 0 : index
    %112 = vector.load %arg10[%c0_190, %c0_191] : memref<72x8xbf16, #tpu.memory_space<vmem>>, vector<72x8xbf16>
    %113 = arith.truncf %111 : vector<128x72xf32> to vector<128x72xbf16>
    %cst_192 = arith.constant dense<0.000000e+00> : vector<128x8xf32>
    %114 = tpu.matmul %113, %112, %cst_192 {dimension_numbers = #tpu.dot_dimension_numbers<[1], [0], [0], [1], [0, 0, 1, 1], [], []>} : vector<128x72xbf16>, vector<72x8xbf16>, vector<128x8xf32> -> vector<128x8xf32>
    %c0_193 = arith.constant 0 : index
    %c0_194 = arith.constant 0 : index
    %115 = vector.load %arg11[%c0_193, %c0_194] : memref<1x8xf32, #tpu.memory_space<vmem>>, vector<1x8xf32>
    %116 = vector.broadcast %115 : vector<1x8xf32> to vector<128x8xf32>
    %117 = arith.addf %114, %116 : vector<128x8xf32>
    %cst_195 = arith.constant 0.000000e+00 : f32
    %118 = vector.broadcast %cst_195 : f32 to vector<128x8xf32>
    %119 = arith.subf %118, %117 : vector<128x8xf32>
    %120 = math.exp %119 : vector<128x8xf32>
    %cst_196 = arith.constant 1.000000e+00 : f32
    %121 = vector.broadcast %cst_196 : f32 to vector<128x8xf32>
    %122 = arith.addf %121, %120 : vector<128x8xf32>
    %123 = tpu.reciprocal %122 {approx = true} : vector<128x8xf32> -> vector<128x8xf32>
    %124 = arith.mulf %117, %123 : vector<128x8xf32>
    %125 = arith.addf %124, %75 : vector<128x8xf32>
    %c0_197 = arith.constant 0 : index
    %c0_198 = arith.constant 0 : index
    %126 = vector.load %arg12[%c0_197, %c0_198] : memref<8x16xbf16, #tpu.memory_space<vmem>>, vector<8x16xbf16>
    %127 = arith.truncf %125 : vector<128x8xf32> to vector<128x8xbf16>
    %cst_199 = arith.constant dense<0.000000e+00> : vector<128x16xf32>
    %128 = tpu.matmul %127, %126, %cst_199 {dimension_numbers = #tpu.dot_dimension_numbers<[1], [0], [0], [1], [0, 0, 1, 1], [], []>} : vector<128x8xbf16>, vector<8x16xbf16>, vector<128x16xf32> -> vector<128x16xf32>
    %c0_200 = arith.constant 0 : index
    %c0_201 = arith.constant 0 : index
    %129 = vector.load %arg13[%c0_200, %c0_201] : memref<8x16xbf16, #tpu.memory_space<vmem>>, vector<8x16xbf16>
    %130 = arith.truncf %76 : vector<128x8xf32> to vector<128x8xbf16>
    %cst_202 = arith.constant dense<0.000000e+00> : vector<128x16xf32>
    %131 = tpu.matmul %130, %129, %cst_202 {dimension_numbers = #tpu.dot_dimension_numbers<[1], [0], [0], [1], [0, 0, 1, 1], [], []>} : vector<128x8xbf16>, vector<8x16xbf16>, vector<128x16xf32> -> vector<128x16xf32>
    %132 = arith.addf %128, %131 : vector<128x16xf32>
    %c0_203 = arith.constant 0 : index
    %c0_204 = arith.constant 0 : index
    %133 = vector.load %arg14[%c0_203, %c0_204] : memref<1x16xf32, #tpu.memory_space<vmem>>, vector<1x16xf32>
    %134 = vector.broadcast %133 : vector<1x16xf32> to vector<128x16xf32>
    %135 = arith.addf %132, %134 : vector<128x16xf32>
    %cst_205 = arith.constant 0.000000e+00 : f32
    %136 = vector.broadcast %cst_205 : f32 to vector<128x16xf32>
    %137 = arith.subf %136, %135 : vector<128x16xf32>
    %138 = math.exp %137 : vector<128x16xf32>
    %cst_206 = arith.constant 1.000000e+00 : f32
    %139 = vector.broadcast %cst_206 : f32 to vector<128x16xf32>
    %140 = arith.addf %139, %138 : vector<128x16xf32>
    %141 = tpu.reciprocal %140 {approx = true} : vector<128x16xf32> -> vector<128x16xf32>
    %142 = arith.mulf %135, %141 : vector<128x16xf32>
    %c0_207 = arith.constant 0 : index
    %c0_208 = arith.constant 0 : index
    %143 = vector.load %arg15[%c0_207, %c0_208] : memref<16x8xbf16, #tpu.memory_space<vmem>>, vector<16x8xbf16>
    %144 = arith.truncf %142 : vector<128x16xf32> to vector<128x16xbf16>
    %cst_209 = arith.constant dense<0.000000e+00> : vector<128x8xf32>
    %145 = tpu.matmul %144, %143, %cst_209 {dimension_numbers = #tpu.dot_dimension_numbers<[1], [0], [0], [1], [0, 0, 1, 1], [], []>} : vector<128x16xbf16>, vector<16x8xbf16>, vector<128x8xf32> -> vector<128x8xf32>
    %c0_210 = arith.constant 0 : index
    %c0_211 = arith.constant 0 : index
    %146 = vector.load %arg16[%c0_210, %c0_211] : memref<1x8xf32, #tpu.memory_space<vmem>>, vector<1x8xf32>
    %147 = vector.broadcast %146 : vector<1x8xf32> to vector<128x8xf32>
    %148 = arith.addf %145, %147 : vector<128x8xf32>
    %cst_212 = arith.constant 0.000000e+00 : f32
    %149 = vector.broadcast %cst_212 : f32 to vector<128x8xf32>
    %150 = arith.subf %149, %148 : vector<128x8xf32>
    %151 = math.exp %150 : vector<128x8xf32>
    %cst_213 = arith.constant 1.000000e+00 : f32
    %152 = vector.broadcast %cst_213 : f32 to vector<128x8xf32>
    %153 = arith.addf %152, %151 : vector<128x8xf32>
    %154 = tpu.reciprocal %153 {approx = true} : vector<128x8xf32> -> vector<128x8xf32>
    %155 = arith.mulf %148, %154 : vector<128x8xf32>
    %156 = vector.shape_cast %155 : vector<128x8xf32> to vector<2x8x8x8xf32>
    %c0_214 = arith.constant 0 : index
    %c2_215 = arith.constant 2 : index
    %c2_216 = arith.constant 2 : index
    %c0_217 = arith.constant 0 : index
    %157 = vector.load %arg29[%c0_214, %c2_215, %c2_216, %c0_217] : memref<2x12x12x8xf32, #tpu.memory_space<vmem>>, vector<2x8x8x8xf32>
    tpu.vector_store %arg29[%c0_214, %c2_215, %c2_216, %c0_217], %156 {strides = array<i32>} : memref<2x12x12x8xf32, #tpu.memory_space<vmem>>, vector<2x8x8x8xf32>,
    %c0_218 = arith.constant 0 : index
    %c0_219 = arith.constant 0 : index
    %c0_220 = arith.constant 0 : index
    %c0_221 = arith.constant 0 : index
    %158 = vector.load %arg29[%c0_218, %c0_219, %c0_220, %c0_221] : memref<2x12x12x8xf32, #tpu.memory_space<vmem>>, vector<2x8x12x8xf32>
    %c0_222 = arith.constant 0 : index
    %c1_223 = arith.constant 1 : index
    %c0_224 = arith.constant 0 : index
    %c0_225 = arith.constant 0 : index
    %159 = vector.load %arg29[%c0_222, %c1_223, %c0_224, %c0_225] : memref<2x12x12x8xf32, #tpu.memory_space<vmem>>, vector<2x8x12x8xf32>
    %160 = arith.maximumf %158, %159 : vector<2x8x12x8xf32>
    %c0_226 = arith.constant 0 : index
    %c2_227 = arith.constant 2 : index
    %c0_228 = arith.constant 0 : index
    %c0_229 = arith.constant 0 : index
    %161 = vector.load %arg29[%c0_226, %c2_227, %c0_228, %c0_229] : memref<2x12x12x8xf32, #tpu.memory_space<vmem>>, vector<2x8x12x8xf32>
    %162 = arith.maximumf %160, %161 : vector<2x8x12x8xf32>
    %c0_230 = arith.constant 0 : index
    %c3_231 = arith.constant 3 : index
    %c0_232 = arith.constant 0 : index
    %c0_233 = arith.constant 0 : index
    %163 = vector.load %arg29[%c0_230, %c3_231, %c0_232, %c0_233] : memref<2x12x12x8xf32, #tpu.memory_space<vmem>>, vector<2x8x12x8xf32>
    %164 = arith.maximumf %162, %163 : vector<2x8x12x8xf32>
    %c0_234 = arith.constant 0 : index
    %c4 = arith.constant 4 : index
    %c0_235 = arith.constant 0 : index
    %c0_236 = arith.constant 0 : index
    %165 = vector.load %arg29[%c0_234, %c4, %c0_235, %c0_236] : memref<2x12x12x8xf32, #tpu.memory_space<vmem>>, vector<2x8x12x8xf32>
    %166 = arith.maximumf %164, %165 : vector<2x8x12x8xf32>
    %167 = vector.extract_strided_slice %166 {offsets = [0, 0, 0, 0], sizes = [2, 8, 8, 8], strides = [1, 1, 1, 1]} : vector<2x8x12x8xf32> to vector<2x8x8x8xf32>
    %168 = vector.extract_strided_slice %166 {offsets = [0, 0, 1, 0], sizes = [2, 8, 8, 8], strides = [1, 1, 1, 1]} : vector<2x8x12x8xf32> to vector<2x8x8x8xf32>
    %169 = arith.maximumf %167, %168 : vector<2x8x8x8xf32>
    %170 = vector.extract_strided_slice %166 {offsets = [0, 0, 2, 0], sizes = [2, 8, 8, 8], strides = [1, 1, 1, 1]} : vector<2x8x12x8xf32> to vector<2x8x8x8xf32>
    %171 = arith.maximumf %169, %170 : vector<2x8x8x8xf32>
    %172 = vector.extract_strided_slice %166 {offsets = [0, 0, 3, 0], sizes = [2, 8, 8, 8], strides = [1, 1, 1, 1]} : vector<2x8x12x8xf32> to vector<2x8x8x8xf32>
    %173 = arith.maximumf %171, %172 : vector<2x8x8x8xf32>
    %174 = vector.extract_strided_slice %166 {offsets = [0, 0, 4, 0], sizes = [2, 8, 8, 8], strides = [1, 1, 1, 1]} : vector<2x8x12x8xf32> to vector<2x8x8x8xf32>
    %175 = arith.maximumf %173, %174 : vector<2x8x8x8xf32>
    %176 = vector.shape_cast %175 : vector<2x8x8x8xf32> to vector<128x8xf32>
    %177 = vector.shape_cast %176 : vector<128x8xf32> to vector<2x8x8x8xf32>
    %c0_237 = arith.constant 0 : index
    %c2_238 = arith.constant 2 : index
    %c2_239 = arith.constant 2 : index
    %c0_240 = arith.constant 0 : index
    %178 = vector.load %arg29[%c0_237, %c2_238, %c2_239, %c0_240] : memref<2x12x12x8xf32, #tpu.memory_space<vmem>>, vector<2x8x8x8xf32>
    tpu.vector_store %arg29[%c0_237, %c2_238, %c2_239, %c0_240], %177 {strides = array<i32>} : memref<2x12x12x8xf32, #tpu.memory_space<vmem>>, vector<2x8x8x8xf32>,
    %c0_241 = arith.constant 0 : index
    %c0_242 = arith.constant 0 : index
    %c0_243 = arith.constant 0 : index
    %c0_244 = arith.constant 0 : index
    %179 = vector.load %arg29[%c0_241, %c0_242, %c0_243, %c0_244] : memref<2x12x12x8xf32, #tpu.memory_space<vmem>>, vector<2x8x12x8xf32>
    %c0_245 = arith.constant 0 : index
    %c1_246 = arith.constant 1 : index
    %c0_247 = arith.constant 0 : index
    %c0_248 = arith.constant 0 : index
    %180 = vector.load %arg29[%c0_245, %c1_246, %c0_247, %c0_248] : memref<2x12x12x8xf32, #tpu.memory_space<vmem>>, vector<2x8x12x8xf32>
    %181 = arith.maximumf %179, %180 : vector<2x8x12x8xf32>
    %c0_249 = arith.constant 0 : index
    %c2_250 = arith.constant 2 : index
    %c0_251 = arith.constant 0 : index
    %c0_252 = arith.constant 0 : index
    %182 = vector.load %arg29[%c0_249, %c2_250, %c0_251, %c0_252] : memref<2x12x12x8xf32, #tpu.memory_space<vmem>>, vector<2x8x12x8xf32>
    %183 = arith.maximumf %181, %182 : vector<2x8x12x8xf32>
    %c0_253 = arith.constant 0 : index
    %c3_254 = arith.constant 3 : index
    %c0_255 = arith.constant 0 : index
    %c0_256 = arith.constant 0 : index
    %184 = vector.load %arg29[%c0_253, %c3_254, %c0_255, %c0_256] : memref<2x12x12x8xf32, #tpu.memory_space<vmem>>, vector<2x8x12x8xf32>
    %185 = arith.maximumf %183, %184 : vector<2x8x12x8xf32>
    %c0_257 = arith.constant 0 : index
    %c4_258 = arith.constant 4 : index
    %c0_259 = arith.constant 0 : index
    %c0_260 = arith.constant 0 : index
    %186 = vector.load %arg29[%c0_257, %c4_258, %c0_259, %c0_260] : memref<2x12x12x8xf32, #tpu.memory_space<vmem>>, vector<2x8x12x8xf32>
    %187 = arith.maximumf %185, %186 : vector<2x8x12x8xf32>
    %188 = vector.extract_strided_slice %187 {offsets = [0, 0, 0, 0], sizes = [2, 8, 8, 8], strides = [1, 1, 1, 1]} : vector<2x8x12x8xf32> to vector<2x8x8x8xf32>
    %189 = vector.extract_strided_slice %187 {offsets = [0, 0, 1, 0], sizes = [2, 8, 8, 8], strides = [1, 1, 1, 1]} : vector<2x8x12x8xf32> to vector<2x8x8x8xf32>
    %190 = arith.maximumf %188, %189 : vector<2x8x8x8xf32>
    %191 = vector.extract_strided_slice %187 {offsets = [0, 0, 2, 0], sizes = [2, 8, 8, 8], strides = [1, 1, 1, 1]} : vector<2x8x12x8xf32> to vector<2x8x8x8xf32>
    %192 = arith.maximumf %190, %191 : vector<2x8x8x8xf32>
    %193 = vector.extract_strided_slice %187 {offsets = [0, 0, 3, 0], sizes = [2, 8, 8, 8], strides = [1, 1, 1, 1]} : vector<2x8x12x8xf32> to vector<2x8x8x8xf32>
    %194 = arith.maximumf %192, %193 : vector<2x8x8x8xf32>
    %195 = vector.extract_strided_slice %187 {offsets = [0, 0, 4, 0], sizes = [2, 8, 8, 8], strides = [1, 1, 1, 1]} : vector<2x8x12x8xf32> to vector<2x8x8x8xf32>
    %196 = arith.maximumf %194, %195 : vector<2x8x8x8xf32>
    %197 = vector.shape_cast %196 : vector<2x8x8x8xf32> to vector<128x8xf32>
    %198 = vector.shape_cast %197 : vector<128x8xf32> to vector<2x8x8x8xf32>
    %c0_261 = arith.constant 0 : index
    %c2_262 = arith.constant 2 : index
    %c2_263 = arith.constant 2 : index
    %c0_264 = arith.constant 0 : index
    %199 = vector.load %arg29[%c0_261, %c2_262, %c2_263, %c0_264] : memref<2x12x12x8xf32, #tpu.memory_space<vmem>>, vector<2x8x8x8xf32>
    tpu.vector_store %arg29[%c0_261, %c2_262, %c2_263, %c0_264], %198 {strides = array<i32>} : memref<2x12x12x8xf32, #tpu.memory_space<vmem>>, vector<2x8x8x8xf32>,
    %c0_265 = arith.constant 0 : index
    %c0_266 = arith.constant 0 : index
    %c0_267 = arith.constant 0 : index
    %c0_268 = arith.constant 0 : index
    %200 = vector.load %arg29[%c0_265, %c0_266, %c0_267, %c0_268] : memref<2x12x12x8xf32, #tpu.memory_space<vmem>>, vector<2x8x12x8xf32>
    %c0_269 = arith.constant 0 : index
    %c1_270 = arith.constant 1 : index
    %c0_271 = arith.constant 0 : index
    %c0_272 = arith.constant 0 : index
    %201 = vector.load %arg29[%c0_269, %c1_270, %c0_271, %c0_272] : memref<2x12x12x8xf32, #tpu.memory_space<vmem>>, vector<2x8x12x8xf32>
    %202 = arith.maximumf %200, %201 : vector<2x8x12x8xf32>
    %c0_273 = arith.constant 0 : index
    %c2_274 = arith.constant 2 : index
    %c0_275 = arith.constant 0 : index
    %c0_276 = arith.constant 0 : index
    %203 = vector.load %arg29[%c0_273, %c2_274, %c0_275, %c0_276] : memref<2x12x12x8xf32, #tpu.memory_space<vmem>>, vector<2x8x12x8xf32>
    %204 = arith.maximumf %202, %203 : vector<2x8x12x8xf32>
    %c0_277 = arith.constant 0 : index
    %c3_278 = arith.constant 3 : index
    %c0_279 = arith.constant 0 : index
    %c0_280 = arith.constant 0 : index
    %205 = vector.load %arg29[%c0_277, %c3_278, %c0_279, %c0_280] : memref<2x12x12x8xf32, #tpu.memory_space<vmem>>, vector<2x8x12x8xf32>
    %206 = arith.maximumf %204, %205 : vector<2x8x12x8xf32>
    %c0_281 = arith.constant 0 : index
    %c4_282 = arith.constant 4 : index
    %c0_283 = arith.constant 0 : index
    %c0_284 = arith.constant 0 : index
    %207 = vector.load %arg29[%c0_281, %c4_282, %c0_283, %c0_284] : memref<2x12x12x8xf32, #tpu.memory_space<vmem>>, vector<2x8x12x8xf32>
    %208 = arith.maximumf %206, %207 : vector<2x8x12x8xf32>
    %209 = vector.extract_strided_slice %208 {offsets = [0, 0, 0, 0], sizes = [2, 8, 8, 8], strides = [1, 1, 1, 1]} : vector<2x8x12x8xf32> to vector<2x8x8x8xf32>
    %210 = vector.extract_strided_slice %208 {offsets = [0, 0, 1, 0], sizes = [2, 8, 8, 8], strides = [1, 1, 1, 1]} : vector<2x8x12x8xf32> to vector<2x8x8x8xf32>
    %211 = arith.maximumf %209, %210 : vector<2x8x8x8xf32>
    %212 = vector.extract_strided_slice %208 {offsets = [0, 0, 2, 0], sizes = [2, 8, 8, 8], strides = [1, 1, 1, 1]} : vector<2x8x12x8xf32> to vector<2x8x8x8xf32>
    %213 = arith.maximumf %211, %212 : vector<2x8x8x8xf32>
    %214 = vector.extract_strided_slice %208 {offsets = [0, 0, 3, 0], sizes = [2, 8, 8, 8], strides = [1, 1, 1, 1]} : vector<2x8x12x8xf32> to vector<2x8x8x8xf32>
    %215 = arith.maximumf %213, %214 : vector<2x8x8x8xf32>
    %216 = vector.extract_strided_slice %208 {offsets = [0, 0, 4, 0], sizes = [2, 8, 8, 8], strides = [1, 1, 1, 1]} : vector<2x8x12x8xf32> to vector<2x8x8x8xf32>
    %217 = arith.maximumf %215, %216 : vector<2x8x8x8xf32>
    %218 = vector.shape_cast %217 : vector<2x8x8x8xf32> to vector<128x8xf32>
    %c0_285 = arith.constant 0 : index
    %c0_286 = arith.constant 0 : index
    %219 = vector.load %arg17[%c0_285, %c0_286] : memref<8x16xbf16, #tpu.memory_space<vmem>>, vector<8x16xbf16>
    %220 = arith.truncf %155 : vector<128x8xf32> to vector<128x8xbf16>
    %cst_287 = arith.constant dense<0.000000e+00> : vector<128x16xf32>
    %221 = tpu.matmul %220, %219, %cst_287 {dimension_numbers = #tpu.dot_dimension_numbers<[1], [0], [0], [1], [0, 0, 1, 1], [], []>} : vector<128x8xbf16>, vector<8x16xbf16>, vector<128x16xf32> -> vector<128x16xf32>
    %c0_288 = arith.constant 0 : index
    %c0_289 = arith.constant 0 : index
    %222 = vector.load %arg18[%c0_288, %c0_289] : memref<8x16xbf16, #tpu.memory_space<vmem>>, vector<8x16xbf16>
    %223 = arith.truncf %176 : vector<128x8xf32> to vector<128x8xbf16>
    %cst_290 = arith.constant dense<0.000000e+00> : vector<128x16xf32>
    %224 = tpu.matmul %223, %222, %cst_290 {dimension_numbers = #tpu.dot_dimension_numbers<[1], [0], [0], [1], [0, 0, 1, 1], [], []>} : vector<128x8xbf16>, vector<8x16xbf16>, vector<128x16xf32> -> vector<128x16xf32>
    %225 = arith.addf %221, %224 : vector<128x16xf32>
    %c0_291 = arith.constant 0 : index
    %c0_292 = arith.constant 0 : index
    %226 = vector.load %arg19[%c0_291, %c0_292] : memref<8x16xbf16, #tpu.memory_space<vmem>>, vector<8x16xbf16>
    %227 = arith.truncf %197 : vector<128x8xf32> to vector<128x8xbf16>
    %cst_293 = arith.constant dense<0.000000e+00> : vector<128x16xf32>
    %228 = tpu.matmul %227, %226, %cst_293 {dimension_numbers = #tpu.dot_dimension_numbers<[1], [0], [0], [1], [0, 0, 1, 1], [], []>} : vector<128x8xbf16>, vector<8x16xbf16>, vector<128x16xf32> -> vector<128x16xf32>
    %229 = arith.addf %225, %228 : vector<128x16xf32>
    %c0_294 = arith.constant 0 : index
    %c0_295 = arith.constant 0 : index
    %230 = vector.load %arg20[%c0_294, %c0_295] : memref<8x16xbf16, #tpu.memory_space<vmem>>, vector<8x16xbf16>
    %231 = arith.truncf %218 : vector<128x8xf32> to vector<128x8xbf16>
    %cst_296 = arith.constant dense<0.000000e+00> : vector<128x16xf32>
    %232 = tpu.matmul %231, %230, %cst_296 {dimension_numbers = #tpu.dot_dimension_numbers<[1], [0], [0], [1], [0, 0, 1, 1], [], []>} : vector<128x8xbf16>, vector<8x16xbf16>, vector<128x16xf32> -> vector<128x16xf32>
    %233 = arith.addf %229, %232 : vector<128x16xf32>
    %c0_297 = arith.constant 0 : index
    %c0_298 = arith.constant 0 : index
    %234 = vector.load %arg21[%c0_297, %c0_298] : memref<1x16xf32, #tpu.memory_space<vmem>>, vector<1x16xf32>
    %235 = vector.broadcast %234 : vector<1x16xf32> to vector<128x16xf32>
    %236 = arith.addf %233, %235 : vector<128x16xf32>
    %cst_299 = arith.constant 0.000000e+00 : f32
    %237 = vector.broadcast %cst_299 : f32 to vector<128x16xf32>
    %238 = arith.subf %237, %236 : vector<128x16xf32>
    %239 = math.exp %238 : vector<128x16xf32>
    %cst_300 = arith.constant 1.000000e+00 : f32
    %240 = vector.broadcast %cst_300 : f32 to vector<128x16xf32>
    %241 = arith.addf %240, %239 : vector<128x16xf32>
    %242 = tpu.reciprocal %241 {approx = true} : vector<128x16xf32> -> vector<128x16xf32>
    %243 = arith.mulf %236, %242 : vector<128x16xf32>
    %c0_301 = arith.constant 0 : index
    %c0_302 = arith.constant 0 : index
    %244 = vector.load %arg22[%c0_301, %c0_302] : memref<16x21xbf16, #tpu.memory_space<vmem>>, vector<16x21xbf16>
    %245 = arith.truncf %243 : vector<128x16xf32> to vector<128x16xbf16>
    %cst_303 = arith.constant dense<0.000000e+00> : vector<128x21xf32>
    %246 = tpu.matmul %245, %244, %cst_303 {dimension_numbers = #tpu.dot_dimension_numbers<[1], [0], [0], [1], [0, 0, 1, 1], [], []>} : vector<128x16xbf16>, vector<16x21xbf16>, vector<128x21xf32> -> vector<128x21xf32>
    %c0_304 = arith.constant 0 : index
    %c0_305 = arith.constant 0 : index
    %247 = vector.load %arg23[%c0_304, %c0_305] : memref<1x21xf32, #tpu.memory_space<vmem>>, vector<1x21xf32>
    %248 = vector.broadcast %247 : vector<1x21xf32> to vector<128x21xf32>
    %249 = arith.addf %246, %248 : vector<128x21xf32>
    %cst_306 = arith.constant 0.000000e+00 : f32
    %250 = vector.broadcast %cst_306 : f32 to vector<128x21xf32>
    %251 = arith.subf %250, %249 : vector<128x21xf32>
    %252 = math.exp %251 : vector<128x21xf32>
    %cst_307 = arith.constant 1.000000e+00 : f32
    %253 = vector.broadcast %cst_307 : f32 to vector<128x21xf32>
    %254 = arith.addf %253, %252 : vector<128x21xf32>
    %cst_308 = arith.constant 1.000000e+00 : f32
    %255 = vector.broadcast %cst_308 : f32 to vector<128x21xf32>
    %256 = arith.divf %255, %254 : vector<128x21xf32>
    %257 = vector.shape_cast %256 : vector<128x21xf32> to vector<2x64x21xf32>
    %c0_309 = arith.constant 0 : index
    %c0_310 = arith.constant 0 : index
    %c0_311 = arith.constant 0 : index
    %258 = vector.load %arg24[%c0_309, %c0_310, %c0_311] : memref<2x64x21xf32, #tpu.memory_space<vmem>>, vector<2x64x21xf32>
    tpu.vector_store %arg24[%c0_309, %c0_310, %c0_311], %257 {strides = array<i32>} : memref<2x64x21xf32, #tpu.memory_space<vmem>>, vector<2x64x21xf32>,
    return
  }
  func.func @transform_0(%arg0: i32) -> (i32, i32, i32, i32) {
    %c0_i32 = arith.constant 0 : i32
    %c0_i32_0 = arith.constant 0 : i32
    %c0_i32_1 = arith.constant 0 : i32
    %c0_i32_2 = arith.constant 0 : i32
    return %c0_i32, %arg0, %c0_i32_0, %c0_i32_1 : i32, i32, i32, i32
  }
  func.func @transform_1(%arg0: i32) -> (i32, i32) {
    %c0_i32 = arith.constant 0 : i32
    %c0_i32_0 = arith.constant 0 : i32
    %c0_i32_1 = arith.constant 0 : i32
    return %c0_i32, %c0_i32_0 : i32, i32
  }
  func.func @transform_2(%arg0: i32) -> (i32, i32) {
    %c0_i32 = arith.constant 0 : i32
    %c0_i32_0 = arith.constant 0 : i32
    %c0_i32_1 = arith.constant 0 : i32
    return %c0_i32, %c0_i32_0 : i32, i32
  }
  func.func @transform_3(%arg0: i32) -> (i32, i32) {
    %c0_i32 = arith.constant 0 : i32
    %c0_i32_0 = arith.constant 0 : i32
    %c0_i32_1 = arith.constant 0 : i32
    return %c0_i32, %c0_i32_0 : i32, i32
  }
  func.func @transform_4(%arg0: i32) -> (i32, i32) {
    %c0_i32 = arith.constant 0 : i32
    %c0_i32_0 = arith.constant 0 : i32
    %c0_i32_1 = arith.constant 0 : i32
    return %c0_i32, %c0_i32_0 : i32, i32
  }
  func.func @transform_5(%arg0: i32) -> (i32, i32) {
    %c0_i32 = arith.constant 0 : i32
    %c0_i32_0 = arith.constant 0 : i32
    %c0_i32_1 = arith.constant 0 : i32
    return %c0_i32, %c0_i32_0 : i32, i32
  }
  func.func @transform_6(%arg0: i32) -> (i32, i32) {
    %c0_i32 = arith.constant 0 : i32
    %c0_i32_0 = arith.constant 0 : i32
    %c0_i32_1 = arith.constant 0 : i32
    return %c0_i32, %c0_i32_0 : i32, i32
  }
  func.func @transform_7(%arg0: i32) -> (i32, i32) {
    %c0_i32 = arith.constant 0 : i32
    %c0_i32_0 = arith.constant 0 : i32
    %c0_i32_1 = arith.constant 0 : i32
    return %c0_i32, %c0_i32_0 : i32, i32
  }
  func.func @transform_8(%arg0: i32) -> (i32, i32) {
    %c0_i32 = arith.constant 0 : i32
    %c0_i32_0 = arith.constant 0 : i32
    %c0_i32_1 = arith.constant 0 : i32
    return %c0_i32, %c0_i32_0 : i32, i32
  }
  func.func @transform_9(%arg0: i32) -> (i32, i32) {
    %c0_i32 = arith.constant 0 : i32
    %c0_i32_0 = arith.constant 0 : i32
    %c0_i32_1 = arith.constant 0 : i32
    return %c0_i32, %c0_i32_0 : i32, i32
  }
  func.func @transform_10(%arg0: i32) -> (i32, i32) {
    %c0_i32 = arith.constant 0 : i32
    %c0_i32_0 = arith.constant 0 : i32
    %c0_i32_1 = arith.constant 0 : i32
    return %c0_i32, %c0_i32_0 : i32, i32
  }
  func.func @transform_11(%arg0: i32) -> (i32, i32) {
    %c0_i32 = arith.constant 0 : i32
    %c0_i32_0 = arith.constant 0 : i32
    %c0_i32_1 = arith.constant 0 : i32
    return %c0_i32, %c0_i32_0 : i32, i32
  }
  func.func @transform_12(%arg0: i32) -> (i32, i32) {
    %c0_i32 = arith.constant 0 : i32
    %c0_i32_0 = arith.constant 0 : i32
    %c0_i32_1 = arith.constant 0 : i32
    return %c0_i32, %c0_i32_0 : i32, i32
  }
  func.func @transform_13(%arg0: i32) -> (i32, i32) {
    %c0_i32 = arith.constant 0 : i32
    %c0_i32_0 = arith.constant 0 : i32
    %c0_i32_1 = arith.constant 0 : i32
    return %c0_i32, %c0_i32_0 : i32, i32
  }
  func.func @transform_14(%arg0: i32) -> (i32, i32) {
    %c0_i32 = arith.constant 0 : i32
    %c0_i32_0 = arith.constant 0 : i32
    %c0_i32_1 = arith.constant 0 : i32
    return %c0_i32, %c0_i32_0 : i32, i32
  }
  func.func @transform_15(%arg0: i32) -> (i32, i32) {
    %c0_i32 = arith.constant 0 : i32
    %c0_i32_0 = arith.constant 0 : i32
    %c0_i32_1 = arith.constant 0 : i32
    return %c0_i32, %c0_i32_0 : i32, i32
  }
  func.func @transform_16(%arg0: i32) -> (i32, i32) {
    %c0_i32 = arith.constant 0 : i32
    %c0_i32_0 = arith.constant 0 : i32
    %c0_i32_1 = arith.constant 0 : i32
    return %c0_i32, %c0_i32_0 : i32, i32
  }
  func.func @transform_17(%arg0: i32) -> (i32, i32) {
    %c0_i32 = arith.constant 0 : i32
    %c0_i32_0 = arith.constant 0 : i32
    %c0_i32_1 = arith.constant 0 : i32
    return %c0_i32, %c0_i32_0 : i32, i32
  }
  func.func @transform_18(%arg0: i32) -> (i32, i32) {
    %c0_i32 = arith.constant 0 : i32
    %c0_i32_0 = arith.constant 0 : i32
    %c0_i32_1 = arith.constant 0 : i32
    return %c0_i32, %c0_i32_0 : i32, i32
  }
  func.func @transform_19(%arg0: i32) -> (i32, i32) {
    %c0_i32 = arith.constant 0 : i32
    %c0_i32_0 = arith.constant 0 : i32
    %c0_i32_1 = arith.constant 0 : i32
    return %c0_i32, %c0_i32_0 : i32, i32
  }
  func.func @transform_20(%arg0: i32) -> (i32, i32) {
    %c0_i32 = arith.constant 0 : i32
    %c0_i32_0 = arith.constant 0 : i32
    %c0_i32_1 = arith.constant 0 : i32
    return %c0_i32, %c0_i32_0 : i32, i32
  }
  func.func @transform_21(%arg0: i32) -> (i32, i32) {
    %c0_i32 = arith.constant 0 : i32
    %c0_i32_0 = arith.constant 0 : i32
    %c0_i32_1 = arith.constant 0 : i32
    return %c0_i32, %c0_i32_0 : i32, i32
  }
  func.func @transform_22(%arg0: i32) -> (i32, i32) {
    %c0_i32 = arith.constant 0 : i32
    %c0_i32_0 = arith.constant 0 : i32
    %c0_i32_1 = arith.constant 0 : i32
    return %c0_i32, %c0_i32_0 : i32, i32
  }
  func.func @transform_23(%arg0: i32) -> (i32, i32, i32) {
    %c0_i32 = arith.constant 0 : i32
    %c0_i32_0 = arith.constant 0 : i32
    %c0_i32_1 = arith.constant 0 : i32
    return %arg0, %c0_i32, %c0_i32_0 : i32, i32, i32
  }
}

</mosaic_0001>

<llo_original>
// kernel: yolov5_forward.1
$region0: #{yolov5_forward.1}
  #allocation0 [shape = 'u32[]', space=smem, size = 0x4, offset = 0x4, fixed_abs, tag = 'smem constant byte address 0x4 - core index']
  #allocation1 [shape = 'u32[72,128]{1,0:T(1,128)}', space=vmem, size = 0x9000, scoped, tag = 'internal scratch']
  #allocation2 [shape = 'f32[4,2,8,8,8]{4,3,2,1,0:T(8,128)}', space=vmem, size = 0x40000, scoped, tag = 'scratch operand']
  #allocation3 [shape = 'f32[2,8,8,72]{3,2,1,0:T(8,128)}', space=vmem, size = 0x10000, scoped, tag = 'scratch operand']
  #allocation4 [shape = 'f32[2,8,8,8]{3,2,1,0:T(8,128)}', space=vmem, size = 0x10000, scoped, tag = 'scratch operand']
  #allocation5 [shape = 'f32[2,8,8,72]{3,2,1,0:T(8,128)}', space=vmem, size = 0x10000, scoped, tag = 'scratch operand']
  #allocation6 [shape = 'f32[2,12,12,8]{3,2,1,0:T(8,128)}', space=vmem, size = 0x30000, scoped, tag = 'scratch operand']
  %s0 = inlined_call_operand.vmem [shape: f32[4,2,64,27], index: 0, kind: input, shape index: {}]
  %s1 = inlined_call_operand.vmem [shape: bf16[27,8], index: 1, kind: input, shape index: {}]
  %s2 = inlined_call_operand.vmem [shape: f32[1,8], index: 2, kind: input, shape index: {}]
  %s3 = inlined_call_operand.vmem [shape: bf16[72,16], index: 3, kind: input, shape index: {}]
  %s4 = inlined_call_operand.vmem [shape: f32[1,16], index: 4, kind: input, shape index: {}]
  %s5 = inlined_call_operand.vmem [shape: bf16[16,16], index: 5, kind: input, shape index: {}]
  %s6 = inlined_call_operand.vmem [shape: f32[1,16], index: 6, kind: input, shape index: {}]
  %s7 = inlined_call_operand.vmem [shape: bf16[8,8], index: 7, kind: input, shape index: {}]
  %s8 = inlined_call_operand.vmem [shape: f32[1,8], index: 8, kind: input, shape index: {}]
  %s9 = inlined_call_operand.vmem [shape: bf16[72,8], index: 9, kind: input, shape index: {}]
  %s10 = inlined_call_operand.vmem [shape: f32[1,8], index: 10, kind: input, shape index: {}]
  %s11 = inlined_call_operand.vmem [shape: bf16[8,16], index: 11, kind: input, shape index: {}]
  %s12 = inlined_call_operand.vmem [shape: bf16[8,16], index: 12, kind: input, shape index: {}]
  %s13 = inlined_call_operand.vmem [shape: f32[1,16], index: 13, kind: input, shape index: {}]
  %s14 = inlined_call_operand.vmem [shape: bf16[16,8], index: 14, kind: input, shape index: {}]
  %s15 = inlined_call_operand.vmem [shape: f32[1,8], index: 15, kind: input, shape index: {}]
  %s16 = inlined_call_operand.vmem [shape: bf16[8,16], index: 16, kind: input, shape index: {}]
  %s17 = inlined_call_operand.vmem [shape: bf16[8,16], index: 17, kind: input, shape index: {}]
  %s18 = inlined_call_operand.vmem [shape: bf16[8,16], index: 18, kind: input, shape index: {}]
  %s19 = inlined_call_operand.vmem [shape: bf16[8,16], index: 19, kind: input, shape index: {}]
  %s20 = inlined_call_operand.vmem [shape: f32[1,16], index: 20, kind: input, shape index: {}]
  %s21 = inlined_call_operand.vmem [shape: bf16[16,21], index: 21, kind: input, shape index: {}]
  %s22 = inlined_call_operand.vmem [shape: f32[1,21], index: 22, kind: input, shape index: {}]
  %s23 = inlined_call_operand.vmem [shape: f32[2,64,21], index: 23, kind: output, shape index: {}]
  %s24 = sld [smem:[#allocation0]]
  $region106: #{yolov5_forward.1} parent=0
    _
  %s26 = ssub.s32 1, %s24
  %s27 = scalar_select 0, %s26, %s24
  // Predicated region
  $region2: #{yolov5_forward.1} parent=0 // pred_check
    _
  $region3: #{yolov5_forward.1} parent=0 // pred_check_branch
    %29 = sbr.rel (0) target = $region5
  $region4: #{yolov5_forward.1} parent=0 // pred_region
    _
  $region5: #{yolov5_forward.1} parent=0 // pred_fallthru
    _
  // Predicated region
  $region6: #{yolov5_forward.1} parent=0 // pred_check
    _
  $region7: #{yolov5_forward.1} parent=0 // pred_check_branch
    %31 = sbr.rel (0) target = $region9
  $region8: #{yolov5_forward.1} parent=0 // pred_region
    _
  $region9: #{yolov5_forward.1} parent=0 // pred_fallthru
    _
  // Predicated region
  $region10: #{yolov5_forward.1} parent=0 // pred_check
    _
  $region11: #{yolov5_forward.1} parent=0 // pred_check_branch
    %33 = sbr.rel (0) target = $region13
  $region12: #{yolov5_forward.1} parent=0 // pred_region
    _
  $region13: #{yolov5_forward.1} parent=0 // pred_fallthru
    _
  // Predicated region
  $region14: #{yolov5_forward.1} parent=0 // pred_check
    _
  $region15: #{yolov5_forward.1} parent=0 // pred_check_branch
    %35 = sbr.rel (0) target = $region17
  $region16: #{yolov5_forward.1} parent=0 // pred_region
    _
  $region17: #{yolov5_forward.1} parent=0 // pred_fallthru
    _
  // Predicated region
  $region18: #{yolov5_forward.1} parent=0 // pred_check
    _
  $region19: #{yolov5_forward.1} parent=0 // pred_check_branch
    %37 = sbr.rel (0) target = $region21
  $region20: #{yolov5_forward.1} parent=0 // pred_region
    _
  $region21: #{yolov5_forward.1} parent=0 // pred_fallthru
    _
  // Predicated region
  $region22: #{yolov5_forward.1} parent=0 // pred_check
    _
  $region23: #{yolov5_forward.1} parent=0 // pred_check_branch
    %39 = sbr.rel (0) target = $region25
  $region24: #{yolov5_forward.1} parent=0 // pred_region
    _
  $region25: #{yolov5_forward.1} parent=0 // pred_fallthru
    _
  // Predicated region
  $region26: #{yolov5_forward.1} parent=0 // pred_check
    _
  $region27: #{yolov5_forward.1} parent=0 // pred_check_branch
    %41 = sbr.rel (0) target = $region29
  $region28: #{yolov5_forward.1} parent=0 // pred_region
    _
  $region29: #{yolov5_forward.1} parent=0 // pred_fallthru
    _
  // Predicated region
  $region30: #{yolov5_forward.1} parent=0 // pred_check
    _
  $region31: #{yolov5_forward.1} parent=0 // pred_check_branch
    %43 = sbr.rel (0) target = $region33
  $region32: #{yolov5_forward.1} parent=0 // pred_region
    _
  $region33: #{yolov5_forward.1} parent=0 // pred_fallthru
    _
  // Predicated region
  $region34: #{yolov5_forward.1} parent=0 // pred_check
    _
  $region35: #{yolov5_forward.1} parent=0 // pred_check_branch
    %45 = sbr.rel (0) target = $region37
  $region36: #{yolov5_forward.1} parent=0 // pred_region
    _
  $region37: #{yolov5_forward.1} parent=0 // pred_fallthru
    _
  // Predicated region
  $region38: #{yolov5_forward.1} parent=0 // pred_check
    _
  $region39: #{yolov5_forward.1} parent=0 // pred_check_branch
    %47 = sbr.rel (0) target = $region41
  $region40: #{yolov5_forward.1} parent=0 // pred_region
    _
  $region41: #{yolov5_forward.1} parent=0 // pred_fallthru
    _
  // Predicated region
  $region42: #{yolov5_forward.1} parent=0 // pred_check
    _
  $region43: #{yolov5_forward.1} parent=0 // pred_check_branch
    %49 = sbr.rel (0) target = $region45
  $region44: #{yolov5_forward.1} parent=0 // pred_region
    _
  $region45: #{yolov5_forward.1} parent=0 // pred_fallthru
    _
  // Predicated region
  $region46: #{yolov5_forward.1} parent=0 // pred_check
    _
  $region47: #{yolov5_forward.1} parent=0 // pred_check_branch
    %51 = sbr.rel (0) target = $region49
  $region48: #{yolov5_forward.1} parent=0 // pred_region
    _
  $region49: #{yolov5_forward.1} parent=0 // pred_fallthru
    _
  // Predicated region
  $region50: #{yolov5_forward.1} parent=0 // pred_check
    _
  $region51: #{yolov5_forward.1} parent=0 // pred_check_branch
    %53 = sbr.rel (0) target = $region53
  $region52: #{yolov5_forward.1} parent=0 // pred_region
    _
  $region53: #{yolov5_forward.1} parent=0 // pred_fallthru
    _
  // Predicated region
  $region54: #{yolov5_forward.1} parent=0 // pred_check
    _
  $region55: #{yolov5_forward.1} parent=0 // pred_check_branch
    %55 = sbr.rel (0) target = $region57
  $region56: #{yolov5_forward.1} parent=0 // pred_region
    _
  $region57: #{yolov5_forward.1} parent=0 // pred_fallthru
    _
  // Predicated region
  $region58: #{yolov5_forward.1} parent=0 // pred_check
    _
  $region59: #{yolov5_forward.1} parent=0 // pred_check_branch
    %57 = sbr.rel (0) target = $region61
  $region60: #{yolov5_forward.1} parent=0 // pred_region
    _
  $region61: #{yolov5_forward.1} parent=0 // pred_fallthru
    _
  // Predicated region
  $region62: #{yolov5_forward.1} parent=0 // pred_check
    _
  $region63: #{yolov5_forward.1} parent=0 // pred_check_branch
    %59 = sbr.rel (0) target = $region65
  $region64: #{yolov5_forward.1} parent=0 // pred_region
    _
  $region65: #{yolov5_forward.1} parent=0 // pred_fallthru
    _
  // Predicated region
  $region66: #{yolov5_forward.1} parent=0 // pred_check
    _
  $region67: #{yolov5_forward.1} parent=0 // pred_check_branch
    %61 = sbr.rel (0) target = $region69
  $region68: #{yolov5_forward.1} parent=0 // pred_region
    _
  $region69: #{yolov5_forward.1} parent=0 // pred_fallthru
    _
  // Predicated region
  $region70: #{yolov5_forward.1} parent=0 // pred_check
    _
  $region71: #{yolov5_forward.1} parent=0 // pred_check_branch
    %63 = sbr.rel (0) target = $region73
  $region72: #{yolov5_forward.1} parent=0 // pred_region
    _
  $region73: #{yolov5_forward.1} parent=0 // pred_fallthru
    _
  // Predicated region
  $region74: #{yolov5_forward.1} parent=0 // pred_check
    _
  $region75: #{yolov5_forward.1} parent=0 // pred_check_branch
    %65 = sbr.rel (0) target = $region77
  $region76: #{yolov5_forward.1} parent=0 // pred_region
    _
  $region77: #{yolov5_forward.1} parent=0 // pred_fallthru
    _
  // Predicated region
  $region78: #{yolov5_forward.1} parent=0 // pred_check
    _
  $region79: #{yolov5_forward.1} parent=0 // pred_check_branch
    %67 = sbr.rel (0) target = $region81
  $region80: #{yolov5_forward.1} parent=0 // pred_region
    _
  $region81: #{yolov5_forward.1} parent=0 // pred_fallthru
    _
  // Predicated region
  $region82: #{yolov5_forward.1} parent=0 // pred_check
    _
  $region83: #{yolov5_forward.1} parent=0 // pred_check_branch
    %69 = sbr.rel (0) target = $region85
  $region84: #{yolov5_forward.1} parent=0 // pred_region
    _
  $region85: #{yolov5_forward.1} parent=0 // pred_fallthru
    _
  // Predicated region
  $region86: #{yolov5_forward.1} parent=0 // pred_check
    _
  $region87: #{yolov5_forward.1} parent=0 // pred_check_branch
    %71 = sbr.rel (0) target = $region89
  $region88: #{yolov5_forward.1} parent=0 // pred_region
    _
  $region89: #{yolov5_forward.1} parent=0 // pred_fallthru
    _
  // Predicated region
  $region90: #{yolov5_forward.1} parent=0 // pred_check
    _
  $region91: #{yolov5_forward.1} parent=0 // pred_check_branch
    %73 = sbr.rel (0) target = $region93
  $region92: #{yolov5_forward.1} parent=0 // pred_region
    _
  $region93: #{yolov5_forward.1} parent=0 // pred_fallthru
    _
  %p75 = scmp.eq.s32.totalorder 0, 0
  // Predicated region
  $region94: #{yolov5_forward.1} parent=0 // pred_check
    %p76 = pneg %p75
  $region95: #{yolov5_forward.1} parent=0 // pred_check_branch
    %78 = sbr.rel (%p76) target = $region97
  $region96: #{yolov5_forward.1} parent=0 // pred_region
    %vm79 = vcmask 588800
    %80 = vst.msk [vmem:[#allocation3] sm:$0xff] %vm79, 0.0
    %81 = vst.msk [vmem:[#allocation3 + $0x8] sm:$0xff] %vm79, 0.0
    %82 = vst.msk [vmem:[#allocation3 + $0x10] sm:$0xff] %vm79, 0.0
    %83 = vst.msk [vmem:[#allocation3 + $0x18] sm:$0xff] %vm79, 0.0
    %84 = vst.msk [vmem:[#allocation3 + $0x20] sm:$0xff] %vm79, 0.0
    %85 = vst.msk [vmem:[#allocation3 + $0x28] sm:$0xff] %vm79, 0.0
    %86 = vst.msk [vmem:[#allocation3 + $0x30] sm:$0xff] %vm79, 0.0
    %87 = vst.msk [vmem:[#allocation3 + $0x38] sm:$0xff] %vm79, 0.0
    %88 = vst.msk [vmem:[#allocation3 + $0x40] sm:$0xff] %vm79, 0.0
    %89 = vst.msk [vmem:[#allocation3 + $0x48] sm:$0xff] %vm79, 0.0
    %90 = vst.msk [vmem:[#allocation3 + $0x50] sm:$0xff] %vm79, 0.0
    %91 = vst.msk [vmem:[#allocation3 + $0x58] sm:$0xff] %vm79, 0.0
    %92 = vst.msk [vmem:[#allocation3 + $0x60] sm:$0xff] %vm79, 0.0
    %93 = vst.msk [vmem:[#allocation3 + $0x68] sm:$0xff] %vm79, 0.0
    %94 = vst.msk [vmem:[#allocation3 + $0x70] sm:$0xff] %vm79, 0.0
    %95 = vst.msk [vmem:[#allocation3 + $0x78] sm:$0xff] %vm79, 0.0
    %96 = vst.msk [vmem:[#allocation5] sm:$0xff] %vm79, 0.0
    %97 = vst.msk [vmem:[#allocation5 + $0x8] sm:$0xff] %vm79, 0.0
    %98 = vst.msk [vmem:[#allocation5 + $0x10] sm:$0xff] %vm79, 0.0
    %99 = vst.msk [vmem:[#allocation5 + $0x18] sm:$0xff] %vm79, 0.0
    %100 = vst.msk [vmem:[#allocation5 + $0x20] sm:$0xff] %vm79, 0.0
    %101 = vst.msk [vmem:[#allocation5 + $0x28] sm:$0xff] %vm79, 0.0
    %102 = vst.msk [vmem:[#allocation5 + $0x30] sm:$0xff] %vm79, 0.0
    %103 = vst.msk [vmem:[#allocation5 + $0x38] sm:$0xff] %vm79, 0.0
    %104 = vst.msk [vmem:[#allocation5 + $0x40] sm:$0xff] %vm79, 0.0
    %105 = vst.msk [vmem:[#allocation5 + $0x48] sm:$0xff] %vm79, 0.0
    %106 = vst.msk [vmem:[#allocation5 + $0x50] sm:$0xff] %vm79, 0.0
    %107 = vst.msk [vmem:[#allocation5 + $0x58] sm:$0xff] %vm79, 0.0
    %108 = vst.msk [vmem:[#allocation5 + $0x60] sm:$0xff] %vm79, 0.0
    %109 = vst.msk [vmem:[#allocation5 + $0x68] sm:$0xff] %vm79, 0.0
    %110 = vst.msk [vmem:[#allocation5 + $0x70] sm:$0xff] %vm79, 0.0
    %111 = vst.msk [vmem:[#allocation5 + $0x78] sm:$0xff] %vm79, 0.0
    %vm112 = vcmask 64512
    %113 = vst.msk [vmem:[#allocation6] sm:$0xff] %vm112, -inf
    %vm114 = vcmask 60416
    %115 = vst.msk [vmem:[#allocation6 + $0x8] sm:$0xf] %vm114, -inf
    %116 = vst.msk [vmem:[#allocation6 + $0x10] sm:$0xff] %vm112, -inf
    %117 = vst.msk [vmem:[#allocation6 + $0x18] sm:$0xf] %vm114, -inf
    %118 = vst.msk [vmem:[#allocation6 + $0x20] sm:$0xff] %vm112, -inf
    %119 = vst.msk [vmem:[#allocation6 + $0x28] sm:$0xf] %vm114, -inf
    %120 = vst.msk [vmem:[#allocation6 + $0x30] sm:$0xff] %vm112, -inf
    %121 = vst.msk [vmem:[#allocation6 + $0x38] sm:$0xf] %vm114, -inf
    %122 = vst.msk [vmem:[#allocation6 + $0x40] sm:$0xff] %vm112, -inf
    %123 = vst.msk [vmem:[#allocation6 + $0x48] sm:$0xf] %vm114, -inf
    %124 = vst.msk [vmem:[#allocation6 + $0x50] sm:$0xff] %vm112, -inf
    %125 = vst.msk [vmem:[#allocation6 + $0x58] sm:$0xf] %vm114, -inf
    %126 = vst.msk [vmem:[#allocation6 + $0x60] sm:$0xff] %vm112, -inf
    %127 = vst.msk [vmem:[#allocation6 + $0x68] sm:$0xf] %vm114, -inf
    %128 = vst.msk [vmem:[#allocation6 + $0x70] sm:$0xff] %vm112, -inf
    %129 = vst.msk [vmem:[#allocation6 + $0x78] sm:$0xf] %vm114, -inf
    %130 = vst.msk [vmem:[#allocation6 + $0x80] sm:$0xff] %vm112, -inf
    %131 = vst.msk [vmem:[#allocation6 + $0x88] sm:$0xf] %vm114, -inf
    %132 = vst.msk [vmem:[#allocation6 + $0x90] sm:$0xff] %vm112, -inf
    %133 = vst.msk [vmem:[#allocation6 + $0x98] sm:$0xf] %vm114, -inf
    %134 = vst.msk [vmem:[#allocation6 + $0xa0] sm:$0xff] %vm112, -inf
    %135 = vst.msk [vmem:[#allocation6 + $0xa8] sm:$0xf] %vm114, -inf
    %136 = vst.msk [vmem:[#allocation6 + $0xb0] sm:$0xff] %vm112, -inf
    %137 = vst.msk [vmem:[#allocation6 + $0xb8] sm:$0xf] %vm114, -inf
    %138 = vst.msk [vmem:[#allocation6 + $0xc0] sm:$0xff] %vm112, -inf
    %139 = vst.msk [vmem:[#allocation6 + $0xc8] sm:$0xf] %vm114, -inf
    %140 = vst.msk [vmem:[#allocation6 + $0xd0] sm:$0xff] %vm112, -inf
    %141 = vst.msk [vmem:[#allocation6 + $0xd8] sm:$0xf] %vm114, -inf
    %142 = vst.msk [vmem:[#allocation6 + $0xe0] sm:$0xff] %vm112, -inf
    %143 = vst.msk [vmem:[#allocation6 + $0xe8] sm:$0xf] %vm114, -inf
    %144 = vst.msk [vmem:[#allocation6 + $0xf0] sm:$0xff] %vm112, -inf
    %145 = vst.msk [vmem:[#allocation6 + $0xf8] sm:$0xf] %vm114, -inf
    %146 = vst.msk [vmem:[#allocation6 + $0x100] sm:$0xff] %vm112, -inf
    %147 = vst.msk [vmem:[#allocation6 + $0x108] sm:$0xf] %vm114, -inf
    %148 = vst.msk [vmem:[#allocation6 + $0x110] sm:$0xff] %vm112, -inf
    %149 = vst.msk [vmem:[#allocation6 + $0x118] sm:$0xf] %vm114, -inf
    %150 = vst.msk [vmem:[#allocation6 + $0x120] sm:$0xff] %vm112, -inf
    %151 = vst.msk [vmem:[#allocation6 + $0x128] sm:$0xf] %vm114, -inf
    %152 = vst.msk [vmem:[#allocation6 + $0x130] sm:$0xff] %vm112, -inf
    %153 = vst.msk [vmem:[#allocation6 + $0x138] sm:$0xf] %vm114, -inf
    %154 = vst.msk [vmem:[#allocation6 + $0x140] sm:$0xff] %vm112, -inf
    %155 = vst.msk [vmem:[#allocation6 + $0x148] sm:$0xf] %vm114, -inf
    %156 = vst.msk [vmem:[#allocation6 + $0x150] sm:$0xff] %vm112, -inf
    %157 = vst.msk [vmem:[#allocation6 + $0x158] sm:$0xf] %vm114, -inf
    %158 = vst.msk [vmem:[#allocation6 + $0x160] sm:$0xff] %vm112, -inf
    %159 = vst.msk [vmem:[#allocation6 + $0x168] sm:$0xf] %vm114, -inf
    %160 = vst.msk [vmem:[#allocation6 + $0x170] sm:$0xff] %vm112, -inf
    %161 = vst.msk [vmem:[#allocation6 + $0x178] sm:$0xf] %vm114, -inf
  $region97: #{yolov5_forward.1} parent=0 // pred_fallthru
    _
  %v162 = vld [vmem:[%s0] sm:$0xff]
  %v163 = vld [vmem:[%s0 + $0x8] sm:$0xff]
  %v164 = vld [vmem:[%s0 + $0x10] sm:$0xff]
  %v165 = vld [vmem:[%s0 + $0x18] sm:$0xff]
  %v166 = vld [vmem:[%s0 + $0x20] sm:$0xff]
  %v167 = vld [vmem:[%s0 + $0x28] sm:$0xff]
  %v168 = vld [vmem:[%s0 + $0x30] sm:$0xff]
  %v169 = vld [vmem:[%s0 + $0x38] sm:$0xff]
  %v170 = vld [vmem:[%s0 + $0x40] sm:$0xff]
  %v171 = vld [vmem:[%s0 + $0x48] sm:$0xff]
  %v172 = vld [vmem:[%s0 + $0x50] sm:$0xff]
  %v173 = vld [vmem:[%s0 + $0x58] sm:$0xff]
  %v174 = vld [vmem:[%s0 + $0x60] sm:$0xff]
  %v175 = vld [vmem:[%s0 + $0x68] sm:$0xff]
  %v176 = vld [vmem:[%s0 + $0x70] sm:$0xff]
  %v177 = vld [vmem:[%s0 + $0x78] sm:$0xff]
  %v178 = vld [vmem:[%s0 + $0x80] sm:$0xff]
  %v179 = vld [vmem:[%s0 + $0x88] sm:$0xff]
  %v180 = vld [vmem:[%s0 + $0x90] sm:$0xff]
  %v181 = vld [vmem:[%s0 + $0x98] sm:$0xff]
  %v182 = vld [vmem:[%s0 + $0xa0] sm:$0xff]
  %v183 = vld [vmem:[%s0 + $0xa8] sm:$0xff]
  %v184 = vld [vmem:[%s0 + $0xb0] sm:$0xff]
  %v185 = vld [vmem:[%s0 + $0xb8] sm:$0xff]
  %v186 = vld [vmem:[%s0 + $0xc0] sm:$0xff]
  %v187 = vld [vmem:[%s0 + $0xc8] sm:$0xff]
  %v188 = vld [vmem:[%s0 + $0xd0] sm:$0xff]
  %v189 = vld [vmem:[%s0 + $0xd8] sm:$0xff]
  %v190 = vld [vmem:[%s0 + $0xe0] sm:$0xff]
  %v191 = vld [vmem:[%s0 + $0xe8] sm:$0xff]
  %v192 = vld [vmem:[%s0 + $0xf0] sm:$0xff]
  %v193 = vld [vmem:[%s0 + $0xf8] sm:$0xff]
  %v194 = vld [vmem:[%s0 + $0x100] sm:$0xff]
  %v195 = vld [vmem:[%s0 + $0x108] sm:$0xff]
  %v196 = vld [vmem:[%s0 + $0x110] sm:$0xff]
  %v197 = vld [vmem:[%s0 + $0x118] sm:$0xff]
  %v198 = vld [vmem:[%s0 + $0x120] sm:$0xff]
  %v199 = vld [vmem:[%s0 + $0x128] sm:$0xff]
  %v200 = vld [vmem:[%s0 + $0x130] sm:$0xff]
  %v201 = vld [vmem:[%s0 + $0x138] sm:$0xff]
  %v202 = vld [vmem:[%s0 + $0x140] sm:$0xff]
  %v203 = vld [vmem:[%s0 + $0x148] sm:$0xff]
  %v204 = vld [vmem:[%s0 + $0x150] sm:$0xff]
  %v205 = vld [vmem:[%s0 + $0x158] sm:$0xff]
  %v206 = vld [vmem:[%s0 + $0x160] sm:$0xff]
  %v207 = vld [vmem:[%s0 + $0x168] sm:$0xff]
  %v208 = vld [vmem:[%s0 + $0x170] sm:$0xff]
  %v209 = vld [vmem:[%s0 + $0x178] sm:$0xff]
  %v210 = vld [vmem:[%s0 + $0x180] sm:$0xff]
  %v211 = vld [vmem:[%s0 + $0x188] sm:$0xff]
  %v212 = vld [vmem:[%s0 + $0x190] sm:$0xff]
  %v213 = vld [vmem:[%s0 + $0x198] sm:$0xff]
  %v214 = vld [vmem:[%s0 + $0x1a0] sm:$0xff]
  %v215 = vld [vmem:[%s0 + $0x1a8] sm:$0xff]
  %v216 = vld [vmem:[%s0 + $0x1b0] sm:$0xff]
  %v217 = vld [vmem:[%s0 + $0x1b8] sm:$0xff]
  %v218 = vld [vmem:[%s0 + $0x1c0] sm:$0xff]
  %v219 = vld [vmem:[%s0 + $0x1c8] sm:$0xff]
  %v220 = vld [vmem:[%s0 + $0x1d0] sm:$0xff]
  %v221 = vld [vmem:[%s0 + $0x1d8] sm:$0xff]
  %v222 = vld [vmem:[%s0 + $0x1e0] sm:$0xff]
  %v223 = vld [vmem:[%s0 + $0x1e8] sm:$0xff]
  %v224 = vld [vmem:[%s0 + $0x1f0] sm:$0xff]
  %v225 = vld [vmem:[%s0 + $0x1f8] sm:$0xff]
  %v226 = vld [vmem:[%s1] sm:$0xf]
  %v227 = vld [vmem:[%s1 + $0x4] sm:$0xf]
  %v228 = vld [vmem:[%s1 + $0x8] sm:$0xf]
  %v229 = vld [vmem:[%s1 + $0xc] sm:$0x3]
  %v230 = vpack.c.bf16 %v163, %v162
  %v231 = vpack.c.bf16 %v165, %v164
  %v232 = vpack.c.bf16 %v167, %v166
  %v233 = vpack.c.bf16 %v169, %v168
  %v234 = vpack.c.bf16 %v171, %v170
  %v235 = vpack.c.bf16 %v173, %v172
  %v236 = vpack.c.bf16 %v175, %v174
  %v237 = vpack.c.bf16 %v177, %v176
  %v238 = vpack.c.bf16 %v179, %v178
  %v239 = vpack.c.bf16 %v181, %v180
  %v240 = vpack.c.bf16 %v183, %v182
  %v241 = vpack.c.bf16 %v185, %v184
  %v242 = vpack.c.bf16 %v187, %v186
  %v243 = vpack.c.bf16 %v189, %v188
  %v244 = vpack.c.bf16 %v191, %v190
  %v245 = vpack.c.bf16 %v193, %v192
  %v246 = vpack.c.bf16 %v195, %v194
  %v247 = vpack.c.bf16 %v197, %v196
  %v248 = vpack.c.bf16 %v199, %v198
  %v249 = vpack.c.bf16 %v201, %v200
  %v250 = vpack.c.bf16 %v203, %v202
  %v251 = vpack.c.bf16 %v205, %v204
  %v252 = vpack.c.bf16 %v207, %v206
  %v253 = vpack.c.bf16 %v209, %v208
  %v254 = vpack.c.bf16 %v211, %v210
  %v255 = vpack.c.bf16 %v213, %v212
  %v256 = vpack.c.bf16 %v215, %v214
  %v257 = vpack.c.bf16 %v217, %v216
  %v258 = vpack.c.bf16 %v219, %v218
  %v259 = vpack.c.bf16 %v221, %v220
  %v260 = vpack.c.bf16 %v223, %v222
  %v261 = vpack.c.bf16 %v225, %v224
  %v262 = vld [vmem:[%s2] sm:$0x1]
  %v264 = vperm.slane %v262, 0
  %v270 = vunpack.c.l.b16 %v226
  %v271 = vunpack.c.l.b16 %v227
  %v272 = vunpack.c.l.b16 %v228
  %v273 = vunpack.c.l.b16 %v229
  %v274 = vpack.c.b16 %v271, %v270
  %v275 = vpack.c.b16 %v273, %v272
  %vm277 = vcmask 220160
  %v279 = vsel %vm277, %v230, 0
  %v282 = vsel %vm277, %v231, 0
  %v285 = vsel %vm277, %v232, 0
  %v288 = vsel %vm277, %v233, 0
  %v291 = vsel %vm277, %v234, 0
  %v294 = vsel %vm277, %v235, 0
  %v297 = vsel %vm277, %v236, 0
  %v300 = vsel %vm277, %v237, 0
  %v303 = vsel %vm277, %v238, 0
  %v306 = vsel %vm277, %v239, 0
  %v309 = vsel %vm277, %v240, 0
  %v312 = vsel %vm277, %v241, 0
  %v315 = vsel %vm277, %v242, 0
  %v318 = vsel %vm277, %v243, 0
  %v321 = vsel %vm277, %v244, 0
  %v324 = vsel %vm277, %v245, 0
  %v327 = vsel %vm277, %v246, 0
  %v330 = vsel %vm277, %v247, 0
  %v333 = vsel %vm277, %v248, 0
  %v336 = vsel %vm277, %v249, 0
  %v339 = vsel %vm277, %v250, 0
  %v342 = vsel %vm277, %v251, 0
  %v345 = vsel %vm277, %v252, 0
  %v348 = vsel %vm277, %v253, 0
  %v351 = vsel %vm277, %v254, 0
  %v354 = vsel %vm277, %v255, 0
  %v357 = vsel %vm277, %v256, 0
  %v360 = vsel %vm277, %v257, 0
  %v363 = vsel %vm277, %v258, 0
  %v366 = vsel %vm277, %v259, 0
  %v369 = vsel %vm277, %v260, 0
  %v372 = vsel %vm277, %v261, 0
  %vm374 = vcmask 1044480
  %vm375 = vcmask 1045504
  %v376 = vsel %vm374, 4294967295, 65535
  %v377 = vsel %vm375, %v376, 0
  %v379 = vand.u32 %v275, %v377
  %381 = vmatpush.bf16.msra.mxu0 0
  %382 = vmatpush.bf16.msra.mxu0 0
  %383 = vmatpush.bf16.msra.mxu0 0
  %384 = vmatpush.bf16.msra.mxu0 0
  %385 = vmatpush.bf16.msra.mxu0 0
  %386 = vmatpush.bf16.msra.mxu0 0
  %387 = vmatpush.bf16.msra.mxu0 %v379
  %388 = vmatpush.bf16.msra.mxu0 %v274
  %389 = vmatmul.bf16.gmra.mxu0 %v279
  %v390 = vpop.f32.mrf.mxu0
  %v391 = vadd.f32 %v264, %v390
  %v392 = vpop.f32.mrf.mxu0
  %v393 = vadd.f32 %v264, %v392
  %394 = vmatmul.bf16.gmra.mxu0 %v282
  %v395 = vpop.f32.mrf.mxu0
  %v396 = vadd.f32 %v264, %v395
  %v397 = vpop.f32.mrf.mxu0
  %v398 = vadd.f32 %v264, %v397
  %399 = vmatmul.bf16.gmra.mxu0 %v285
  %v400 = vpop.f32.mrf.mxu0
  %v401 = vadd.f32 %v264, %v400
  %v402 = vpop.f32.mrf.mxu0
  %v403 = vadd.f32 %v264, %v402
  %404 = vmatmul.bf16.gmra.mxu0 %v288
  %v405 = vpop.f32.mrf.mxu0
  %v406 = vadd.f32 %v264, %v405
  %v407 = vpop.f32.mrf.mxu0
  %v408 = vadd.f32 %v264, %v407
  %409 = vmatmul.bf16.gmra.mxu0 %v291
  %v410 = vpop.f32.mrf.mxu0
  %v411 = vadd.f32 %v264, %v410
  %v412 = vpop.f32.mrf.mxu0
  %v413 = vadd.f32 %v264, %v412
  %414 = vmatmul.bf16.gmra.mxu0 %v294
  %v415 = vpop.f32.mrf.mxu0
  %v416 = vadd.f32 %v264, %v415
  %v417 = vpop.f32.mrf.mxu0
  %v418 = vadd.f32 %v264, %v417
  %419 = vmatmul.bf16.gmra.mxu0 %v297
  %v420 = vpop.f32.mrf.mxu0
  %v421 = vadd.f32 %v264, %v420
  %v422 = vpop.f32.mrf.mxu0
  %v423 = vadd.f32 %v264, %v422
  %424 = vmatmul.bf16.gmra.mxu0 %v300
  %v425 = vpop.f32.mrf.mxu0
  %v426 = vadd.f32 %v264, %v425
  %v427 = vpop.f32.mrf.mxu0
  %v428 = vadd.f32 %v264, %v427
  %429 = vmatmul.bf16.gmra.mxu0 %v303
  %v430 = vpop.f32.mrf.mxu0
  %v431 = vadd.f32 %v264, %v430
  %v432 = vpop.f32.mrf.mxu0
  %v433 = vadd.f32 %v264, %v432
  %434 = vmatmul.bf16.gmra.mxu0 %v306
  %v435 = vpop.f32.mrf.mxu0
  %v436 = vadd.f32 %v264, %v435
  %v437 = vpop.f32.mrf.mxu0
  %v438 = vadd.f32 %v264, %v437
  %439 = vmatmul.bf16.gmra.mxu0 %v309
  %v440 = vpop.f32.mrf.mxu0
  %v441 = vadd.f32 %v264, %v440
  %v442 = vpop.f32.mrf.mxu0
  %v443 = vadd.f32 %v264, %v442
  %444 = vmatmul.bf16.gmra.mxu0 %v312
  %v445 = vpop.f32.mrf.mxu0
  %v446 = vadd.f32 %v264, %v445
  %v447 = vpop.f32.mrf.mxu0
  %v448 = vadd.f32 %v264, %v447
  %449 = vmatmul.bf16.gmra.mxu0 %v315
  %v450 = vpop.f32.mrf.mxu0
  %v451 = vadd.f32 %v264, %v450
  %v452 = vpop.f32.mrf.mxu0
  %v453 = vadd.f32 %v264, %v452
  %454 = vmatmul.bf16.gmra.mxu0 %v318
  %v455 = vpop.f32.mrf.mxu0
  %v456 = vadd.f32 %v264, %v455
  %v457 = vpop.f32.mrf.mxu0
  %v458 = vadd.f32 %v264, %v457
  %459 = vmatmul.bf16.gmra.mxu0 %v321
  %v460 = vpop.f32.mrf.mxu0
  %v461 = vadd.f32 %v264, %v460
  %v462 = vpop.f32.mrf.mxu0
  %v463 = vadd.f32 %v264, %v462
  %464 = vmatmul.bf16.gmra.mxu0 %v324
  %v465 = vpop.f32.mrf.mxu0
  %v466 = vadd.f32 %v264, %v465
  %v467 = vpop.f32.mrf.mxu0
  %v468 = vadd.f32 %v264, %v467
  %469 = vmatmul.bf16.gmra.mxu0 %v327
  %v470 = vpop.f32.mrf.mxu0
  %v471 = vadd.f32 %v264, %v470
  %v472 = vpop.f32.mrf.mxu0
  %v473 = vadd.f32 %v264, %v472
  %474 = vmatmul.bf16.gmra.mxu0 %v330
  %v475 = vpop.f32.mrf.mxu0
  %v476 = vadd.f32 %v264, %v475
  %v477 = vpop.f32.mrf.mxu0
  %v478 = vadd.f32 %v264, %v477
  %479 = vmatmul.bf16.gmra.mxu0 %v333
  %v480 = vpop.f32.mrf.mxu0
  %v481 = vadd.f32 %v264, %v480
  %v482 = vpop.f32.mrf.mxu0
  %v483 = vadd.f32 %v264, %v482
  %484 = vmatmul.bf16.gmra.mxu0 %v336
  %v485 = vpop.f32.mrf.mxu0
  %v486 = vadd.f32 %v264, %v485
  %v487 = vpop.f32.mrf.mxu0
  %v488 = vadd.f32 %v264, %v487
  %489 = vmatmul.bf16.gmra.mxu0 %v339
  %v490 = vpop.f32.mrf.mxu0
  %v491 = vadd.f32 %v264, %v490
  %v492 = vpop.f32.mrf.mxu0
  %v493 = vadd.f32 %v264, %v492
  %494 = vmatmul.bf16.gmra.mxu0 %v342
  %v495 = vpop.f32.mrf.mxu0
  %v496 = vadd.f32 %v264, %v495
  %v497 = vpop.f32.mrf.mxu0
  %v498 = vadd.f32 %v264, %v497
  %499 = vmatmul.bf16.gmra.mxu0 %v345
  %v500 = vpop.f32.mrf.mxu0
  %v501 = vadd.f32 %v264, %v500
  %v502 = vpop.f32.mrf.mxu0
  %v503 = vadd.f32 %v264, %v502
  %504 = vmatmul.bf16.gmra.mxu0 %v348
  %v505 = vpop.f32.mrf.mxu0
  %v506 = vadd.f32 %v264, %v505
  %v507 = vpop.f32.mrf.mxu0
  %v508 = vadd.f32 %v264, %v507
  %509 = vmatmul.bf16.gmra.mxu0 %v351
  %v510 = vpop.f32.mrf.mxu0
  %v511 = vadd.f32 %v264, %v510
  %v512 = vpop.f32.mrf.mxu0
  %v513 = vadd.f32 %v264, %v512
  %514 = vmatmul.bf16.gmra.mxu0 %v354
  %v515 = vpop.f32.mrf.mxu0
  %v516 = vadd.f32 %v264, %v515
  %v517 = vpop.f32.mrf.mxu0
  %v518 = vadd.f32 %v264, %v517
  %519 = vmatmul.bf16.gmra.mxu0 %v357
  %v520 = vpop.f32.mrf.mxu0
  %v521 = vadd.f32 %v264, %v520
  %v522 = vpop.f32.mrf.mxu0
  %v523 = vadd.f32 %v264, %v522
  %524 = vmatmul.bf16.gmra.mxu0 %v360
  %v525 = vpop.f32.mrf.mxu0
  %v526 = vadd.f32 %v264, %v525
  %v527 = vpop.f32.mrf.mxu0
  %v528 = vadd.f32 %v264, %v527
  %529 = vmatmul.bf16.gmra.mxu0 %v363
  %v530 = vpop.f32.mrf.mxu0
  %v531 = vadd.f32 %v264, %v530
  %v532 = vpop.f32.mrf.mxu0
  %v533 = vadd.f32 %v264, %v532
  %534 = vmatmul.bf16.gmra.mxu0 %v366
  %v535 = vpop.f32.mrf.mxu0
  %v536 = vadd.f32 %v264, %v535
  %v537 = vpop.f32.mrf.mxu0
  %v538 = vadd.f32 %v264, %v537
  %539 = vmatmul.bf16.gmra.mxu0 %v369
  %v540 = vpop.f32.mrf.mxu0
  %v541 = vadd.f32 %v264, %v540
  %v542 = vpop.f32.mrf.mxu0
  %v543 = vadd.f32 %v264, %v542
  %544 = vmatmul.bf16.gmra.mxu0 %v372
  %v545 = vpop.f32.mrf.mxu0
  %v546 = vadd.f32 %v264, %v545
  %v547 = vpop.f32.mrf.mxu0
  %v548 = vadd.f32 %v264, %v547
  %549 = vdwg.mxu0
  %v550 = vsub.f32 0.0, %v391
  %v551 = vsub.f32 0.0, %v393
  %v552 = vsub.f32 0.0, %v396
  %v553 = vsub.f32 0.0, %v398
  %v554 = vsub.f32 0.0, %v401
  %v555 = vsub.f32 0.0, %v403
  %v556 = vsub.f32 0.0, %v406
  %v557 = vsub.f32 0.0, %v408
  %v558 = vsub.f32 0.0, %v411
  %v559 = vsub.f32 0.0, %v413
  %v560 = vsub.f32 0.0, %v416
  %v561 = vsub.f32 0.0, %v418
  %v562 = vsub.f32 0.0, %v421
  %v563 = vsub.f32 0.0, %v423
  %v564 = vsub.f32 0.0, %v426
  %v565 = vsub.f32 0.0, %v428
  %v566 = vsub.f32 0.0, %v431
  %v567 = vsub.f32 0.0, %v433
  %v568 = vsub.f32 0.0, %v436
  %v569 = vsub.f32 0.0, %v438
  %v570 = vsub.f32 0.0, %v441
  %v571 = vsub.f32 0.0, %v443
  %v572 = vsub.f32 0.0, %v446
  %v573 = vsub.f32 0.0, %v448
  %v574 = vsub.f32 0.0, %v451
  %v575 = vsub.f32 0.0, %v453
  %v576 = vsub.f32 0.0, %v456
  %v577 = vsub.f32 0.0, %v458
  %v578 = vsub.f32 0.0, %v461
  %v579 = vsub.f32 0.0, %v463
  %v580 = vsub.f32 0.0, %v466
  %v581 = vsub.f32 0.0, %v468
  %v582 = vsub.f32 0.0, %v471
  %v583 = vsub.f32 0.0, %v473
  %v584 = vsub.f32 0.0, %v476
  %v585 = vsub.f32 0.0, %v478
  %v586 = vsub.f32 0.0, %v481
  %v587 = vsub.f32 0.0, %v483
  %v588 = vsub.f32 0.0, %v486
  %v589 = vsub.f32 0.0, %v488
  %v590 = vsub.f32 0.0, %v491
  %v591 = vsub.f32 0.0, %v493
  %v592 = vsub.f32 0.0, %v496
  %v593 = vsub.f32 0.0, %v498
  %v594 = vsub.f32 0.0, %v501
  %v595 = vsub.f32 0.0, %v503
  %v596 = vsub.f32 0.0, %v506
  %v597 = vsub.f32 0.0, %v508
  %v598 = vsub.f32 0.0, %v511
  %v599 = vsub.f32 0.0, %v513
  %v600 = vsub.f32 0.0, %v516
  %v601 = vsub.f32 0.0, %v518
  %v602 = vsub.f32 0.0, %v521
  %v603 = vsub.f32 0.0, %v523
  %v604 = vsub.f32 0.0, %v526
  %v605 = vsub.f32 0.0, %v528
  %v606 = vsub.f32 0.0, %v531
  %v607 = vsub.f32 0.0, %v533
  %v608 = vsub.f32 0.0, %v536
  %v609 = vsub.f32 0.0, %v538
  %v610 = vsub.f32 0.0, %v541
  %v611 = vsub.f32 0.0, %v543
  %v612 = vsub.f32 0.0, %v546
  %v613 = vsub.f32 0.0, %v548
  %v614 = vmul.f32 %v550, 1.442695
  %v615 = vpow.pop %v614
  %v616 = vmul.f32 %v551, 1.442695
  %v617 = vpow.pop %v616
  %v618 = vmul.f32 %v552, 1.442695
  %v619 = vpow.pop %v618
  %v620 = vmul.f32 %v553, 1.442695
  %v621 = vpow.pop %v620
  %v622 = vmul.f32 %v554, 1.442695
  %v623 = vpow.pop %v622
  %v624 = vmul.f32 %v555, 1.442695
  %v625 = vpow.pop %v624
  %v626 = vmul.f32 %v556, 1.442695
  %v627 = vpow.pop %v626
  %v628 = vmul.f32 %v557, 1.442695
  %v629 = vpow.pop %v628
  %v630 = vmul.f32 %v558, 1.442695
  %v631 = vpow.pop %v630
  %v632 = vmul.f32 %v559, 1.442695
  %v633 = vpow.pop %v632
  %v634 = vmul.f32 %v560, 1.442695
  %v635 = vpow.pop %v634
  %v636 = vmul.f32 %v561, 1.442695
  %v637 = vpow.pop %v636
  %v638 = vmul.f32 %v562, 1.442695
  %v639 = vpow.pop %v638
  %v640 = vmul.f32 %v563, 1.442695
  %v641 = vpow.pop %v640
  %v642 = vmul.f32 %v564, 1.442695
  %v643 = vpow.pop %v642
  %v644 = vmul.f32 %v565, 1.442695
  %v645 = vpow.pop %v644
  %v646 = vmul.f32 %v566, 1.442695
  %v647 = vpow.pop %v646
  %v648 = vmul.f32 %v567, 1.442695
  %v649 = vpow.pop %v648
  %v650 = vmul.f32 %v568, 1.442695
  %v651 = vpow.pop %v650
  %v652 = vmul.f32 %v569, 1.442695
  %v653 = vpow.pop %v652
  %v654 = vmul.f32 %v570, 1.442695
  %v655 = vpow.pop %v654
  %v656 = vmul.f32 %v571, 1.442695
  %v657 = vpow.pop %v656
  %v658 = vmul.f32 %v572, 1.442695
  %v659 = vpow.pop %v658
  %v660 = vmul.f32 %v573, 1.442695
  %v661 = vpow.pop %v660
  %v662 = vmul.f32 %v574, 1.442695
  %v663 = vpow.pop %v662
  %v664 = vmul.f32 %v575, 1.442695
  %v665 = vpow.pop %v664
  %v666 = vmul.f32 %v576, 1.442695
  %v667 = vpow.pop %v666
  %v668 = vmul.f32 %v577, 1.442695
  %v669 = vpow.pop %v668
  %v670 = vmul.f32 %v578, 1.442695
  %v671 = vpow.pop %v670
  %v672 = vmul.f32 %v579, 1.442695
  %v673 = vpow.pop %v672
  %v674 = vmul.f32 %v580, 1.442695
  %v675 = vpow.pop %v674
  %v676 = vmul.f32 %v581, 1.442695
  %v677 = vpow.pop %v676
  %v678 = vmul.f32 %v582, 1.442695
  %v679 = vpow.pop %v678
  %v680 = vmul.f32 %v583, 1.442695
  %v681 = vpow.pop %v680
  %v682 = vmul.f32 %v584, 1.442695
  %v683 = vpow.pop %v682
  %v684 = vmul.f32 %v585, 1.442695
  %v685 = vpow.pop %v684
  %v686 = vmul.f32 %v586, 1.442695
  %v687 = vpow.pop %v686
  %v688 = vmul.f32 %v587, 1.442695
  %v689 = vpow.pop %v688
  %v690 = vmul.f32 %v588, 1.442695
  %v691 = vpow.pop %v690
  %v692 = vmul.f32 %v589, 1.442695
  %v693 = vpow.pop %v692
  %v694 = vmul.f32 %v590, 1.442695
  %v695 = vpow.pop %v694
  %v696 = vmul.f32 %v591, 1.442695
  %v697 = vpow.pop %v696
  %v698 = vmul.f32 %v592, 1.442695
  %v699 = vpow.pop %v698
  %v700 = vmul.f32 %v593, 1.442695
  %v701 = vpow.pop %v700
  %v702 = vmul.f32 %v594, 1.442695
  %v703 = vpow.pop %v702
  %v704 = vmul.f32 %v595, 1.442695
  %v705 = vpow.pop %v704
  %v706 = vmul.f32 %v596, 1.442695
  %v707 = vpow.pop %v706
  %v708 = vmul.f32 %v597, 1.442695
  %v709 = vpow.pop %v708
  %v710 = vmul.f32 %v598, 1.442695
  %v711 = vpow.pop %v710
  %v712 = vmul.f32 %v599, 1.442695
  %v713 = vpow.pop %v712
  %v714 = vmul.f32 %v600, 1.442695
  %v715 = vpow.pop %v714
  %v716 = vmul.f32 %v601, 1.442695
  %v717 = vpow.pop %v716
  %v718 = vmul.f32 %v602, 1.442695
  %v719 = vpow.pop %v718
  %v720 = vmul.f32 %v603, 1.442695
  %v721 = vpow.pop %v720
  %v722 = vmul.f32 %v604, 1.442695
  %v723 = vpow.pop %v722
  %v724 = vmul.f32 %v605, 1.442695
  %v725 = vpow.pop %v724
  %v726 = vmul.f32 %v606, 1.442695
  %v727 = vpow.pop %v726
  %v728 = vmul.f32 %v607, 1.442695
  %v729 = vpow.pop %v728
  %v730 = vmul.f32 %v608, 1.442695
  %v731 = vpow.pop %v730
  %v732 = vmul.f32 %v609, 1.442695
  %v733 = vpow.pop %v732
  %v734 = vmul.f32 %v610, 1.442695
  %v735 = vpow.pop %v734
  %v736 = vmul.f32 %v611, 1.442695
  %v737 = vpow.pop %v736
  %v738 = vmul.f32 %v612, 1.442695
  %v739 = vpow.pop %v738
  %v740 = vmul.f32 %v613, 1.442695
  %v741 = vpow.pop %v740
  %v742 = vadd.f32 %v615, 1.0
  %v743 = vadd.f32 %v617, 1.0
  %v744 = vadd.f32 %v619, 1.0
  %v745 = vadd.f32 %v621, 1.0
  %v746 = vadd.f32 %v623, 1.0
  %v747 = vadd.f32 %v625, 1.0
  %v748 = vadd.f32 %v627, 1.0
  %v749 = vadd.f32 %v629, 1.0
  %v750 = vadd.f32 %v631, 1.0
  %v751 = vadd.f32 %v633, 1.0
  %v752 = vadd.f32 %v635, 1.0
  %v753 = vadd.f32 %v637, 1.0
  %v754 = vadd.f32 %v639, 1.0
  %v755 = vadd.f32 %v641, 1.0
  %v756 = vadd.f32 %v643, 1.0
  %v757 = vadd.f32 %v645, 1.0
  %v758 = vadd.f32 %v647, 1.0
  %v759 = vadd.f32 %v649, 1.0
  %v760 = vadd.f32 %v651, 1.0
  %v761 = vadd.f32 %v653, 1.0
  %v762 = vadd.f32 %v655, 1.0
  %v763 = vadd.f32 %v657, 1.0
  %v764 = vadd.f32 %v659, 1.0
  %v765 = vadd.f32 %v661, 1.0
  %v766 = vadd.f32 %v663, 1.0
  %v767 = vadd.f32 %v665, 1.0
  %v768 = vadd.f32 %v667, 1.0
  %v769 = vadd.f32 %v669, 1.0
  %v770 = vadd.f32 %v671, 1.0
  %v771 = vadd.f32 %v673, 1.0
  %v772 = vadd.f32 %v675, 1.0
  %v773 = vadd.f32 %v677, 1.0
  %v774 = vadd.f32 %v679, 1.0
  %v775 = vadd.f32 %v681, 1.0
  %v776 = vadd.f32 %v683, 1.0
  %v777 = vadd.f32 %v685, 1.0
  %v778 = vadd.f32 %v687, 1.0
  %v779 = vadd.f32 %v689, 1.0
  %v780 = vadd.f32 %v691, 1.0
  %v781 = vadd.f32 %v693, 1.0
  %v782 = vadd.f32 %v695, 1.0
  %v783 = vadd.f32 %v697, 1.0
  %v784 = vadd.f32 %v699, 1.0
  %v785 = vadd.f32 %v701, 1.0
  %v786 = vadd.f32 %v703, 1.0
  %v787 = vadd.f32 %v705, 1.0
  %v788 = vadd.f32 %v707, 1.0
  %v789 = vadd.f32 %v709, 1.0
  %v790 = vadd.f32 %v711, 1.0
  %v791 = vadd.f32 %v713, 1.0
  %v792 = vadd.f32 %v715, 1.0
  %v793 = vadd.f32 %v717, 1.0
  %v794 = vadd.f32 %v719, 1.0
  %v795 = vadd.f32 %v721, 1.0
  %v796 = vadd.f32 %v723, 1.0
  %v797 = vadd.f32 %v725, 1.0
  %v798 = vadd.f32 %v727, 1.0
  %v799 = vadd.f32 %v729, 1.0
  %v800 = vadd.f32 %v731, 1.0
  %v801 = vadd.f32 %v733, 1.0
  %v802 = vadd.f32 %v735, 1.0
  %v803 = vadd.f32 %v737, 1.0
  %v804 = vadd.f32 %v739, 1.0
  %v805 = vadd.f32 %v741, 1.0
  %v806 = vrcp.pop %v742
  %v807 = vrcp.pop %v743
  %v808 = vrcp.pop %v744
  %v809 = vrcp.pop %v745
  %v810 = vrcp.pop %v746
  %v811 = vrcp.pop %v747
  %v812 = vrcp.pop %v748
  %v813 = vrcp.pop %v749
  %v814 = vrcp.pop %v750
  %v815 = vrcp.pop %v751
  %v816 = vrcp.pop %v752
  %v817 = vrcp.pop %v753
  %v818 = vrcp.pop %v754
  %v819 = vrcp.pop %v755
  %v820 = vrcp.pop %v756
  %v821 = vrcp.pop %v757
  %v822 = vrcp.pop %v758
  %v823 = vrcp.pop %v759
  %v824 = vrcp.pop %v760
  %v825 = vrcp.pop %v761
  %v826 = vrcp.pop %v762
  %v827 = vrcp.pop %v763
  %v828 = vrcp.pop %v764
  %v829 = vrcp.pop %v765
  %v830 = vrcp.pop %v766
  %v831 = vrcp.pop %v767
  %v832 = vrcp.pop %v768
  %v833 = vrcp.pop %v769
  %v834 = vrcp.pop %v770
  %v835 = vrcp.pop %v771
  %v836 = vrcp.pop %v772
  %v837 = vrcp.pop %v773
  %v838 = vrcp.pop %v774
  %v839 = vrcp.pop %v775
  %v840 = vrcp.pop %v776
  %v841 = vrcp.pop %v777
  %v842 = vrcp.pop %v778
  %v843 = vrcp.pop %v779
  %v844 = vrcp.pop %v780
  %v845 = vrcp.pop %v781
  %v846 = vrcp.pop %v782
  %v847 = vrcp.pop %v783
  %v848 = vrcp.pop %v784
  %v849 = vrcp.pop %v785
  %v850 = vrcp.pop %v786
  %v851 = vrcp.pop %v787
  %v852 = vrcp.pop %v788
  %v853 = vrcp.pop %v789
  %v854 = vrcp.pop %v790
  %v855 = vrcp.pop %v791
  %v856 = vrcp.pop %v792
  %v857 = vrcp.pop %v793
  %v858 = vrcp.pop %v794
  %v859 = vrcp.pop %v795
  %v860 = vrcp.pop %v796
  %v861 = vrcp.pop %v797
  %v862 = vrcp.pop %v798
  %v863 = vrcp.pop %v799
  %v864 = vrcp.pop %v800
  %v865 = vrcp.pop %v801
  %v866 = vrcp.pop %v802
  %v867 = vrcp.pop %v803
  %v868 = vrcp.pop %v804
  %v869 = vrcp.pop %v805
  %v870 = vmul.f32 %v391, %v806
  %v871 = vmul.f32 %v393, %v807
  %v872 = vmul.f32 %v396, %v808
  %v873 = vmul.f32 %v398, %v809
  %v874 = vmul.f32 %v401, %v810
  %v875 = vmul.f32 %v403, %v811
  %v876 = vmul.f32 %v406, %v812
  %v877 = vmul.f32 %v408, %v813
  %v878 = vmul.f32 %v411, %v814
  %v879 = vmul.f32 %v413, %v815
  %v880 = vmul.f32 %v416, %v816
  %v881 = vmul.f32 %v418, %v817
  %v882 = vmul.f32 %v421, %v818
  %v883 = vmul.f32 %v423, %v819
  %v884 = vmul.f32 %v426, %v820
  %v885 = vmul.f32 %v428, %v821
  %v886 = vmul.f32 %v431, %v822
  %v887 = vmul.f32 %v433, %v823
  %v888 = vmul.f32 %v436, %v824
  %v889 = vmul.f32 %v438, %v825
  %v890 = vmul.f32 %v441, %v826
  %v891 = vmul.f32 %v443, %v827
  %v892 = vmul.f32 %v446, %v828
  %v893 = vmul.f32 %v448, %v829
  %v894 = vmul.f32 %v451, %v830
  %v895 = vmul.f32 %v453, %v831
  %v896 = vmul.f32 %v456, %v832
  %v897 = vmul.f32 %v458, %v833
  %v898 = vmul.f32 %v461, %v834
  %v899 = vmul.f32 %v463, %v835
  %v900 = vmul.f32 %v466, %v836
  %v901 = vmul.f32 %v468, %v837
  %v902 = vmul.f32 %v471, %v838
  %v903 = vmul.f32 %v473, %v839
  %v904 = vmul.f32 %v476, %v840
  %v905 = vmul.f32 %v478, %v841
  %v906 = vmul.f32 %v481, %v842
  %v907 = vmul.f32 %v483, %v843
  %v908 = vmul.f32 %v486, %v844
  %v909 = vmul.f32 %v488, %v845
  %v910 = vmul.f32 %v491, %v846
  %v911 = vmul.f32 %v493, %v847
  %v912 = vmul.f32 %v496, %v848
  %v913 = vmul.f32 %v498, %v849
  %v914 = vmul.f32 %v501, %v850
  %v915 = vmul.f32 %v503, %v851
  %v916 = vmul.f32 %v506, %v852
  %v917 = vmul.f32 %v508, %v853
  %v918 = vmul.f32 %v511, %v854
  %v919 = vmul.f32 %v513, %v855
  %v920 = vmul.f32 %v516, %v856
  %v921 = vmul.f32 %v518, %v857
  %v922 = vmul.f32 %v521, %v858
  %v923 = vmul.f32 %v523, %v859
  %v924 = vmul.f32 %v526, %v860
  %v925 = vmul.f32 %v528, %v861
  %v926 = vmul.f32 %v531, %v862
  %v927 = vmul.f32 %v533, %v863
  %v928 = vmul.f32 %v536, %v864
  %v929 = vmul.f32 %v538, %v865
  %v930 = vmul.f32 %v541, %v866
  %v931 = vmul.f32 %v543, %v867
  %v932 = vmul.f32 %v546, %v868
  %v933 = vmul.f32 %v548, %v869
  %vm934 = vcmask 64512
  %935 = vst.msk [vmem:[#allocation2] sm:$0xff] %vm934, %v870
  %936 = vst.msk [vmem:[#allocation2 + $0x8] sm:$0xff] %vm934, %v871
  %937 = vst.msk [vmem:[#allocation2 + $0x10] sm:$0xff] %vm934, %v872
  %938 = vst.msk [vmem:[#allocation2 + $0x18] sm:$0xff] %vm934, %v873
  %939 = vst.msk [vmem:[#allocation2 + $0x20] sm:$0xff] %vm934, %v874
  %940 = vst.msk [vmem:[#allocation2 + $0x28] sm:$0xff] %vm934, %v875
  %941 = vst.msk [vmem:[#allocation2 + $0x30] sm:$0xff] %vm934, %v876
  %942 = vst.msk [vmem:[#allocation2 + $0x38] sm:$0xff] %vm934, %v877
  %943 = vst.msk [vmem:[#allocation2 + $0x40] sm:$0xff] %vm934, %v878
  %944 = vst.msk [vmem:[#allocation2 + $0x48] sm:$0xff] %vm934, %v879
  %945 = vst.msk [vmem:[#allocation2 + $0x50] sm:$0xff] %vm934, %v880
  %946 = vst.msk [vmem:[#allocation2 + $0x58] sm:$0xff] %vm934, %v881
  %947 = vst.msk [vmem:[#allocation2 + $0x60] sm:$0xff] %vm934, %v882
  %948 = vst.msk [vmem:[#allocation2 + $0x68] sm:$0xff] %vm934, %v883
  %949 = vst.msk [vmem:[#allocation2 + $0x70] sm:$0xff] %vm934, %v884
  %950 = vst.msk [vmem:[#allocation2 + $0x78] sm:$0xff] %vm934, %v885
  %951 = vst.msk [vmem:[#allocation2 + $0x80] sm:$0xff] %vm934, %v886
  %952 = vst.msk [vmem:[#allocation2 + $0x88] sm:$0xff] %vm934, %v887
  %953 = vst.msk [vmem:[#allocation2 + $0x90] sm:$0xff] %vm934, %v888
  %954 = vst.msk [vmem:[#allocation2 + $0x98] sm:$0xff] %vm934, %v889
  %955 = vst.msk [vmem:[#allocation2 + $0xa0] sm:$0xff] %vm934, %v890
  %956 = vst.msk [vmem:[#allocation2 + $0xa8] sm:$0xff] %vm934, %v891
  %957 = vst.msk [vmem:[#allocation2 + $0xb0] sm:$0xff] %vm934, %v892
  %958 = vst.msk [vmem:[#allocation2 + $0xb8] sm:$0xff] %vm934, %v893
  %959 = vst.msk [vmem:[#allocation2 + $0xc0] sm:$0xff] %vm934, %v894
  %960 = vst.msk [vmem:[#allocation2 + $0xc8] sm:$0xff] %vm934, %v895
  %961 = vst.msk [vmem:[#allocation2 + $0xd0] sm:$0xff] %vm934, %v896
  %962 = vst.msk [vmem:[#allocation2 + $0xd8] sm:$0xff] %vm934, %v897
  %963 = vst.msk [vmem:[#allocation2 + $0xe0] sm:$0xff] %vm934, %v898
  %964 = vst.msk [vmem:[#allocation2 + $0xe8] sm:$0xff] %vm934, %v899
  %965 = vst.msk [vmem:[#allocation2 + $0xf0] sm:$0xff] %vm934, %v900
  %966 = vst.msk [vmem:[#allocation2 + $0xf8] sm:$0xff] %vm934, %v901
  %967 = vst.msk [vmem:[#allocation2 + $0x100] sm:$0xff] %vm934, %v902
  %968 = vst.msk [vmem:[#allocation2 + $0x108] sm:$0xff] %vm934, %v903
  %969 = vst.msk [vmem:[#allocation2 + $0x110] sm:$0xff] %vm934, %v904
  %970 = vst.msk [vmem:[#allocation2 + $0x118] sm:$0xff] %vm934, %v905
  %971 = vst.msk [vmem:[#allocation2 + $0x120] sm:$0xff] %vm934, %v906
  %972 = vst.msk [vmem:[#allocation2 + $0x128] sm:$0xff] %vm934, %v907
  %973 = vst.msk [vmem:[#allocation2 + $0x130] sm:$0xff] %vm934, %v908
  %974 = vst.msk [vmem:[#allocation2 + $0x138] sm:$0xff] %vm934, %v909
  %975 = vst.msk [vmem:[#allocation2 + $0x140] sm:$0xff] %vm934, %v910
  %976 = vst.msk [vmem:[#allocation2 + $0x148] sm:$0xff] %vm934, %v911
  %977 = vst.msk [vmem:[#allocation2 + $0x150] sm:$0xff] %vm934, %v912
  %978 = vst.msk [vmem:[#allocation2 + $0x158] sm:$0xff] %vm934, %v913
  %979 = vst.msk [vmem:[#allocation2 + $0x160] sm:$0xff] %vm934, %v914
  %980 = vst.msk [vmem:[#allocation2 + $0x168] sm:$0xff] %vm934, %v915
  %981 = vst.msk [vmem:[#allocation2 + $0x170] sm:$0xff] %vm934, %v916
  %982 = vst.msk [vmem:[#allocation2 + $0x178] sm:$0xff] %vm934, %v917
  %983 = vst.msk [vmem:[#allocation2 + $0x180] sm:$0xff] %vm934, %v918
  %984 = vst.msk [vmem:[#allocation2 + $0x188] sm:$0xff] %vm934, %v919
  %985 = vst.msk [vmem:[#allocation2 + $0x190] sm:$0xff] %vm934, %v920
  %986 = vst.msk [vmem:[#allocation2 + $0x198] sm:$0xff] %vm934, %v921
  %987 = vst.msk [vmem:[#allocation2 + $0x1a0] sm:$0xff] %vm934, %v922
  %988 = vst.msk [vmem:[#allocation2 + $0x1a8] sm:$0xff] %vm934, %v923
  %989 = vst.msk [vmem:[#allocation2 + $0x1b0] sm:$0xff] %vm934, %v924
  %990 = vst.msk [vmem:[#allocation2 + $0x1b8] sm:$0xff] %vm934, %v925
  %991 = vst.msk [vmem:[#allocation2 + $0x1c0] sm:$0xff] %vm934, %v926
  %992 = vst.msk [vmem:[#allocation2 + $0x1c8] sm:$0xff] %vm934, %v927
  %993 = vst.msk [vmem:[#allocation2 + $0x1d0] sm:$0xff] %vm934, %v928
  %994 = vst.msk [vmem:[#allocation2 + $0x1d8] sm:$0xff] %vm934, %v929
  %995 = vst.msk [vmem:[#allocation2 + $0x1e0] sm:$0xff] %vm934, %v930
  %996 = vst.msk [vmem:[#allocation2 + $0x1e8] sm:$0xff] %vm934, %v931
  %997 = vst.msk [vmem:[#allocation2 + $0x1f0] sm:$0xff] %vm934, %v932
  %998 = vst.msk [vmem:[#allocation2 + $0x1f8] sm:$0xff] %vm934, %v933
  %s999 = scalar_lea.vmem [#allocation2], 384
  %v1000 = vld [vmem:[%s999] sm:$0x7f]
  %v1001 = vld [vmem:[%s999 + $0x8] sm:$0x7f]
  %v1002 = vld [vmem:[%s999 + $0x10] sm:$0x7f]
  %v1003 = vld [vmem:[%s999 + $0x18] sm:$0x7f]
  %v1004 = vld [vmem:[%s999 + $0x20] sm:$0x7f]
  %v1005 = vld [vmem:[%s999 + $0x28] sm:$0x7f]
  %v1006 = vld [vmem:[%s999 + $0x30] sm:$0x7f]
  %v1007 = vld [vmem:[%s999 + $0x40] sm:$0x7f]
  %v1008 = vld [vmem:[%s999 + $0x48] sm:$0x7f]
  %v1009 = vld [vmem:[%s999 + $0x50] sm:$0x7f]
  %v1010 = vld [vmem:[%s999 + $0x58] sm:$0x7f]
  %v1011 = vld [vmem:[%s999 + $0x60] sm:$0x7f]
  %v1012 = vld [vmem:[%s999 + $0x68] sm:$0x7f]
  %v1013 = vld [vmem:[%s999 + $0x70] sm:$0x7f]
  %s1014 = scalar_lea.vmem [#allocation3], 8
  %vm1015 = vcmask 63488
  %1016 = vst.msk [vmem:[%s1014 + $0x1] sm:$0x7f] %vm1015, %v1000
  %1017 = vst.msk [vmem:[%s1014 + $0x9] sm:$0x7f] %vm1015, %v1001
  %1018 = vst.msk [vmem:[%s1014 + $0x11] sm:$0x7f] %vm1015, %v1002
  %1019 = vst.msk [vmem:[%s1014 + $0x19] sm:$0x7f] %vm1015, %v1003
  %1020 = vst.msk [vmem:[%s1014 + $0x21] sm:$0x7f] %vm1015, %v1004
  %1021 = vst.msk [vmem:[%s1014 + $0x29] sm:$0x7f] %vm1015, %v1005
  %1022 = vst.msk [vmem:[%s1014 + $0x31] sm:$0x7f] %vm1015, %v1006
  %1023 = vst.msk [vmem:[%s1014 + $0x41] sm:$0x7f] %vm1015, %v1007
  %1024 = vst.msk [vmem:[%s1014 + $0x49] sm:$0x7f] %vm1015, %v1008
  %1025 = vst.msk [vmem:[%s1014 + $0x51] sm:$0x7f] %vm1015, %v1009
  %1026 = vst.msk [vmem:[%s1014 + $0x59] sm:$0x7f] %vm1015, %v1010
  %1027 = vst.msk [vmem:[%s1014 + $0x61] sm:$0x7f] %vm1015, %v1011
  %1028 = vst.msk [vmem:[%s1014 + $0x69] sm:$0x7f] %vm1015, %v1012
  %1029 = vst.msk [vmem:[%s1014 + $0x71] sm:$0x7f] %vm1015, %v1013
  %s1030 = scalar_lea.vmem [#allocation2], 256
  %v1031 = vld [vmem:[%s1030] sm:$0xff]
  %v1032 = vld [vmem:[%s1030 + $0x8] sm:$0xff]
  %v1033 = vld [vmem:[%s1030 + $0x10] sm:$0xff]
  %v1034 = vld [vmem:[%s1030 + $0x18] sm:$0xff]
  %v1035 = vld [vmem:[%s1030 + $0x20] sm:$0xff]
  %v1036 = vld [vmem:[%s1030 + $0x28] sm:$0xff]
  %v1037 = vld [vmem:[%s1030 + $0x30] sm:$0xff]
  %v1038 = vld [vmem:[%s1030 + $0x40] sm:$0xff]
  %v1039 = vld [vmem:[%s1030 + $0x48] sm:$0xff]
  %v1040 = vld [vmem:[%s1030 + $0x50] sm:$0xff]
  %v1041 = vld [vmem:[%s1030 + $0x58] sm:$0xff]
  %v1042 = vld [vmem:[%s1030 + $0x60] sm:$0xff]
  %v1043 = vld [vmem:[%s1030 + $0x68] sm:$0xff]
  %v1044 = vld [vmem:[%s1030 + $0x70] sm:$0xff]
  %1059 = vrot.lane.b32.xlu0 %v1031, 8
  %v1060 = vpop.permute.xlu0 %1059
  %1061 = vrot.lane.b32.xlu0 %v1032, 8
  %v1062 = vpop.permute.xlu0 %1061
  %1063 = vrot.lane.b32.xlu0 %v1033, 8
  %v1064 = vpop.permute.xlu0 %1063
  %1065 = vrot.lane.b32.xlu0 %v1034, 8
  %v1066 = vpop.permute.xlu0 %1065
  %1067 = vrot.lane.b32.xlu0 %v1035, 8
  %v1068 = vpop.permute.xlu0 %1067
  %1069 = vrot.lane.b32.xlu0 %v1036, 8
  %v1070 = vpop.permute.xlu0 %1069
  %1071 = vrot.lane.b32.xlu0 %v1037, 8
  %v1072 = vpop.permute.xlu0 %1071
  %1073 = vrot.lane.b32.xlu0 %v1038, 8
  %v1074 = vpop.permute.xlu0 %1073
  %1075 = vrot.lane.b32.xlu0 %v1039, 8
  %v1076 = vpop.permute.xlu0 %1075
  %1077 = vrot.lane.b32.xlu0 %v1040, 8
  %v1078 = vpop.permute.xlu0 %1077
  %1079 = vrot.lane.b32.xlu0 %v1041, 8
  %v1080 = vpop.permute.xlu0 %1079
  %1081 = vrot.lane.b32.xlu0 %v1042, 8
  %v1082 = vpop.permute.xlu0 %1081
  %1083 = vrot.lane.b32.xlu0 %v1043, 8
  %v1084 = vpop.permute.xlu0 %1083
  %1085 = vrot.lane.b32.xlu0 %v1044, 8
  %v1086 = vpop.permute.xlu0 %1085
  %vm1101 = vcmask 130112
  %1102 = vst.msk [vmem:[%s1014] sm:$0xff] %vm1101, %v1060
  %1103 = vst.msk [vmem:[%s1014 + $0x8] sm:$0xff] %vm1101, %v1062
  %1104 = vst.msk [vmem:[%s1014 + $0x10] sm:$0xff] %vm1101, %v1064
  %1105 = vst.msk [vmem:[%s1014 + $0x18] sm:$0xff] %vm1101, %v1066
  %1106 = vst.msk [vmem:[%s1014 + $0x20] sm:$0xff] %vm1101, %v1068
  %1107 = vst.msk [vmem:[%s1014 + $0x28] sm:$0xff] %vm1101, %v1070
  %1108 = vst.msk [vmem:[%s1014 + $0x30] sm:$0xff] %vm1101, %v1072
  %1109 = vst.msk [vmem:[%s1014 + $0x40] sm:$0xff] %vm1101, %v1074
  %1110 = vst.msk [vmem:[%s1014 + $0x48] sm:$0xff] %vm1101, %v1076
  %1111 = vst.msk [vmem:[%s1014 + $0x50] sm:$0xff] %vm1101, %v1078
  %1112 = vst.msk [vmem:[%s1014 + $0x58] sm:$0xff] %vm1101, %v1080
  %1113 = vst.msk [vmem:[%s1014 + $0x60] sm:$0xff] %vm1101, %v1082
  %1114 = vst.msk [vmem:[%s1014 + $0x68] sm:$0xff] %vm1101, %v1084
  %1115 = vst.msk [vmem:[%s1014 + $0x70] sm:$0xff] %vm1101, %v1086
  %v1116 = vld [vmem:[%s999] sm:$0xff]
  %v1117 = vld [vmem:[%s999 + $0x8] sm:$0xff]
  %v1118 = vld [vmem:[%s999 + $0x10] sm:$0xff]
  %v1119 = vld [vmem:[%s999 + $0x18] sm:$0xff]
  %v1120 = vld [vmem:[%s999 + $0x20] sm:$0xff]
  %v1121 = vld [vmem:[%s999 + $0x28] sm:$0xff]
  %v1122 = vld [vmem:[%s999 + $0x30] sm:$0xff]
  %v1123 = vld [vmem:[%s999 + $0x40] sm:$0xff]
  %v1124 = vld [vmem:[%s999 + $0x48] sm:$0xff]
  %v1125 = vld [vmem:[%s999 + $0x50] sm:$0xff]
  %v1126 = vld [vmem:[%s999 + $0x58] sm:$0xff]
  %v1127 = vld [vmem:[%s999 + $0x60] sm:$0xff]
  %v1128 = vld [vmem:[%s999 + $0x68] sm:$0xff]
  %v1129 = vld [vmem:[%s999 + $0x70] sm:$0xff]
  %1144 = vrot.lane.b32.xlu0 %v1116, 16
  %v1145 = vpop.permute.xlu0 %1144
  %1146 = vrot.lane.b32.xlu0 %v1117, 16
  %v1147 = vpop.permute.xlu0 %1146
  %1148 = vrot.lane.b32.xlu0 %v1118, 16
  %v1149 = vpop.permute.xlu0 %1148
  %1150 = vrot.lane.b32.xlu0 %v1119, 16
  %v1151 = vpop.permute.xlu0 %1150
  %1152 = vrot.lane.b32.xlu0 %v1120, 16
  %v1153 = vpop.permute.xlu0 %1152
  %1154 = vrot.lane.b32.xlu0 %v1121, 16
  %v1155 = vpop.permute.xlu0 %1154
  %1156 = vrot.lane.b32.xlu0 %v1122, 16
  %v1157 = vpop.permute.xlu0 %1156
  %1158 = vrot.lane.b32.xlu0 %v1123, 16
  %v1159 = vpop.permute.xlu0 %1158
  %1160 = vrot.lane.b32.xlu0 %v1124, 16
  %v1161 = vpop.permute.xlu0 %1160
  %1162 = vrot.lane.b32.xlu0 %v1125, 16
  %v1163 = vpop.permute.xlu0 %1162
  %1164 = vrot.lane.b32.xlu0 %v1126, 16
  %v1165 = vpop.permute.xlu0 %1164
  %1166 = vrot.lane.b32.xlu0 %v1127, 16
  %v1167 = vpop.permute.xlu0 %1166
  %1168 = vrot.lane.b32.xlu0 %v1128, 16
  %v1169 = vpop.permute.xlu0 %1168
  %1170 = vrot.lane.b32.xlu0 %v1129, 16
  %v1171 = vpop.permute.xlu0 %1170
  %vm1186 = vcmask 195712
  %1187 = vst.msk [vmem:[%s1014] sm:$0xff] %vm1186, %v1145
  %1188 = vst.msk [vmem:[%s1014 + $0x8] sm:$0xff] %vm1186, %v1147
  %1189 = vst.msk [vmem:[%s1014 + $0x10] sm:$0xff] %vm1186, %v1149
  %1190 = vst.msk [vmem:[%s1014 + $0x18] sm:$0xff] %vm1186, %v1151
  %1191 = vst.msk [vmem:[%s1014 + $0x20] sm:$0xff] %vm1186, %v1153
  %1192 = vst.msk [vmem:[%s1014 + $0x28] sm:$0xff] %vm1186, %v1155
  %1193 = vst.msk [vmem:[%s1014 + $0x30] sm:$0xff] %vm1186, %v1157
  %1194 = vst.msk [vmem:[%s1014 + $0x40] sm:$0xff] %vm1186, %v1159
  %1195 = vst.msk [vmem:[%s1014 + $0x48] sm:$0xff] %vm1186, %v1161
  %1196 = vst.msk [vmem:[%s1014 + $0x50] sm:$0xff] %vm1186, %v1163
  %1197 = vst.msk [vmem:[%s1014 + $0x58] sm:$0xff] %vm1186, %v1165
  %1198 = vst.msk [vmem:[%s1014 + $0x60] sm:$0xff] %vm1186, %v1167
  %1199 = vst.msk [vmem:[%s1014 + $0x68] sm:$0xff] %vm1186, %v1169
  %1200 = vst.msk [vmem:[%s1014 + $0x70] sm:$0xff] %vm1186, %v1171
  %s1201 = scalar_lea.vmem [#allocation2], 128
  %v1202 = vld [vmem:[%s1201] sm:$0x7f]
  %v1203 = vld [vmem:[%s1201 + $0x8] sm:$0x7f]
  %v1204 = vld [vmem:[%s1201 + $0x10] sm:$0x7f]
  %v1205 = vld [vmem:[%s1201 + $0x18] sm:$0x7f]
  %v1206 = vld [vmem:[%s1201 + $0x20] sm:$0x7f]
  %v1207 = vld [vmem:[%s1201 + $0x28] sm:$0x7f]
  %v1208 = vld [vmem:[%s1201 + $0x30] sm:$0x7f]
  %v1209 = vld [vmem:[%s1201 + $0x38] sm:$0x7f]
  %v1210 = vld [vmem:[%s1201 + $0x40] sm:$0x7f]
  %v1211 = vld [vmem:[%s1201 + $0x48] sm:$0x7f]
  %v1212 = vld [vmem:[%s1201 + $0x50] sm:$0x7f]
  %v1213 = vld [vmem:[%s1201 + $0x58] sm:$0x7f]
  %v1214 = vld [vmem:[%s1201 + $0x60] sm:$0x7f]
  %v1215 = vld [vmem:[%s1201 + $0x68] sm:$0x7f]
  %v1216 = vld [vmem:[%s1201 + $0x70] sm:$0x7f]
  %v1217 = vld [vmem:[%s1201 + $0x78] sm:$0x7f]
  %1234 = vrot.lane.b32.xlu0 %v1202, 24
  %v1235 = vpop.permute.xlu0 %1234
  %1236 = vrot.lane.b32.xlu0 %v1203, 24
  %v1237 = vpop.permute.xlu0 %1236
  %1238 = vrot.lane.b32.xlu0 %v1204, 24
  %v1239 = vpop.permute.xlu0 %1238
  %1240 = vrot.lane.b32.xlu0 %v1205, 24
  %v1241 = vpop.permute.xlu0 %1240
  %1242 = vrot.lane.b32.xlu0 %v1206, 24
  %v1243 = vpop.permute.xlu0 %1242
  %1244 = vrot.lane.b32.xlu0 %v1207, 24
  %v1245 = vpop.permute.xlu0 %1244
  %1246 = vrot.lane.b32.xlu0 %v1208, 24
  %v1247 = vpop.permute.xlu0 %1246
  %1248 = vrot.lane.b32.xlu0 %v1209, 24
  %v1249 = vpop.permute.xlu0 %1248
  %1250 = vrot.lane.b32.xlu0 %v1210, 24
  %v1251 = vpop.permute.xlu0 %1250
  %1252 = vrot.lane.b32.xlu0 %v1211, 24
  %v1253 = vpop.permute.xlu0 %1252
  %1254 = vrot.lane.b32.xlu0 %v1212, 24
  %v1255 = vpop.permute.xlu0 %1254
  %1256 = vrot.lane.b32.xlu0 %v1213, 24
  %v1257 = vpop.permute.xlu0 %1256
  %1258 = vrot.lane.b32.xlu0 %v1214, 24
  %v1259 = vpop.permute.xlu0 %1258
  %1260 = vrot.lane.b32.xlu0 %v1215, 24
  %v1261 = vpop.permute.xlu0 %1260
  %1262 = vrot.lane.b32.xlu0 %v1216, 24
  %v1263 = vpop.permute.xlu0 %1262
  %1264 = vrot.lane.b32.xlu0 %v1217, 24
  %v1265 = vpop.permute.xlu0 %1264
  %vm1282 = vcmask 260288
  %1283 = vst.msk [vmem:[#allocation3 + $0x1] sm:$0x7f] %vm1282, %v1235
  %1284 = vst.msk [vmem:[#allocation3 + $0x9] sm:$0x7f] %vm1282, %v1237
  %1285 = vst.msk [vmem:[#allocation3 + $0x11] sm:$0x7f] %vm1282, %v1239
  %1286 = vst.msk [vmem:[#allocation3 + $0x19] sm:$0x7f] %vm1282, %v1241
  %1287 = vst.msk [vmem:[#allocation3 + $0x21] sm:$0x7f] %vm1282, %v1243
  %1288 = vst.msk [vmem:[#allocation3 + $0x29] sm:$0x7f] %vm1282, %v1245
  %1289 = vst.msk [vmem:[#allocation3 + $0x31] sm:$0x7f] %vm1282, %v1247
  %1290 = vst.msk [vmem:[#allocation3 + $0x39] sm:$0x7f] %vm1282, %v1249
  %1291 = vst.msk [vmem:[#allocation3 + $0x41] sm:$0x7f] %vm1282, %v1251
  %1292 = vst.msk [vmem:[#allocation3 + $0x49] sm:$0x7f] %vm1282, %v1253
  %1293 = vst.msk [vmem:[#allocation3 + $0x51] sm:$0x7f] %vm1282, %v1255
  %1294 = vst.msk [vmem:[#allocation3 + $0x59] sm:$0x7f] %vm1282, %v1257
  %1295 = vst.msk [vmem:[#allocation3 + $0x61] sm:$0x7f] %vm1282, %v1259
  %1296 = vst.msk [vmem:[#allocation3 + $0x69] sm:$0x7f] %vm1282, %v1261
  %1297 = vst.msk [vmem:[#allocation3 + $0x71] sm:$0x7f] %vm1282, %v1263
  %1298 = vst.msk [vmem:[#allocation3 + $0x79] sm:$0x7f] %vm1282, %v1265
  %v1299 = vld [vmem:[#allocation2] sm:$0xff]
  %v1300 = vld [vmem:[#allocation2 + $0x8] sm:$0xff]
  %v1301 = vld [vmem:[#allocation2 + $0x10] sm:$0xff]
  %v1302 = vld [vmem:[#allocation2 + $0x18] sm:$0xff]
  %v1303 = vld [vmem:[#allocation2 + $0x20] sm:$0xff]
  %v1304 = vld [vmem:[#allocation2 + $0x28] sm:$0xff]
  %v1305 = vld [vmem:[#allocation2 + $0x30] sm:$0xff]
  %v1306 = vld [vmem:[#allocation2 + $0x38] sm:$0xff]
  %v1307 = vld [vmem:[#allocation2 + $0x40] sm:$0xff]
  %v1308 = vld [vmem:[#allocation2 + $0x48] sm:$0xff]
  %v1309 = vld [vmem:[#allocation2 + $0x50] sm:$0xff]
  %v1310 = vld [vmem:[#allocation2 + $0x58] sm:$0xff]
  %v1311 = vld [vmem:[#allocation2 + $0x60] sm:$0xff]
  %v1312 = vld [vmem:[#allocation2 + $0x68] sm:$0xff]
  %v1313 = vld [vmem:[#allocation2 + $0x70] sm:$0xff]
  %v1314 = vld [vmem:[#allocation2 + $0x78] sm:$0xff]
  %1331 = vrot.lane.b32.xlu0 %v1299, 32
  %v1332 = vpop.permute.xlu0 %1331
  %1333 = vrot.lane.b32.xlu0 %v1300, 32
  %v1334 = vpop.permute.xlu0 %1333
  %1335 = vrot.lane.b32.xlu0 %v1301, 32
  %v1336 = vpop.permute.xlu0 %1335
  %1337 = vrot.lane.b32.xlu0 %v1302, 32
  %v1338 = vpop.permute.xlu0 %1337
  %1339 = vrot.lane.b32.xlu0 %v1303, 32
  %v1340 = vpop.permute.xlu0 %1339
  %1341 = vrot.lane.b32.xlu0 %v1304, 32
  %v1342 = vpop.permute.xlu0 %1341
  %1343 = vrot.lane.b32.xlu0 %v1305, 32
  %v1344 = vpop.permute.xlu0 %1343
  %1345 = vrot.lane.b32.xlu0 %v1306, 32
  %v1346 = vpop.permute.xlu0 %1345
  %1347 = vrot.lane.b32.xlu0 %v1307, 32
  %v1348 = vpop.permute.xlu0 %1347
  %1349 = vrot.lane.b32.xlu0 %v1308, 32
  %v1350 = vpop.permute.xlu0 %1349
  %1351 = vrot.lane.b32.xlu0 %v1309, 32
  %v1352 = vpop.permute.xlu0 %1351
  %1353 = vrot.lane.b32.xlu0 %v1310, 32
  %v1354 = vpop.permute.xlu0 %1353
  %1355 = vrot.lane.b32.xlu0 %v1311, 32
  %v1356 = vpop.permute.xlu0 %1355
  %1357 = vrot.lane.b32.xlu0 %v1312, 32
  %v1358 = vpop.permute.xlu0 %1357
  %1359 = vrot.lane.b32.xlu0 %v1313, 32
  %v1360 = vpop.permute.xlu0 %1359
  %1361 = vrot.lane.b32.xlu0 %v1314, 32
  %v1362 = vpop.permute.xlu0 %1361
  %vm1379 = vcmask 326912
  %1380 = vst.msk [vmem:[#allocation3] sm:$0xff] %vm1379, %v1332
  %1381 = vst.msk [vmem:[#allocation3 + $0x8] sm:$0xff] %vm1379, %v1334
  %1382 = vst.msk [vmem:[#allocation3 + $0x10] sm:$0xff] %vm1379, %v1336
  %1383 = vst.msk [vmem:[#allocation3 + $0x18] sm:$0xff] %vm1379, %v1338
  %1384 = vst.msk [vmem:[#allocation3 + $0x20] sm:$0xff] %vm1379, %v1340
  %1385 = vst.msk [vmem:[#allocation3 + $0x28] sm:$0xff] %vm1379, %v1342
  %1386 = vst.msk [vmem:[#allocation3 + $0x30] sm:$0xff] %vm1379, %v1344
  %1387 = vst.msk [vmem:[#allocation3 + $0x38] sm:$0xff] %vm1379, %v1346
  %1388 = vst.msk [vmem:[#allocation3 + $0x40] sm:$0xff] %vm1379, %v1348
  %1389 = vst.msk [vmem:[#allocation3 + $0x48] sm:$0xff] %vm1379, %v1350
  %1390 = vst.msk [vmem:[#allocation3 + $0x50] sm:$0xff] %vm1379, %v1352
  %1391 = vst.msk [vmem:[#allocation3 + $0x58] sm:$0xff] %vm1379, %v1354
  %1392 = vst.msk [vmem:[#allocation3 + $0x60] sm:$0xff] %vm1379, %v1356
  %1393 = vst.msk [vmem:[#allocation3 + $0x68] sm:$0xff] %vm1379, %v1358
  %1394 = vst.msk [vmem:[#allocation3 + $0x70] sm:$0xff] %vm1379, %v1360
  %1395 = vst.msk [vmem:[#allocation3 + $0x78] sm:$0xff] %vm1379, %v1362
  %v1396 = vld [vmem:[%s1201] sm:$0xff]
  %v1397 = vld [vmem:[%s1201 + $0x8] sm:$0xff]
  %v1398 = vld [vmem:[%s1201 + $0x10] sm:$0xff]
  %v1399 = vld [vmem:[%s1201 + $0x18] sm:$0xff]
  %v1400 = vld [vmem:[%s1201 + $0x20] sm:$0xff]
  %v1401 = vld [vmem:[%s1201 + $0x28] sm:$0xff]
  %v1402 = vld [vmem:[%s1201 + $0x30] sm:$0xff]
  %v1403 = vld [vmem:[%s1201 + $0x38] sm:$0xff]
  %v1404 = vld [vmem:[%s1201 + $0x40] sm:$0xff]
  %v1405 = vld [vmem:[%s1201 + $0x48] sm:$0xff]
  %v1406 = vld [vmem:[%s1201 + $0x50] sm:$0xff]
  %v1407 = vld [vmem:[%s1201 + $0x58] sm:$0xff]
  %v1408 = vld [vmem:[%s1201 + $0x60] sm:$0xff]
  %v1409 = vld [vmem:[%s1201 + $0x68] sm:$0xff]
  %v1410 = vld [vmem:[%s1201 + $0x70] sm:$0xff]
  %v1411 = vld [vmem:[%s1201 + $0x78] sm:$0xff]
  %1428 = vrot.lane.b32.xlu0 %v1396, 40
  %v1429 = vpop.permute.xlu0 %1428
  %1430 = vrot.lane.b32.xlu0 %v1397, 40
  %v1431 = vpop.permute.xlu0 %1430
  %1432 = vrot.lane.b32.xlu0 %v1398, 40
  %v1433 = vpop.permute.xlu0 %1432
  %1434 = vrot.lane.b32.xlu0 %v1399, 40
  %v1435 = vpop.permute.xlu0 %1434
  %1436 = vrot.lane.b32.xlu0 %v1400, 40
  %v1437 = vpop.permute.xlu0 %1436
  %1438 = vrot.lane.b32.xlu0 %v1401, 40
  %v1439 = vpop.permute.xlu0 %1438
  %1440 = vrot.lane.b32.xlu0 %v1402, 40
  %v1441 = vpop.permute.xlu0 %1440
  %1442 = vrot.lane.b32.xlu0 %v1403, 40
  %v1443 = vpop.permute.xlu0 %1442
  %1444 = vrot.lane.b32.xlu0 %v1404, 40
  %v1445 = vpop.permute.xlu0 %1444
  %1446 = vrot.lane.b32.xlu0 %v1405, 40
  %v1447 = vpop.permute.xlu0 %1446
  %1448 = vrot.lane.b32.xlu0 %v1406, 40
  %v1449 = vpop.permute.xlu0 %1448
  %1450 = vrot.lane.b32.xlu0 %v1407, 40
  %v1451 = vpop.permute.xlu0 %1450
  %1452 = vrot.lane.b32.xlu0 %v1408, 40
  %v1453 = vpop.permute.xlu0 %1452
  %1454 = vrot.lane.b32.xlu0 %v1409, 40
  %v1455 = vpop.permute.xlu0 %1454
  %1456 = vrot.lane.b32.xlu0 %v1410, 40
  %v1457 = vpop.permute.xlu0 %1456
  %1458 = vrot.lane.b32.xlu0 %v1411, 40
  %v1459 = vpop.permute.xlu0 %1458
  %vm1476 = vcmask 392512
  %1477 = vst.msk [vmem:[#allocation3] sm:$0xff] %vm1476, %v1429
  %1478 = vst.msk [vmem:[#allocation3 + $0x8] sm:$0xff] %vm1476, %v1431
  %1479 = vst.msk [vmem:[#allocation3 + $0x10] sm:$0xff] %vm1476, %v1433
  %1480 = vst.msk [vmem:[#allocation3 + $0x18] sm:$0xff] %vm1476, %v1435
  %1481 = vst.msk [vmem:[#allocation3 + $0x20] sm:$0xff] %vm1476, %v1437
  %1482 = vst.msk [vmem:[#allocation3 + $0x28] sm:$0xff] %vm1476, %v1439
  %1483 = vst.msk [vmem:[#allocation3 + $0x30] sm:$0xff] %vm1476, %v1441
  %1484 = vst.msk [vmem:[#allocation3 + $0x38] sm:$0xff] %vm1476, %v1443
  %1485 = vst.msk [vmem:[#allocation3 + $0x40] sm:$0xff] %vm1476, %v1445
  %1486 = vst.msk [vmem:[#allocation3 + $0x48] sm:$0xff] %vm1476, %v1447
  %1487 = vst.msk [vmem:[#allocation3 + $0x50] sm:$0xff] %vm1476, %v1449
  %1488 = vst.msk [vmem:[#allocation3 + $0x58] sm:$0xff] %vm1476, %v1451
  %1489 = vst.msk [vmem:[#allocation3 + $0x60] sm:$0xff] %vm1476, %v1453
  %1490 = vst.msk [vmem:[#allocation3 + $0x68] sm:$0xff] %vm1476, %v1455
  %1491 = vst.msk [vmem:[#allocation3 + $0x70] sm:$0xff] %vm1476, %v1457
  %1492 = vst.msk [vmem:[#allocation3 + $0x78] sm:$0xff] %vm1476, %v1459
  %v1493 = vld [vmem:[%s999] sm:$0x7f]
  %v1494 = vld [vmem:[%s999 + $0x8] sm:$0x7f]
  %v1495 = vld [vmem:[%s999 + $0x10] sm:$0x7f]
  %v1496 = vld [vmem:[%s999 + $0x18] sm:$0x7f]
  %v1497 = vld [vmem:[%s999 + $0x20] sm:$0x7f]
  %v1498 = vld [vmem:[%s999 + $0x28] sm:$0x7f]
  %v1499 = vld [vmem:[%s999 + $0x30] sm:$0x7f]
  %v1500 = vld [vmem:[%s999 + $0x38] sm:$0x7f]
  %v1501 = vld [vmem:[%s999 + $0x40] sm:$0x7f]
  %v1502 = vld [vmem:[%s999 + $0x48] sm:$0x7f]
  %v1503 = vld [vmem:[%s999 + $0x50] sm:$0x7f]
  %v1504 = vld [vmem:[%s999 + $0x58] sm:$0x7f]
  %v1505 = vld [vmem:[%s999 + $0x60] sm:$0x7f]
  %v1506 = vld [vmem:[%s999 + $0x68] sm:$0x7f]
  %v1507 = vld [vmem:[%s999 + $0x70] sm:$0x7f]
  %v1508 = vld [vmem:[%s999 + $0x78] sm:$0x7f]
  %1525 = vrot.lane.b32.xlu0 %v1493, 48
  %v1526 = vpop.permute.xlu0 %1525
  %1527 = vrot.lane.b32.xlu0 %v1494, 48
  %v1528 = vpop.permute.xlu0 %1527
  %1529 = vrot.lane.b32.xlu0 %v1495, 48
  %v1530 = vpop.permute.xlu0 %1529
  %1531 = vrot.lane.b32.xlu0 %v1496, 48
  %v1532 = vpop.permute.xlu0 %1531
  %1533 = vrot.lane.b32.xlu0 %v1497, 48
  %v1534 = vpop.permute.xlu0 %1533
  %1535 = vrot.lane.b32.xlu0 %v1498, 48
  %v1536 = vpop.permute.xlu0 %1535
  %1537 = vrot.lane.b32.xlu0 %v1499, 48
  %v1538 = vpop.permute.xlu0 %1537
  %1539 = vrot.lane.b32.xlu0 %v1500, 48
  %v1540 = vpop.permute.xlu0 %1539
  %1541 = vrot.lane.b32.xlu0 %v1501, 48
  %v1542 = vpop.permute.xlu0 %1541
  %1543 = vrot.lane.b32.xlu0 %v1502, 48
  %v1544 = vpop.permute.xlu0 %1543
  %1545 = vrot.lane.b32.xlu0 %v1503, 48
  %v1546 = vpop.permute.xlu0 %1545
  %1547 = vrot.lane.b32.xlu0 %v1504, 48
  %v1548 = vpop.permute.xlu0 %1547
  %1549 = vrot.lane.b32.xlu0 %v1505, 48
  %v1550 = vpop.permute.xlu0 %1549
  %1551 = vrot.lane.b32.xlu0 %v1506, 48
  %v1552 = vpop.permute.xlu0 %1551
  %1553 = vrot.lane.b32.xlu0 %v1507, 48
  %v1554 = vpop.permute.xlu0 %1553
  %1555 = vrot.lane.b32.xlu0 %v1508, 48
  %v1556 = vpop.permute.xlu0 %1555
  %vm1573 = vcmask 457088
  %1574 = vst.msk [vmem:[#allocation3 + $0x1] sm:$0x7f] %vm1573, %v1526
  %1575 = vst.msk [vmem:[#allocation3 + $0x9] sm:$0x7f] %vm1573, %v1528
  %1576 = vst.msk [vmem:[#allocation3 + $0x11] sm:$0x7f] %vm1573, %v1530
  %1577 = vst.msk [vmem:[#allocation3 + $0x19] sm:$0x7f] %vm1573, %v1532
  %1578 = vst.msk [vmem:[#allocation3 + $0x21] sm:$0x7f] %vm1573, %v1534
  %1579 = vst.msk [vmem:[#allocation3 + $0x29] sm:$0x7f] %vm1573, %v1536
  %1580 = vst.msk [vmem:[#allocation3 + $0x31] sm:$0x7f] %vm1573, %v1538
  %1581 = vst.msk [vmem:[#allocation3 + $0x39] sm:$0x7f] %vm1573, %v1540
  %1582 = vst.msk [vmem:[#allocation3 + $0x41] sm:$0x7f] %vm1573, %v1542
  %1583 = vst.msk [vmem:[#allocation3 + $0x49] sm:$0x7f] %vm1573, %v1544
  %1584 = vst.msk [vmem:[#allocation3 + $0x51] sm:$0x7f] %vm1573, %v1546
  %1585 = vst.msk [vmem:[#allocation3 + $0x59] sm:$0x7f] %vm1573, %v1548
  %1586 = vst.msk [vmem:[#allocation3 + $0x61] sm:$0x7f] %vm1573, %v1550
  %1587 = vst.msk [vmem:[#allocation3 + $0x69] sm:$0x7f] %vm1573, %v1552
  %1588 = vst.msk [vmem:[#allocation3 + $0x71] sm:$0x7f] %vm1573, %v1554
  %1589 = vst.msk [vmem:[#allocation3 + $0x79] sm:$0x7f] %vm1573, %v1556
  %v1590 = vld [vmem:[%s1030] sm:$0xff]
  %v1591 = vld [vmem:[%s1030 + $0x8] sm:$0xff]
  %v1592 = vld [vmem:[%s1030 + $0x10] sm:$0xff]
  %v1593 = vld [vmem:[%s1030 + $0x18] sm:$0xff]
  %v1594 = vld [vmem:[%s1030 + $0x20] sm:$0xff]
  %v1595 = vld [vmem:[%s1030 + $0x28] sm:$0xff]
  %v1596 = vld [vmem:[%s1030 + $0x30] sm:$0xff]
  %v1597 = vld [vmem:[%s1030 + $0x38] sm:$0xff]
  %v1598 = vld [vmem:[%s1030 + $0x40] sm:$0xff]
  %v1599 = vld [vmem:[%s1030 + $0x48] sm:$0xff]
  %v1600 = vld [vmem:[%s1030 + $0x50] sm:$0xff]
  %v1601 = vld [vmem:[%s1030 + $0x58] sm:$0xff]
  %v1602 = vld [vmem:[%s1030 + $0x60] sm:$0xff]
  %v1603 = vld [vmem:[%s1030 + $0x68] sm:$0xff]
  %v1604 = vld [vmem:[%s1030 + $0x70] sm:$0xff]
  %v1605 = vld [vmem:[%s1030 + $0x78] sm:$0xff]
  %1622 = vrot.lane.b32.xlu0 %v1590, 56
  %v1623 = vpop.permute.xlu0 %1622
  %1624 = vrot.lane.b32.xlu0 %v1591, 56
  %v1625 = vpop.permute.xlu0 %1624
  %1626 = vrot.lane.b32.xlu0 %v1592, 56
  %v1627 = vpop.permute.xlu0 %1626
  %1628 = vrot.lane.b32.xlu0 %v1593, 56
  %v1629 = vpop.permute.xlu0 %1628
  %1630 = vrot.lane.b32.xlu0 %v1594, 56
  %v1631 = vpop.permute.xlu0 %1630
  %1632 = vrot.lane.b32.xlu0 %v1595, 56
  %v1633 = vpop.permute.xlu0 %1632
  %1634 = vrot.lane.b32.xlu0 %v1596, 56
  %v1635 = vpop.permute.xlu0 %1634
  %1636 = vrot.lane.b32.xlu0 %v1597, 56
  %v1637 = vpop.permute.xlu0 %1636
  %1638 = vrot.lane.b32.xlu0 %v1598, 56
  %v1639 = vpop.permute.xlu0 %1638
  %1640 = vrot.lane.b32.xlu0 %v1599, 56
  %v1641 = vpop.permute.xlu0 %1640
  %1642 = vrot.lane.b32.xlu0 %v1600, 56
  %v1643 = vpop.permute.xlu0 %1642
  %1644 = vrot.lane.b32.xlu0 %v1601, 56
  %v1645 = vpop.permute.xlu0 %1644
  %1646 = vrot.lane.b32.xlu0 %v1602, 56
  %v1647 = vpop.permute.xlu0 %1646
  %1648 = vrot.lane.b32.xlu0 %v1603, 56
  %v1649 = vpop.permute.xlu0 %1648
  %1650 = vrot.lane.b32.xlu0 %v1604, 56
  %v1651 = vpop.permute.xlu0 %1650
  %1652 = vrot.lane.b32.xlu0 %v1605, 56
  %v1653 = vpop.permute.xlu0 %1652
  %vm1670 = vcmask 523712
  %1671 = vst.msk [vmem:[#allocation3] sm:$0xff] %vm1670, %v1623
  %1672 = vst.msk [vmem:[#allocation3 + $0x8] sm:$0xff] %vm1670, %v1625
  %1673 = vst.msk [vmem:[#allocation3 + $0x10] sm:$0xff] %vm1670, %v1627
  %1674 = vst.msk [vmem:[#allocation3 + $0x18] sm:$0xff] %vm1670, %v1629
  %1675 = vst.msk [vmem:[#allocation3 + $0x20] sm:$0xff] %vm1670, %v1631
  %1676 = vst.msk [vmem:[#allocation3 + $0x28] sm:$0xff] %vm1670, %v1633
  %1677 = vst.msk [vmem:[#allocation3 + $0x30] sm:$0xff] %vm1670, %v1635
  %1678 = vst.msk [vmem:[#allocation3 + $0x38] sm:$0xff] %vm1670, %v1637
  %1679 = vst.msk [vmem:[#allocation3 + $0x40] sm:$0xff] %vm1670, %v1639
  %1680 = vst.msk [vmem:[#allocation3 + $0x48] sm:$0xff] %vm1670, %v1641
  %1681 = vst.msk [vmem:[#allocation3 + $0x50] sm:$0xff] %vm1670, %v1643
  %1682 = vst.msk [vmem:[#allocation3 + $0x58] sm:$0xff] %vm1670, %v1645
  %1683 = vst.msk [vmem:[#allocation3 + $0x60] sm:$0xff] %vm1670, %v1647
  %1684 = vst.msk [vmem:[#allocation3 + $0x68] sm:$0xff] %vm1670, %v1649
  %1685 = vst.msk [vmem:[#allocation3 + $0x70] sm:$0xff] %vm1670, %v1651
  %1686 = vst.msk [vmem:[#allocation3 + $0x78] sm:$0xff] %vm1670, %v1653
  %v1687 = vld [vmem:[%s999] sm:$0xff]
  %v1688 = vld [vmem:[%s999 + $0x8] sm:$0xff]
  %v1689 = vld [vmem:[%s999 + $0x10] sm:$0xff]
  %v1690 = vld [vmem:[%s999 + $0x18] sm:$0xff]
  %v1691 = vld [vmem:[%s999 + $0x20] sm:$0xff]
  %v1692 = vld [vmem:[%s999 + $0x28] sm:$0xff]
  %v1693 = vld [vmem:[%s999 + $0x30] sm:$0xff]
  %v1694 = vld [vmem:[%s999 + $0x38] sm:$0xff]
  %v1695 = vld [vmem:[%s999 + $0x40] sm:$0xff]
  %v1696 = vld [vmem:[%s999 + $0x48] sm:$0xff]
  %v1697 = vld [vmem:[%s999 + $0x50] sm:$0xff]
  %v1698 = vld [vmem:[%s999 + $0x58] sm:$0xff]
  %v1699 = vld [vmem:[%s999 + $0x60] sm:$0xff]
  %v1700 = vld [vmem:[%s999 + $0x68] sm:$0xff]
  %v1701 = vld [vmem:[%s999 + $0x70] sm:$0xff]
  %v1702 = vld [vmem:[%s999 + $0x78] sm:$0xff]
  %1719 = vrot.lane.b32.xlu0 %v1687, 64
  %v1720 = vpop.permute.xlu0 %1719
  %1721 = vrot.lane.b32.xlu0 %v1688, 64
  %v1722 = vpop.permute.xlu0 %1721
  %1723 = vrot.lane.b32.xlu0 %v1689, 64
  %v1724 = vpop.permute.xlu0 %1723
  %1725 = vrot.lane.b32.xlu0 %v1690, 64
  %v1726 = vpop.permute.xlu0 %1725
  %1727 = vrot.lane.b32.xlu0 %v1691, 64
  %v1728 = vpop.permute.xlu0 %1727
  %1729 = vrot.lane.b32.xlu0 %v1692, 64
  %v1730 = vpop.permute.xlu0 %1729
  %1731 = vrot.lane.b32.xlu0 %v1693, 64
  %v1732 = vpop.permute.xlu0 %1731
  %1733 = vrot.lane.b32.xlu0 %v1694, 64
  %v1734 = vpop.permute.xlu0 %1733
  %1735 = vrot.lane.b32.xlu0 %v1695, 64
  %v1736 = vpop.permute.xlu0 %1735
  %1737 = vrot.lane.b32.xlu0 %v1696, 64
  %v1738 = vpop.permute.xlu0 %1737
  %1739 = vrot.lane.b32.xlu0 %v1697, 64
  %v1740 = vpop.permute.xlu0 %1739
  %1741 = vrot.lane.b32.xlu0 %v1698, 64
  %v1742 = vpop.permute.xlu0 %1741
  %1743 = vrot.lane.b32.xlu0 %v1699, 64
  %v1744 = vpop.permute.xlu0 %1743
  %1745 = vrot.lane.b32.xlu0 %v1700, 64
  %v1746 = vpop.permute.xlu0 %1745
  %1747 = vrot.lane.b32.xlu0 %v1701, 64
  %v1748 = vpop.permute.xlu0 %1747
  %1749 = vrot.lane.b32.xlu0 %v1702, 64
  %v1750 = vpop.permute.xlu0 %1749
  %vm1767 = vcmask 589312
  %1768 = vst.msk [vmem:[#allocation3] sm:$0xff] %vm1767, %v1720
  %1769 = vst.msk [vmem:[#allocation3 + $0x8] sm:$0xff] %vm1767, %v1722
  %1770 = vst.msk [vmem:[#allocation3 + $0x10] sm:$0xff] %vm1767, %v1724
  %1771 = vst.msk [vmem:[#allocation3 + $0x18] sm:$0xff] %vm1767, %v1726
  %1772 = vst.msk [vmem:[#allocation3 + $0x20] sm:$0xff] %vm1767, %v1728
  %1773 = vst.msk [vmem:[#allocation3 + $0x28] sm:$0xff] %vm1767, %v1730
  %1774 = vst.msk [vmem:[#allocation3 + $0x30] sm:$0xff] %vm1767, %v1732
  %1775 = vst.msk [vmem:[#allocation3 + $0x38] sm:$0xff] %vm1767, %v1734
  %1776 = vst.msk [vmem:[#allocation3 + $0x40] sm:$0xff] %vm1767, %v1736
  %1777 = vst.msk [vmem:[#allocation3 + $0x48] sm:$0xff] %vm1767, %v1738
  %1778 = vst.msk [vmem:[#allocation3 + $0x50] sm:$0xff] %vm1767, %v1740
  %1779 = vst.msk [vmem:[#allocation3 + $0x58] sm:$0xff] %vm1767, %v1742
  %1780 = vst.msk [vmem:[#allocation3 + $0x60] sm:$0xff] %vm1767, %v1744
  %1781 = vst.msk [vmem:[#allocation3 + $0x68] sm:$0xff] %vm1767, %v1746
  %1782 = vst.msk [vmem:[#allocation3 + $0x70] sm:$0xff] %vm1767, %v1748
  %1783 = vst.msk [vmem:[#allocation3 + $0x78] sm:$0xff] %vm1767, %v1750
  %v1784 = vld [vmem:[#allocation3] sm:$0xff]
  %v1785 = vld [vmem:[#allocation3 + $0x8] sm:$0xff]
  %v1786 = vld [vmem:[#allocation3 + $0x10] sm:$0xff]
  %v1787 = vld [vmem:[#allocation3 + $0x18] sm:$0xff]
  %v1788 = vld [vmem:[#allocation3 + $0x20] sm:$0xff]
  %v1789 = vld [vmem:[#allocation3 + $0x28] sm:$0xff]
  %v1790 = vld [vmem:[#allocation3 + $0x30] sm:$0xff]
  %v1791 = vld [vmem:[#allocation3 + $0x38] sm:$0xff]
  %v1792 = vld [vmem:[#allocation3 + $0x40] sm:$0xff]
  %v1793 = vld [vmem:[#allocation3 + $0x48] sm:$0xff]
  %v1794 = vld [vmem:[#allocation3 + $0x50] sm:$0xff]
  %v1795 = vld [vmem:[#allocation3 + $0x58] sm:$0xff]
  %v1796 = vld [vmem:[#allocation3 + $0x60] sm:$0xff]
  %v1797 = vld [vmem:[#allocation3 + $0x68] sm:$0xff]
  %v1798 = vld [vmem:[#allocation3 + $0x70] sm:$0xff]
  %v1799 = vld [vmem:[#allocation3 + $0x78] sm:$0xff]
  %v1800 = vld [vmem:[%s3] sm:$0xf]
  %v1801 = vld [vmem:[%s3 + $0x4] sm:$0xf]
  %v1802 = vld [vmem:[%s3 + $0x8] sm:$0xf]
  %v1803 = vld [vmem:[%s3 + $0xc] sm:$0xf]
  %v1804 = vld [vmem:[%s3 + $0x10] sm:$0xf]
  %v1805 = vld [vmem:[%s3 + $0x14] sm:$0xf]
  %v1806 = vld [vmem:[%s3 + $0x18] sm:$0xf]
  %v1807 = vld [vmem:[%s3 + $0x1c] sm:$0xf]
  %v1808 = vld [vmem:[%s3 + $0x20] sm:$0xf]
  %v1809 = vpack.c.bf16 %v1785, %v1784
  %v1810 = vpack.c.bf16 %v1787, %v1786
  %v1811 = vpack.c.bf16 %v1789, %v1788
  %v1812 = vpack.c.bf16 %v1791, %v1790
  %v1813 = vpack.c.bf16 %v1793, %v1792
  %v1814 = vpack.c.bf16 %v1795, %v1794
  %v1815 = vpack.c.bf16 %v1797, %v1796
  %v1816 = vpack.c.bf16 %v1799, %v1798
  %v1817 = vld [vmem:[%s4] sm:$0x1]
  %v1819 = vperm.slane %v1817, 0
  %v1830 = vunpack.c.l.b16 %v1800
  %v1831 = vunpack.c.l.b16 %v1801
  %v1832 = vunpack.c.l.b16 %v1802
  %v1833 = vunpack.c.l.b16 %v1803
  %v1834 = vunpack.c.l.b16 %v1804
  %v1835 = vunpack.c.l.b16 %v1805
  %v1836 = vunpack.c.l.b16 %v1806
  %v1837 = vunpack.c.l.b16 %v1807
  %v1838 = vunpack.c.l.b16 %v1808
  %v1839 = vpack.c.b16 %v1831, %v1830
  %v1840 = vpack.c.b16 %v1833, %v1832
  %v1841 = vpack.c.b16 %v1835, %v1834
  %v1842 = vpack.c.b16 %v1837, %v1836
  %v1843 = vpack.c.b16 %v1838, %v1838
  %vm1848 = vcmask 588800
  %v1850 = vsel %vm1848, %v1809, 0
  %v1853 = vsel %vm1848, %v1810, 0
  %v1856 = vsel %vm1848, %v1811, 0
  %v1859 = vsel %vm1848, %v1812, 0
  %v1862 = vsel %vm1848, %v1813, 0
  %v1865 = vsel %vm1848, %v1814, 0
  %v1868 = vsel %vm1848, %v1815, 0
  %v1871 = vsel %vm1848, %v1816, 0
  %vm1873 = vcmask 1043456
  %v1875 = vsel %vm1873, %v1843, 0
  %1877 = vmatpush.bf16.msra.mxu0 0
  %1878 = vmatpush.bf16.msra.mxu0 0
  %1879 = vmatpush.bf16.msra.mxu0 0
  %1880 = vmatpush.bf16.msra.mxu0 %v1875
  %1881 = vmatpush.bf16.msra.mxu0 %v1842
  %1882 = vmatpush.bf16.msra.mxu0 %v1841
  %1883 = vmatpush.bf16.msra.mxu0 %v1840
  %1884 = vmatpush.bf16.msra.mxu0 %v1839
  %1885 = vmatmul.bf16.gmra.mxu0 %v1850
  %v1886 = vpop.f32.mrf.mxu0
  %v1887 = vadd.f32 %v1819, %v1886
  %v1888 = vpop.f32.mrf.mxu0
  %v1889 = vadd.f32 %v1819, %v1888
  %1890 = vmatmul.bf16.gmra.mxu0 %v1853
  %v1891 = vpop.f32.mrf.mxu0
  %v1892 = vadd.f32 %v1819, %v1891
  %v1893 = vpop.f32.mrf.mxu0
  %v1894 = vadd.f32 %v1819, %v1893
  %1895 = vmatmul.bf16.gmra.mxu0 %v1856
  %v1896 = vpop.f32.mrf.mxu0
  %v1897 = vadd.f32 %v1819, %v1896
  %v1898 = vpop.f32.mrf.mxu0
  %v1899 = vadd.f32 %v1819, %v1898
  %1900 = vmatmul.bf16.gmra.mxu0 %v1859
  %v1901 = vpop.f32.mrf.mxu0
  %v1902 = vadd.f32 %v1819, %v1901
  %v1903 = vpop.f32.mrf.mxu0
  %v1904 = vadd.f32 %v1819, %v1903
  %1905 = vmatmul.bf16.gmra.mxu0 %v1862
  %v1906 = vpop.f32.mrf.mxu0
  %v1907 = vadd.f32 %v1819, %v1906
  %v1908 = vpop.f32.mrf.mxu0
  %v1909 = vadd.f32 %v1819, %v1908
  %1910 = vmatmul.bf16.gmra.mxu0 %v1865
  %v1911 = vpop.f32.mrf.mxu0
  %v1912 = vadd.f32 %v1819, %v1911
  %v1913 = vpop.f32.mrf.mxu0
  %v1914 = vadd.f32 %v1819, %v1913
  %1915 = vmatmul.bf16.gmra.mxu0 %v1868
  %v1916 = vpop.f32.mrf.mxu0
  %v1917 = vadd.f32 %v1819, %v1916
  %v1918 = vpop.f32.mrf.mxu0
  %v1919 = vadd.f32 %v1819, %v1918
  %1920 = vmatmul.bf16.gmra.mxu0 %v1871
  %v1921 = vpop.f32.mrf.mxu0
  %v1922 = vadd.f32 %v1819, %v1921
  %v1923 = vpop.f32.mrf.mxu0
  %v1924 = vadd.f32 %v1819, %v1923
  %1925 = vdwg.mxu0
  %v1926 = vsub.f32 0.0, %v1887
  %v1927 = vsub.f32 0.0, %v1889
  %v1928 = vsub.f32 0.0, %v1892
  %v1929 = vsub.f32 0.0, %v1894
  %v1930 = vsub.f32 0.0, %v1897
  %v1931 = vsub.f32 0.0, %v1899
  %v1932 = vsub.f32 0.0, %v1902
  %v1933 = vsub.f32 0.0, %v1904
  %v1934 = vsub.f32 0.0, %v1907
  %v1935 = vsub.f32 0.0, %v1909
  %v1936 = vsub.f32 0.0, %v1912
  %v1937 = vsub.f32 0.0, %v1914
  %v1938 = vsub.f32 0.0, %v1917
  %v1939 = vsub.f32 0.0, %v1919
  %v1940 = vsub.f32 0.0, %v1922
  %v1941 = vsub.f32 0.0, %v1924
  %v1942 = vmul.f32 %v1926, 1.442695
  %v1943 = vpow.pop %v1942
  %v1944 = vmul.f32 %v1927, 1.442695
  %v1945 = vpow.pop %v1944
  %v1946 = vmul.f32 %v1928, 1.442695
  %v1947 = vpow.pop %v1946
  %v1948 = vmul.f32 %v1929, 1.442695
  %v1949 = vpow.pop %v1948
  %v1950 = vmul.f32 %v1930, 1.442695
  %v1951 = vpow.pop %v1950
  %v1952 = vmul.f32 %v1931, 1.442695
  %v1953 = vpow.pop %v1952
  %v1954 = vmul.f32 %v1932, 1.442695
  %v1955 = vpow.pop %v1954
  %v1956 = vmul.f32 %v1933, 1.442695
  %v1957 = vpow.pop %v1956
  %v1958 = vmul.f32 %v1934, 1.442695
  %v1959 = vpow.pop %v1958
  %v1960 = vmul.f32 %v1935, 1.442695
  %v1961 = vpow.pop %v1960
  %v1962 = vmul.f32 %v1936, 1.442695
  %v1963 = vpow.pop %v1962
  %v1964 = vmul.f32 %v1937, 1.442695
  %v1965 = vpow.pop %v1964
  %v1966 = vmul.f32 %v1938, 1.442695
  %v1967 = vpow.pop %v1966
  %v1968 = vmul.f32 %v1939, 1.442695
  %v1969 = vpow.pop %v1968
  %v1970 = vmul.f32 %v1940, 1.442695
  %v1971 = vpow.pop %v1970
  %v1972 = vmul.f32 %v1941, 1.442695
  %v1973 = vpow.pop %v1972
  %v1974 = vadd.f32 %v1943, 1.0
  %v1975 = vadd.f32 %v1945, 1.0
  %v1976 = vadd.f32 %v1947, 1.0
  %v1977 = vadd.f32 %v1949, 1.0
  %v1978 = vadd.f32 %v1951, 1.0
  %v1979 = vadd.f32 %v1953, 1.0
  %v1980 = vadd.f32 %v1955, 1.0
  %v1981 = vadd.f32 %v1957, 1.0
  %v1982 = vadd.f32 %v1959, 1.0
  %v1983 = vadd.f32 %v1961, 1.0
  %v1984 = vadd.f32 %v1963, 1.0
  %v1985 = vadd.f32 %v1965, 1.0
  %v1986 = vadd.f32 %v1967, 1.0
  %v1987 = vadd.f32 %v1969, 1.0
  %v1988 = vadd.f32 %v1971, 1.0
  %v1989 = vadd.f32 %v1973, 1.0
  %v1990 = vrcp.pop %v1974
  %v1991 = vrcp.pop %v1975
  %v1992 = vrcp.pop %v1976
  %v1993 = vrcp.pop %v1977
  %v1994 = vrcp.pop %v1978
  %v1995 = vrcp.pop %v1979
  %v1996 = vrcp.pop %v1980
  %v1997 = vrcp.pop %v1981
  %v1998 = vrcp.pop %v1982
  %v1999 = vrcp.pop %v1983
  %v2000 = vrcp.pop %v1984
  %v2001 = vrcp.pop %v1985
  %v2002 = vrcp.pop %v1986
  %v2003 = vrcp.pop %v1987
  %v2004 = vrcp.pop %v1988
  %v2005 = vrcp.pop %v1989
  %v2006 = vmul.f32 %v1887, %v1990
  %v2007 = vmul.f32 %v1889, %v1991
  %v2008 = vmul.f32 %v1892, %v1992
  %v2009 = vmul.f32 %v1894, %v1993
  %v2010 = vmul.f32 %v1897, %v1994
  %v2011 = vmul.f32 %v1899, %v1995
  %v2012 = vmul.f32 %v1902, %v1996
  %v2013 = vmul.f32 %v1904, %v1997
  %v2014 = vmul.f32 %v1907, %v1998
  %v2015 = vmul.f32 %v1909, %v1999
  %v2016 = vmul.f32 %v1912, %v2000
  %v2017 = vmul.f32 %v1914, %v2001
  %v2018 = vmul.f32 %v1917, %v2002
  %v2019 = vmul.f32 %v1919, %v2003
  %v2020 = vmul.f32 %v1922, %v2004
  %v2021 = vmul.f32 %v1924, %v2005
  %v2022 = vld [vmem:[%s5] sm:$0xf]
  %v2023 = vld [vmem:[%s5 + $0x4] sm:$0xf]
  %v2024 = vpack.c.bf16 %v2007, %v2006
  %v2025 = vpack.c.bf16 %v2009, %v2008
  %v2026 = vpack.c.bf16 %v2011, %v2010
  %v2027 = vpack.c.bf16 %v2013, %v2012
  %v2028 = vpack.c.bf16 %v2015, %v2014
  %v2029 = vpack.c.bf16 %v2017, %v2016
  %v2030 = vpack.c.bf16 %v2019, %v2018
  %v2031 = vpack.c.bf16 %v2021, %v2020
  %v2032 = vld [vmem:[%s6] sm:$0x1]
  %v2034 = vperm.slane %v2032, 0
  %v2038 = vunpack.c.l.b16 %v2022
  %v2039 = vunpack.c.l.b16 %v2023
  %v2040 = vpack.c.b16 %v2039, %v2038
  %vm2042 = vcmask 130048
  %v2044 = vsel %vm2042, %v2024, 0
  %v2047 = vsel %vm2042, %v2025, 0
  %v2050 = vsel %vm2042, %v2026, 0
  %v2053 = vsel %vm2042, %v2027, 0
  %v2056 = vsel %vm2042, %v2028, 0
  %v2059 = vsel %vm2042, %v2029, 0
  %v2062 = vsel %vm2042, %v2030, 0
  %v2065 = vsel %vm2042, %v2031, 0
  %2067 = vmatpush.bf16.msra.mxu0 0
  %2068 = vmatpush.bf16.msra.mxu0 0
  %2069 = vmatpush.bf16.msra.mxu0 0
  %2070 = vmatpush.bf16.msra.mxu0 0
  %2071 = vmatpush.bf16.msra.mxu0 0
  %2072 = vmatpush.bf16.msra.mxu0 0
  %2073 = vmatpush.bf16.msra.mxu0 0
  %2074 = vmatpush.bf16.msra.mxu0 %v2040
  %2075 = vmatmul.bf16.gmra.mxu0 %v2044
  %v2076 = vpop.f32.mrf.mxu0
  %v2077 = vadd.f32 %v2034, %v2076
  %v2078 = vpop.f32.mrf.mxu0
  %v2079 = vadd.f32 %v2034, %v2078
  %2080 = vmatmul.bf16.gmra.mxu0 %v2047
  %v2081 = vpop.f32.mrf.mxu0
  %v2082 = vadd.f32 %v2034, %v2081
  %v2083 = vpop.f32.mrf.mxu0
  %v2084 = vadd.f32 %v2034, %v2083
  %2085 = vmatmul.bf16.gmra.mxu0 %v2050
  %v2086 = vpop.f32.mrf.mxu0
  %v2087 = vadd.f32 %v2034, %v2086
  %v2088 = vpop.f32.mrf.mxu0
  %v2089 = vadd.f32 %v2034, %v2088
  %2090 = vmatmul.bf16.gmra.mxu0 %v2053
  %v2091 = vpop.f32.mrf.mxu0
  %v2092 = vadd.f32 %v2034, %v2091
  %v2093 = vpop.f32.mrf.mxu0
  %v2094 = vadd.f32 %v2034, %v2093
  %2095 = vmatmul.bf16.gmra.mxu0 %v2056
  %v2096 = vpop.f32.mrf.mxu0
  %v2097 = vadd.f32 %v2034, %v2096
  %v2098 = vpop.f32.mrf.mxu0
  %v2099 = vadd.f32 %v2034, %v2098
  %2100 = vmatmul.bf16.gmra.mxu0 %v2059
  %v2101 = vpop.f32.mrf.mxu0
  %v2102 = vadd.f32 %v2034, %v2101
  %v2103 = vpop.f32.mrf.mxu0
  %v2104 = vadd.f32 %v2034, %v2103
  %2105 = vmatmul.bf16.gmra.mxu0 %v2062
  %v2106 = vpop.f32.mrf.mxu0
  %v2107 = vadd.f32 %v2034, %v2106
  %v2108 = vpop.f32.mrf.mxu0
  %v2109 = vadd.f32 %v2034, %v2108
  %2110 = vmatmul.bf16.gmra.mxu0 %v2065
  %v2111 = vpop.f32.mrf.mxu0
  %v2112 = vadd.f32 %v2034, %v2111
  %v2113 = vpop.f32.mrf.mxu0
  %v2114 = vadd.f32 %v2034, %v2113
  %2115 = vdwg.mxu0
  %v2116 = vsub.f32 0.0, %v2077
  %v2117 = vsub.f32 0.0, %v2079
  %v2118 = vsub.f32 0.0, %v2082
  %v2119 = vsub.f32 0.0, %v2084
  %v2120 = vsub.f32 0.0, %v2087
  %v2121 = vsub.f32 0.0, %v2089
  %v2122 = vsub.f32 0.0, %v2092
  %v2123 = vsub.f32 0.0, %v2094
  %v2124 = vsub.f32 0.0, %v2097
  %v2125 = vsub.f32 0.0, %v2099
  %v2126 = vsub.f32 0.0, %v2102
  %v2127 = vsub.f32 0.0, %v2104
  %v2128 = vsub.f32 0.0, %v2107
  %v2129 = vsub.f32 0.0, %v2109
  %v2130 = vsub.f32 0.0, %v2112
  %v2131 = vsub.f32 0.0, %v2114
  %v2132 = vmul.f32 %v2116, 1.442695
  %v2133 = vpow.pop %v2132
  %v2134 = vmul.f32 %v2117, 1.442695
  %v2135 = vpow.pop %v2134
  %v2136 = vmul.f32 %v2118, 1.442695
  %v2137 = vpow.pop %v2136
  %v2138 = vmul.f32 %v2119, 1.442695
  %v2139 = vpow.pop %v2138
  %v2140 = vmul.f32 %v2120, 1.442695
  %v2141 = vpow.pop %v2140
  %v2142 = vmul.f32 %v2121, 1.442695
  %v2143 = vpow.pop %v2142
  %v2144 = vmul.f32 %v2122, 1.442695
  %v2145 = vpow.pop %v2144
  %v2146 = vmul.f32 %v2123, 1.442695
  %v2147 = vpow.pop %v2146
  %v2148 = vmul.f32 %v2124, 1.442695
  %v2149 = vpow.pop %v2148
  %v2150 = vmul.f32 %v2125, 1.442695
  %v2151 = vpow.pop %v2150
  %v2152 = vmul.f32 %v2126, 1.442695
  %v2153 = vpow.pop %v2152
  %v2154 = vmul.f32 %v2127, 1.442695
  %v2155 = vpow.pop %v2154
  %v2156 = vmul.f32 %v2128, 1.442695
  %v2157 = vpow.pop %v2156
  %v2158 = vmul.f32 %v2129, 1.442695
  %v2159 = vpow.pop %v2158
  %v2160 = vmul.f32 %v2130, 1.442695
  %v2161 = vpow.pop %v2160
  %v2162 = vmul.f32 %v2131, 1.442695
  %v2163 = vpow.pop %v2162
  %v2164 = vadd.f32 %v2133, 1.0
  %v2165 = vadd.f32 %v2135, 1.0
  %v2166 = vadd.f32 %v2137, 1.0
  %v2167 = vadd.f32 %v2139, 1.0
  %v2168 = vadd.f32 %v2141, 1.0
  %v2169 = vadd.f32 %v2143, 1.0
  %v2170 = vadd.f32 %v2145, 1.0
  %v2171 = vadd.f32 %v2147, 1.0
  %v2172 = vadd.f32 %v2149, 1.0
  %v2173 = vadd.f32 %v2151, 1.0
  %v2174 = vadd.f32 %v2153, 1.0
  %v2175 = vadd.f32 %v2155, 1.0
  %v2176 = vadd.f32 %v2157, 1.0
  %v2177 = vadd.f32 %v2159, 1.0
  %v2178 = vadd.f32 %v2161, 1.0
  %v2179 = vadd.f32 %v2163, 1.0
  %v2180 = vrcp.pop %v2164
  %v2181 = vrcp.pop %v2165
  %v2182 = vrcp.pop %v2166
  %v2183 = vrcp.pop %v2167
  %v2184 = vrcp.pop %v2168
  %v2185 = vrcp.pop %v2169
  %v2186 = vrcp.pop %v2170
  %v2187 = vrcp.pop %v2171
  %v2188 = vrcp.pop %v2172
  %v2189 = vrcp.pop %v2173
  %v2190 = vrcp.pop %v2174
  %v2191 = vrcp.pop %v2175
  %v2192 = vrcp.pop %v2176
  %v2193 = vrcp.pop %v2177
  %v2194 = vrcp.pop %v2178
  %v2195 = vrcp.pop %v2179
  %v2196 = vmul.f32 %v2077, %v2180
  %v2197 = vmul.f32 %v2079, %v2181
  %v2198 = vmul.f32 %v2082, %v2182
  %v2199 = vmul.f32 %v2084, %v2183
  %v2200 = vmul.f32 %v2087, %v2184
  %v2201 = vmul.f32 %v2089, %v2185
  %v2202 = vmul.f32 %v2092, %v2186
  %v2203 = vmul.f32 %v2094, %v2187
  %v2204 = vmul.f32 %v2097, %v2188
  %v2205 = vmul.f32 %v2099, %v2189
  %v2206 = vmul.f32 %v2102, %v2190
  %v2207 = vmul.f32 %v2104, %v2191
  %v2208 = vmul.f32 %v2107, %v2192
  %v2209 = vmul.f32 %v2109, %v2193
  %v2210 = vmul.f32 %v2112, %v2194
  %v2211 = vmul.f32 %v2114, %v2195
  %v2212 = vld [vmem:[%s7] sm:$0xf]
  %v2213 = vpack.c.bf16 %v2197, %v2196
  %v2214 = vpack.c.bf16 %v2199, %v2198
  %v2215 = vpack.c.bf16 %v2201, %v2200
  %v2216 = vpack.c.bf16 %v2203, %v2202
  %v2217 = vpack.c.bf16 %v2205, %v2204
  %v2218 = vpack.c.bf16 %v2207, %v2206
  %v2219 = vpack.c.bf16 %v2209, %v2208
  %v2220 = vpack.c.bf16 %v2211, %v2210
  %v2221 = vld [vmem:[%s8] sm:$0x1]
  %v2223 = vperm.slane %v2221, 0
  %v2226 = vsel %vm934, %v2213, 0
  %v2229 = vsel %vm934, %v2214, 0
  %v2232 = vsel %vm934, %v2215, 0
  %v2235 = vsel %vm934, %v2216, 0
  %v2238 = vsel %vm934, %v2217, 0
  %v2241 = vsel %vm934, %v2218, 0
  %v2244 = vsel %vm934, %v2219, 0
  %v2247 = vsel %vm934, %v2220, 0
  %v2250 = vsel %vm1873, %v2212, 0
  %2252 = vmatpush.bf16.msra.mxu0 0
  %2253 = vmatpush.bf16.msra.mxu0 0
  %2254 = vmatpush.bf16.msra.mxu0 0
  %2255 = vmatpush.bf16.msra.mxu0 0
  %2256 = vmatpush.bf16.msra.mxu0 0
  %2257 = vmatpush.bf16.msra.mxu0 0
  %2258 = vmatpush.bf16.msra.mxu0 0
  %2259 = vmatpush.bf16.msra.mxu0 %v2250
  %2260 = vmatmul.bf16.gmra.mxu0 %v2226
  %v2261 = vpop.f32.mrf.mxu0
  %v2262 = vadd.f32 %v2223, %v2261
  %v2263 = vpop.f32.mrf.mxu0
  %v2264 = vadd.f32 %v2223, %v2263
  %2265 = vmatmul.bf16.gmra.mxu0 %v2229
  %v2266 = vpop.f32.mrf.mxu0
  %v2267 = vadd.f32 %v2223, %v2266
  %v2268 = vpop.f32.mrf.mxu0
  %v2269 = vadd.f32 %v2223, %v2268
  %2270 = vmatmul.bf16.gmra.mxu0 %v2232
  %v2271 = vpop.f32.mrf.mxu0
  %v2272 = vadd.f32 %v2223, %v2271
  %v2273 = vpop.f32.mrf.mxu0
  %v2274 = vadd.f32 %v2223, %v2273
  %2275 = vmatmul.bf16.gmra.mxu0 %v2235
  %v2276 = vpop.f32.mrf.mxu0
  %v2277 = vadd.f32 %v2223, %v2276
  %v2278 = vpop.f32.mrf.mxu0
  %v2279 = vadd.f32 %v2223, %v2278
  %2280 = vmatmul.bf16.gmra.mxu0 %v2238
  %v2281 = vpop.f32.mrf.mxu0
  %v2282 = vadd.f32 %v2223, %v2281
  %v2283 = vpop.f32.mrf.mxu0
  %v2284 = vadd.f32 %v2223, %v2283
  %2285 = vmatmul.bf16.gmra.mxu0 %v2241
  %v2286 = vpop.f32.mrf.mxu0
  %v2287 = vadd.f32 %v2223, %v2286
  %v2288 = vpop.f32.mrf.mxu0
  %v2289 = vadd.f32 %v2223, %v2288
  %2290 = vmatmul.bf16.gmra.mxu0 %v2244
  %v2291 = vpop.f32.mrf.mxu0
  %v2292 = vadd.f32 %v2223, %v2291
  %v2293 = vpop.f32.mrf.mxu0
  %v2294 = vadd.f32 %v2223, %v2293
  %2295 = vmatmul.bf16.gmra.mxu0 %v2247
  %v2296 = vpop.f32.mrf.mxu0
  %v2297 = vadd.f32 %v2223, %v2296
  %v2298 = vpop.f32.mrf.mxu0
  %v2299 = vadd.f32 %v2223, %v2298
  %2300 = vdwg.mxu0
  %v2301 = vsub.f32 0.0, %v2262
  %v2302 = vsub.f32 0.0, %v2264
  %v2303 = vsub.f32 0.0, %v2267
  %v2304 = vsub.f32 0.0, %v2269
  %v2305 = vsub.f32 0.0, %v2272
  %v2306 = vsub.f32 0.0, %v2274
  %v2307 = vsub.f32 0.0, %v2277
  %v2308 = vsub.f32 0.0, %v2279
  %v2309 = vsub.f32 0.0, %v2282
  %v2310 = vsub.f32 0.0, %v2284
  %v2311 = vsub.f32 0.0, %v2287
  %v2312 = vsub.f32 0.0, %v2289
  %v2313 = vsub.f32 0.0, %v2292
  %v2314 = vsub.f32 0.0, %v2294
  %v2315 = vsub.f32 0.0, %v2297
  %v2316 = vsub.f32 0.0, %v2299
  %v2317 = vmul.f32 %v2301, 1.442695
  %v2318 = vpow.pop %v2317
  %v2319 = vmul.f32 %v2302, 1.442695
  %v2320 = vpow.pop %v2319
  %v2321 = vmul.f32 %v2303, 1.442695
  %v2322 = vpow.pop %v2321
  %v2323 = vmul.f32 %v2304, 1.442695
  %v2324 = vpow.pop %v2323
  %v2325 = vmul.f32 %v2305, 1.442695
  %v2326 = vpow.pop %v2325
  %v2327 = vmul.f32 %v2306, 1.442695
  %v2328 = vpow.pop %v2327
  %v2329 = vmul.f32 %v2307, 1.442695
  %v2330 = vpow.pop %v2329
  %v2331 = vmul.f32 %v2308, 1.442695
  %v2332 = vpow.pop %v2331
  %v2333 = vmul.f32 %v2309, 1.442695
  %v2334 = vpow.pop %v2333
  %v2335 = vmul.f32 %v2310, 1.442695
  %v2336 = vpow.pop %v2335
  %v2337 = vmul.f32 %v2311, 1.442695
  %v2338 = vpow.pop %v2337
  %v2339 = vmul.f32 %v2312, 1.442695
  %v2340 = vpow.pop %v2339
  %v2341 = vmul.f32 %v2313, 1.442695
  %v2342 = vpow.pop %v2341
  %v2343 = vmul.f32 %v2314, 1.442695
  %v2344 = vpow.pop %v2343
  %v2345 = vmul.f32 %v2315, 1.442695
  %v2346 = vpow.pop %v2345
  %v2347 = vmul.f32 %v2316, 1.442695
  %v2348 = vpow.pop %v2347
  %v2349 = vadd.f32 %v2318, 1.0
  %v2350 = vadd.f32 %v2320, 1.0
  %v2351 = vadd.f32 %v2322, 1.0
  %v2352 = vadd.f32 %v2324, 1.0
  %v2353 = vadd.f32 %v2326, 1.0
  %v2354 = vadd.f32 %v2328, 1.0
  %v2355 = vadd.f32 %v2330, 1.0
  %v2356 = vadd.f32 %v2332, 1.0
  %v2357 = vadd.f32 %v2334, 1.0
  %v2358 = vadd.f32 %v2336, 1.0
  %v2359 = vadd.f32 %v2338, 1.0
  %v2360 = vadd.f32 %v2340, 1.0
  %v2361 = vadd.f32 %v2342, 1.0
  %v2362 = vadd.f32 %v2344, 1.0
  %v2363 = vadd.f32 %v2346, 1.0
  %v2364 = vadd.f32 %v2348, 1.0
  %v2365 = vrcp.pop %v2349
  %v2366 = vrcp.pop %v2350
  %v2367 = vrcp.pop %v2351
  %v2368 = vrcp.pop %v2352
  %v2369 = vrcp.pop %v2353
  %v2370 = vrcp.pop %v2354
  %v2371 = vrcp.pop %v2355
  %v2372 = vrcp.pop %v2356
  %v2373 = vrcp.pop %v2357
  %v2374 = vrcp.pop %v2358
  %v2375 = vrcp.pop %v2359
  %v2376 = vrcp.pop %v2360
  %v2377 = vrcp.pop %v2361
  %v2378 = vrcp.pop %v2362
  %v2379 = vrcp.pop %v2363
  %v2380 = vrcp.pop %v2364
  %v2381 = vmul.f32 %v2262, %v2365
  %v2382 = vmul.f32 %v2264, %v2366
  %v2383 = vmul.f32 %v2267, %v2367
  %v2384 = vmul.f32 %v2269, %v2368
  %v2385 = vmul.f32 %v2272, %v2369
  %v2386 = vmul.f32 %v2274, %v2370
  %v2387 = vmul.f32 %v2277, %v2371
  %v2388 = vmul.f32 %v2279, %v2372
  %v2389 = vmul.f32 %v2282, %v2373
  %v2390 = vmul.f32 %v2284, %v2374
  %v2391 = vmul.f32 %v2287, %v2375
  %v2392 = vmul.f32 %v2289, %v2376
  %v2393 = vmul.f32 %v2292, %v2377
  %v2394 = vmul.f32 %v2294, %v2378
  %v2395 = vmul.f32 %v2297, %v2379
  %v2396 = vmul.f32 %v2299, %v2380
  %2397 = vst.msk [vmem:[#allocation4] sm:$0xff] %vm934, %v2381
  %2398 = vst.msk [vmem:[#allocation4 + $0x8] sm:$0xff] %vm934, %v2382
  %2399 = vst.msk [vmem:[#allocation4 + $0x10] sm:$0xff] %vm934, %v2383
  %2400 = vst.msk [vmem:[#allocation4 + $0x18] sm:$0xff] %vm934, %v2384
  %2401 = vst.msk [vmem:[#allocation4 + $0x20] sm:$0xff] %vm934, %v2385
  %2402 = vst.msk [vmem:[#allocation4 + $0x28] sm:$0xff] %vm934, %v2386
  %2403 = vst.msk [vmem:[#allocation4 + $0x30] sm:$0xff] %vm934, %v2387
  %2404 = vst.msk [vmem:[#allocation4 + $0x38] sm:$0xff] %vm934, %v2388
  %2405 = vst.msk [vmem:[#allocation4 + $0x40] sm:$0xff] %vm934, %v2389
  %2406 = vst.msk [vmem:[#allocation4 + $0x48] sm:$0xff] %vm934, %v2390
  %2407 = vst.msk [vmem:[#allocation4 + $0x50] sm:$0xff] %vm934, %v2391
  %2408 = vst.msk [vmem:[#allocation4 + $0x58] sm:$0xff] %vm934, %v2392
  %2409 = vst.msk [vmem:[#allocation4 + $0x60] sm:$0xff] %vm934, %v2393
  %2410 = vst.msk [vmem:[#allocation4 + $0x68] sm:$0xff] %vm934, %v2394
  %2411 = vst.msk [vmem:[#allocation4 + $0x70] sm:$0xff] %vm934, %v2395
  %2412 = vst.msk [vmem:[#allocation4 + $0x78] sm:$0xff] %vm934, %v2396
  %v2413 = vld [vmem:[#allocation4] sm:$0x7f]
  %v2414 = vld [vmem:[#allocation4 + $0x8] sm:$0x7f]
  %v2415 = vld [vmem:[#allocation4 + $0x10] sm:$0x7f]
  %v2416 = vld [vmem:[#allocation4 + $0x18] sm:$0x7f]
  %v2417 = vld [vmem:[#allocation4 + $0x20] sm:$0x7f]
  %v2418 = vld [vmem:[#allocation4 + $0x28] sm:$0x7f]
  %v2419 = vld [vmem:[#allocation4 + $0x30] sm:$0x7f]
  %v2420 = vld [vmem:[#allocation4 + $0x40] sm:$0x7f]
  %v2421 = vld [vmem:[#allocation4 + $0x48] sm:$0x7f]
  %v2422 = vld [vmem:[#allocation4 + $0x50] sm:$0x7f]
  %v2423 = vld [vmem:[#allocation4 + $0x58] sm:$0x7f]
  %v2424 = vld [vmem:[#allocation4 + $0x60] sm:$0x7f]
  %v2425 = vld [vmem:[#allocation4 + $0x68] sm:$0x7f]
  %v2426 = vld [vmem:[#allocation4 + $0x70] sm:$0x7f]
  %s2427 = scalar_lea.vmem [#allocation5], 8
  %2428 = vst.msk [vmem:[%s2427 + $0x1] sm:$0x7f] %vm1015, %v2413
  %2429 = vst.msk [vmem:[%s2427 + $0x9] sm:$0x7f] %vm1015, %v2414
  %2430 = vst.msk [vmem:[%s2427 + $0x11] sm:$0x7f] %vm1015, %v2415
  %2431 = vst.msk [vmem:[%s2427 + $0x19] sm:$0x7f] %vm1015, %v2416
  %2432 = vst.msk [vmem:[%s2427 + $0x21] sm:$0x7f] %vm1015, %v2417
  %2433 = vst.msk [vmem:[%s2427 + $0x29] sm:$0x7f] %vm1015, %v2418
  %2434 = vst.msk [vmem:[%s2427 + $0x31] sm:$0x7f] %vm1015, %v2419
  %2435 = vst.msk [vmem:[%s2427 + $0x41] sm:$0x7f] %vm1015, %v2420
  %2436 = vst.msk [vmem:[%s2427 + $0x49] sm:$0x7f] %vm1015, %v2421
  %2437 = vst.msk [vmem:[%s2427 + $0x51] sm:$0x7f] %vm1015, %v2422
  %2438 = vst.msk [vmem:[%s2427 + $0x59] sm:$0x7f] %vm1015, %v2423
  %2439 = vst.msk [vmem:[%s2427 + $0x61] sm:$0x7f] %vm1015, %v2424
  %2440 = vst.msk [vmem:[%s2427 + $0x69] sm:$0x7f] %vm1015, %v2425
  %2441 = vst.msk [vmem:[%s2427 + $0x71] sm:$0x7f] %vm1015, %v2426
  %v2442 = vld [vmem:[#allocation4] sm:$0xff]
  %v2443 = vld [vmem:[#allocation4 + $0x8] sm:$0xff]
  %v2444 = vld [vmem:[#allocation4 + $0x10] sm:$0xff]
  %v2445 = vld [vmem:[#allocation4 + $0x18] sm:$0xff]
  %v2446 = vld [vmem:[#allocation4 + $0x20] sm:$0xff]
  %v2447 = vld [vmem:[#allocation4 + $0x28] sm:$0xff]
  %v2448 = vld [vmem:[#allocation4 + $0x30] sm:$0xff]
  %v2449 = vld [vmem:[#allocation4 + $0x40] sm:$0xff]
  %v2450 = vld [vmem:[#allocation4 + $0x48] sm:$0xff]
  %v2451 = vld [vmem:[#allocation4 + $0x50] sm:$0xff]
  %v2452 = vld [vmem:[#allocation4 + $0x58] sm:$0xff]
  %v2453 = vld [vmem:[#allocation4 + $0x60] sm:$0xff]
  %v2454 = vld [vmem:[#allocation4 + $0x68] sm:$0xff]
  %v2455 = vld [vmem:[#allocation4 + $0x70] sm:$0xff]
  %2470 = vrot.lane.b32.xlu0 %v2442, 8
  %v2471 = vpop.permute.xlu0 %2470
  %2472 = vrot.lane.b32.xlu0 %v2443, 8
  %v2473 = vpop.permute.xlu0 %2472
  %2474 = vrot.lane.b32.xlu0 %v2444, 8
  %v2475 = vpop.permute.xlu0 %2474
  %2476 = vrot.lane.b32.xlu0 %v2445, 8
  %v2477 = vpop.permute.xlu0 %2476
  %2478 = vrot.lane.b32.xlu0 %v2446, 8
  %v2479 = vpop.permute.xlu0 %2478
  %2480 = vrot.lane.b32.xlu0 %v2447, 8
  %v2481 = vpop.permute.xlu0 %2480
  %2482 = vrot.lane.b32.xlu0 %v2448, 8
  %v2483 = vpop.permute.xlu0 %2482
  %2484 = vrot.lane.b32.xlu0 %v2449, 8
  %v2485 = vpop.permute.xlu0 %2484
  %2486 = vrot.lane.b32.xlu0 %v2450, 8
  %v2487 = vpop.permute.xlu0 %2486
  %2488 = vrot.lane.b32.xlu0 %v2451, 8
  %v2489 = vpop.permute.xlu0 %2488
  %2490 = vrot.lane.b32.xlu0 %v2452, 8
  %v2491 = vpop.permute.xlu0 %2490
  %2492 = vrot.lane.b32.xlu0 %v2453, 8
  %v2493 = vpop.permute.xlu0 %2492
  %2494 = vrot.lane.b32.xlu0 %v2454, 8
  %v2495 = vpop.permute.xlu0 %2494
  %2496 = vrot.lane.b32.xlu0 %v2455, 8
  %v2497 = vpop.permute.xlu0 %2496
  %2512 = vst.msk [vmem:[%s2427] sm:$0xff] %vm1101, %v2471
  %2513 = vst.msk [vmem:[%s2427 + $0x8] sm:$0xff] %vm1101, %v2473
  %2514 = vst.msk [vmem:[%s2427 + $0x10] sm:$0xff] %vm1101, %v2475
  %2515 = vst.msk [vmem:[%s2427 + $0x18] sm:$0xff] %vm1101, %v2477
  %2516 = vst.msk [vmem:[%s2427 + $0x20] sm:$0xff] %vm1101, %v2479
  %2517 = vst.msk [vmem:[%s2427 + $0x28] sm:$0xff] %vm1101, %v2481
  %2518 = vst.msk [vmem:[%s2427 + $0x30] sm:$0xff] %vm1101, %v2483
  %2519 = vst.msk [vmem:[%s2427 + $0x40] sm:$0xff] %vm1101, %v2485
  %2520 = vst.msk [vmem:[%s2427 + $0x48] sm:$0xff] %vm1101, %v2487
  %2521 = vst.msk [vmem:[%s2427 + $0x50] sm:$0xff] %vm1101, %v2489
  %2522 = vst.msk [vmem:[%s2427 + $0x58] sm:$0xff] %vm1101, %v2491
  %2523 = vst.msk [vmem:[%s2427 + $0x60] sm:$0xff] %vm1101, %v2493
  %2524 = vst.msk [vmem:[%s2427 + $0x68] sm:$0xff] %vm1101, %v2495
  %2525 = vst.msk [vmem:[%s2427 + $0x70] sm:$0xff] %vm1101, %v2497
  %v2526 = vld [vmem:[#allocation4 + $0x1] sm:$0x7f]
  %v2527 = vld [vmem:[#allocation4 + $0x9] sm:$0x7f]
  %v2528 = vld [vmem:[#allocation4 + $0x11] sm:$0x7f]
  %v2529 = vld [vmem:[#allocation4 + $0x19] sm:$0x7f]
  %v2530 = vld [vmem:[#allocation4 + $0x21] sm:$0x7f]
  %v2531 = vld [vmem:[#allocation4 + $0x29] sm:$0x7f]
  %v2532 = vld [vmem:[#allocation4 + $0x31] sm:$0x7f]
  %v2533 = vld [vmem:[#allocation4 + $0x41] sm:$0x7f]
  %v2534 = vld [vmem:[#allocation4 + $0x49] sm:$0x7f]
  %v2535 = vld [vmem:[#allocation4 + $0x51] sm:$0x7f]
  %v2536 = vld [vmem:[#allocation4 + $0x59] sm:$0x7f]
  %v2537 = vld [vmem:[#allocation4 + $0x61] sm:$0x7f]
  %v2538 = vld [vmem:[#allocation4 + $0x69] sm:$0x7f]
  %v2539 = vld [vmem:[#allocation4 + $0x71] sm:$0x7f]
  %2554 = vrot.lane.b32.xlu0 %v2526, 16
  %v2555 = vpop.permute.xlu0 %2554
  %2556 = vrot.lane.b32.xlu0 %v2527, 16
  %v2557 = vpop.permute.xlu0 %2556
  %2558 = vrot.lane.b32.xlu0 %v2528, 16
  %v2559 = vpop.permute.xlu0 %2558
  %2560 = vrot.lane.b32.xlu0 %v2529, 16
  %v2561 = vpop.permute.xlu0 %2560
  %2562 = vrot.lane.b32.xlu0 %v2530, 16
  %v2563 = vpop.permute.xlu0 %2562
  %2564 = vrot.lane.b32.xlu0 %v2531, 16
  %v2565 = vpop.permute.xlu0 %2564
  %2566 = vrot.lane.b32.xlu0 %v2532, 16
  %v2567 = vpop.permute.xlu0 %2566
  %2568 = vrot.lane.b32.xlu0 %v2533, 16
  %v2569 = vpop.permute.xlu0 %2568
  %2570 = vrot.lane.b32.xlu0 %v2534, 16
  %v2571 = vpop.permute.xlu0 %2570
  %2572 = vrot.lane.b32.xlu0 %v2535, 16
  %v2573 = vpop.permute.xlu0 %2572
  %2574 = vrot.lane.b32.xlu0 %v2536, 16
  %v2575 = vpop.permute.xlu0 %2574
  %2576 = vrot.lane.b32.xlu0 %v2537, 16
  %v2577 = vpop.permute.xlu0 %2576
  %2578 = vrot.lane.b32.xlu0 %v2538, 16
  %v2579 = vpop.permute.xlu0 %2578
  %2580 = vrot.lane.b32.xlu0 %v2539, 16
  %v2581 = vpop.permute.xlu0 %2580
  %vm2596 = vcmask 194688
  %2597 = vst.msk [vmem:[%s2427] sm:$0x7f] %vm2596, %v2555
  %2598 = vst.msk [vmem:[%s2427 + $0x8] sm:$0x7f] %vm2596, %v2557
  %2599 = vst.msk [vmem:[%s2427 + $0x10] sm:$0x7f] %vm2596, %v2559
  %2600 = vst.msk [vmem:[%s2427 + $0x18] sm:$0x7f] %vm2596, %v2561
  %2601 = vst.msk [vmem:[%s2427 + $0x20] sm:$0x7f] %vm2596, %v2563
  %2602 = vst.msk [vmem:[%s2427 + $0x28] sm:$0x7f] %vm2596, %v2565
  %2603 = vst.msk [vmem:[%s2427 + $0x30] sm:$0x7f] %vm2596, %v2567
  %2604 = vst.msk [vmem:[%s2427 + $0x40] sm:$0x7f] %vm2596, %v2569
  %2605 = vst.msk [vmem:[%s2427 + $0x48] sm:$0x7f] %vm2596, %v2571
  %2606 = vst.msk [vmem:[%s2427 + $0x50] sm:$0x7f] %vm2596, %v2573
  %2607 = vst.msk [vmem:[%s2427 + $0x58] sm:$0x7f] %vm2596, %v2575
  %2608 = vst.msk [vmem:[%s2427 + $0x60] sm:$0x7f] %vm2596, %v2577
  %2609 = vst.msk [vmem:[%s2427 + $0x68] sm:$0x7f] %vm2596, %v2579
  %2610 = vst.msk [vmem:[%s2427 + $0x70] sm:$0x7f] %vm2596, %v2581
  %v2611 = vld [vmem:[#allocation4] sm:$0x7f]
  %v2612 = vld [vmem:[#allocation4 + $0x8] sm:$0x7f]
  %v2613 = vld [vmem:[#allocation4 + $0x10] sm:$0x7f]
  %v2614 = vld [vmem:[#allocation4 + $0x18] sm:$0x7f]
  %v2615 = vld [vmem:[#allocation4 + $0x20] sm:$0x7f]
  %v2616 = vld [vmem:[#allocation4 + $0x28] sm:$0x7f]
  %v2617 = vld [vmem:[#allocation4 + $0x30] sm:$0x7f]
  %v2618 = vld [vmem:[#allocation4 + $0x38] sm:$0x7f]
  %v2619 = vld [vmem:[#allocation4 + $0x40] sm:$0x7f]
  %v2620 = vld [vmem:[#allocation4 + $0x48] sm:$0x7f]
  %v2621 = vld [vmem:[#allocation4 + $0x50] sm:$0x7f]
  %v2622 = vld [vmem:[#allocation4 + $0x58] sm:$0x7f]
  %v2623 = vld [vmem:[#allocation4 + $0x60] sm:$0x7f]
  %v2624 = vld [vmem:[#allocation4 + $0x68] sm:$0x7f]
  %v2625 = vld [vmem:[#allocation4 + $0x70] sm:$0x7f]
  %v2626 = vld [vmem:[#allocation4 + $0x78] sm:$0x7f]
  %2643 = vrot.lane.b32.xlu0 %v2611, 24
  %v2644 = vpop.permute.xlu0 %2643
  %2645 = vrot.lane.b32.xlu0 %v2612, 24
  %v2646 = vpop.permute.xlu0 %2645
  %2647 = vrot.lane.b32.xlu0 %v2613, 24
  %v2648 = vpop.permute.xlu0 %2647
  %2649 = vrot.lane.b32.xlu0 %v2614, 24
  %v2650 = vpop.permute.xlu0 %2649
  %2651 = vrot.lane.b32.xlu0 %v2615, 24
  %v2652 = vpop.permute.xlu0 %2651
  %2653 = vrot.lane.b32.xlu0 %v2616, 24
  %v2654 = vpop.permute.xlu0 %2653
  %2655 = vrot.lane.b32.xlu0 %v2617, 24
  %v2656 = vpop.permute.xlu0 %2655
  %2657 = vrot.lane.b32.xlu0 %v2618, 24
  %v2658 = vpop.permute.xlu0 %2657
  %2659 = vrot.lane.b32.xlu0 %v2619, 24
  %v2660 = vpop.permute.xlu0 %2659
  %2661 = vrot.lane.b32.xlu0 %v2620, 24
  %v2662 = vpop.permute.xlu0 %2661
  %2663 = vrot.lane.b32.xlu0 %v2621, 24
  %v2664 = vpop.permute.xlu0 %2663
  %2665 = vrot.lane.b32.xlu0 %v2622, 24
  %v2666 = vpop.permute.xlu0 %2665
  %2667 = vrot.lane.b32.xlu0 %v2623, 24
  %v2668 = vpop.permute.xlu0 %2667
  %2669 = vrot.lane.b32.xlu0 %v2624, 24
  %v2670 = vpop.permute.xlu0 %2669
  %2671 = vrot.lane.b32.xlu0 %v2625, 24
  %v2672 = vpop.permute.xlu0 %2671
  %2673 = vrot.lane.b32.xlu0 %v2626, 24
  %v2674 = vpop.permute.xlu0 %2673
  %2691 = vst.msk [vmem:[#allocation5 + $0x1] sm:$0x7f] %vm1282, %v2644
  %2692 = vst.msk [vmem:[#allocation5 + $0x9] sm:$0x7f] %vm1282, %v2646
  %2693 = vst.msk [vmem:[#allocation5 + $0x11] sm:$0x7f] %vm1282, %v2648
  %2694 = vst.msk [vmem:[#allocation5 + $0x19] sm:$0x7f] %vm1282, %v2650
  %2695 = vst.msk [vmem:[#allocation5 + $0x21] sm:$0x7f] %vm1282, %v2652
  %2696 = vst.msk [vmem:[#allocation5 + $0x29] sm:$0x7f] %vm1282, %v2654
  %2697 = vst.msk [vmem:[#allocation5 + $0x31] sm:$0x7f] %vm1282, %v2656
  %2698 = vst.msk [vmem:[#allocation5 + $0x39] sm:$0x7f] %vm1282, %v2658
  %2699 = vst.msk [vmem:[#allocation5 + $0x41] sm:$0x7f] %vm1282, %v2660
  %2700 = vst.msk [vmem:[#allocation5 + $0x49] sm:$0x7f] %vm1282, %v2662
  %2701 = vst.msk [vmem:[#allocation5 + $0x51] sm:$0x7f] %vm1282, %v2664
  %2702 = vst.msk [vmem:[#allocation5 + $0x59] sm:$0x7f] %vm1282, %v2666
  %2703 = vst.msk [vmem:[#allocation5 + $0x61] sm:$0x7f] %vm1282, %v2668
  %2704 = vst.msk [vmem:[#allocation5 + $0x69] sm:$0x7f] %vm1282, %v2670
  %2705 = vst.msk [vmem:[#allocation5 + $0x71] sm:$0x7f] %vm1282, %v2672
  %2706 = vst.msk [vmem:[#allocation5 + $0x79] sm:$0x7f] %vm1282, %v2674
  %v2707 = vld [vmem:[#allocation4] sm:$0xff]
  %v2708 = vld [vmem:[#allocation4 + $0x8] sm:$0xff]
  %v2709 = vld [vmem:[#allocation4 + $0x10] sm:$0xff]
  %v2710 = vld [vmem:[#allocation4 + $0x18] sm:$0xff]
  %v2711 = vld [vmem:[#allocation4 + $0x20] sm:$0xff]
  %v2712 = vld [vmem:[#allocation4 + $0x28] sm:$0xff]
  %v2713 = vld [vmem:[#allocation4 + $0x30] sm:$0xff]
  %v2714 = vld [vmem:[#allocation4 + $0x38] sm:$0xff]
  %v2715 = vld [vmem:[#allocation4 + $0x40] sm:$0xff]
  %v2716 = vld [vmem:[#allocation4 + $0x48] sm:$0xff]
  %v2717 = vld [vmem:[#allocation4 + $0x50] sm:$0xff]
  %v2718 = vld [vmem:[#allocation4 + $0x58] sm:$0xff]
  %v2719 = vld [vmem:[#allocation4 + $0x60] sm:$0xff]
  %v2720 = vld [vmem:[#allocation4 + $0x68] sm:$0xff]
  %v2721 = vld [vmem:[#allocation4 + $0x70] sm:$0xff]
  %v2722 = vld [vmem:[#allocation4 + $0x78] sm:$0xff]
  %2739 = vrot.lane.b32.xlu0 %v2707, 32
  %v2740 = vpop.permute.xlu0 %2739
  %2741 = vrot.lane.b32.xlu0 %v2708, 32
  %v2742 = vpop.permute.xlu0 %2741
  %2743 = vrot.lane.b32.xlu0 %v2709, 32
  %v2744 = vpop.permute.xlu0 %2743
  %2745 = vrot.lane.b32.xlu0 %v2710, 32
  %v2746 = vpop.permute.xlu0 %2745
  %2747 = vrot.lane.b32.xlu0 %v2711, 32
  %v2748 = vpop.permute.xlu0 %2747
  %2749 = vrot.lane.b32.xlu0 %v2712, 32
  %v2750 = vpop.permute.xlu0 %2749
  %2751 = vrot.lane.b32.xlu0 %v2713, 32
  %v2752 = vpop.permute.xlu0 %2751
  %2753 = vrot.lane.b32.xlu0 %v2714, 32
  %v2754 = vpop.permute.xlu0 %2753
  %2755 = vrot.lane.b32.xlu0 %v2715, 32
  %v2756 = vpop.permute.xlu0 %2755
  %2757 = vrot.lane.b32.xlu0 %v2716, 32
  %v2758 = vpop.permute.xlu0 %2757
  %2759 = vrot.lane.b32.xlu0 %v2717, 32
  %v2760 = vpop.permute.xlu0 %2759
  %2761 = vrot.lane.b32.xlu0 %v2718, 32
  %v2762 = vpop.permute.xlu0 %2761
  %2763 = vrot.lane.b32.xlu0 %v2719, 32
  %v2764 = vpop.permute.xlu0 %2763
  %2765 = vrot.lane.b32.xlu0 %v2720, 32
  %v2766 = vpop.permute.xlu0 %2765
  %2767 = vrot.lane.b32.xlu0 %v2721, 32
  %v2768 = vpop.permute.xlu0 %2767
  %2769 = vrot.lane.b32.xlu0 %v2722, 32
  %v2770 = vpop.permute.xlu0 %2769
  %2787 = vst.msk [vmem:[#allocation5] sm:$0xff] %vm1379, %v2740
  %2788 = vst.msk [vmem:[#allocation5 + $0x8] sm:$0xff] %vm1379, %v2742
  %2789 = vst.msk [vmem:[#allocation5 + $0x10] sm:$0xff] %vm1379, %v2744
  %2790 = vst.msk [vmem:[#allocation5 + $0x18] sm:$0xff] %vm1379, %v2746
  %2791 = vst.msk [vmem:[#allocation5 + $0x20] sm:$0xff] %vm1379, %v2748
  %2792 = vst.msk [vmem:[#allocation5 + $0x28] sm:$0xff] %vm1379, %v2750
  %2793 = vst.msk [vmem:[#allocation5 + $0x30] sm:$0xff] %vm1379, %v2752
  %2794 = vst.msk [vmem:[#allocation5 + $0x38] sm:$0xff] %vm1379, %v2754
  %2795 = vst.msk [vmem:[#allocation5 + $0x40] sm:$0xff] %vm1379, %v2756
  %2796 = vst.msk [vmem:[#allocation5 + $0x48] sm:$0xff] %vm1379, %v2758
  %2797 = vst.msk [vmem:[#allocation5 + $0x50] sm:$0xff] %vm1379, %v2760
  %2798 = vst.msk [vmem:[#allocation5 + $0x58] sm:$0xff] %vm1379, %v2762
  %2799 = vst.msk [vmem:[#allocation5 + $0x60] sm:$0xff] %vm1379, %v2764
  %2800 = vst.msk [vmem:[#allocation5 + $0x68] sm:$0xff] %vm1379, %v2766
  %2801 = vst.msk [vmem:[#allocation5 + $0x70] sm:$0xff] %vm1379, %v2768
  %2802 = vst.msk [vmem:[#allocation5 + $0x78] sm:$0xff] %vm1379, %v2770
  %v2803 = vld [vmem:[#allocation4 + $0x1] sm:$0x7f]
  %v2804 = vld [vmem:[#allocation4 + $0x9] sm:$0x7f]
  %v2805 = vld [vmem:[#allocation4 + $0x11] sm:$0x7f]
  %v2806 = vld [vmem:[#allocation4 + $0x19] sm:$0x7f]
  %v2807 = vld [vmem:[#allocation4 + $0x21] sm:$0x7f]
  %v2808 = vld [vmem:[#allocation4 + $0x29] sm:$0x7f]
  %v2809 = vld [vmem:[#allocation4 + $0x31] sm:$0x7f]
  %v2810 = vld [vmem:[#allocation4 + $0x39] sm:$0x7f]
  %v2811 = vld [vmem:[#allocation4 + $0x41] sm:$0x7f]
  %v2812 = vld [vmem:[#allocation4 + $0x49] sm:$0x7f]
  %v2813 = vld [vmem:[#allocation4 + $0x51] sm:$0x7f]
  %v2814 = vld [vmem:[#allocation4 + $0x59] sm:$0x7f]
  %v2815 = vld [vmem:[#allocation4 + $0x61] sm:$0x7f]
  %v2816 = vld [vmem:[#allocation4 + $0x69] sm:$0x7f]
  %v2817 = vld [vmem:[#allocation4 + $0x71] sm:$0x7f]
  %v2818 = vld [vmem:[#allocation4 + $0x79] sm:$0x7f]
  %2835 = vrot.lane.b32.xlu0 %v2803, 40
  %v2836 = vpop.permute.xlu0 %2835
  %2837 = vrot.lane.b32.xlu0 %v2804, 40
  %v2838 = vpop.permute.xlu0 %2837
  %2839 = vrot.lane.b32.xlu0 %v2805, 40
  %v2840 = vpop.permute.xlu0 %2839
  %2841 = vrot.lane.b32.xlu0 %v2806, 40
  %v2842 = vpop.permute.xlu0 %2841
  %2843 = vrot.lane.b32.xlu0 %v2807, 40
  %v2844 = vpop.permute.xlu0 %2843
  %2845 = vrot.lane.b32.xlu0 %v2808, 40
  %v2846 = vpop.permute.xlu0 %2845
  %2847 = vrot.lane.b32.xlu0 %v2809, 40
  %v2848 = vpop.permute.xlu0 %2847
  %2849 = vrot.lane.b32.xlu0 %v2810, 40
  %v2850 = vpop.permute.xlu0 %2849
  %2851 = vrot.lane.b32.xlu0 %v2811, 40
  %v2852 = vpop.permute.xlu0 %2851
  %2853 = vrot.lane.b32.xlu0 %v2812, 40
  %v2854 = vpop.permute.xlu0 %2853
  %2855 = vrot.lane.b32.xlu0 %v2813, 40
  %v2856 = vpop.permute.xlu0 %2855
  %2857 = vrot.lane.b32.xlu0 %v2814, 40
  %v2858 = vpop.permute.xlu0 %2857
  %2859 = vrot.lane.b32.xlu0 %v2815, 40
  %v2860 = vpop.permute.xlu0 %2859
  %2861 = vrot.lane.b32.xlu0 %v2816, 40
  %v2862 = vpop.permute.xlu0 %2861
  %2863 = vrot.lane.b32.xlu0 %v2817, 40
  %v2864 = vpop.permute.xlu0 %2863
  %2865 = vrot.lane.b32.xlu0 %v2818, 40
  %v2866 = vpop.permute.xlu0 %2865
  %vm2883 = vcmask 391488
  %2884 = vst.msk [vmem:[#allocation5] sm:$0x7f] %vm2883, %v2836
  %2885 = vst.msk [vmem:[#allocation5 + $0x8] sm:$0x7f] %vm2883, %v2838
  %2886 = vst.msk [vmem:[#allocation5 + $0x10] sm:$0x7f] %vm2883, %v2840
  %2887 = vst.msk [vmem:[#allocation5 + $0x18] sm:$0x7f] %vm2883, %v2842
  %2888 = vst.msk [vmem:[#allocation5 + $0x20] sm:$0x7f] %vm2883, %v2844
  %2889 = vst.msk [vmem:[#allocation5 + $0x28] sm:$0x7f] %vm2883, %v2846
  %2890 = vst.msk [vmem:[#allocation5 + $0x30] sm:$0x7f] %vm2883, %v2848
  %2891 = vst.msk [vmem:[#allocation5 + $0x38] sm:$0x7f] %vm2883, %v2850
  %2892 = vst.msk [vmem:[#allocation5 + $0x40] sm:$0x7f] %vm2883, %v2852
  %2893 = vst.msk [vmem:[#allocation5 + $0x48] sm:$0x7f] %vm2883, %v2854
  %2894 = vst.msk [vmem:[#allocation5 + $0x50] sm:$0x7f] %vm2883, %v2856
  %2895 = vst.msk [vmem:[#allocation5 + $0x58] sm:$0x7f] %vm2883, %v2858
  %2896 = vst.msk [vmem:[#allocation5 + $0x60] sm:$0x7f] %vm2883, %v2860
  %2897 = vst.msk [vmem:[#allocation5 + $0x68] sm:$0x7f] %vm2883, %v2862
  %2898 = vst.msk [vmem:[#allocation5 + $0x70] sm:$0x7f] %vm2883, %v2864
  %2899 = vst.msk [vmem:[#allocation5 + $0x78] sm:$0x7f] %vm2883, %v2866
  %s2900 = scalar_lea.vmem [#allocation4], 8
  %v2901 = vld [vmem:[%s2900] sm:$0x7f]
  %v2902 = vld [vmem:[%s2900 + $0x8] sm:$0x7f]
  %v2903 = vld [vmem:[%s2900 + $0x10] sm:$0x7f]
  %v2904 = vld [vmem:[%s2900 + $0x18] sm:$0x7f]
  %v2905 = vld [vmem:[%s2900 + $0x20] sm:$0x7f]
  %v2906 = vld [vmem:[%s2900 + $0x28] sm:$0x7f]
  %v2907 = vld [vmem:[%s2900 + $0x30] sm:$0x7f]
  %v2908 = vld [vmem:[%s2900 + $0x40] sm:$0x7f]
  %v2909 = vld [vmem:[%s2900 + $0x48] sm:$0x7f]
  %v2910 = vld [vmem:[%s2900 + $0x50] sm:$0x7f]
  %v2911 = vld [vmem:[%s2900 + $0x58] sm:$0x7f]
  %v2912 = vld [vmem:[%s2900 + $0x60] sm:$0x7f]
  %v2913 = vld [vmem:[%s2900 + $0x68] sm:$0x7f]
  %v2914 = vld [vmem:[%s2900 + $0x70] sm:$0x7f]
  %2929 = vrot.lane.b32.xlu0 %v2901, 48
  %v2930 = vpop.permute.xlu0 %2929
  %2931 = vrot.lane.b32.xlu0 %v2902, 48
  %v2932 = vpop.permute.xlu0 %2931
  %2933 = vrot.lane.b32.xlu0 %v2903, 48
  %v2934 = vpop.permute.xlu0 %2933
  %2935 = vrot.lane.b32.xlu0 %v2904, 48
  %v2936 = vpop.permute.xlu0 %2935
  %2937 = vrot.lane.b32.xlu0 %v2905, 48
  %v2938 = vpop.permute.xlu0 %2937
  %2939 = vrot.lane.b32.xlu0 %v2906, 48
  %v2940 = vpop.permute.xlu0 %2939
  %2941 = vrot.lane.b32.xlu0 %v2907, 48
  %v2942 = vpop.permute.xlu0 %2941
  %2943 = vrot.lane.b32.xlu0 %v2908, 48
  %v2944 = vpop.permute.xlu0 %2943
  %2945 = vrot.lane.b32.xlu0 %v2909, 48
  %v2946 = vpop.permute.xlu0 %2945
  %2947 = vrot.lane.b32.xlu0 %v2910, 48
  %v2948 = vpop.permute.xlu0 %2947
  %2949 = vrot.lane.b32.xlu0 %v2911, 48
  %v2950 = vpop.permute.xlu0 %2949
  %2951 = vrot.lane.b32.xlu0 %v2912, 48
  %v2952 = vpop.permute.xlu0 %2951
  %2953 = vrot.lane.b32.xlu0 %v2913, 48
  %v2954 = vpop.permute.xlu0 %2953
  %2955 = vrot.lane.b32.xlu0 %v2914, 48
  %v2956 = vpop.permute.xlu0 %2955
  %2971 = vst.msk [vmem:[#allocation5 + $0x1] sm:$0x7f] %vm1573, %v2930
  %2972 = vst.msk [vmem:[#allocation5 + $0x9] sm:$0x7f] %vm1573, %v2932
  %2973 = vst.msk [vmem:[#allocation5 + $0x11] sm:$0x7f] %vm1573, %v2934
  %2974 = vst.msk [vmem:[#allocation5 + $0x19] sm:$0x7f] %vm1573, %v2936
  %2975 = vst.msk [vmem:[#allocation5 + $0x21] sm:$0x7f] %vm1573, %v2938
  %2976 = vst.msk [vmem:[#allocation5 + $0x29] sm:$0x7f] %vm1573, %v2940
  %2977 = vst.msk [vmem:[#allocation5 + $0x31] sm:$0x7f] %vm1573, %v2942
  %2978 = vst.msk [vmem:[#allocation5 + $0x41] sm:$0x7f] %vm1573, %v2944
  %2979 = vst.msk [vmem:[#allocation5 + $0x49] sm:$0x7f] %vm1573, %v2946
  %2980 = vst.msk [vmem:[#allocation5 + $0x51] sm:$0x7f] %vm1573, %v2948
  %2981 = vst.msk [vmem:[#allocation5 + $0x59] sm:$0x7f] %vm1573, %v2950
  %2982 = vst.msk [vmem:[#allocation5 + $0x61] sm:$0x7f] %vm1573, %v2952
  %2983 = vst.msk [vmem:[#allocation5 + $0x69] sm:$0x7f] %vm1573, %v2954
  %2984 = vst.msk [vmem:[#allocation5 + $0x71] sm:$0x7f] %vm1573, %v2956
  %v2985 = vld [vmem:[%s2900] sm:$0xff]
  %v2986 = vld [vmem:[%s2900 + $0x8] sm:$0xff]
  %v2987 = vld [vmem:[%s2900 + $0x10] sm:$0xff]
  %v2988 = vld [vmem:[%s2900 + $0x18] sm:$0xff]
  %v2989 = vld [vmem:[%s2900 + $0x20] sm:$0xff]
  %v2990 = vld [vmem:[%s2900 + $0x28] sm:$0xff]
  %v2991 = vld [vmem:[%s2900 + $0x30] sm:$0xff]
  %v2992 = vld [vmem:[%s2900 + $0x40] sm:$0xff]
  %v2993 = vld [vmem:[%s2900 + $0x48] sm:$0xff]
  %v2994 = vld [vmem:[%s2900 + $0x50] sm:$0xff]
  %v2995 = vld [vmem:[%s2900 + $0x58] sm:$0xff]
  %v2996 = vld [vmem:[%s2900 + $0x60] sm:$0xff]
  %v2997 = vld [vmem:[%s2900 + $0x68] sm:$0xff]
  %v2998 = vld [vmem:[%s2900 + $0x70] sm:$0xff]
  %3013 = vrot.lane.b32.xlu0 %v2985, 56
  %v3014 = vpop.permute.xlu0 %3013
  %3015 = vrot.lane.b32.xlu0 %v2986, 56
  %v3016 = vpop.permute.xlu0 %3015
  %3017 = vrot.lane.b32.xlu0 %v2987, 56
  %v3018 = vpop.permute.xlu0 %3017
  %3019 = vrot.lane.b32.xlu0 %v2988, 56
  %v3020 = vpop.permute.xlu0 %3019
  %3021 = vrot.lane.b32.xlu0 %v2989, 56
  %v3022 = vpop.permute.xlu0 %3021
  %3023 = vrot.lane.b32.xlu0 %v2990, 56
  %v3024 = vpop.permute.xlu0 %3023
  %3025 = vrot.lane.b32.xlu0 %v2991, 56
  %v3026 = vpop.permute.xlu0 %3025
  %3027 = vrot.lane.b32.xlu0 %v2992, 56
  %v3028 = vpop.permute.xlu0 %3027
  %3029 = vrot.lane.b32.xlu0 %v2993, 56
  %v3030 = vpop.permute.xlu0 %3029
  %3031 = vrot.lane.b32.xlu0 %v2994, 56
  %v3032 = vpop.permute.xlu0 %3031
  %3033 = vrot.lane.b32.xlu0 %v2995, 56
  %v3034 = vpop.permute.xlu0 %3033
  %3035 = vrot.lane.b32.xlu0 %v2996, 56
  %v3036 = vpop.permute.xlu0 %3035
  %3037 = vrot.lane.b32.xlu0 %v2997, 56
  %v3038 = vpop.permute.xlu0 %3037
  %3039 = vrot.lane.b32.xlu0 %v2998, 56
  %v3040 = vpop.permute.xlu0 %3039
  %3055 = vst.msk [vmem:[#allocation5] sm:$0xff] %vm1670, %v3014
  %3056 = vst.msk [vmem:[#allocation5 + $0x8] sm:$0xff] %vm1670, %v3016
  %3057 = vst.msk [vmem:[#allocation5 + $0x10] sm:$0xff] %vm1670, %v3018
  %3058 = vst.msk [vmem:[#allocation5 + $0x18] sm:$0xff] %vm1670, %v3020
  %3059 = vst.msk [vmem:[#allocation5 + $0x20] sm:$0xff] %vm1670, %v3022
  %3060 = vst.msk [vmem:[#allocation5 + $0x28] sm:$0xff] %vm1670, %v3024
  %3061 = vst.msk [vmem:[#allocation5 + $0x30] sm:$0xff] %vm1670, %v3026
  %3062 = vst.msk [vmem:[#allocation5 + $0x40] sm:$0xff] %vm1670, %v3028
  %3063 = vst.msk [vmem:[#allocation5 + $0x48] sm:$0xff] %vm1670, %v3030
  %3064 = vst.msk [vmem:[#allocation5 + $0x50] sm:$0xff] %vm1670, %v3032
  %3065 = vst.msk [vmem:[#allocation5 + $0x58] sm:$0xff] %vm1670, %v3034
  %3066 = vst.msk [vmem:[#allocation5 + $0x60] sm:$0xff] %vm1670, %v3036
  %3067 = vst.msk [vmem:[#allocation5 + $0x68] sm:$0xff] %vm1670, %v3038
  %3068 = vst.msk [vmem:[#allocation5 + $0x70] sm:$0xff] %vm1670, %v3040
  %v3069 = vld [vmem:[%s2900 + $0x1] sm:$0x7f]
  %v3070 = vld [vmem:[%s2900 + $0x9] sm:$0x7f]
  %v3071 = vld [vmem:[%s2900 + $0x11] sm:$0x7f]
  %v3072 = vld [vmem:[%s2900 + $0x19] sm:$0x7f]
  %v3073 = vld [vmem:[%s2900 + $0x21] sm:$0x7f]
  %v3074 = vld [vmem:[%s2900 + $0x29] sm:$0x7f]
  %v3075 = vld [vmem:[%s2900 + $0x31] sm:$0x7f]
  %v3076 = vld [vmem:[%s2900 + $0x41] sm:$0x7f]
  %v3077 = vld [vmem:[%s2900 + $0x49] sm:$0x7f]
  %v3078 = vld [vmem:[%s2900 + $0x51] sm:$0x7f]
  %v3079 = vld [vmem:[%s2900 + $0x59] sm:$0x7f]
  %v3080 = vld [vmem:[%s2900 + $0x61] sm:$0x7f]
  %v3081 = vld [vmem:[%s2900 + $0x69] sm:$0x7f]
  %v3082 = vld [vmem:[%s2900 + $0x71] sm:$0x7f]
  %3097 = vrot.lane.b32.xlu0 %v3069, 64
  %v3098 = vpop.permute.xlu0 %3097
  %3099 = vrot.lane.b32.xlu0 %v3070, 64
  %v3100 = vpop.permute.xlu0 %3099
  %3101 = vrot.lane.b32.xlu0 %v3071, 64
  %v3102 = vpop.permute.xlu0 %3101
  %3103 = vrot.lane.b32.xlu0 %v3072, 64
  %v3104 = vpop.permute.xlu0 %3103
  %3105 = vrot.lane.b32.xlu0 %v3073, 64
  %v3106 = vpop.permute.xlu0 %3105
  %3107 = vrot.lane.b32.xlu0 %v3074, 64
  %v3108 = vpop.permute.xlu0 %3107
  %3109 = vrot.lane.b32.xlu0 %v3075, 64
  %v3110 = vpop.permute.xlu0 %3109
  %3111 = vrot.lane.b32.xlu0 %v3076, 64
  %v3112 = vpop.permute.xlu0 %3111
  %3113 = vrot.lane.b32.xlu0 %v3077, 64
  %v3114 = vpop.permute.xlu0 %3113
  %3115 = vrot.lane.b32.xlu0 %v3078, 64
  %v3116 = vpop.permute.xlu0 %3115
  %3117 = vrot.lane.b32.xlu0 %v3079, 64
  %v3118 = vpop.permute.xlu0 %3117
  %3119 = vrot.lane.b32.xlu0 %v3080, 64
  %v3120 = vpop.permute.xlu0 %3119
  %3121 = vrot.lane.b32.xlu0 %v3081, 64
  %v3122 = vpop.permute.xlu0 %3121
  %3123 = vrot.lane.b32.xlu0 %v3082, 64
  %v3124 = vpop.permute.xlu0 %3123
  %vm3139 = vcmask 588288
  %3140 = vst.msk [vmem:[#allocation5] sm:$0x7f] %vm3139, %v3098
  %3141 = vst.msk [vmem:[#allocation5 + $0x8] sm:$0x7f] %vm3139, %v3100
  %3142 = vst.msk [vmem:[#allocation5 + $0x10] sm:$0x7f] %vm3139, %v3102
  %3143 = vst.msk [vmem:[#allocation5 + $0x18] sm:$0x7f] %vm3139, %v3104
  %3144 = vst.msk [vmem:[#allocation5 + $0x20] sm:$0x7f] %vm3139, %v3106
  %3145 = vst.msk [vmem:[#allocation5 + $0x28] sm:$0x7f] %vm3139, %v3108
  %3146 = vst.msk [vmem:[#allocation5 + $0x30] sm:$0x7f] %vm3139, %v3110
  %3147 = vst.msk [vmem:[#allocation5 + $0x40] sm:$0x7f] %vm3139, %v3112
  %3148 = vst.msk [vmem:[#allocation5 + $0x48] sm:$0x7f] %vm3139, %v3114
  %3149 = vst.msk [vmem:[#allocation5 + $0x50] sm:$0x7f] %vm3139, %v3116
  %3150 = vst.msk [vmem:[#allocation5 + $0x58] sm:$0x7f] %vm3139, %v3118
  %3151 = vst.msk [vmem:[#allocation5 + $0x60] sm:$0x7f] %vm3139, %v3120
  %3152 = vst.msk [vmem:[#allocation5 + $0x68] sm:$0x7f] %vm3139, %v3122
  %3153 = vst.msk [vmem:[#allocation5 + $0x70] sm:$0x7f] %vm3139, %v3124
  %v3154 = vld [vmem:[#allocation5] sm:$0xff]
  %v3155 = vld [vmem:[#allocation5 + $0x8] sm:$0xff]
  %v3156 = vld [vmem:[#allocation5 + $0x10] sm:$0xff]
  %v3157 = vld [vmem:[#allocation5 + $0x18] sm:$0xff]
  %v3158 = vld [vmem:[#allocation5 + $0x20] sm:$0xff]
  %v3159 = vld [vmem:[#allocation5 + $0x28] sm:$0xff]
  %v3160 = vld [vmem:[#allocation5 + $0x30] sm:$0xff]
  %v3161 = vld [vmem:[#allocation5 + $0x38] sm:$0xff]
  %v3162 = vld [vmem:[#allocation5 + $0x40] sm:$0xff]
  %v3163 = vld [vmem:[#allocation5 + $0x48] sm:$0xff]
  %v3164 = vld [vmem:[#allocation5 + $0x50] sm:$0xff]
  %v3165 = vld [vmem:[#allocation5 + $0x58] sm:$0xff]
  %v3166 = vld [vmem:[#allocation5 + $0x60] sm:$0xff]
  %v3167 = vld [vmem:[#allocation5 + $0x68] sm:$0xff]
  %v3168 = vld [vmem:[#allocation5 + $0x70] sm:$0xff]
  %v3169 = vld [vmem:[#allocation5 + $0x78] sm:$0xff]
  %v3170 = vld [vmem:[%s9] sm:$0xf]
  %v3171 = vld [vmem:[%s9 + $0x4] sm:$0xf]
  %v3172 = vld [vmem:[%s9 + $0x8] sm:$0xf]
  %v3173 = vld [vmem:[%s9 + $0xc] sm:$0xf]
  %v3174 = vld [vmem:[%s9 + $0x10] sm:$0xf]
  %v3175 = vld [vmem:[%s9 + $0x14] sm:$0xf]
  %v3176 = vld [vmem:[%s9 + $0x18] sm:$0xf]
  %v3177 = vld [vmem:[%s9 + $0x1c] sm:$0xf]
  %v3178 = vld [vmem:[%s9 + $0x20] sm:$0xf]
  %v3179 = vpack.c.bf16 %v3155, %v3154
  %v3180 = vpack.c.bf16 %v3157, %v3156
  %v3181 = vpack.c.bf16 %v3159, %v3158
  %v3182 = vpack.c.bf16 %v3161, %v3160
  %v3183 = vpack.c.bf16 %v3163, %v3162
  %v3184 = vpack.c.bf16 %v3165, %v3164
  %v3185 = vpack.c.bf16 %v3167, %v3166
  %v3186 = vpack.c.bf16 %v3169, %v3168
  %v3187 = vld [vmem:[%s10] sm:$0x1]
  %v3189 = vperm.slane %v3187, 0
  %v3200 = vunpack.c.l.b16 %v3170
  %v3201 = vunpack.c.l.b16 %v3171
  %v3202 = vunpack.c.l.b16 %v3172
  %v3203 = vunpack.c.l.b16 %v3173
  %v3204 = vunpack.c.l.b16 %v3174
  %v3205 = vunpack.c.l.b16 %v3175
  %v3206 = vunpack.c.l.b16 %v3176
  %v3207 = vunpack.c.l.b16 %v3177
  %v3208 = vunpack.c.l.b16 %v3178
  %v3209 = vpack.c.b16 %v3201, %v3200
  %v3210 = vpack.c.b16 %v3203, %v3202
  %v3211 = vpack.c.b16 %v3205, %v3204
  %v3212 = vpack.c.b16 %v3207, %v3206
  %v3213 = vpack.c.b16 %v3208, %v3208
  %v3219 = vsel %vm1848, %v3179, 0
  %v3222 = vsel %vm1848, %v3180, 0
  %v3225 = vsel %vm1848, %v3181, 0
  %v3228 = vsel %vm1848, %v3182, 0
  %v3231 = vsel %vm1848, %v3183, 0
  %v3234 = vsel %vm1848, %v3184, 0
  %v3237 = vsel %vm1848, %v3185, 0
  %v3240 = vsel %vm1848, %v3186, 0
  %v3243 = vsel %vm1873, %v3213, 0
  %3245 = vmatpush.bf16.msra.mxu0 0
  %3246 = vmatpush.bf16.msra.mxu0 0
  %3247 = vmatpush.bf16.msra.mxu0 0
  %3248 = vmatpush.bf16.msra.mxu0 %v3243
  %3249 = vmatpush.bf16.msra.mxu0 %v3212
  %3250 = vmatpush.bf16.msra.mxu0 %v3211
  %3251 = vmatpush.bf16.msra.mxu0 %v3210
  %3252 = vmatpush.bf16.msra.mxu0 %v3209
  %3253 = vmatmul.bf16.gmra.mxu0 %v3219
  %v3254 = vpop.f32.mrf.mxu0
  %v3255 = vadd.f32 %v3189, %v3254
  %v3256 = vpop.f32.mrf.mxu0
  %v3257 = vadd.f32 %v3189, %v3256
  %3258 = vmatmul.bf16.gmra.mxu0 %v3222
  %v3259 = vpop.f32.mrf.mxu0
  %v3260 = vadd.f32 %v3189, %v3259
  %v3261 = vpop.f32.mrf.mxu0
  %v3262 = vadd.f32 %v3189, %v3261
  %3263 = vmatmul.bf16.gmra.mxu0 %v3225
  %v3264 = vpop.f32.mrf.mxu0
  %v3265 = vadd.f32 %v3189, %v3264
  %v3266 = vpop.f32.mrf.mxu0
  %v3267 = vadd.f32 %v3189, %v3266
  %3268 = vmatmul.bf16.gmra.mxu0 %v3228
  %v3269 = vpop.f32.mrf.mxu0
  %v3270 = vadd.f32 %v3189, %v3269
  %v3271 = vpop.f32.mrf.mxu0
  %v3272 = vadd.f32 %v3189, %v3271
  %3273 = vmatmul.bf16.gmra.mxu0 %v3231
  %v3274 = vpop.f32.mrf.mxu0
  %v3275 = vadd.f32 %v3189, %v3274
  %v3276 = vpop.f32.mrf.mxu0
  %v3277 = vadd.f32 %v3189, %v3276
  %3278 = vmatmul.bf16.gmra.mxu0 %v3234
  %v3279 = vpop.f32.mrf.mxu0
  %v3280 = vadd.f32 %v3189, %v3279
  %v3281 = vpop.f32.mrf.mxu0
  %v3282 = vadd.f32 %v3189, %v3281
  %3283 = vmatmul.bf16.gmra.mxu0 %v3237
  %v3284 = vpop.f32.mrf.mxu0
  %v3285 = vadd.f32 %v3189, %v3284
  %v3286 = vpop.f32.mrf.mxu0
  %v3287 = vadd.f32 %v3189, %v3286
  %3288 = vmatmul.bf16.gmra.mxu0 %v3240
  %v3289 = vpop.f32.mrf.mxu0
  %v3290 = vadd.f32 %v3189, %v3289
  %v3291 = vpop.f32.mrf.mxu0
  %v3292 = vadd.f32 %v3189, %v3291
  %3293 = vdwg.mxu0
  %v3294 = vsub.f32 0.0, %v3255
  %v3295 = vsub.f32 0.0, %v3257
  %v3296 = vsub.f32 0.0, %v3260
  %v3297 = vsub.f32 0.0, %v3262
  %v3298 = vsub.f32 0.0, %v3265
  %v3299 = vsub.f32 0.0, %v3267
  %v3300 = vsub.f32 0.0, %v3270
  %v3301 = vsub.f32 0.0, %v3272
  %v3302 = vsub.f32 0.0, %v3275
  %v3303 = vsub.f32 0.0, %v3277
  %v3304 = vsub.f32 0.0, %v3280
  %v3305 = vsub.f32 0.0, %v3282
  %v3306 = vsub.f32 0.0, %v3285
  %v3307 = vsub.f32 0.0, %v3287
  %v3308 = vsub.f32 0.0, %v3290
  %v3309 = vsub.f32 0.0, %v3292
  %v3310 = vmul.f32 %v3294, 1.442695
  %v3311 = vpow.pop %v3310
  %v3312 = vmul.f32 %v3295, 1.442695
  %v3313 = vpow.pop %v3312
  %v3314 = vmul.f32 %v3296, 1.442695
  %v3315 = vpow.pop %v3314
  %v3316 = vmul.f32 %v3297, 1.442695
  %v3317 = vpow.pop %v3316
  %v3318 = vmul.f32 %v3298, 1.442695
  %v3319 = vpow.pop %v3318
  %v3320 = vmul.f32 %v3299, 1.442695
  %v3321 = vpow.pop %v3320
  %v3322 = vmul.f32 %v3300, 1.442695
  %v3323 = vpow.pop %v3322
  %v3324 = vmul.f32 %v3301, 1.442695
  %v3325 = vpow.pop %v3324
  %v3326 = vmul.f32 %v3302, 1.442695
  %v3327 = vpow.pop %v3326
  %v3328 = vmul.f32 %v3303, 1.442695
  %v3329 = vpow.pop %v3328
  %v3330 = vmul.f32 %v3304, 1.442695
  %v3331 = vpow.pop %v3330
  %v3332 = vmul.f32 %v3305, 1.442695
  %v3333 = vpow.pop %v3332
  %v3334 = vmul.f32 %v3306, 1.442695
  %v3335 = vpow.pop %v3334
  %v3336 = vmul.f32 %v3307, 1.442695
  %v3337 = vpow.pop %v3336
  %v3338 = vmul.f32 %v3308, 1.442695
  %v3339 = vpow.pop %v3338
  %v3340 = vmul.f32 %v3309, 1.442695
  %v3341 = vpow.pop %v3340
  %v3342 = vadd.f32 %v3311, 1.0
  %v3343 = vadd.f32 %v3313, 1.0
  %v3344 = vadd.f32 %v3315, 1.0
  %v3345 = vadd.f32 %v3317, 1.0
  %v3346 = vadd.f32 %v3319, 1.0
  %v3347 = vadd.f32 %v3321, 1.0
  %v3348 = vadd.f32 %v3323, 1.0
  %v3349 = vadd.f32 %v3325, 1.0
  %v3350 = vadd.f32 %v3327, 1.0
  %v3351 = vadd.f32 %v3329, 1.0
  %v3352 = vadd.f32 %v3331, 1.0
  %v3353 = vadd.f32 %v3333, 1.0
  %v3354 = vadd.f32 %v3335, 1.0
  %v3355 = vadd.f32 %v3337, 1.0
  %v3356 = vadd.f32 %v3339, 1.0
  %v3357 = vadd.f32 %v3341, 1.0
  %v3358 = vrcp.pop %v3342
  %v3359 = vrcp.pop %v3343
  %v3360 = vrcp.pop %v3344
  %v3361 = vrcp.pop %v3345
  %v3362 = vrcp.pop %v3346
  %v3363 = vrcp.pop %v3347
  %v3364 = vrcp.pop %v3348
  %v3365 = vrcp.pop %v3349
  %v3366 = vrcp.pop %v3350
  %v3367 = vrcp.pop %v3351
  %v3368 = vrcp.pop %v3352
  %v3369 = vrcp.pop %v3353
  %v3370 = vrcp.pop %v3354
  %v3371 = vrcp.pop %v3355
  %v3372 = vrcp.pop %v3356
  %v3373 = vrcp.pop %v3357
  %v3374 = vmul.f32 %v3255, %v3358
  %v3375 = vmul.f32 %v3257, %v3359
  %v3376 = vmul.f32 %v3260, %v3360
  %v3377 = vmul.f32 %v3262, %v3361
  %v3378 = vmul.f32 %v3265, %v3362
  %v3379 = vmul.f32 %v3267, %v3363
  %v3380 = vmul.f32 %v3270, %v3364
  %v3381 = vmul.f32 %v3272, %v3365
  %v3382 = vmul.f32 %v3275, %v3366
  %v3383 = vmul.f32 %v3277, %v3367
  %v3384 = vmul.f32 %v3280, %v3368
  %v3385 = vmul.f32 %v3282, %v3369
  %v3386 = vmul.f32 %v3285, %v3370
  %v3387 = vmul.f32 %v3287, %v3371
  %v3388 = vmul.f32 %v3290, %v3372
  %v3389 = vmul.f32 %v3292, %v3373
  %v3390 = vadd.f32 %v3374, %v2196
  %v3391 = vadd.f32 %v3375, %v2197
  %v3392 = vadd.f32 %v3376, %v2198
  %v3393 = vadd.f32 %v3377, %v2199
  %v3394 = vadd.f32 %v3378, %v2200
  %v3395 = vadd.f32 %v3379, %v2201
  %v3396 = vadd.f32 %v3380, %v2202
  %v3397 = vadd.f32 %v3381, %v2203
  %v3398 = vadd.f32 %v3382, %v2204
  %v3399 = vadd.f32 %v3383, %v2205
  %v3400 = vadd.f32 %v3384, %v2206
  %v3401 = vadd.f32 %v3385, %v2207
  %v3402 = vadd.f32 %v3386, %v2208
  %v3403 = vadd.f32 %v3387, %v2209
  %v3404 = vadd.f32 %v3388, %v2210
  %v3405 = vadd.f32 %v3389, %v2211
  %v3406 = vld [vmem:[%s11] sm:$0xf]
  %v3407 = vpack.c.bf16 %v3391, %v3390
  %v3408 = vpack.c.bf16 %v3393, %v3392
  %v3409 = vpack.c.bf16 %v3395, %v3394
  %v3410 = vpack.c.bf16 %v3397, %v3396
  %v3411 = vpack.c.bf16 %v3399, %v3398
  %v3412 = vpack.c.bf16 %v3401, %v3400
  %v3413 = vpack.c.bf16 %v3403, %v3402
  %v3414 = vpack.c.bf16 %v3405, %v3404
  %v3415 = vld [vmem:[%s12] sm:$0xf]
  %3424 = vrot.lane.b32.xlu0 %v2213, 120
  %v3425 = vpop.permute.xlu0 %3424
  %3426 = vrot.lane.b32.xlu0 %v2214, 120
  %v3427 = vpop.permute.xlu0 %3426
  %3428 = vrot.lane.b32.xlu0 %v2215, 120
  %v3429 = vpop.permute.xlu0 %3428
  %3430 = vrot.lane.b32.xlu0 %v2216, 120
  %v3431 = vpop.permute.xlu0 %3430
  %3432 = vrot.lane.b32.xlu0 %v2217, 120
  %v3433 = vpop.permute.xlu0 %3432
  %3434 = vrot.lane.b32.xlu0 %v2218, 120
  %v3435 = vpop.permute.xlu0 %3434
  %3436 = vrot.lane.b32.xlu0 %v2219, 120
  %v3437 = vpop.permute.xlu0 %3436
  %3438 = vrot.lane.b32.xlu0 %v2220, 120
  %v3439 = vpop.permute.xlu0 %3438
  %v3441 = vsel %vm934, %v3425, 0
  %v3444 = vsel %vm934, %v3427, 0
  %v3447 = vsel %vm934, %v3429, 0
  %v3450 = vsel %vm934, %v3431, 0
  %v3453 = vsel %vm934, %v3433, 0
  %v3456 = vsel %vm934, %v3435, 0
  %v3459 = vsel %vm934, %v3437, 0
  %v3462 = vsel %vm934, %v3439, 0
  %v3465 = vsel %vm1873, %v3415, 0
  %3467 = vmatpush.bf16.msra.mxu0 0
  %3468 = vmatpush.bf16.msra.mxu0 0
  %3469 = vmatpush.bf16.msra.mxu0 0
  %3470 = vmatpush.bf16.msra.mxu0 0
  %3471 = vmatpush.bf16.msra.mxu0 0
  %3472 = vmatpush.bf16.msra.mxu0 0
  %3473 = vmatpush.bf16.msra.mxu0 0
  %3474 = vmatpush.bf16.msra.mxu0 %v3465
  %3475 = vmatmul.bf16.gmra.mxu0 %v3441
  %v3476 = vpop.f32.mrf.mxu0
  %v3477 = vadd.f32 0.0, %v3476
  %v3478 = vpop.f32.mrf.mxu0
  %v3479 = vadd.f32 0.0, %v3478
  %3480 = vmatmul.bf16.gmra.mxu0 %v3444
  %v3481 = vpop.f32.mrf.mxu0
  %v3482 = vadd.f32 0.0, %v3481
  %v3483 = vpop.f32.mrf.mxu0
  %v3484 = vadd.f32 0.0, %v3483
  %3485 = vmatmul.bf16.gmra.mxu0 %v3447
  %v3486 = vpop.f32.mrf.mxu0
  %v3487 = vadd.f32 0.0, %v3486
  %v3488 = vpop.f32.mrf.mxu0
  %v3489 = vadd.f32 0.0, %v3488
  %3490 = vmatmul.bf16.gmra.mxu0 %v3450
  %v3491 = vpop.f32.mrf.mxu0
  %v3492 = vadd.f32 0.0, %v3491
  %v3493 = vpop.f32.mrf.mxu0
  %v3494 = vadd.f32 0.0, %v3493
  %3495 = vmatmul.bf16.gmra.mxu0 %v3453
  %v3496 = vpop.f32.mrf.mxu0
  %v3497 = vadd.f32 0.0, %v3496
  %v3498 = vpop.f32.mrf.mxu0
  %v3499 = vadd.f32 0.0, %v3498
  %3500 = vmatmul.bf16.gmra.mxu0 %v3456
  %v3501 = vpop.f32.mrf.mxu0
  %v3502 = vadd.f32 0.0, %v3501
  %v3503 = vpop.f32.mrf.mxu0
  %v3504 = vadd.f32 0.0, %v3503
  %3505 = vmatmul.bf16.gmra.mxu0 %v3459
  %v3506 = vpop.f32.mrf.mxu0
  %v3507 = vadd.f32 0.0, %v3506
  %v3508 = vpop.f32.mrf.mxu0
  %v3509 = vadd.f32 0.0, %v3508
  %3510 = vmatmul.bf16.gmra.mxu0 %v3462
  %v3511 = vpop.f32.mrf.mxu0
  %v3512 = vadd.f32 0.0, %v3511
  %v3513 = vpop.f32.mrf.mxu0
  %v3514 = vadd.f32 0.0, %v3513
  %3515 = vdwg.mxu0
  %v3517 = vsel %vm934, %v3407, 0
  %v3520 = vsel %vm934, %v3408, 0
  %v3523 = vsel %vm934, %v3409, 0
  %v3526 = vsel %vm934, %v3410, 0
  %v3529 = vsel %vm934, %v3411, 0
  %v3532 = vsel %vm934, %v3412, 0
  %v3535 = vsel %vm934, %v3413, 0
  %v3538 = vsel %vm934, %v3414, 0
  %v3541 = vsel %vm1873, %v3406, 0
  %3543 = vmatpush.bf16.msra.mxu0 0
  %3544 = vmatpush.bf16.msra.mxu0 0
  %3545 = vmatpush.bf16.msra.mxu0 0
  %3546 = vmatpush.bf16.msra.mxu0 0
  %3547 = vmatpush.bf16.msra.mxu0 0
  %3548 = vmatpush.bf16.msra.mxu0 0
  %3549 = vmatpush.bf16.msra.mxu0 0
  %3550 = vmatpush.bf16.msra.mxu0 %v3541
  %3551 = vmatmul.bf16.gmra.mxu0 %v3517
  %v3552 = vpop.f32.mrf.mxu0
  %v3553 = vadd.f32 %v3477, %v3552
  %v3554 = vpop.f32.mrf.mxu0
  %v3555 = vadd.f32 %v3479, %v3554
  %3556 = vmatmul.bf16.gmra.mxu0 %v3520
  %v3557 = vpop.f32.mrf.mxu0
  %v3558 = vadd.f32 %v3482, %v3557
  %v3559 = vpop.f32.mrf.mxu0
  %v3560 = vadd.f32 %v3484, %v3559
  %3561 = vmatmul.bf16.gmra.mxu0 %v3523
  %v3562 = vpop.f32.mrf.mxu0
  %v3563 = vadd.f32 %v3487, %v3562
  %v3564 = vpop.f32.mrf.mxu0
  %v3565 = vadd.f32 %v3489, %v3564
  %3566 = vmatmul.bf16.gmra.mxu0 %v3526
  %v3567 = vpop.f32.mrf.mxu0
  %v3568 = vadd.f32 %v3492, %v3567
  %v3569 = vpop.f32.mrf.mxu0
  %v3570 = vadd.f32 %v3494, %v3569
  %3571 = vmatmul.bf16.gmra.mxu0 %v3529
  %v3572 = vpop.f32.mrf.mxu0
  %v3573 = vadd.f32 %v3497, %v3572
  %v3574 = vpop.f32.mrf.mxu0
  %v3575 = vadd.f32 %v3499, %v3574
  %3576 = vmatmul.bf16.gmra.mxu0 %v3532
  %v3577 = vpop.f32.mrf.mxu0
  %v3578 = vadd.f32 %v3502, %v3577
  %v3579 = vpop.f32.mrf.mxu0
  %v3580 = vadd.f32 %v3504, %v3579
  %3581 = vmatmul.bf16.gmra.mxu0 %v3535
  %v3582 = vpop.f32.mrf.mxu0
  %v3583 = vadd.f32 %v3507, %v3582
  %v3584 = vpop.f32.mrf.mxu0
  %v3585 = vadd.f32 %v3509, %v3584
  %3586 = vmatmul.bf16.gmra.mxu0 %v3538
  %v3587 = vpop.f32.mrf.mxu0
  %v3588 = vadd.f32 %v3512, %v3587
  %v3589 = vpop.f32.mrf.mxu0
  %v3590 = vadd.f32 %v3514, %v3589
  %3591 = vdwg.mxu0
  %v3592 = vld [vmem:[%s13] sm:$0x1]
  %v3594 = vperm.slane %v3592, 0
  %v3596 = vadd.f32 %v3553, %v3594
  %v3597 = vadd.f32 %v3555, %v3594
  %v3598 = vadd.f32 %v3558, %v3594
  %v3599 = vadd.f32 %v3560, %v3594
  %v3600 = vadd.f32 %v3563, %v3594
  %v3601 = vadd.f32 %v3565, %v3594
  %v3602 = vadd.f32 %v3568, %v3594
  %v3603 = vadd.f32 %v3570, %v3594
  %v3604 = vadd.f32 %v3573, %v3594
  %v3605 = vadd.f32 %v3575, %v3594
  %v3606 = vadd.f32 %v3578, %v3594
  %v3607 = vadd.f32 %v3580, %v3594
  %v3608 = vadd.f32 %v3583, %v3594
  %v3609 = vadd.f32 %v3585, %v3594
  %v3610 = vadd.f32 %v3588, %v3594
  %v3611 = vadd.f32 %v3590, %v3594
  %v3612 = vsub.f32 0.0, %v3596
  %v3613 = vsub.f32 0.0, %v3597
  %v3614 = vsub.f32 0.0, %v3598
  %v3615 = vsub.f32 0.0, %v3599
  %v3616 = vsub.f32 0.0, %v3600
  %v3617 = vsub.f32 0.0, %v3601
  %v3618 = vsub.f32 0.0, %v3602
  %v3619 = vsub.f32 0.0, %v3603
  %v3620 = vsub.f32 0.0, %v3604
  %v3621 = vsub.f32 0.0, %v3605
  %v3622 = vsub.f32 0.0, %v3606
  %v3623 = vsub.f32 0.0, %v3607
  %v3624 = vsub.f32 0.0, %v3608
  %v3625 = vsub.f32 0.0, %v3609
  %v3626 = vsub.f32 0.0, %v3610
  %v3627 = vsub.f32 0.0, %v3611
  %v3628 = vmul.f32 %v3612, 1.442695
  %v3629 = vpow.pop %v3628
  %v3630 = vmul.f32 %v3613, 1.442695
  %v3631 = vpow.pop %v3630
  %v3632 = vmul.f32 %v3614, 1.442695
  %v3633 = vpow.pop %v3632
  %v3634 = vmul.f32 %v3615, 1.442695
  %v3635 = vpow.pop %v3634
  %v3636 = vmul.f32 %v3616, 1.442695
  %v3637 = vpow.pop %v3636
  %v3638 = vmul.f32 %v3617, 1.442695
  %v3639 = vpow.pop %v3638
  %v3640 = vmul.f32 %v3618, 1.442695
  %v3641 = vpow.pop %v3640
  %v3642 = vmul.f32 %v3619, 1.442695
  %v3643 = vpow.pop %v3642
  %v3644 = vmul.f32 %v3620, 1.442695
  %v3645 = vpow.pop %v3644
  %v3646 = vmul.f32 %v3621, 1.442695
  %v3647 = vpow.pop %v3646
  %v3648 = vmul.f32 %v3622, 1.442695
  %v3649 = vpow.pop %v3648
  %v3650 = vmul.f32 %v3623, 1.442695
  %v3651 = vpow.pop %v3650
  %v3652 = vmul.f32 %v3624, 1.442695
  %v3653 = vpow.pop %v3652
  %v3654 = vmul.f32 %v3625, 1.442695
  %v3655 = vpow.pop %v3654
  %v3656 = vmul.f32 %v3626, 1.442695
  %v3657 = vpow.pop %v3656
  %v3658 = vmul.f32 %v3627, 1.442695
  %v3659 = vpow.pop %v3658
  %v3660 = vadd.f32 %v3629, 1.0
  %v3661 = vadd.f32 %v3631, 1.0
  %v3662 = vadd.f32 %v3633, 1.0
  %v3663 = vadd.f32 %v3635, 1.0
  %v3664 = vadd.f32 %v3637, 1.0
  %v3665 = vadd.f32 %v3639, 1.0
  %v3666 = vadd.f32 %v3641, 1.0
  %v3667 = vadd.f32 %v3643, 1.0
  %v3668 = vadd.f32 %v3645, 1.0
  %v3669 = vadd.f32 %v3647, 1.0
  %v3670 = vadd.f32 %v3649, 1.0
  %v3671 = vadd.f32 %v3651, 1.0
  %v3672 = vadd.f32 %v3653, 1.0
  %v3673 = vadd.f32 %v3655, 1.0
  %v3674 = vadd.f32 %v3657, 1.0
  %v3675 = vadd.f32 %v3659, 1.0
  %v3676 = vrcp.pop %v3660
  %v3677 = vrcp.pop %v3661
  %v3678 = vrcp.pop %v3662
  %v3679 = vrcp.pop %v3663
  %v3680 = vrcp.pop %v3664
  %v3681 = vrcp.pop %v3665
  %v3682 = vrcp.pop %v3666
  %v3683 = vrcp.pop %v3667
  %v3684 = vrcp.pop %v3668
  %v3685 = vrcp.pop %v3669
  %v3686 = vrcp.pop %v3670
  %v3687 = vrcp.pop %v3671
  %v3688 = vrcp.pop %v3672
  %v3689 = vrcp.pop %v3673
  %v3690 = vrcp.pop %v3674
  %v3691 = vrcp.pop %v3675
  %v3692 = vmul.f32 %v3596, %v3676
  %v3693 = vmul.f32 %v3597, %v3677
  %v3694 = vmul.f32 %v3598, %v3678
  %v3695 = vmul.f32 %v3599, %v3679
  %v3696 = vmul.f32 %v3600, %v3680
  %v3697 = vmul.f32 %v3601, %v3681
  %v3698 = vmul.f32 %v3602, %v3682
  %v3699 = vmul.f32 %v3603, %v3683
  %v3700 = vmul.f32 %v3604, %v3684
  %v3701 = vmul.f32 %v3605, %v3685
  %v3702 = vmul.f32 %v3606, %v3686
  %v3703 = vmul.f32 %v3607, %v3687
  %v3704 = vmul.f32 %v3608, %v3688
  %v3705 = vmul.f32 %v3609, %v3689
  %v3706 = vmul.f32 %v3610, %v3690
  %v3707 = vmul.f32 %v3611, %v3691
  %v3708 = vld [vmem:[%s14] sm:$0xf]
  %v3709 = vld [vmem:[%s14 + $0x4] sm:$0xf]
  %v3710 = vpack.c.bf16 %v3693, %v3692
  %v3711 = vpack.c.bf16 %v3695, %v3694
  %v3712 = vpack.c.bf16 %v3697, %v3696
  %v3713 = vpack.c.bf16 %v3699, %v3698
  %v3714 = vpack.c.bf16 %v3701, %v3700
  %v3715 = vpack.c.bf16 %v3703, %v3702
  %v3716 = vpack.c.bf16 %v3705, %v3704
  %v3717 = vpack.c.bf16 %v3707, %v3706
  %v3718 = vld [vmem:[%s15] sm:$0x1]
  %v3720 = vperm.slane %v3718, 0
  %v3724 = vunpack.c.l.b16 %v3708
  %v3725 = vunpack.c.l.b16 %v3709
  %v3726 = vpack.c.b16 %v3725, %v3724
  %v3729 = vsel %vm2042, %v3710, 0
  %v3732 = vsel %vm2042, %v3711, 0
  %v3735 = vsel %vm2042, %v3712, 0
  %v3738 = vsel %vm2042, %v3713, 0
  %v3741 = vsel %vm2042, %v3714, 0
  %v3744 = vsel %vm2042, %v3715, 0
  %v3747 = vsel %vm2042, %v3716, 0
  %v3750 = vsel %vm2042, %v3717, 0
  %3752 = vmatpush.bf16.msra.mxu0 0
  %3753 = vmatpush.bf16.msra.mxu0 0
  %3754 = vmatpush.bf16.msra.mxu0 0
  %3755 = vmatpush.bf16.msra.mxu0 0
  %3756 = vmatpush.bf16.msra.mxu0 0
  %3757 = vmatpush.bf16.msra.mxu0 0
  %3758 = vmatpush.bf16.msra.mxu0 0
  %3759 = vmatpush.bf16.msra.mxu0 %v3726
  %3760 = vmatmul.bf16.gmra.mxu0 %v3729
  %v3761 = vpop.f32.mrf.mxu0
  %v3762 = vadd.f32 %v3720, %v3761
  %v3763 = vpop.f32.mrf.mxu0
  %v3764 = vadd.f32 %v3720, %v3763
  %3765 = vmatmul.bf16.gmra.mxu0 %v3732
  %v3766 = vpop.f32.mrf.mxu0
  %v3767 = vadd.f32 %v3720, %v3766
  %v3768 = vpop.f32.mrf.mxu0
  %v3769 = vadd.f32 %v3720, %v3768
  %3770 = vmatmul.bf16.gmra.mxu0 %v3735
  %v3771 = vpop.f32.mrf.mxu0
  %v3772 = vadd.f32 %v3720, %v3771
  %v3773 = vpop.f32.mrf.mxu0
  %v3774 = vadd.f32 %v3720, %v3773
  %3775 = vmatmul.bf16.gmra.mxu0 %v3738
  %v3776 = vpop.f32.mrf.mxu0
  %v3777 = vadd.f32 %v3720, %v3776
  %v3778 = vpop.f32.mrf.mxu0
  %v3779 = vadd.f32 %v3720, %v3778
  %3780 = vmatmul.bf16.gmra.mxu0 %v3741
  %v3781 = vpop.f32.mrf.mxu0
  %v3782 = vadd.f32 %v3720, %v3781
  %v3783 = vpop.f32.mrf.mxu0
  %v3784 = vadd.f32 %v3720, %v3783
  %3785 = vmatmul.bf16.gmra.mxu0 %v3744
  %v3786 = vpop.f32.mrf.mxu0
  %v3787 = vadd.f32 %v3720, %v3786
  %v3788 = vpop.f32.mrf.mxu0
  %v3789 = vadd.f32 %v3720, %v3788
  %3790 = vmatmul.bf16.gmra.mxu0 %v3747
  %v3791 = vpop.f32.mrf.mxu0
  %v3792 = vadd.f32 %v3720, %v3791
  %v3793 = vpop.f32.mrf.mxu0
  %v3794 = vadd.f32 %v3720, %v3793
  %3795 = vmatmul.bf16.gmra.mxu0 %v3750
  %v3796 = vpop.f32.mrf.mxu0
  %v3797 = vadd.f32 %v3720, %v3796
  %v3798 = vpop.f32.mrf.mxu0
  %v3799 = vadd.f32 %v3720, %v3798
  %3800 = vdwg.mxu0
  %v3801 = vsub.f32 0.0, %v3762
  %v3802 = vsub.f32 0.0, %v3764
  %v3803 = vsub.f32 0.0, %v3767
  %v3804 = vsub.f32 0.0, %v3769
  %v3805 = vsub.f32 0.0, %v3772
  %v3806 = vsub.f32 0.0, %v3774
  %v3807 = vsub.f32 0.0, %v3777
  %v3808 = vsub.f32 0.0, %v3779
  %v3809 = vsub.f32 0.0, %v3782
  %v3810 = vsub.f32 0.0, %v3784
  %v3811 = vsub.f32 0.0, %v3787
  %v3812 = vsub.f32 0.0, %v3789
  %v3813 = vsub.f32 0.0, %v3792
  %v3814 = vsub.f32 0.0, %v3794
  %v3815 = vsub.f32 0.0, %v3797
  %v3816 = vsub.f32 0.0, %v3799
  %v3817 = vmul.f32 %v3801, 1.442695
  %v3818 = vpow.pop %v3817
  %v3819 = vmul.f32 %v3802, 1.442695
  %v3820 = vpow.pop %v3819
  %v3821 = vmul.f32 %v3803, 1.442695
  %v3822 = vpow.pop %v3821
  %v3823 = vmul.f32 %v3804, 1.442695
  %v3824 = vpow.pop %v3823
  %v3825 = vmul.f32 %v3805, 1.442695
  %v3826 = vpow.pop %v3825
  %v3827 = vmul.f32 %v3806, 1.442695
  %v3828 = vpow.pop %v3827
  %v3829 = vmul.f32 %v3807, 1.442695
  %v3830 = vpow.pop %v3829
  %v3831 = vmul.f32 %v3808, 1.442695
  %v3832 = vpow.pop %v3831
  %v3833 = vmul.f32 %v3809, 1.442695
  %v3834 = vpow.pop %v3833
  %v3835 = vmul.f32 %v3810, 1.442695
  %v3836 = vpow.pop %v3835
  %v3837 = vmul.f32 %v3811, 1.442695
  %v3838 = vpow.pop %v3837
  %v3839 = vmul.f32 %v3812, 1.442695
  %v3840 = vpow.pop %v3839
  %v3841 = vmul.f32 %v3813, 1.442695
  %v3842 = vpow.pop %v3841
  %v3843 = vmul.f32 %v3814, 1.442695
  %v3844 = vpow.pop %v3843
  %v3845 = vmul.f32 %v3815, 1.442695
  %v3846 = vpow.pop %v3845
  %v3847 = vmul.f32 %v3816, 1.442695
  %v3848 = vpow.pop %v3847
  %v3849 = vadd.f32 %v3818, 1.0
  %v3850 = vadd.f32 %v3820, 1.0
  %v3851 = vadd.f32 %v3822, 1.0
  %v3852 = vadd.f32 %v3824, 1.0
  %v3853 = vadd.f32 %v3826, 1.0
  %v3854 = vadd.f32 %v3828, 1.0
  %v3855 = vadd.f32 %v3830, 1.0
  %v3856 = vadd.f32 %v3832, 1.0
  %v3857 = vadd.f32 %v3834, 1.0
  %v3858 = vadd.f32 %v3836, 1.0
  %v3859 = vadd.f32 %v3838, 1.0
  %v3860 = vadd.f32 %v3840, 1.0
  %v3861 = vadd.f32 %v3842, 1.0
  %v3862 = vadd.f32 %v3844, 1.0
  %v3863 = vadd.f32 %v3846, 1.0
  %v3864 = vadd.f32 %v3848, 1.0
  %v3865 = vrcp.pop %v3849
  %v3866 = vrcp.pop %v3850
  %v3867 = vrcp.pop %v3851
  %v3868 = vrcp.pop %v3852
  %v3869 = vrcp.pop %v3853
  %v3870 = vrcp.pop %v3854
  %v3871 = vrcp.pop %v3855
  %v3872 = vrcp.pop %v3856
  %v3873 = vrcp.pop %v3857
  %v3874 = vrcp.pop %v3858
  %v3875 = vrcp.pop %v3859
  %v3876 = vrcp.pop %v3860
  %v3877 = vrcp.pop %v3861
  %v3878 = vrcp.pop %v3862
  %v3879 = vrcp.pop %v3863
  %v3880 = vrcp.pop %v3864
  %v3881 = vmul.f32 %v3762, %v3865
  %v3882 = vmul.f32 %v3764, %v3866
  %v3883 = vmul.f32 %v3767, %v3867
  %v3884 = vmul.f32 %v3769, %v3868
  %v3885 = vmul.f32 %v3772, %v3869
  %v3886 = vmul.f32 %v3774, %v3870
  %v3887 = vmul.f32 %v3777, %v3871
  %v3888 = vmul.f32 %v3779, %v3872
  %v3889 = vmul.f32 %v3782, %v3873
  %v3890 = vmul.f32 %v3784, %v3874
  %v3891 = vmul.f32 %v3787, %v3875
  %v3892 = vmul.f32 %v3789, %v3876
  %v3893 = vmul.f32 %v3792, %v3877
  %v3894 = vmul.f32 %v3794, %v3878
  %v3895 = vmul.f32 %v3797, %v3879
  %v3896 = vmul.f32 %v3799, %v3880
  %s3897 = scalar_lea.vmem [#allocation6], 32
  %3898 = vst.msk [vmem:[%s3897 + $0x2] sm:$0xff] %vm934, %v3881
  %3899 = vst.msk [vmem:[%s3897 + $0x12] sm:$0xff] %vm934, %v3882
  %3900 = vst.msk [vmem:[%s3897 + $0x22] sm:$0xff] %vm934, %v3883
  %3901 = vst.msk [vmem:[%s3897 + $0x32] sm:$0xff] %vm934, %v3884
  %3902 = vst.msk [vmem:[%s3897 + $0x42] sm:$0xff] %vm934, %v3885
  %3903 = vst.msk [vmem:[%s3897 + $0x52] sm:$0xff] %vm934, %v3886
  %3904 = vst.msk [vmem:[%s3897 + $0x62] sm:$0xff] %vm934, %v3887
  %3905 = vst.msk [vmem:[%s3897 + $0x72] sm:$0xff] %vm934, %v3888
  %3906 = vst.msk [vmem:[%s3897 + $0xc2] sm:$0xff] %vm934, %v3889
  %3907 = vst.msk [vmem:[%s3897 + $0xd2] sm:$0xff] %vm934, %v3890
  %3908 = vst.msk [vmem:[%s3897 + $0xe2] sm:$0xff] %vm934, %v3891
  %3909 = vst.msk [vmem:[%s3897 + $0xf2] sm:$0xff] %vm934, %v3892
  %3910 = vst.msk [vmem:[%s3897 + $0x102] sm:$0xff] %vm934, %v3893
  %3911 = vst.msk [vmem:[%s3897 + $0x112] sm:$0xff] %vm934, %v3894
  %3912 = vst.msk [vmem:[%s3897 + $0x122] sm:$0xff] %vm934, %v3895
  %3913 = vst.msk [vmem:[%s3897 + $0x132] sm:$0xff] %vm934, %v3896
  %v3914 = vld [vmem:[#allocation6] sm:$0xff]
  %v3915 = vld [vmem:[#allocation6 + $0x8] sm:$0xf]
  %v3916 = vld [vmem:[#allocation6 + $0x10] sm:$0xff]
  %v3917 = vld [vmem:[#allocation6 + $0x18] sm:$0xf]
  %v3918 = vld [vmem:[#allocation6 + $0x20] sm:$0xff]
  %v3919 = vld [vmem:[#allocation6 + $0x28] sm:$0xf]
  %v3920 = vld [vmem:[#allocation6 + $0x30] sm:$0xff]
  %v3921 = vld [vmem:[#allocation6 + $0x38] sm:$0xf]
  %v3922 = vld [vmem:[#allocation6 + $0x40] sm:$0xff]
  %v3923 = vld [vmem:[#allocation6 + $0x48] sm:$0xf]
  %v3924 = vld [vmem:[#allocation6 + $0x50] sm:$0xff]
  %v3925 = vld [vmem:[#allocation6 + $0x58] sm:$0xf]
  %v3926 = vld [vmem:[#allocation6 + $0x60] sm:$0xff]
  %v3927 = vld [vmem:[#allocation6 + $0x68] sm:$0xf]
  %v3928 = vld [vmem:[#allocation6 + $0x70] sm:$0xff]
  %v3929 = vld [vmem:[#allocation6 + $0x78] sm:$0xf]
  %v3930 = vld [vmem:[#allocation6 + $0xc0] sm:$0xff]
  %v3931 = vld [vmem:[#allocation6 + $0xc8] sm:$0xf]
  %v3932 = vld [vmem:[#allocation6 + $0xd0] sm:$0xff]
  %v3933 = vld [vmem:[#allocation6 + $0xd8] sm:$0xf]
  %v3934 = vld [vmem:[#allocation6 + $0xe0] sm:$0xff]
  %v3935 = vld [vmem:[#allocation6 + $0xe8] sm:$0xf]
  %v3936 = vld [vmem:[#allocation6 + $0xf0] sm:$0xff]
  %v3937 = vld [vmem:[#allocation6 + $0xf8] sm:$0xf]
  %v3938 = vld [vmem:[#allocation6 + $0x100] sm:$0xff]
  %v3939 = vld [vmem:[#allocation6 + $0x108] sm:$0xf]
  %v3940 = vld [vmem:[#allocation6 + $0x110] sm:$0xff]
  %v3941 = vld [vmem:[#allocation6 + $0x118] sm:$0xf]
  %v3942 = vld [vmem:[#allocation6 + $0x120] sm:$0xff]
  %v3943 = vld [vmem:[#allocation6 + $0x128] sm:$0xf]
  %v3944 = vld [vmem:[#allocation6 + $0x130] sm:$0xff]
  %v3945 = vld [vmem:[#allocation6 + $0x138] sm:$0xf]
  %s3946 = scalar_lea.vmem [#allocation6], 16
  %v3947 = vld [vmem:[%s3946] sm:$0xff]
  %v3948 = vld [vmem:[%s3946 + $0x8] sm:$0xf]
  %v3949 = vld [vmem:[%s3946 + $0x10] sm:$0xff]
  %v3950 = vld [vmem:[%s3946 + $0x18] sm:$0xf]
  %v3951 = vld [vmem:[%s3946 + $0x20] sm:$0xff]
  %v3952 = vld [vmem:[%s3946 + $0x28] sm:$0xf]
  %v3953 = vld [vmem:[%s3946 + $0x30] sm:$0xff]
  %v3954 = vld [vmem:[%s3946 + $0x38] sm:$0xf]
  %v3955 = vld [vmem:[%s3946 + $0x40] sm:$0xff]
  %v3956 = vld [vmem:[%s3946 + $0x48] sm:$0xf]
  %v3957 = vld [vmem:[%s3946 + $0x50] sm:$0xff]
  %v3958 = vld [vmem:[%s3946 + $0x58] sm:$0xf]
  %v3959 = vld [vmem:[%s3946 + $0x60] sm:$0xff]
  %v3960 = vld [vmem:[%s3946 + $0x68] sm:$0xf]
  %v3961 = vld [vmem:[%s3946 + $0x70] sm:$0xff]
  %v3962 = vld [vmem:[%s3946 + $0x78] sm:$0xf]
  %v3963 = vld [vmem:[%s3946 + $0xc0] sm:$0xff]
  %v3964 = vld [vmem:[%s3946 + $0xc8] sm:$0xf]
  %v3965 = vld [vmem:[%s3946 + $0xd0] sm:$0xff]
  %v3966 = vld [vmem:[%s3946 + $0xd8] sm:$0xf]
  %v3967 = vld [vmem:[%s3946 + $0xe0] sm:$0xff]
  %v3968 = vld [vmem:[%s3946 + $0xe8] sm:$0xf]
  %v3969 = vld [vmem:[%s3946 + $0xf0] sm:$0xff]
  %v3970 = vld [vmem:[%s3946 + $0xf8] sm:$0xf]
  %v3971 = vld [vmem:[%s3946 + $0x100] sm:$0xff]
  %v3972 = vld [vmem:[%s3946 + $0x108] sm:$0xf]
  %v3973 = vld [vmem:[%s3946 + $0x110] sm:$0xff]
  %v3974 = vld [vmem:[%s3946 + $0x118] sm:$0xf]
  %v3975 = vld [vmem:[%s3946 + $0x120] sm:$0xff]
  %v3976 = vld [vmem:[%s3946 + $0x128] sm:$0xf]
  %v3977 = vld [vmem:[%s3946 + $0x130] sm:$0xff]
  %v3978 = vld [vmem:[%s3946 + $0x138] sm:$0xf]
  %v3979 = vmax.f32 %v3914, %v3947
  %v3980 = vmax.f32 %v3915, %v3948
  %v3981 = vmax.f32 %v3916, %v3949
  %v3982 = vmax.f32 %v3917, %v3950
  %v3983 = vmax.f32 %v3918, %v3951
  %v3984 = vmax.f32 %v3919, %v3952
  %v3985 = vmax.f32 %v3920, %v3953
  %v3986 = vmax.f32 %v3921, %v3954
  %v3987 = vmax.f32 %v3922, %v3955
  %v3988 = vmax.f32 %v3923, %v3956
  %v3989 = vmax.f32 %v3924, %v3957
  %v3990 = vmax.f32 %v3925, %v3958
  %v3991 = vmax.f32 %v3926, %v3959
  %v3992 = vmax.f32 %v3927, %v3960
  %v3993 = vmax.f32 %v3928, %v3961
  %v3994 = vmax.f32 %v3929, %v3962
  %v3995 = vmax.f32 %v3930, %v3963
  %v3996 = vmax.f32 %v3931, %v3964
  %v3997 = vmax.f32 %v3932, %v3965
  %v3998 = vmax.f32 %v3933, %v3966
  %v3999 = vmax.f32 %v3934, %v3967
  %v4000 = vmax.f32 %v3935, %v3968
  %v4001 = vmax.f32 %v3936, %v3969
  %v4002 = vmax.f32 %v3937, %v3970
  %v4003 = vmax.f32 %v3938, %v3971
  %v4004 = vmax.f32 %v3939, %v3972
  %v4005 = vmax.f32 %v3940, %v3973
  %v4006 = vmax.f32 %v3941, %v3974
  %v4007 = vmax.f32 %v3942, %v3975
  %v4008 = vmax.f32 %v3943, %v3976
  %v4009 = vmax.f32 %v3944, %v3977
  %v4010 = vmax.f32 %v3945, %v3978
  %v4011 = vld [vmem:[%s3897] sm:$0xff]
  %v4012 = vld [vmem:[%s3897 + $0x8] sm:$0xf]
  %v4013 = vld [vmem:[%s3897 + $0x10] sm:$0xff]
  %v4014 = vld [vmem:[%s3897 + $0x18] sm:$0xf]
  %v4015 = vld [vmem:[%s3897 + $0x20] sm:$0xff]
  %v4016 = vld [vmem:[%s3897 + $0x28] sm:$0xf]
  %v4017 = vld [vmem:[%s3897 + $0x30] sm:$0xff]
  %v4018 = vld [vmem:[%s3897 + $0x38] sm:$0xf]
  %v4019 = vld [vmem:[%s3897 + $0x40] sm:$0xff]
  %v4020 = vld [vmem:[%s3897 + $0x48] sm:$0xf]
  %v4021 = vld [vmem:[%s3897 + $0x50] sm:$0xff]
  %v4022 = vld [vmem:[%s3897 + $0x58] sm:$0xf]
  %v4023 = vld [vmem:[%s3897 + $0x60] sm:$0xff]
  %v4024 = vld [vmem:[%s3897 + $0x68] sm:$0xf]
  %v4025 = vld [vmem:[%s3897 + $0x70] sm:$0xff]
  %v4026 = vld [vmem:[%s3897 + $0x78] sm:$0xf]
  %v4027 = vld [vmem:[%s3897 + $0xc0] sm:$0xff]
  %v4028 = vld [vmem:[%s3897 + $0xc8] sm:$0xf]
  %v4029 = vld [vmem:[%s3897 + $0xd0] sm:$0xff]
  %v4030 = vld [vmem:[%s3897 + $0xd8] sm:$0xf]
  %v4031 = vld [vmem:[%s3897 + $0xe0] sm:$0xff]
  %v4032 = vld [vmem:[%s3897 + $0xe8] sm:$0xf]
  %v4033 = vld [vmem:[%s3897 + $0xf0] sm:$0xff]
  %v4034 = vld [vmem:[%s3897 + $0xf8] sm:$0xf]
  %v4035 = vld [vmem:[%s3897 + $0x100] sm:$0xff]
  %v4036 = vld [vmem:[%s3897 + $0x108] sm:$0xf]
  %v4037 = vld [vmem:[%s3897 + $0x110] sm:$0xff]
  %v4038 = vld [vmem:[%s3897 + $0x118] sm:$0xf]
  %v4039 = vld [vmem:[%s3897 + $0x120] sm:$0xff]
  %v4040 = vld [vmem:[%s3897 + $0x128] sm:$0xf]
  %v4041 = vld [vmem:[%s3897 + $0x130] sm:$0xff]
  %v4042 = vld [vmem:[%s3897 + $0x138] sm:$0xf]
  %v4043 = vmax.f32 %v3979, %v4011
  %v4044 = vmax.f32 %v3980, %v4012
  %v4045 = vmax.f32 %v3981, %v4013
  %v4046 = vmax.f32 %v3982, %v4014
  %v4047 = vmax.f32 %v3983, %v4015
  %v4048 = vmax.f32 %v3984, %v4016
  %v4049 = vmax.f32 %v3985, %v4017
  %v4050 = vmax.f32 %v3986, %v4018
  %v4051 = vmax.f32 %v3987, %v4019
  %v4052 = vmax.f32 %v3988, %v4020
  %v4053 = vmax.f32 %v3989, %v4021
  %v4054 = vmax.f32 %v3990, %v4022
  %v4055 = vmax.f32 %v3991, %v4023
  %v4056 = vmax.f32 %v3992, %v4024
  %v4057 = vmax.f32 %v3993, %v4025
  %v4058 = vmax.f32 %v3994, %v4026
  %v4059 = vmax.f32 %v3995, %v4027
  %v4060 = vmax.f32 %v3996, %v4028
  %v4061 = vmax.f32 %v3997, %v4029
  %v4062 = vmax.f32 %v3998, %v4030
  %v4063 = vmax.f32 %v3999, %v4031
  %v4064 = vmax.f32 %v4000, %v4032
  %v4065 = vmax.f32 %v4001, %v4033
  %v4066 = vmax.f32 %v4002, %v4034
  %v4067 = vmax.f32 %v4003, %v4035
  %v4068 = vmax.f32 %v4004, %v4036
  %v4069 = vmax.f32 %v4005, %v4037
  %v4070 = vmax.f32 %v4006, %v4038
  %v4071 = vmax.f32 %v4007, %v4039
  %v4072 = vmax.f32 %v4008, %v4040
  %v4073 = vmax.f32 %v4009, %v4041
  %v4074 = vmax.f32 %v4010, %v4042
  %s4075 = scalar_lea.vmem [#allocation6], 48
  %v4076 = vld [vmem:[%s4075] sm:$0xff]
  %v4077 = vld [vmem:[%s4075 + $0x8] sm:$0xf]
  %v4078 = vld [vmem:[%s4075 + $0x10] sm:$0xff]
  %v4079 = vld [vmem:[%s4075 + $0x18] sm:$0xf]
  %v4080 = vld [vmem:[%s4075 + $0x20] sm:$0xff]
  %v4081 = vld [vmem:[%s4075 + $0x28] sm:$0xf]
  %v4082 = vld [vmem:[%s4075 + $0x30] sm:$0xff]
  %v4083 = vld [vmem:[%s4075 + $0x38] sm:$0xf]
  %v4084 = vld [vmem:[%s4075 + $0x40] sm:$0xff]
  %v4085 = vld [vmem:[%s4075 + $0x48] sm:$0xf]
  %v4086 = vld [vmem:[%s4075 + $0x50] sm:$0xff]
  %v4087 = vld [vmem:[%s4075 + $0x58] sm:$0xf]
  %v4088 = vld [vmem:[%s4075 + $0x60] sm:$0xff]
  %v4089 = vld [vmem:[%s4075 + $0x68] sm:$0xf]
  %v4090 = vld [vmem:[%s4075 + $0x70] sm:$0xff]
  %v4091 = vld [vmem:[%s4075 + $0x78] sm:$0xf]
  %v4092 = vld [vmem:[%s4075 + $0xc0] sm:$0xff]
  %v4093 = vld [vmem:[%s4075 + $0xc8] sm:$0xf]
  %v4094 = vld [vmem:[%s4075 + $0xd0] sm:$0xff]
  %v4095 = vld [vmem:[%s4075 + $0xd8] sm:$0xf]
  %v4096 = vld [vmem:[%s4075 + $0xe0] sm:$0xff]
  %v4097 = vld [vmem:[%s4075 + $0xe8] sm:$0xf]
  %v4098 = vld [vmem:[%s4075 + $0xf0] sm:$0xff]
  %v4099 = vld [vmem:[%s4075 + $0xf8] sm:$0xf]
  %v4100 = vld [vmem:[%s4075 + $0x100] sm:$0xff]
  %v4101 = vld [vmem:[%s4075 + $0x108] sm:$0xf]
  %v4102 = vld [vmem:[%s4075 + $0x110] sm:$0xff]
  %v4103 = vld [vmem:[%s4075 + $0x118] sm:$0xf]
  %v4104 = vld [vmem:[%s4075 + $0x120] sm:$0xff]
  %v4105 = vld [vmem:[%s4075 + $0x128] sm:$0xf]
  %v4106 = vld [vmem:[%s4075 + $0x130] sm:$0xff]
  %v4107 = vld [vmem:[%s4075 + $0x138] sm:$0xf]
  %v4108 = vmax.f32 %v4043, %v4076
  %v4109 = vmax.f32 %v4044, %v4077
  %v4110 = vmax.f32 %v4045, %v4078
  %v4111 = vmax.f32 %v4046, %v4079
  %v4112 = vmax.f32 %v4047, %v4080
  %v4113 = vmax.f32 %v4048, %v4081
  %v4114 = vmax.f32 %v4049, %v4082
  %v4115 = vmax.f32 %v4050, %v4083
  %v4116 = vmax.f32 %v4051, %v4084
  %v4117 = vmax.f32 %v4052, %v4085
  %v4118 = vmax.f32 %v4053, %v4086
  %v4119 = vmax.f32 %v4054, %v4087
  %v4120 = vmax.f32 %v4055, %v4088
  %v4121 = vmax.f32 %v4056, %v4089
  %v4122 = vmax.f32 %v4057, %v4090
  %v4123 = vmax.f32 %v4058, %v4091
  %v4124 = vmax.f32 %v4059, %v4092
  %v4125 = vmax.f32 %v4060, %v4093
  %v4126 = vmax.f32 %v4061, %v4094
  %v4127 = vmax.f32 %v4062, %v4095
  %v4128 = vmax.f32 %v4063, %v4096
  %v4129 = vmax.f32 %v4064, %v4097
  %v4130 = vmax.f32 %v4065, %v4098
  %v4131 = vmax.f32 %v4066, %v4099
  %v4132 = vmax.f32 %v4067, %v4100
  %v4133 = vmax.f32 %v4068, %v4101
  %v4134 = vmax.f32 %v4069, %v4102
  %v4135 = vmax.f32 %v4070, %v4103
  %v4136 = vmax.f32 %v4071, %v4104
  %v4137 = vmax.f32 %v4072, %v4105
  %v4138 = vmax.f32 %v4073, %v4106
  %v4139 = vmax.f32 %v4074, %v4107
  %s4140 = scalar_lea.vmem [#allocation6], 64
  %v4141 = vld [vmem:[%s4140] sm:$0xff]
  %v4142 = vld [vmem:[%s4140 + $0x8] sm:$0xf]
  %v4143 = vld [vmem:[%s4140 + $0x10] sm:$0xff]
  %v4144 = vld [vmem:[%s4140 + $0x18] sm:$0xf]
  %v4145 = vld [vmem:[%s4140 + $0x20] sm:$0xff]
  %v4146 = vld [vmem:[%s4140 + $0x28] sm:$0xf]
  %v4147 = vld [vmem:[%s4140 + $0x30] sm:$0xff]
  %v4148 = vld [vmem:[%s4140 + $0x38] sm:$0xf]
  %v4149 = vld [vmem:[%s4140 + $0x40] sm:$0xff]
  %v4150 = vld [vmem:[%s4140 + $0x48] sm:$0xf]
  %v4151 = vld [vmem:[%s4140 + $0x50] sm:$0xff]
  %v4152 = vld [vmem:[%s4140 + $0x58] sm:$0xf]
  %v4153 = vld [vmem:[%s4140 + $0x60] sm:$0xff]
  %v4154 = vld [vmem:[%s4140 + $0x68] sm:$0xf]
  %v4155 = vld [vmem:[%s4140 + $0x70] sm:$0xff]
  %v4156 = vld [vmem:[%s4140 + $0x78] sm:$0xf]
  %v4157 = vld [vmem:[%s4140 + $0xc0] sm:$0xff]
  %v4158 = vld [vmem:[%s4140 + $0xc8] sm:$0xf]
  %v4159 = vld [vmem:[%s4140 + $0xd0] sm:$0xff]
  %v4160 = vld [vmem:[%s4140 + $0xd8] sm:$0xf]
  %v4161 = vld [vmem:[%s4140 + $0xe0] sm:$0xff]
  %v4162 = vld [vmem:[%s4140 + $0xe8] sm:$0xf]
  %v4163 = vld [vmem:[%s4140 + $0xf0] sm:$0xff]
  %v4164 = vld [vmem:[%s4140 + $0xf8] sm:$0xf]
  %v4165 = vld [vmem:[%s4140 + $0x100] sm:$0xff]
  %v4166 = vld [vmem:[%s4140 + $0x108] sm:$0xf]
  %v4167 = vld [vmem:[%s4140 + $0x110] sm:$0xff]
  %v4168 = vld [vmem:[%s4140 + $0x118] sm:$0xf]
  %v4169 = vld [vmem:[%s4140 + $0x120] sm:$0xff]
  %v4170 = vld [vmem:[%s4140 + $0x128] sm:$0xf]
  %v4171 = vld [vmem:[%s4140 + $0x130] sm:$0xff]
  %v4172 = vld [vmem:[%s4140 + $0x138] sm:$0xf]
  %v4173 = vmax.f32 %v4108, %v4141
  %v4174 = vmax.f32 %v4109, %v4142
  %v4175 = vmax.f32 %v4110, %v4143
  %v4176 = vmax.f32 %v4111, %v4144
  %v4177 = vmax.f32 %v4112, %v4145
  %v4178 = vmax.f32 %v4113, %v4146
  %v4179 = vmax.f32 %v4114, %v4147
  %v4180 = vmax.f32 %v4115, %v4148
  %v4181 = vmax.f32 %v4116, %v4149
  %v4182 = vmax.f32 %v4117, %v4150
  %v4183 = vmax.f32 %v4118, %v4151
  %v4184 = vmax.f32 %v4119, %v4152
  %v4185 = vmax.f32 %v4120, %v4153
  %v4186 = vmax.f32 %v4121, %v4154
  %v4187 = vmax.f32 %v4122, %v4155
  %v4188 = vmax.f32 %v4123, %v4156
  %v4189 = vmax.f32 %v4124, %v4157
  %v4190 = vmax.f32 %v4125, %v4158
  %v4191 = vmax.f32 %v4126, %v4159
  %v4192 = vmax.f32 %v4127, %v4160
  %v4193 = vmax.f32 %v4128, %v4161
  %v4194 = vmax.f32 %v4129, %v4162
  %v4195 = vmax.f32 %v4130, %v4163
  %v4196 = vmax.f32 %v4131, %v4164
  %v4197 = vmax.f32 %v4132, %v4165
  %v4198 = vmax.f32 %v4133, %v4166
  %v4199 = vmax.f32 %v4134, %v4167
  %v4200 = vmax.f32 %v4135, %v4168
  %v4201 = vmax.f32 %v4136, %v4169
  %v4202 = vmax.f32 %v4137, %v4170
  %v4203 = vmax.f32 %v4138, %v4171
  %v4204 = vmax.f32 %v4139, %v4172
  %vm4237 = vcmask 1046528
  %v4238 = vrot.slane %v4173, 1
  %v4239 = vrot.slane %v4174, 1
  %v4240 = vsel %vm4237, %v4238, %v4239
  %v4241 = vrot.slane %v4175, 1
  %v4242 = vrot.slane %v4176, 1
  %v4243 = vsel %vm4237, %v4241, %v4242
  %v4244 = vrot.slane %v4177, 1
  %v4245 = vrot.slane %v4178, 1
  %v4246 = vsel %vm4237, %v4244, %v4245
  %v4247 = vrot.slane %v4179, 1
  %v4248 = vrot.slane %v4180, 1
  %v4249 = vsel %vm4237, %v4247, %v4248
  %v4250 = vrot.slane %v4181, 1
  %v4251 = vrot.slane %v4182, 1
  %v4252 = vsel %vm4237, %v4250, %v4251
  %v4253 = vrot.slane %v4183, 1
  %v4254 = vrot.slane %v4184, 1
  %v4255 = vsel %vm4237, %v4253, %v4254
  %v4256 = vrot.slane %v4185, 1
  %v4257 = vrot.slane %v4186, 1
  %v4258 = vsel %vm4237, %v4256, %v4257
  %v4259 = vrot.slane %v4187, 1
  %v4260 = vrot.slane %v4188, 1
  %v4261 = vsel %vm4237, %v4259, %v4260
  %v4262 = vrot.slane %v4189, 1
  %v4263 = vrot.slane %v4190, 1
  %v4264 = vsel %vm4237, %v4262, %v4263
  %v4265 = vrot.slane %v4191, 1
  %v4266 = vrot.slane %v4192, 1
  %v4267 = vsel %vm4237, %v4265, %v4266
  %v4268 = vrot.slane %v4193, 1
  %v4269 = vrot.slane %v4194, 1
  %v4270 = vsel %vm4237, %v4268, %v4269
  %v4271 = vrot.slane %v4195, 1
  %v4272 = vrot.slane %v4196, 1
  %v4273 = vsel %vm4237, %v4271, %v4272
  %v4274 = vrot.slane %v4197, 1
  %v4275 = vrot.slane %v4198, 1
  %v4276 = vsel %vm4237, %v4274, %v4275
  %v4277 = vrot.slane %v4199, 1
  %v4278 = vrot.slane %v4200, 1
  %v4279 = vsel %vm4237, %v4277, %v4278
  %v4280 = vrot.slane %v4201, 1
  %v4281 = vrot.slane %v4202, 1
  %v4282 = vsel %vm4237, %v4280, %v4281
  %v4283 = vrot.slane %v4203, 1
  %v4284 = vrot.slane %v4204, 1
  %v4285 = vsel %vm4237, %v4283, %v4284
  %v4302 = vmax.f32 %v4173, %v4240
  %v4303 = vmax.f32 %v4175, %v4243
  %v4304 = vmax.f32 %v4177, %v4246
  %v4305 = vmax.f32 %v4179, %v4249
  %v4306 = vmax.f32 %v4181, %v4252
  %v4307 = vmax.f32 %v4183, %v4255
  %v4308 = vmax.f32 %v4185, %v4258
  %v4309 = vmax.f32 %v4187, %v4261
  %v4310 = vmax.f32 %v4189, %v4264
  %v4311 = vmax.f32 %v4191, %v4267
  %v4312 = vmax.f32 %v4193, %v4270
  %v4313 = vmax.f32 %v4195, %v4273
  %v4314 = vmax.f32 %v4197, %v4276
  %v4315 = vmax.f32 %v4199, %v4279
  %v4316 = vmax.f32 %v4201, %v4282
  %v4317 = vmax.f32 %v4203, %v4285
  %v4318 = vrot.slane %v4173, 2
  %v4319 = vrot.slane %v4174, 2
  %v4320 = vsel %vm375, %v4318, %v4319
  %v4321 = vrot.slane %v4175, 2
  %v4322 = vrot.slane %v4176, 2
  %v4323 = vsel %vm375, %v4321, %v4322
  %v4324 = vrot.slane %v4177, 2
  %v4325 = vrot.slane %v4178, 2
  %v4326 = vsel %vm375, %v4324, %v4325
  %v4327 = vrot.slane %v4179, 2
  %v4328 = vrot.slane %v4180, 2
  %v4329 = vsel %vm375, %v4327, %v4328
  %v4330 = vrot.slane %v4181, 2
  %v4331 = vrot.slane %v4182, 2
  %v4332 = vsel %vm375, %v4330, %v4331
  %v4333 = vrot.slane %v4183, 2
  %v4334 = vrot.slane %v4184, 2
  %v4335 = vsel %vm375, %v4333, %v4334
  %v4336 = vrot.slane %v4185, 2
  %v4337 = vrot.slane %v4186, 2
  %v4338 = vsel %vm375, %v4336, %v4337
  %v4339 = vrot.slane %v4187, 2
  %v4340 = vrot.slane %v4188, 2
  %v4341 = vsel %vm375, %v4339, %v4340
  %v4342 = vrot.slane %v4189, 2
  %v4343 = vrot.slane %v4190, 2
  %v4344 = vsel %vm375, %v4342, %v4343
  %v4345 = vrot.slane %v4191, 2
  %v4346 = vrot.slane %v4192, 2
  %v4347 = vsel %vm375, %v4345, %v4346
  %v4348 = vrot.slane %v4193, 2
  %v4349 = vrot.slane %v4194, 2
  %v4350 = vsel %vm375, %v4348, %v4349
  %v4351 = vrot.slane %v4195, 2
  %v4352 = vrot.slane %v4196, 2
  %v4353 = vsel %vm375, %v4351, %v4352
  %v4354 = vrot.slane %v4197, 2
  %v4355 = vrot.slane %v4198, 2
  %v4356 = vsel %vm375, %v4354, %v4355
  %v4357 = vrot.slane %v4199, 2
  %v4358 = vrot.slane %v4200, 2
  %v4359 = vsel %vm375, %v4357, %v4358
  %v4360 = vrot.slane %v4201, 2
  %v4361 = vrot.slane %v4202, 2
  %v4362 = vsel %vm375, %v4360, %v4361
  %v4363 = vrot.slane %v4203, 2
  %v4364 = vrot.slane %v4204, 2
  %v4365 = vsel %vm375, %v4363, %v4364
  %v4382 = vmax.f32 %v4302, %v4320
  %v4383 = vmax.f32 %v4303, %v4323
  %v4384 = vmax.f32 %v4304, %v4326
  %v4385 = vmax.f32 %v4305, %v4329
  %v4386 = vmax.f32 %v4306, %v4332
  %v4387 = vmax.f32 %v4307, %v4335
  %v4388 = vmax.f32 %v4308, %v4338
  %v4389 = vmax.f32 %v4309, %v4341
  %v4390 = vmax.f32 %v4310, %v4344
  %v4391 = vmax.f32 %v4311, %v4347
  %v4392 = vmax.f32 %v4312, %v4350
  %v4393 = vmax.f32 %v4313, %v4353
  %v4394 = vmax.f32 %v4314, %v4356
  %v4395 = vmax.f32 %v4315, %v4359
  %v4396 = vmax.f32 %v4316, %v4362
  %v4397 = vmax.f32 %v4317, %v4365
  %v4398 = vrot.slane %v4173, 3
  %v4399 = vrot.slane %v4174, 3
  %v4400 = vsel %vm374, %v4398, %v4399
  %v4401 = vrot.slane %v4175, 3
  %v4402 = vrot.slane %v4176, 3
  %v4403 = vsel %vm374, %v4401, %v4402
  %v4404 = vrot.slane %v4177, 3
  %v4405 = vrot.slane %v4178, 3
  %v4406 = vsel %vm374, %v4404, %v4405
  %v4407 = vrot.slane %v4179, 3
  %v4408 = vrot.slane %v4180, 3
  %v4409 = vsel %vm374, %v4407, %v4408
  %v4410 = vrot.slane %v4181, 3
  %v4411 = vrot.slane %v4182, 3
  %v4412 = vsel %vm374, %v4410, %v4411
  %v4413 = vrot.slane %v4183, 3
  %v4414 = vrot.slane %v4184, 3
  %v4415 = vsel %vm374, %v4413, %v4414
  %v4416 = vrot.slane %v4185, 3
  %v4417 = vrot.slane %v4186, 3
  %v4418 = vsel %vm374, %v4416, %v4417
  %v4419 = vrot.slane %v4187, 3
  %v4420 = vrot.slane %v4188, 3
  %v4421 = vsel %vm374, %v4419, %v4420
  %v4422 = vrot.slane %v4189, 3
  %v4423 = vrot.slane %v4190, 3
  %v4424 = vsel %vm374, %v4422, %v4423
  %v4425 = vrot.slane %v4191, 3
  %v4426 = vrot.slane %v4192, 3
  %v4427 = vsel %vm374, %v4425, %v4426
  %v4428 = vrot.slane %v4193, 3
  %v4429 = vrot.slane %v4194, 3
  %v4430 = vsel %vm374, %v4428, %v4429
  %v4431 = vrot.slane %v4195, 3
  %v4432 = vrot.slane %v4196, 3
  %v4433 = vsel %vm374, %v4431, %v4432
  %v4434 = vrot.slane %v4197, 3
  %v4435 = vrot.slane %v4198, 3
  %v4436 = vsel %vm374, %v4434, %v4435
  %v4437 = vrot.slane %v4199, 3
  %v4438 = vrot.slane %v4200, 3
  %v4439 = vsel %vm374, %v4437, %v4438
  %v4440 = vrot.slane %v4201, 3
  %v4441 = vrot.slane %v4202, 3
  %v4442 = vsel %vm374, %v4440, %v4441
  %v4443 = vrot.slane %v4203, 3
  %v4444 = vrot.slane %v4204, 3
  %v4445 = vsel %vm374, %v4443, %v4444
  %v4462 = vmax.f32 %v4382, %v4400
  %v4463 = vmax.f32 %v4383, %v4403
  %v4464 = vmax.f32 %v4384, %v4406
  %v4465 = vmax.f32 %v4385, %v4409
  %v4466 = vmax.f32 %v4386, %v4412
  %v4467 = vmax.f32 %v4387, %v4415
  %v4468 = vmax.f32 %v4388, %v4418
  %v4469 = vmax.f32 %v4389, %v4421
  %v4470 = vmax.f32 %v4390, %v4424
  %v4471 = vmax.f32 %v4391, %v4427
  %v4472 = vmax.f32 %v4392, %v4430
  %v4473 = vmax.f32 %v4393, %v4433
  %v4474 = vmax.f32 %v4394, %v4436
  %v4475 = vmax.f32 %v4395, %v4439
  %v4476 = vmax.f32 %v4396, %v4442
  %v4477 = vmax.f32 %v4397, %v4445
  %v4478 = vrot.slane %v4173, 4
  %v4479 = vrot.slane %v4174, 4
  %v4480 = vsel %vm1873, %v4478, %v4479
  %v4481 = vrot.slane %v4175, 4
  %v4482 = vrot.slane %v4176, 4
  %v4483 = vsel %vm1873, %v4481, %v4482
  %v4484 = vrot.slane %v4177, 4
  %v4485 = vrot.slane %v4178, 4
  %v4486 = vsel %vm1873, %v4484, %v4485
  %v4487 = vrot.slane %v4179, 4
  %v4488 = vrot.slane %v4180, 4
  %v4489 = vsel %vm1873, %v4487, %v4488
  %v4490 = vrot.slane %v4181, 4
  %v4491 = vrot.slane %v4182, 4
  %v4492 = vsel %vm1873, %v4490, %v4491
  %v4493 = vrot.slane %v4183, 4
  %v4494 = vrot.slane %v4184, 4
  %v4495 = vsel %vm1873, %v4493, %v4494
  %v4496 = vrot.slane %v4185, 4
  %v4497 = vrot.slane %v4186, 4
  %v4498 = vsel %vm1873, %v4496, %v4497
  %v4499 = vrot.slane %v4187, 4
  %v4500 = vrot.slane %v4188, 4
  %v4501 = vsel %vm1873, %v4499, %v4500
  %v4502 = vrot.slane %v4189, 4
  %v4503 = vrot.slane %v4190, 4
  %v4504 = vsel %vm1873, %v4502, %v4503
  %v4505 = vrot.slane %v4191, 4
  %v4506 = vrot.slane %v4192, 4
  %v4507 = vsel %vm1873, %v4505, %v4506
  %v4508 = vrot.slane %v4193, 4
  %v4509 = vrot.slane %v4194, 4
  %v4510 = vsel %vm1873, %v4508, %v4509
  %v4511 = vrot.slane %v4195, 4
  %v4512 = vrot.slane %v4196, 4
  %v4513 = vsel %vm1873, %v4511, %v4512
  %v4514 = vrot.slane %v4197, 4
  %v4515 = vrot.slane %v4198, 4
  %v4516 = vsel %vm1873, %v4514, %v4515
  %v4517 = vrot.slane %v4199, 4
  %v4518 = vrot.slane %v4200, 4
  %v4519 = vsel %vm1873, %v4517, %v4518
  %v4520 = vrot.slane %v4201, 4
  %v4521 = vrot.slane %v4202, 4
  %v4522 = vsel %vm1873, %v4520, %v4521
  %v4523 = vrot.slane %v4203, 4
  %v4524 = vrot.slane %v4204, 4
  %v4525 = vsel %vm1873, %v4523, %v4524
  %v4542 = vmax.f32 %v4462, %v4480
  %v4543 = vmax.f32 %v4463, %v4483
  %v4544 = vmax.f32 %v4464, %v4486
  %v4545 = vmax.f32 %v4465, %v4489
  %v4546 = vmax.f32 %v4466, %v4492
  %v4547 = vmax.f32 %v4467, %v4495
  %v4548 = vmax.f32 %v4468, %v4498
  %v4549 = vmax.f32 %v4469, %v4501
  %v4550 = vmax.f32 %v4470, %v4504
  %v4551 = vmax.f32 %v4471, %v4507
  %v4552 = vmax.f32 %v4472, %v4510
  %v4553 = vmax.f32 %v4473, %v4513
  %v4554 = vmax.f32 %v4474, %v4516
  %v4555 = vmax.f32 %v4475, %v4519
  %v4556 = vmax.f32 %v4476, %v4522
  %v4557 = vmax.f32 %v4477, %v4525
  %4558 = vst.msk [vmem:[%s3897 + $0x2] sm:$0xff] %vm934, %v4542
  %4559 = vst.msk [vmem:[%s3897 + $0x12] sm:$0xff] %vm934, %v4543
  %4560 = vst.msk [vmem:[%s3897 + $0x22] sm:$0xff] %vm934, %v4544
  %4561 = vst.msk [vmem:[%s3897 + $0x32] sm:$0xff] %vm934, %v4545
  %4562 = vst.msk [vmem:[%s3897 + $0x42] sm:$0xff] %vm934, %v4546
  %4563 = vst.msk [vmem:[%s3897 + $0x52] sm:$0xff] %vm934, %v4547
  %4564 = vst.msk [vmem:[%s3897 + $0x62] sm:$0xff] %vm934, %v4548
  %4565 = vst.msk [vmem:[%s3897 + $0x72] sm:$0xff] %vm934, %v4549
  %4566 = vst.msk [vmem:[%s3897 + $0xc2] sm:$0xff] %vm934, %v4550
  %4567 = vst.msk [vmem:[%s3897 + $0xd2] sm:$0xff] %vm934, %v4551
  %4568 = vst.msk [vmem:[%s3897 + $0xe2] sm:$0xff] %vm934, %v4552
  %4569 = vst.msk [vmem:[%s3897 + $0xf2] sm:$0xff] %vm934, %v4553
  %4570 = vst.msk [vmem:[%s3897 + $0x102] sm:$0xff] %vm934, %v4554
  %4571 = vst.msk [vmem:[%s3897 + $0x112] sm:$0xff] %vm934, %v4555
  %4572 = vst.msk [vmem:[%s3897 + $0x122] sm:$0xff] %vm934, %v4556
  %4573 = vst.msk [vmem:[%s3897 + $0x132] sm:$0xff] %vm934, %v4557
  %v4574 = vld [vmem:[#allocation6] sm:$0xff]
  %v4575 = vld [vmem:[#allocation6 + $0x8] sm:$0xf]
  %v4576 = vld [vmem:[#allocation6 + $0x10] sm:$0xff]
  %v4577 = vld [vmem:[#allocation6 + $0x18] sm:$0xf]
  %v4578 = vld [vmem:[#allocation6 + $0x20] sm:$0xff]
  %v4579 = vld [vmem:[#allocation6 + $0x28] sm:$0xf]
  %v4580 = vld [vmem:[#allocation6 + $0x30] sm:$0xff]
  %v4581 = vld [vmem:[#allocation6 + $0x38] sm:$0xf]
  %v4582 = vld [vmem:[#allocation6 + $0x40] sm:$0xff]
  %v4583 = vld [vmem:[#allocation6 + $0x48] sm:$0xf]
  %v4584 = vld [vmem:[#allocation6 + $0x50] sm:$0xff]
  %v4585 = vld [vmem:[#allocation6 + $0x58] sm:$0xf]
  %v4586 = vld [vmem:[#allocation6 + $0x60] sm:$0xff]
  %v4587 = vld [vmem:[#allocation6 + $0x68] sm:$0xf]
  %v4588 = vld [vmem:[#allocation6 + $0x70] sm:$0xff]
  %v4589 = vld [vmem:[#allocation6 + $0x78] sm:$0xf]
  %v4590 = vld [vmem:[#allocation6 + $0xc0] sm:$0xff]
  %v4591 = vld [vmem:[#allocation6 + $0xc8] sm:$0xf]
  %v4592 = vld [vmem:[#allocation6 + $0xd0] sm:$0xff]
  %v4593 = vld [vmem:[#allocation6 + $0xd8] sm:$0xf]
  %v4594 = vld [vmem:[#allocation6 + $0xe0] sm:$0xff]
  %v4595 = vld [vmem:[#allocation6 + $0xe8] sm:$0xf]
  %v4596 = vld [vmem:[#allocation6 + $0xf0] sm:$0xff]
  %v4597 = vld [vmem:[#allocation6 + $0xf8] sm:$0xf]
  %v4598 = vld [vmem:[#allocation6 + $0x100] sm:$0xff]
  %v4599 = vld [vmem:[#allocation6 + $0x108] sm:$0xf]
  %v4600 = vld [vmem:[#allocation6 + $0x110] sm:$0xff]
  %v4601 = vld [vmem:[#allocation6 + $0x118] sm:$0xf]
  %v4602 = vld [vmem:[#allocation6 + $0x120] sm:$0xff]
  %v4603 = vld [vmem:[#allocation6 + $0x128] sm:$0xf]
  %v4604 = vld [vmem:[#allocation6 + $0x130] sm:$0xff]
  %v4605 = vld [vmem:[#allocation6 + $0x138] sm:$0xf]
  %v4606 = vld [vmem:[%s3946] sm:$0xff]
  %v4607 = vld [vmem:[%s3946 + $0x8] sm:$0xf]
  %v4608 = vld [vmem:[%s3946 + $0x10] sm:$0xff]
  %v4609 = vld [vmem:[%s3946 + $0x18] sm:$0xf]
  %v4610 = vld [vmem:[%s3946 + $0x20] sm:$0xff]
  %v4611 = vld [vmem:[%s3946 + $0x28] sm:$0xf]
  %v4612 = vld [vmem:[%s3946 + $0x30] sm:$0xff]
  %v4613 = vld [vmem:[%s3946 + $0x38] sm:$0xf]
  %v4614 = vld [vmem:[%s3946 + $0x40] sm:$0xff]
  %v4615 = vld [vmem:[%s3946 + $0x48] sm:$0xf]
  %v4616 = vld [vmem:[%s3946 + $0x50] sm:$0xff]
  %v4617 = vld [vmem:[%s3946 + $0x58] sm:$0xf]
  %v4618 = vld [vmem:[%s3946 + $0x60] sm:$0xff]
  %v4619 = vld [vmem:[%s3946 + $0x68] sm:$0xf]
  %v4620 = vld [vmem:[%s3946 + $0x70] sm:$0xff]
  %v4621 = vld [vmem:[%s3946 + $0x78] sm:$0xf]
  %v4622 = vld [vmem:[%s3946 + $0xc0] sm:$0xff]
  %v4623 = vld [vmem:[%s3946 + $0xc8] sm:$0xf]
  %v4624 = vld [vmem:[%s3946 + $0xd0] sm:$0xff]
  %v4625 = vld [vmem:[%s3946 + $0xd8] sm:$0xf]
  %v4626 = vld [vmem:[%s3946 + $0xe0] sm:$0xff]
  %v4627 = vld [vmem:[%s3946 + $0xe8] sm:$0xf]
  %v4628 = vld [vmem:[%s3946 + $0xf0] sm:$0xff]
  %v4629 = vld [vmem:[%s3946 + $0xf8] sm:$0xf]
  %v4630 = vld [vmem:[%s3946 + $0x100] sm:$0xff]
  %v4631 = vld [vmem:[%s3946 + $0x108] sm:$0xf]
  %v4632 = vld [vmem:[%s3946 + $0x110] sm:$0xff]
  %v4633 = vld [vmem:[%s3946 + $0x118] sm:$0xf]
  %v4634 = vld [vmem:[%s3946 + $0x120] sm:$0xff]
  %v4635 = vld [vmem:[%s3946 + $0x128] sm:$0xf]
  %v4636 = vld [vmem:[%s3946 + $0x130] sm:$0xff]
  %v4637 = vld [vmem:[%s3946 + $0x138] sm:$0xf]
  %v4638 = vmax.f32 %v4574, %v4606
  %v4639 = vmax.f32 %v4575, %v4607
  %v4640 = vmax.f32 %v4576, %v4608
  %v4641 = vmax.f32 %v4577, %v4609
  %v4642 = vmax.f32 %v4578, %v4610
  %v4643 = vmax.f32 %v4579, %v4611
  %v4644 = vmax.f32 %v4580, %v4612
  %v4645 = vmax.f32 %v4581, %v4613
  %v4646 = vmax.f32 %v4582, %v4614
  %v4647 = vmax.f32 %v4583, %v4615
  %v4648 = vmax.f32 %v4584, %v4616
  %v4649 = vmax.f32 %v4585, %v4617
  %v4650 = vmax.f32 %v4586, %v4618
  %v4651 = vmax.f32 %v4587, %v4619
  %v4652 = vmax.f32 %v4588, %v4620
  %v4653 = vmax.f32 %v4589, %v4621
  %v4654 = vmax.f32 %v4590, %v4622
  %v4655 = vmax.f32 %v4591, %v4623
  %v4656 = vmax.f32 %v4592, %v4624
  %v4657 = vmax.f32 %v4593, %v4625
  %v4658 = vmax.f32 %v4594, %v4626
  %v4659 = vmax.f32 %v4595, %v4627
  %v4660 = vmax.f32 %v4596, %v4628
  %v4661 = vmax.f32 %v4597, %v4629
  %v4662 = vmax.f32 %v4598, %v4630
  %v4663 = vmax.f32 %v4599, %v4631
  %v4664 = vmax.f32 %v4600, %v4632
  %v4665 = vmax.f32 %v4601, %v4633
  %v4666 = vmax.f32 %v4602, %v4634
  %v4667 = vmax.f32 %v4603, %v4635
  %v4668 = vmax.f32 %v4604, %v4636
  %v4669 = vmax.f32 %v4605, %v4637
  %v4670 = vld [vmem:[%s3897] sm:$0xff]
  %v4671 = vld [vmem:[%s3897 + $0x8] sm:$0xf]
  %v4672 = vld [vmem:[%s3897 + $0x10] sm:$0xff]
  %v4673 = vld [vmem:[%s3897 + $0x18] sm:$0xf]
  %v4674 = vld [vmem:[%s3897 + $0x20] sm:$0xff]
  %v4675 = vld [vmem:[%s3897 + $0x28] sm:$0xf]
  %v4676 = vld [vmem:[%s3897 + $0x30] sm:$0xff]
  %v4677 = vld [vmem:[%s3897 + $0x38] sm:$0xf]
  %v4678 = vld [vmem:[%s3897 + $0x40] sm:$0xff]
  %v4679 = vld [vmem:[%s3897 + $0x48] sm:$0xf]
  %v4680 = vld [vmem:[%s3897 + $0x50] sm:$0xff]
  %v4681 = vld [vmem:[%s3897 + $0x58] sm:$0xf]
  %v4682 = vld [vmem:[%s3897 + $0x60] sm:$0xff]
  %v4683 = vld [vmem:[%s3897 + $0x68] sm:$0xf]
  %v4684 = vld [vmem:[%s3897 + $0x70] sm:$0xff]
  %v4685 = vld [vmem:[%s3897 + $0x78] sm:$0xf]
  %v4686 = vld [vmem:[%s3897 + $0xc0] sm:$0xff]
  %v4687 = vld [vmem:[%s3897 + $0xc8] sm:$0xf]
  %v4688 = vld [vmem:[%s3897 + $0xd0] sm:$0xff]
  %v4689 = vld [vmem:[%s3897 + $0xd8] sm:$0xf]
  %v4690 = vld [vmem:[%s3897 + $0xe0] sm:$0xff]
  %v4691 = vld [vmem:[%s3897 + $0xe8] sm:$0xf]
  %v4692 = vld [vmem:[%s3897 + $0xf0] sm:$0xff]
  %v4693 = vld [vmem:[%s3897 + $0xf8] sm:$0xf]
  %v4694 = vld [vmem:[%s3897 + $0x100] sm:$0xff]
  %v4695 = vld [vmem:[%s3897 + $0x108] sm:$0xf]
  %v4696 = vld [vmem:[%s3897 + $0x110] sm:$0xff]
  %v4697 = vld [vmem:[%s3897 + $0x118] sm:$0xf]
  %v4698 = vld [vmem:[%s3897 + $0x120] sm:$0xff]
  %v4699 = vld [vmem:[%s3897 + $0x128] sm:$0xf]
  %v4700 = vld [vmem:[%s3897 + $0x130] sm:$0xff]
  %v4701 = vld [vmem:[%s3897 + $0x138] sm:$0xf]
  %v4702 = vmax.f32 %v4638, %v4670
  %v4703 = vmax.f32 %v4639, %v4671
  %v4704 = vmax.f32 %v4640, %v4672
  %v4705 = vmax.f32 %v4641, %v4673
  %v4706 = vmax.f32 %v4642, %v4674
  %v4707 = vmax.f32 %v4643, %v4675
  %v4708 = vmax.f32 %v4644, %v4676
  %v4709 = vmax.f32 %v4645, %v4677
  %v4710 = vmax.f32 %v4646, %v4678
  %v4711 = vmax.f32 %v4647, %v4679
  %v4712 = vmax.f32 %v4648, %v4680
  %v4713 = vmax.f32 %v4649, %v4681
  %v4714 = vmax.f32 %v4650, %v4682
  %v4715 = vmax.f32 %v4651, %v4683
  %v4716 = vmax.f32 %v4652, %v4684
  %v4717 = vmax.f32 %v4653, %v4685
  %v4718 = vmax.f32 %v4654, %v4686
  %v4719 = vmax.f32 %v4655, %v4687
  %v4720 = vmax.f32 %v4656, %v4688
  %v4721 = vmax.f32 %v4657, %v4689
  %v4722 = vmax.f32 %v4658, %v4690
  %v4723 = vmax.f32 %v4659, %v4691
  %v4724 = vmax.f32 %v4660, %v4692
  %v4725 = vmax.f32 %v4661, %v4693
  %v4726 = vmax.f32 %v4662, %v4694
  %v4727 = vmax.f32 %v4663, %v4695
  %v4728 = vmax.f32 %v4664, %v4696
  %v4729 = vmax.f32 %v4665, %v4697
  %v4730 = vmax.f32 %v4666, %v4698
  %v4731 = vmax.f32 %v4667, %v4699
  %v4732 = vmax.f32 %v4668, %v4700
  %v4733 = vmax.f32 %v4669, %v4701
  %v4734 = vld [vmem:[%s4075] sm:$0xff]
  %v4735 = vld [vmem:[%s4075 + $0x8] sm:$0xf]
  %v4736 = vld [vmem:[%s4075 + $0x10] sm:$0xff]
  %v4737 = vld [vmem:[%s4075 + $0x18] sm:$0xf]
  %v4738 = vld [vmem:[%s4075 + $0x20] sm:$0xff]
  %v4739 = vld [vmem:[%s4075 + $0x28] sm:$0xf]
  %v4740 = vld [vmem:[%s4075 + $0x30] sm:$0xff]
  %v4741 = vld [vmem:[%s4075 + $0x38] sm:$0xf]
  %v4742 = vld [vmem:[%s4075 + $0x40] sm:$0xff]
  %v4743 = vld [vmem:[%s4075 + $0x48] sm:$0xf]
  %v4744 = vld [vmem:[%s4075 + $0x50] sm:$0xff]
  %v4745 = vld [vmem:[%s4075 + $0x58] sm:$0xf]
  %v4746 = vld [vmem:[%s4075 + $0x60] sm:$0xff]
  %v4747 = vld [vmem:[%s4075 + $0x68] sm:$0xf]
  %v4748 = vld [vmem:[%s4075 + $0x70] sm:$0xff]
  %v4749 = vld [vmem:[%s4075 + $0x78] sm:$0xf]
  %v4750 = vld [vmem:[%s4075 + $0xc0] sm:$0xff]
  %v4751 = vld [vmem:[%s4075 + $0xc8] sm:$0xf]
  %v4752 = vld [vmem:[%s4075 + $0xd0] sm:$0xff]
  %v4753 = vld [vmem:[%s4075 + $0xd8] sm:$0xf]
  %v4754 = vld [vmem:[%s4075 + $0xe0] sm:$0xff]
  %v4755 = vld [vmem:[%s4075 + $0xe8] sm:$0xf]
  %v4756 = vld [vmem:[%s4075 + $0xf0] sm:$0xff]
  %v4757 = vld [vmem:[%s4075 + $0xf8] sm:$0xf]
  %v4758 = vld [vmem:[%s4075 + $0x100] sm:$0xff]
  %v4759 = vld [vmem:[%s4075 + $0x108] sm:$0xf]
  %v4760 = vld [vmem:[%s4075 + $0x110] sm:$0xff]
  %v4761 = vld [vmem:[%s4075 + $0x118] sm:$0xf]
  %v4762 = vld [vmem:[%s4075 + $0x120] sm:$0xff]
  %v4763 = vld [vmem:[%s4075 + $0x128] sm:$0xf]
  %v4764 = vld [vmem:[%s4075 + $0x130] sm:$0xff]
  %v4765 = vld [vmem:[%s4075 + $0x138] sm:$0xf]
  %v4766 = vmax.f32 %v4702, %v4734
  %v4767 = vmax.f32 %v4703, %v4735
  %v4768 = vmax.f32 %v4704, %v4736
  %v4769 = vmax.f32 %v4705, %v4737
  %v4770 = vmax.f32 %v4706, %v4738
  %v4771 = vmax.f32 %v4707, %v4739
  %v4772 = vmax.f32 %v4708, %v4740
  %v4773 = vmax.f32 %v4709, %v4741
  %v4774 = vmax.f32 %v4710, %v4742
  %v4775 = vmax.f32 %v4711, %v4743
  %v4776 = vmax.f32 %v4712, %v4744
  %v4777 = vmax.f32 %v4713, %v4745
  %v4778 = vmax.f32 %v4714, %v4746
  %v4779 = vmax.f32 %v4715, %v4747
  %v4780 = vmax.f32 %v4716, %v4748
  %v4781 = vmax.f32 %v4717, %v4749
  %v4782 = vmax.f32 %v4718, %v4750
  %v4783 = vmax.f32 %v4719, %v4751
  %v4784 = vmax.f32 %v4720, %v4752
  %v4785 = vmax.f32 %v4721, %v4753
  %v4786 = vmax.f32 %v4722, %v4754
  %v4787 = vmax.f32 %v4723, %v4755
  %v4788 = vmax.f32 %v4724, %v4756
  %v4789 = vmax.f32 %v4725, %v4757
  %v4790 = vmax.f32 %v4726, %v4758
  %v4791 = vmax.f32 %v4727, %v4759
  %v4792 = vmax.f32 %v4728, %v4760
  %v4793 = vmax.f32 %v4729, %v4761
  %v4794 = vmax.f32 %v4730, %v4762
  %v4795 = vmax.f32 %v4731, %v4763
  %v4796 = vmax.f32 %v4732, %v4764
  %v4797 = vmax.f32 %v4733, %v4765
  %v4798 = vld [vmem:[%s4140] sm:$0xff]
  %v4799 = vld [vmem:[%s4140 + $0x8] sm:$0xf]
  %v4800 = vld [vmem:[%s4140 + $0x10] sm:$0xff]
  %v4801 = vld [vmem:[%s4140 + $0x18] sm:$0xf]
  %v4802 = vld [vmem:[%s4140 + $0x20] sm:$0xff]
  %v4803 = vld [vmem:[%s4140 + $0x28] sm:$0xf]
  %v4804 = vld [vmem:[%s4140 + $0x30] sm:$0xff]
  %v4805 = vld [vmem:[%s4140 + $0x38] sm:$0xf]
  %v4806 = vld [vmem:[%s4140 + $0x40] sm:$0xff]
  %v4807 = vld [vmem:[%s4140 + $0x48] sm:$0xf]
  %v4808 = vld [vmem:[%s4140 + $0x50] sm:$0xff]
  %v4809 = vld [vmem:[%s4140 + $0x58] sm:$0xf]
  %v4810 = vld [vmem:[%s4140 + $0x60] sm:$0xff]
  %v4811 = vld [vmem:[%s4140 + $0x68] sm:$0xf]
  %v4812 = vld [vmem:[%s4140 + $0x70] sm:$0xff]
  %v4813 = vld [vmem:[%s4140 + $0x78] sm:$0xf]
  %v4814 = vld [vmem:[%s4140 + $0xc0] sm:$0xff]
  %v4815 = vld [vmem:[%s4140 + $0xc8] sm:$0xf]
  %v4816 = vld [vmem:[%s4140 + $0xd0] sm:$0xff]
  %v4817 = vld [vmem:[%s4140 + $0xd8] sm:$0xf]
  %v4818 = vld [vmem:[%s4140 + $0xe0] sm:$0xff]
  %v4819 = vld [vmem:[%s4140 + $0xe8] sm:$0xf]
  %v4820 = vld [vmem:[%s4140 + $0xf0] sm:$0xff]
  %v4821 = vld [vmem:[%s4140 + $0xf8] sm:$0xf]
  %v4822 = vld [vmem:[%s4140 + $0x100] sm:$0xff]
  %v4823 = vld [vmem:[%s4140 + $0x108] sm:$0xf]
  %v4824 = vld [vmem:[%s4140 + $0x110] sm:$0xff]
  %v4825 = vld [vmem:[%s4140 + $0x118] sm:$0xf]
  %v4826 = vld [vmem:[%s4140 + $0x120] sm:$0xff]
  %v4827 = vld [vmem:[%s4140 + $0x128] sm:$0xf]
  %v4828 = vld [vmem:[%s4140 + $0x130] sm:$0xff]
  %v4829 = vld [vmem:[%s4140 + $0x138] sm:$0xf]
  %v4830 = vmax.f32 %v4766, %v4798
  %v4831 = vmax.f32 %v4767, %v4799
  %v4832 = vmax.f32 %v4768, %v4800
  %v4833 = vmax.f32 %v4769, %v4801
  %v4834 = vmax.f32 %v4770, %v4802
  %v4835 = vmax.f32 %v4771, %v4803
  %v4836 = vmax.f32 %v4772, %v4804
  %v4837 = vmax.f32 %v4773, %v4805
  %v4838 = vmax.f32 %v4774, %v4806
  %v4839 = vmax.f32 %v4775, %v4807
  %v4840 = vmax.f32 %v4776, %v4808
  %v4841 = vmax.f32 %v4777, %v4809
  %v4842 = vmax.f32 %v4778, %v4810
  %v4843 = vmax.f32 %v4779, %v4811
  %v4844 = vmax.f32 %v4780, %v4812
  %v4845 = vmax.f32 %v4781, %v4813
  %v4846 = vmax.f32 %v4782, %v4814
  %v4847 = vmax.f32 %v4783, %v4815
  %v4848 = vmax.f32 %v4784, %v4816
  %v4849 = vmax.f32 %v4785, %v4817
  %v4850 = vmax.f32 %v4786, %v4818
  %v4851 = vmax.f32 %v4787, %v4819
  %v4852 = vmax.f32 %v4788, %v4820
  %v4853 = vmax.f32 %v4789, %v4821
  %v4854 = vmax.f32 %v4790, %v4822
  %v4855 = vmax.f32 %v4791, %v4823
  %v4856 = vmax.f32 %v4792, %v4824
  %v4857 = vmax.f32 %v4793, %v4825
  %v4858 = vmax.f32 %v4794, %v4826
  %v4859 = vmax.f32 %v4795, %v4827
  %v4860 = vmax.f32 %v4796, %v4828
  %v4861 = vmax.f32 %v4797, %v4829
  %v4894 = vrot.slane %v4830, 1
  %v4895 = vrot.slane %v4831, 1
  %v4896 = vsel %vm4237, %v4894, %v4895
  %v4897 = vrot.slane %v4832, 1
  %v4898 = vrot.slane %v4833, 1
  %v4899 = vsel %vm4237, %v4897, %v4898
  %v4900 = vrot.slane %v4834, 1
  %v4901 = vrot.slane %v4835, 1
  %v4902 = vsel %vm4237, %v4900, %v4901
  %v4903 = vrot.slane %v4836, 1
  %v4904 = vrot.slane %v4837, 1
  %v4905 = vsel %vm4237, %v4903, %v4904
  %v4906 = vrot.slane %v4838, 1
  %v4907 = vrot.slane %v4839, 1
  %v4908 = vsel %vm4237, %v4906, %v4907
  %v4909 = vrot.slane %v4840, 1
  %v4910 = vrot.slane %v4841, 1
  %v4911 = vsel %vm4237, %v4909, %v4910
  %v4912 = vrot.slane %v4842, 1
  %v4913 = vrot.slane %v4843, 1
  %v4914 = vsel %vm4237, %v4912, %v4913
  %v4915 = vrot.slane %v4844, 1
  %v4916 = vrot.slane %v4845, 1
  %v4917 = vsel %vm4237, %v4915, %v4916
  %v4918 = vrot.slane %v4846, 1
  %v4919 = vrot.slane %v4847, 1
  %v4920 = vsel %vm4237, %v4918, %v4919
  %v4921 = vrot.slane %v4848, 1
  %v4922 = vrot.slane %v4849, 1
  %v4923 = vsel %vm4237, %v4921, %v4922
  %v4924 = vrot.slane %v4850, 1
  %v4925 = vrot.slane %v4851, 1
  %v4926 = vsel %vm4237, %v4924, %v4925
  %v4927 = vrot.slane %v4852, 1
  %v4928 = vrot.slane %v4853, 1
  %v4929 = vsel %vm4237, %v4927, %v4928
  %v4930 = vrot.slane %v4854, 1
  %v4931 = vrot.slane %v4855, 1
  %v4932 = vsel %vm4237, %v4930, %v4931
  %v4933 = vrot.slane %v4856, 1
  %v4934 = vrot.slane %v4857, 1
  %v4935 = vsel %vm4237, %v4933, %v4934
  %v4936 = vrot.slane %v4858, 1
  %v4937 = vrot.slane %v4859, 1
  %v4938 = vsel %vm4237, %v4936, %v4937
  %v4939 = vrot.slane %v4860, 1
  %v4940 = vrot.slane %v4861, 1
  %v4941 = vsel %vm4237, %v4939, %v4940
  %v4958 = vmax.f32 %v4830, %v4896
  %v4959 = vmax.f32 %v4832, %v4899
  %v4960 = vmax.f32 %v4834, %v4902
  %v4961 = vmax.f32 %v4836, %v4905
  %v4962 = vmax.f32 %v4838, %v4908
  %v4963 = vmax.f32 %v4840, %v4911
  %v4964 = vmax.f32 %v4842, %v4914
  %v4965 = vmax.f32 %v4844, %v4917
  %v4966 = vmax.f32 %v4846, %v4920
  %v4967 = vmax.f32 %v4848, %v4923
  %v4968 = vmax.f32 %v4850, %v4926
  %v4969 = vmax.f32 %v4852, %v4929
  %v4970 = vmax.f32 %v4854, %v4932
  %v4971 = vmax.f32 %v4856, %v4935
  %v4972 = vmax.f32 %v4858, %v4938
  %v4973 = vmax.f32 %v4860, %v4941
  %v4974 = vrot.slane %v4830, 2
  %v4975 = vrot.slane %v4831, 2
  %v4976 = vsel %vm375, %v4974, %v4975
  %v4977 = vrot.slane %v4832, 2
  %v4978 = vrot.slane %v4833, 2
  %v4979 = vsel %vm375, %v4977, %v4978
  %v4980 = vrot.slane %v4834, 2
  %v4981 = vrot.slane %v4835, 2
  %v4982 = vsel %vm375, %v4980, %v4981
  %v4983 = vrot.slane %v4836, 2
  %v4984 = vrot.slane %v4837, 2
  %v4985 = vsel %vm375, %v4983, %v4984
  %v4986 = vrot.slane %v4838, 2
  %v4987 = vrot.slane %v4839, 2
  %v4988 = vsel %vm375, %v4986, %v4987
  %v4989 = vrot.slane %v4840, 2
  %v4990 = vrot.slane %v4841, 2
  %v4991 = vsel %vm375, %v4989, %v4990
  %v4992 = vrot.slane %v4842, 2
  %v4993 = vrot.slane %v4843, 2
  %v4994 = vsel %vm375, %v4992, %v4993
  %v4995 = vrot.slane %v4844, 2
  %v4996 = vrot.slane %v4845, 2
  %v4997 = vsel %vm375, %v4995, %v4996
  %v4998 = vrot.slane %v4846, 2
  %v4999 = vrot.slane %v4847, 2
  %v5000 = vsel %vm375, %v4998, %v4999
  %v5001 = vrot.slane %v4848, 2
  %v5002 = vrot.slane %v4849, 2
  %v5003 = vsel %vm375, %v5001, %v5002
  %v5004 = vrot.slane %v4850, 2
  %v5005 = vrot.slane %v4851, 2
  %v5006 = vsel %vm375, %v5004, %v5005
  %v5007 = vrot.slane %v4852, 2
  %v5008 = vrot.slane %v4853, 2
  %v5009 = vsel %vm375, %v5007, %v5008
  %v5010 = vrot.slane %v4854, 2
  %v5011 = vrot.slane %v4855, 2
  %v5012 = vsel %vm375, %v5010, %v5011
  %v5013 = vrot.slane %v4856, 2
  %v5014 = vrot.slane %v4857, 2
  %v5015 = vsel %vm375, %v5013, %v5014
  %v5016 = vrot.slane %v4858, 2
  %v5017 = vrot.slane %v4859, 2
  %v5018 = vsel %vm375, %v5016, %v5017
  %v5019 = vrot.slane %v4860, 2
  %v5020 = vrot.slane %v4861, 2
  %v5021 = vsel %vm375, %v5019, %v5020
  %v5038 = vmax.f32 %v4958, %v4976
  %v5039 = vmax.f32 %v4959, %v4979
  %v5040 = vmax.f32 %v4960, %v4982
  %v5041 = vmax.f32 %v4961, %v4985
  %v5042 = vmax.f32 %v4962, %v4988
  %v5043 = vmax.f32 %v4963, %v4991
  %v5044 = vmax.f32 %v4964, %v4994
  %v5045 = vmax.f32 %v4965, %v4997
  %v5046 = vmax.f32 %v4966, %v5000
  %v5047 = vmax.f32 %v4967, %v5003
  %v5048 = vmax.f32 %v4968, %v5006
  %v5049 = vmax.f32 %v4969, %v5009
  %v5050 = vmax.f32 %v4970, %v5012
  %v5051 = vmax.f32 %v4971, %v5015
  %v5052 = vmax.f32 %v4972, %v5018
  %v5053 = vmax.f32 %v4973, %v5021
  %v5054 = vrot.slane %v4830, 3
  %v5055 = vrot.slane %v4831, 3
  %v5056 = vsel %vm374, %v5054, %v5055
  %v5057 = vrot.slane %v4832, 3
  %v5058 = vrot.slane %v4833, 3
  %v5059 = vsel %vm374, %v5057, %v5058
  %v5060 = vrot.slane %v4834, 3
  %v5061 = vrot.slane %v4835, 3
  %v5062 = vsel %vm374, %v5060, %v5061
  %v5063 = vrot.slane %v4836, 3
  %v5064 = vrot.slane %v4837, 3
  %v5065 = vsel %vm374, %v5063, %v5064
  %v5066 = vrot.slane %v4838, 3
  %v5067 = vrot.slane %v4839, 3
  %v5068 = vsel %vm374, %v5066, %v5067
  %v5069 = vrot.slane %v4840, 3
  %v5070 = vrot.slane %v4841, 3
  %v5071 = vsel %vm374, %v5069, %v5070
  %v5072 = vrot.slane %v4842, 3
  %v5073 = vrot.slane %v4843, 3
  %v5074 = vsel %vm374, %v5072, %v5073
  %v5075 = vrot.slane %v4844, 3
  %v5076 = vrot.slane %v4845, 3
  %v5077 = vsel %vm374, %v5075, %v5076
  %v5078 = vrot.slane %v4846, 3
  %v5079 = vrot.slane %v4847, 3
  %v5080 = vsel %vm374, %v5078, %v5079
  %v5081 = vrot.slane %v4848, 3
  %v5082 = vrot.slane %v4849, 3
  %v5083 = vsel %vm374, %v5081, %v5082
  %v5084 = vrot.slane %v4850, 3
  %v5085 = vrot.slane %v4851, 3
  %v5086 = vsel %vm374, %v5084, %v5085
  %v5087 = vrot.slane %v4852, 3
  %v5088 = vrot.slane %v4853, 3
  %v5089 = vsel %vm374, %v5087, %v5088
  %v5090 = vrot.slane %v4854, 3
  %v5091 = vrot.slane %v4855, 3
  %v5092 = vsel %vm374, %v5090, %v5091
  %v5093 = vrot.slane %v4856, 3
  %v5094 = vrot.slane %v4857, 3
  %v5095 = vsel %vm374, %v5093, %v5094
  %v5096 = vrot.slane %v4858, 3
  %v5097 = vrot.slane %v4859, 3
  %v5098 = vsel %vm374, %v5096, %v5097
  %v5099 = vrot.slane %v4860, 3
  %v5100 = vrot.slane %v4861, 3
  %v5101 = vsel %vm374, %v5099, %v5100
  %v5118 = vmax.f32 %v5038, %v5056
  %v5119 = vmax.f32 %v5039, %v5059
  %v5120 = vmax.f32 %v5040, %v5062
  %v5121 = vmax.f32 %v5041, %v5065
  %v5122 = vmax.f32 %v5042, %v5068
  %v5123 = vmax.f32 %v5043, %v5071
  %v5124 = vmax.f32 %v5044, %v5074
  %v5125 = vmax.f32 %v5045, %v5077
  %v5126 = vmax.f32 %v5046, %v5080
  %v5127 = vmax.f32 %v5047, %v5083
  %v5128 = vmax.f32 %v5048, %v5086
  %v5129 = vmax.f32 %v5049, %v5089
  %v5130 = vmax.f32 %v5050, %v5092
  %v5131 = vmax.f32 %v5051, %v5095
  %v5132 = vmax.f32 %v5052, %v5098
  %v5133 = vmax.f32 %v5053, %v5101
  %v5134 = vrot.slane %v4830, 4
  %v5135 = vrot.slane %v4831, 4
  %v5136 = vsel %vm1873, %v5134, %v5135
  %v5137 = vrot.slane %v4832, 4
  %v5138 = vrot.slane %v4833, 4
  %v5139 = vsel %vm1873, %v5137, %v5138
  %v5140 = vrot.slane %v4834, 4
  %v5141 = vrot.slane %v4835, 4
  %v5142 = vsel %vm1873, %v5140, %v5141
  %v5143 = vrot.slane %v4836, 4
  %v5144 = vrot.slane %v4837, 4
  %v5145 = vsel %vm1873, %v5143, %v5144
  %v5146 = vrot.slane %v4838, 4
  %v5147 = vrot.slane %v4839, 4
  %v5148 = vsel %vm1873, %v5146, %v5147
  %v5149 = vrot.slane %v4840, 4
  %v5150 = vrot.slane %v4841, 4
  %v5151 = vsel %vm1873, %v5149, %v5150
  %v5152 = vrot.slane %v4842, 4
  %v5153 = vrot.slane %v4843, 4
  %v5154 = vsel %vm1873, %v5152, %v5153
  %v5155 = vrot.slane %v4844, 4
  %v5156 = vrot.slane %v4845, 4
  %v5157 = vsel %vm1873, %v5155, %v5156
  %v5158 = vrot.slane %v4846, 4
  %v5159 = vrot.slane %v4847, 4
  %v5160 = vsel %vm1873, %v5158, %v5159
  %v5161 = vrot.slane %v4848, 4
  %v5162 = vrot.slane %v4849, 4
  %v5163 = vsel %vm1873, %v5161, %v5162
  %v5164 = vrot.slane %v4850, 4
  %v5165 = vrot.slane %v4851, 4
  %v5166 = vsel %vm1873, %v5164, %v5165
  %v5167 = vrot.slane %v4852, 4
  %v5168 = vrot.slane %v4853, 4
  %v5169 = vsel %vm1873, %v5167, %v5168
  %v5170 = vrot.slane %v4854, 4
  %v5171 = vrot.slane %v4855, 4
  %v5172 = vsel %vm1873, %v5170, %v5171
  %v5173 = vrot.slane %v4856, 4
  %v5174 = vrot.slane %v4857, 4
  %v5175 = vsel %vm1873, %v5173, %v5174
  %v5176 = vrot.slane %v4858, 4
  %v5177 = vrot.slane %v4859, 4
  %v5178 = vsel %vm1873, %v5176, %v5177
  %v5179 = vrot.slane %v4860, 4
  %v5180 = vrot.slane %v4861, 4
  %v5181 = vsel %vm1873, %v5179, %v5180
  %v5198 = vmax.f32 %v5118, %v5136
  %v5199 = vmax.f32 %v5119, %v5139
  %v5200 = vmax.f32 %v5120, %v5142
  %v5201 = vmax.f32 %v5121, %v5145
  %v5202 = vmax.f32 %v5122, %v5148
  %v5203 = vmax.f32 %v5123, %v5151
  %v5204 = vmax.f32 %v5124, %v5154
  %v5205 = vmax.f32 %v5125, %v5157
  %v5206 = vmax.f32 %v5126, %v5160
  %v5207 = vmax.f32 %v5127, %v5163
  %v5208 = vmax.f32 %v5128, %v5166
  %v5209 = vmax.f32 %v5129, %v5169
  %v5210 = vmax.f32 %v5130, %v5172
  %v5211 = vmax.f32 %v5131, %v5175
  %v5212 = vmax.f32 %v5132, %v5178
  %v5213 = vmax.f32 %v5133, %v5181
  %5214 = vst.msk [vmem:[%s3897 + $0x2] sm:$0xff] %vm934, %v5198
  %5215 = vst.msk [vmem:[%s3897 + $0x12] sm:$0xff] %vm934, %v5199
  %5216 = vst.msk [vmem:[%s3897 + $0x22] sm:$0xff] %vm934, %v5200
  %5217 = vst.msk [vmem:[%s3897 + $0x32] sm:$0xff] %vm934, %v5201
  %5218 = vst.msk [vmem:[%s3897 + $0x42] sm:$0xff] %vm934, %v5202
  %5219 = vst.msk [vmem:[%s3897 + $0x52] sm:$0xff] %vm934, %v5203
  %5220 = vst.msk [vmem:[%s3897 + $0x62] sm:$0xff] %vm934, %v5204
  %5221 = vst.msk [vmem:[%s3897 + $0x72] sm:$0xff] %vm934, %v5205
  %5222 = vst.msk [vmem:[%s3897 + $0xc2] sm:$0xff] %vm934, %v5206
  %5223 = vst.msk [vmem:[%s3897 + $0xd2] sm:$0xff] %vm934, %v5207
  %5224 = vst.msk [vmem:[%s3897 + $0xe2] sm:$0xff] %vm934, %v5208
  %5225 = vst.msk [vmem:[%s3897 + $0xf2] sm:$0xff] %vm934, %v5209
  %5226 = vst.msk [vmem:[%s3897 + $0x102] sm:$0xff] %vm934, %v5210
  %5227 = vst.msk [vmem:[%s3897 + $0x112] sm:$0xff] %vm934, %v5211
  %5228 = vst.msk [vmem:[%s3897 + $0x122] sm:$0xff] %vm934, %v5212
  %5229 = vst.msk [vmem:[%s3897 + $0x132] sm:$0xff] %vm934, %v5213
  %v5230 = vld [vmem:[#allocation6] sm:$0xff]
  %v5231 = vld [vmem:[#allocation6 + $0x8] sm:$0xf]
  %v5232 = vld [vmem:[#allocation6 + $0x10] sm:$0xff]
  %v5233 = vld [vmem:[#allocation6 + $0x18] sm:$0xf]
  %v5234 = vld [vmem:[#allocation6 + $0x20] sm:$0xff]
  %v5235 = vld [vmem:[#allocation6 + $0x28] sm:$0xf]
  %v5236 = vld [vmem:[#allocation6 + $0x30] sm:$0xff]
  %v5237 = vld [vmem:[#allocation6 + $0x38] sm:$0xf]
  %v5238 = vld [vmem:[#allocation6 + $0x40] sm:$0xff]
  %v5239 = vld [vmem:[#allocation6 + $0x48] sm:$0xf]
  %v5240 = vld [vmem:[#allocation6 + $0x50] sm:$0xff]
  %v5241 = vld [vmem:[#allocation6 + $0x58] sm:$0xf]
  %v5242 = vld [vmem:[#allocation6 + $0x60] sm:$0xff]
  %v5243 = vld [vmem:[#allocation6 + $0x68] sm:$0xf]
  %v5244 = vld [vmem:[#allocation6 + $0x70] sm:$0xff]
  %v5245 = vld [vmem:[#allocation6 + $0x78] sm:$0xf]
  %v5246 = vld [vmem:[#allocation6 + $0xc0] sm:$0xff]
  %v5247 = vld [vmem:[#allocation6 + $0xc8] sm:$0xf]
  %v5248 = vld [vmem:[#allocation6 + $0xd0] sm:$0xff]
  %v5249 = vld [vmem:[#allocation6 + $0xd8] sm:$0xf]
  %v5250 = vld [vmem:[#allocation6 + $0xe0] sm:$0xff]
  %v5251 = vld [vmem:[#allocation6 + $0xe8] sm:$0xf]
  %v5252 = vld [vmem:[#allocation6 + $0xf0] sm:$0xff]
  %v5253 = vld [vmem:[#allocation6 + $0xf8] sm:$0xf]
  %v5254 = vld [vmem:[#allocation6 + $0x100] sm:$0xff]
  %v5255 = vld [vmem:[#allocation6 + $0x108] sm:$0xf]
  %v5256 = vld [vmem:[#allocation6 + $0x110] sm:$0xff]
  %v5257 = vld [vmem:[#allocation6 + $0x118] sm:$0xf]
  %v5258 = vld [vmem:[#allocation6 + $0x120] sm:$0xff]
  %v5259 = vld [vmem:[#allocation6 + $0x128] sm:$0xf]
  %v5260 = vld [vmem:[#allocation6 + $0x130] sm:$0xff]
  %v5261 = vld [vmem:[#allocation6 + $0x138] sm:$0xf]
  %v5262 = vld [vmem:[%s3946] sm:$0xff]
  %v5263 = vld [vmem:[%s3946 + $0x8] sm:$0xf]
  %v5264 = vld [vmem:[%s3946 + $0x10] sm:$0xff]
  %v5265 = vld [vmem:[%s3946 + $0x18] sm:$0xf]
  %v5266 = vld [vmem:[%s3946 + $0x20] sm:$0xff]
  %v5267 = vld [vmem:[%s3946 + $0x28] sm:$0xf]
  %v5268 = vld [vmem:[%s3946 + $0x30] sm:$0xff]
  %v5269 = vld [vmem:[%s3946 + $0x38] sm:$0xf]
  %v5270 = vld [vmem:[%s3946 + $0x40] sm:$0xff]
  %v5271 = vld [vmem:[%s3946 + $0x48] sm:$0xf]
  %v5272 = vld [vmem:[%s3946 + $0x50] sm:$0xff]
  %v5273 = vld [vmem:[%s3946 + $0x58] sm:$0xf]
  %v5274 = vld [vmem:[%s3946 + $0x60] sm:$0xff]
  %v5275 = vld [vmem:[%s3946 + $0x68] sm:$0xf]
  %v5276 = vld [vmem:[%s3946 + $0x70] sm:$0xff]
  %v5277 = vld [vmem:[%s3946 + $0x78] sm:$0xf]
  %v5278 = vld [vmem:[%s3946 + $0xc0] sm:$0xff]
  %v5279 = vld [vmem:[%s3946 + $0xc8] sm:$0xf]
  %v5280 = vld [vmem:[%s3946 + $0xd0] sm:$0xff]
  %v5281 = vld [vmem:[%s3946 + $0xd8] sm:$0xf]
  %v5282 = vld [vmem:[%s3946 + $0xe0] sm:$0xff]
  %v5283 = vld [vmem:[%s3946 + $0xe8] sm:$0xf]
  %v5284 = vld [vmem:[%s3946 + $0xf0] sm:$0xff]
  %v5285 = vld [vmem:[%s3946 + $0xf8] sm:$0xf]
  %v5286 = vld [vmem:[%s3946 + $0x100] sm:$0xff]
  %v5287 = vld [vmem:[%s3946 + $0x108] sm:$0xf]
  %v5288 = vld [vmem:[%s3946 + $0x110] sm:$0xff]
  %v5289 = vld [vmem:[%s3946 + $0x118] sm:$0xf]
  %v5290 = vld [vmem:[%s3946 + $0x120] sm:$0xff]
  %v5291 = vld [vmem:[%s3946 + $0x128] sm:$0xf]
  %v5292 = vld [vmem:[%s3946 + $0x130] sm:$0xff]
  %v5293 = vld [vmem:[%s3946 + $0x138] sm:$0xf]
  %v5294 = vmax.f32 %v5230, %v5262
  %v5295 = vmax.f32 %v5231, %v5263
  %v5296 = vmax.f32 %v5232, %v5264
  %v5297 = vmax.f32 %v5233, %v5265
  %v5298 = vmax.f32 %v5234, %v5266
  %v5299 = vmax.f32 %v5235, %v5267
  %v5300 = vmax.f32 %v5236, %v5268
  %v5301 = vmax.f32 %v5237, %v5269
  %v5302 = vmax.f32 %v5238, %v5270
  %v5303 = vmax.f32 %v5239, %v5271
  %v5304 = vmax.f32 %v5240, %v5272
  %v5305 = vmax.f32 %v5241, %v5273
  %v5306 = vmax.f32 %v5242, %v5274
  %v5307 = vmax.f32 %v5243, %v5275
  %v5308 = vmax.f32 %v5244, %v5276
  %v5309 = vmax.f32 %v5245, %v5277
  %v5310 = vmax.f32 %v5246, %v5278
  %v5311 = vmax.f32 %v5247, %v5279
  %v5312 = vmax.f32 %v5248, %v5280
  %v5313 = vmax.f32 %v5249, %v5281
  %v5314 = vmax.f32 %v5250, %v5282
  %v5315 = vmax.f32 %v5251, %v5283
  %v5316 = vmax.f32 %v5252, %v5284
  %v5317 = vmax.f32 %v5253, %v5285
  %v5318 = vmax.f32 %v5254, %v5286
  %v5319 = vmax.f32 %v5255, %v5287
  %v5320 = vmax.f32 %v5256, %v5288
  %v5321 = vmax.f32 %v5257, %v5289
  %v5322 = vmax.f32 %v5258, %v5290
  %v5323 = vmax.f32 %v5259, %v5291
  %v5324 = vmax.f32 %v5260, %v5292
  %v5325 = vmax.f32 %v5261, %v5293
  %v5326 = vld [vmem:[%s3897] sm:$0xff]
  %v5327 = vld [vmem:[%s3897 + $0x8] sm:$0xf]
  %v5328 = vld [vmem:[%s3897 + $0x10] sm:$0xff]
  %v5329 = vld [vmem:[%s3897 + $0x18] sm:$0xf]
  %v5330 = vld [vmem:[%s3897 + $0x20] sm:$0xff]
  %v5331 = vld [vmem:[%s3897 + $0x28] sm:$0xf]
  %v5332 = vld [vmem:[%s3897 + $0x30] sm:$0xff]
  %v5333 = vld [vmem:[%s3897 + $0x38] sm:$0xf]
  %v5334 = vld [vmem:[%s3897 + $0x40] sm:$0xff]
  %v5335 = vld [vmem:[%s3897 + $0x48] sm:$0xf]
  %v5336 = vld [vmem:[%s3897 + $0x50] sm:$0xff]
  %v5337 = vld [vmem:[%s3897 + $0x58] sm:$0xf]
  %v5338 = vld [vmem:[%s3897 + $0x60] sm:$0xff]
  %v5339 = vld [vmem:[%s3897 + $0x68] sm:$0xf]
  %v5340 = vld [vmem:[%s3897 + $0x70] sm:$0xff]
  %v5341 = vld [vmem:[%s3897 + $0x78] sm:$0xf]
  %v5342 = vld [vmem:[%s3897 + $0xc0] sm:$0xff]
  %v5343 = vld [vmem:[%s3897 + $0xc8] sm:$0xf]
  %v5344 = vld [vmem:[%s3897 + $0xd0] sm:$0xff]
  %v5345 = vld [vmem:[%s3897 + $0xd8] sm:$0xf]
  %v5346 = vld [vmem:[%s3897 + $0xe0] sm:$0xff]
  %v5347 = vld [vmem:[%s3897 + $0xe8] sm:$0xf]
  %v5348 = vld [vmem:[%s3897 + $0xf0] sm:$0xff]
  %v5349 = vld [vmem:[%s3897 + $0xf8] sm:$0xf]
  %v5350 = vld [vmem:[%s3897 + $0x100] sm:$0xff]
  %v5351 = vld [vmem:[%s3897 + $0x108] sm:$0xf]
  %v5352 = vld [vmem:[%s3897 + $0x110] sm:$0xff]
  %v5353 = vld [vmem:[%s3897 + $0x118] sm:$0xf]
  %v5354 = vld [vmem:[%s3897 + $0x120] sm:$0xff]
  %v5355 = vld [vmem:[%s3897 + $0x128] sm:$0xf]
  %v5356 = vld [vmem:[%s3897 + $0x130] sm:$0xff]
  %v5357 = vld [vmem:[%s3897 + $0x138] sm:$0xf]
  %v5358 = vmax.f32 %v5294, %v5326
  %v5359 = vmax.f32 %v5295, %v5327
  %v5360 = vmax.f32 %v5296, %v5328
  %v5361 = vmax.f32 %v5297, %v5329
  %v5362 = vmax.f32 %v5298, %v5330
  %v5363 = vmax.f32 %v5299, %v5331
  %v5364 = vmax.f32 %v5300, %v5332
  %v5365 = vmax.f32 %v5301, %v5333
  %v5366 = vmax.f32 %v5302, %v5334
  %v5367 = vmax.f32 %v5303, %v5335
  %v5368 = vmax.f32 %v5304, %v5336
  %v5369 = vmax.f32 %v5305, %v5337
  %v5370 = vmax.f32 %v5306, %v5338
  %v5371 = vmax.f32 %v5307, %v5339
  %v5372 = vmax.f32 %v5308, %v5340
  %v5373 = vmax.f32 %v5309, %v5341
  %v5374 = vmax.f32 %v5310, %v5342
  %v5375 = vmax.f32 %v5311, %v5343
  %v5376 = vmax.f32 %v5312, %v5344
  %v5377 = vmax.f32 %v5313, %v5345
  %v5378 = vmax.f32 %v5314, %v5346
  %v5379 = vmax.f32 %v5315, %v5347
  %v5380 = vmax.f32 %v5316, %v5348
  %v5381 = vmax.f32 %v5317, %v5349
  %v5382 = vmax.f32 %v5318, %v5350
  %v5383 = vmax.f32 %v5319, %v5351
  %v5384 = vmax.f32 %v5320, %v5352
  %v5385 = vmax.f32 %v5321, %v5353
  %v5386 = vmax.f32 %v5322, %v5354
  %v5387 = vmax.f32 %v5323, %v5355
  %v5388 = vmax.f32 %v5324, %v5356
  %v5389 = vmax.f32 %v5325, %v5357
  %v5390 = vld [vmem:[%s4075] sm:$0xff]
  %v5391 = vld [vmem:[%s4075 + $0x8] sm:$0xf]
  %v5392 = vld [vmem:[%s4075 + $0x10] sm:$0xff]
  %v5393 = vld [vmem:[%s4075 + $0x18] sm:$0xf]
  %v5394 = vld [vmem:[%s4075 + $0x20] sm:$0xff]
  %v5395 = vld [vmem:[%s4075 + $0x28] sm:$0xf]
  %v5396 = vld [vmem:[%s4075 + $0x30] sm:$0xff]
  %v5397 = vld [vmem:[%s4075 + $0x38] sm:$0xf]
  %v5398 = vld [vmem:[%s4075 + $0x40] sm:$0xff]
  %v5399 = vld [vmem:[%s4075 + $0x48] sm:$0xf]
  %v5400 = vld [vmem:[%s4075 + $0x50] sm:$0xff]
  %v5401 = vld [vmem:[%s4075 + $0x58] sm:$0xf]
  %v5402 = vld [vmem:[%s4075 + $0x60] sm:$0xff]
  %v5403 = vld [vmem:[%s4075 + $0x68] sm:$0xf]
  %v5404 = vld [vmem:[%s4075 + $0x70] sm:$0xff]
  %v5405 = vld [vmem:[%s4075 + $0x78] sm:$0xf]
  %v5406 = vld [vmem:[%s4075 + $0xc0] sm:$0xff]
  %v5407 = vld [vmem:[%s4075 + $0xc8] sm:$0xf]
  %v5408 = vld [vmem:[%s4075 + $0xd0] sm:$0xff]
  %v5409 = vld [vmem:[%s4075 + $0xd8] sm:$0xf]
  %v5410 = vld [vmem:[%s4075 + $0xe0] sm:$0xff]
  %v5411 = vld [vmem:[%s4075 + $0xe8] sm:$0xf]
  %v5412 = vld [vmem:[%s4075 + $0xf0] sm:$0xff]
  %v5413 = vld [vmem:[%s4075 + $0xf8] sm:$0xf]
  %v5414 = vld [vmem:[%s4075 + $0x100] sm:$0xff]
  %v5415 = vld [vmem:[%s4075 + $0x108] sm:$0xf]
  %v5416 = vld [vmem:[%s4075 + $0x110] sm:$0xff]
  %v5417 = vld [vmem:[%s4075 + $0x118] sm:$0xf]
  %v5418 = vld [vmem:[%s4075 + $0x120] sm:$0xff]
  %v5419 = vld [vmem:[%s4075 + $0x128] sm:$0xf]
  %v5420 = vld [vmem:[%s4075 + $0x130] sm:$0xff]
  %v5421 = vld [vmem:[%s4075 + $0x138] sm:$0xf]
  %v5422 = vmax.f32 %v5358, %v5390
  %v5423 = vmax.f32 %v5359, %v5391
  %v5424 = vmax.f32 %v5360, %v5392
  %v5425 = vmax.f32 %v5361, %v5393
  %v5426 = vmax.f32 %v5362, %v5394
  %v5427 = vmax.f32 %v5363, %v5395
  %v5428 = vmax.f32 %v5364, %v5396
  %v5429 = vmax.f32 %v5365, %v5397
  %v5430 = vmax.f32 %v5366, %v5398
  %v5431 = vmax.f32 %v5367, %v5399
  %v5432 = vmax.f32 %v5368, %v5400
  %v5433 = vmax.f32 %v5369, %v5401
  %v5434 = vmax.f32 %v5370, %v5402
  %v5435 = vmax.f32 %v5371, %v5403
  %v5436 = vmax.f32 %v5372, %v5404
  %v5437 = vmax.f32 %v5373, %v5405
  %v5438 = vmax.f32 %v5374, %v5406
  %v5439 = vmax.f32 %v5375, %v5407
  %v5440 = vmax.f32 %v5376, %v5408
  %v5441 = vmax.f32 %v5377, %v5409
  %v5442 = vmax.f32 %v5378, %v5410
  %v5443 = vmax.f32 %v5379, %v5411
  %v5444 = vmax.f32 %v5380, %v5412
  %v5445 = vmax.f32 %v5381, %v5413
  %v5446 = vmax.f32 %v5382, %v5414
  %v5447 = vmax.f32 %v5383, %v5415
  %v5448 = vmax.f32 %v5384, %v5416
  %v5449 = vmax.f32 %v5385, %v5417
  %v5450 = vmax.f32 %v5386, %v5418
  %v5451 = vmax.f32 %v5387, %v5419
  %v5452 = vmax.f32 %v5388, %v5420
  %v5453 = vmax.f32 %v5389, %v5421
  %v5454 = vld [vmem:[%s4140] sm:$0xff]
  %v5455 = vld [vmem:[%s4140 + $0x8] sm:$0xf]
  %v5456 = vld [vmem:[%s4140 + $0x10] sm:$0xff]
  %v5457 = vld [vmem:[%s4140 + $0x18] sm:$0xf]
  %v5458 = vld [vmem:[%s4140 + $0x20] sm:$0xff]
  %v5459 = vld [vmem:[%s4140 + $0x28] sm:$0xf]
  %v5460 = vld [vmem:[%s4140 + $0x30] sm:$0xff]
  %v5461 = vld [vmem:[%s4140 + $0x38] sm:$0xf]
  %v5462 = vld [vmem:[%s4140 + $0x40] sm:$0xff]
  %v5463 = vld [vmem:[%s4140 + $0x48] sm:$0xf]
  %v5464 = vld [vmem:[%s4140 + $0x50] sm:$0xff]
  %v5465 = vld [vmem:[%s4140 + $0x58] sm:$0xf]
  %v5466 = vld [vmem:[%s4140 + $0x60] sm:$0xff]
  %v5467 = vld [vmem:[%s4140 + $0x68] sm:$0xf]
  %v5468 = vld [vmem:[%s4140 + $0x70] sm:$0xff]
  %v5469 = vld [vmem:[%s4140 + $0x78] sm:$0xf]
  %v5470 = vld [vmem:[%s4140 + $0xc0] sm:$0xff]
  %v5471 = vld [vmem:[%s4140 + $0xc8] sm:$0xf]
  %v5472 = vld [vmem:[%s4140 + $0xd0] sm:$0xff]
  %v5473 = vld [vmem:[%s4140 + $0xd8] sm:$0xf]
  %v5474 = vld [vmem:[%s4140 + $0xe0] sm:$0xff]
  %v5475 = vld [vmem:[%s4140 + $0xe8] sm:$0xf]
  %v5476 = vld [vmem:[%s4140 + $0xf0] sm:$0xff]
  %v5477 = vld [vmem:[%s4140 + $0xf8] sm:$0xf]
  %v5478 = vld [vmem:[%s4140 + $0x100] sm:$0xff]
  %v5479 = vld [vmem:[%s4140 + $0x108] sm:$0xf]
  %v5480 = vld [vmem:[%s4140 + $0x110] sm:$0xff]
  %v5481 = vld [vmem:[%s4140 + $0x118] sm:$0xf]
  %v5482 = vld [vmem:[%s4140 + $0x120] sm:$0xff]
  %v5483 = vld [vmem:[%s4140 + $0x128] sm:$0xf]
  %v5484 = vld [vmem:[%s4140 + $0x130] sm:$0xff]
  %v5485 = vld [vmem:[%s4140 + $0x138] sm:$0xf]
  %v5486 = vmax.f32 %v5422, %v5454
  %v5487 = vmax.f32 %v5423, %v5455
  %v5488 = vmax.f32 %v5424, %v5456
  %v5489 = vmax.f32 %v5425, %v5457
  %v5490 = vmax.f32 %v5426, %v5458
  %v5491 = vmax.f32 %v5427, %v5459
  %v5492 = vmax.f32 %v5428, %v5460
  %v5493 = vmax.f32 %v5429, %v5461
  %v5494 = vmax.f32 %v5430, %v5462
  %v5495 = vmax.f32 %v5431, %v5463
  %v5496 = vmax.f32 %v5432, %v5464
  %v5497 = vmax.f32 %v5433, %v5465
  %v5498 = vmax.f32 %v5434, %v5466
  %v5499 = vmax.f32 %v5435, %v5467
  %v5500 = vmax.f32 %v5436, %v5468
  %v5501 = vmax.f32 %v5437, %v5469
  %v5502 = vmax.f32 %v5438, %v5470
  %v5503 = vmax.f32 %v5439, %v5471
  %v5504 = vmax.f32 %v5440, %v5472
  %v5505 = vmax.f32 %v5441, %v5473
  %v5506 = vmax.f32 %v5442, %v5474
  %v5507 = vmax.f32 %v5443, %v5475
  %v5508 = vmax.f32 %v5444, %v5476
  %v5509 = vmax.f32 %v5445, %v5477
  %v5510 = vmax.f32 %v5446, %v5478
  %v5511 = vmax.f32 %v5447, %v5479
  %v5512 = vmax.f32 %v5448, %v5480
  %v5513 = vmax.f32 %v5449, %v5481
  %v5514 = vmax.f32 %v5450, %v5482
  %v5515 = vmax.f32 %v5451, %v5483
  %v5516 = vmax.f32 %v5452, %v5484
  %v5517 = vmax.f32 %v5453, %v5485
  %v5550 = vrot.slane %v5486, 1
  %v5551 = vrot.slane %v5487, 1
  %v5552 = vsel %vm4237, %v5550, %v5551
  %v5553 = vrot.slane %v5488, 1
  %v5554 = vrot.slane %v5489, 1
  %v5555 = vsel %vm4237, %v5553, %v5554
  %v5556 = vrot.slane %v5490, 1
  %v5557 = vrot.slane %v5491, 1
  %v5558 = vsel %vm4237, %v5556, %v5557
  %v5559 = vrot.slane %v5492, 1
  %v5560 = vrot.slane %v5493, 1
  %v5561 = vsel %vm4237, %v5559, %v5560
  %v5562 = vrot.slane %v5494, 1
  %v5563 = vrot.slane %v5495, 1
  %v5564 = vsel %vm4237, %v5562, %v5563
  %v5565 = vrot.slane %v5496, 1
  %v5566 = vrot.slane %v5497, 1
  %v5567 = vsel %vm4237, %v5565, %v5566
  %v5568 = vrot.slane %v5498, 1
  %v5569 = vrot.slane %v5499, 1
  %v5570 = vsel %vm4237, %v5568, %v5569
  %v5571 = vrot.slane %v5500, 1
  %v5572 = vrot.slane %v5501, 1
  %v5573 = vsel %vm4237, %v5571, %v5572
  %v5574 = vrot.slane %v5502, 1
  %v5575 = vrot.slane %v5503, 1
  %v5576 = vsel %vm4237, %v5574, %v5575
  %v5577 = vrot.slane %v5504, 1
  %v5578 = vrot.slane %v5505, 1
  %v5579 = vsel %vm4237, %v5577, %v5578
  %v5580 = vrot.slane %v5506, 1
  %v5581 = vrot.slane %v5507, 1
  %v5582 = vsel %vm4237, %v5580, %v5581
  %v5583 = vrot.slane %v5508, 1
  %v5584 = vrot.slane %v5509, 1
  %v5585 = vsel %vm4237, %v5583, %v5584
  %v5586 = vrot.slane %v5510, 1
  %v5587 = vrot.slane %v5511, 1
  %v5588 = vsel %vm4237, %v5586, %v5587
  %v5589 = vrot.slane %v5512, 1
  %v5590 = vrot.slane %v5513, 1
  %v5591 = vsel %vm4237, %v5589, %v5590
  %v5592 = vrot.slane %v5514, 1
  %v5593 = vrot.slane %v5515, 1
  %v5594 = vsel %vm4237, %v5592, %v5593
  %v5595 = vrot.slane %v5516, 1
  %v5596 = vrot.slane %v5517, 1
  %v5597 = vsel %vm4237, %v5595, %v5596
  %v5614 = vmax.f32 %v5486, %v5552
  %v5615 = vmax.f32 %v5488, %v5555
  %v5616 = vmax.f32 %v5490, %v5558
  %v5617 = vmax.f32 %v5492, %v5561
  %v5618 = vmax.f32 %v5494, %v5564
  %v5619 = vmax.f32 %v5496, %v5567
  %v5620 = vmax.f32 %v5498, %v5570
  %v5621 = vmax.f32 %v5500, %v5573
  %v5622 = vmax.f32 %v5502, %v5576
  %v5623 = vmax.f32 %v5504, %v5579
  %v5624 = vmax.f32 %v5506, %v5582
  %v5625 = vmax.f32 %v5508, %v5585
  %v5626 = vmax.f32 %v5510, %v5588
  %v5627 = vmax.f32 %v5512, %v5591
  %v5628 = vmax.f32 %v5514, %v5594
  %v5629 = vmax.f32 %v5516, %v5597
  %v5630 = vrot.slane %v5486, 2
  %v5631 = vrot.slane %v5487, 2
  %v5632 = vsel %vm375, %v5630, %v5631
  %v5633 = vrot.slane %v5488, 2
  %v5634 = vrot.slane %v5489, 2
  %v5635 = vsel %vm375, %v5633, %v5634
  %v5636 = vrot.slane %v5490, 2
  %v5637 = vrot.slane %v5491, 2
  %v5638 = vsel %vm375, %v5636, %v5637
  %v5639 = vrot.slane %v5492, 2
  %v5640 = vrot.slane %v5493, 2
  %v5641 = vsel %vm375, %v5639, %v5640
  %v5642 = vrot.slane %v5494, 2
  %v5643 = vrot.slane %v5495, 2
  %v5644 = vsel %vm375, %v5642, %v5643
  %v5645 = vrot.slane %v5496, 2
  %v5646 = vrot.slane %v5497, 2
  %v5647 = vsel %vm375, %v5645, %v5646
  %v5648 = vrot.slane %v5498, 2
  %v5649 = vrot.slane %v5499, 2
  %v5650 = vsel %vm375, %v5648, %v5649
  %v5651 = vrot.slane %v5500, 2
  %v5652 = vrot.slane %v5501, 2
  %v5653 = vsel %vm375, %v5651, %v5652
  %v5654 = vrot.slane %v5502, 2
  %v5655 = vrot.slane %v5503, 2
  %v5656 = vsel %vm375, %v5654, %v5655
  %v5657 = vrot.slane %v5504, 2
  %v5658 = vrot.slane %v5505, 2
  %v5659 = vsel %vm375, %v5657, %v5658
  %v5660 = vrot.slane %v5506, 2
  %v5661 = vrot.slane %v5507, 2
  %v5662 = vsel %vm375, %v5660, %v5661
  %v5663 = vrot.slane %v5508, 2
  %v5664 = vrot.slane %v5509, 2
  %v5665 = vsel %vm375, %v5663, %v5664
  %v5666 = vrot.slane %v5510, 2
  %v5667 = vrot.slane %v5511, 2
  %v5668 = vsel %vm375, %v5666, %v5667
  %v5669 = vrot.slane %v5512, 2
  %v5670 = vrot.slane %v5513, 2
  %v5671 = vsel %vm375, %v5669, %v5670
  %v5672 = vrot.slane %v5514, 2
  %v5673 = vrot.slane %v5515, 2
  %v5674 = vsel %vm375, %v5672, %v5673
  %v5675 = vrot.slane %v5516, 2
  %v5676 = vrot.slane %v5517, 2
  %v5677 = vsel %vm375, %v5675, %v5676
  %v5694 = vmax.f32 %v5614, %v5632
  %v5695 = vmax.f32 %v5615, %v5635
  %v5696 = vmax.f32 %v5616, %v5638
  %v5697 = vmax.f32 %v5617, %v5641
  %v5698 = vmax.f32 %v5618, %v5644
  %v5699 = vmax.f32 %v5619, %v5647
  %v5700 = vmax.f32 %v5620, %v5650
  %v5701 = vmax.f32 %v5621, %v5653
  %v5702 = vmax.f32 %v5622, %v5656
  %v5703 = vmax.f32 %v5623, %v5659
  %v5704 = vmax.f32 %v5624, %v5662
  %v5705 = vmax.f32 %v5625, %v5665
  %v5706 = vmax.f32 %v5626, %v5668
  %v5707 = vmax.f32 %v5627, %v5671
  %v5708 = vmax.f32 %v5628, %v5674
  %v5709 = vmax.f32 %v5629, %v5677
  %v5710 = vrot.slane %v5486, 3
  %v5711 = vrot.slane %v5487, 3
  %v5712 = vsel %vm374, %v5710, %v5711
  %v5713 = vrot.slane %v5488, 3
  %v5714 = vrot.slane %v5489, 3
  %v5715 = vsel %vm374, %v5713, %v5714
  %v5716 = vrot.slane %v5490, 3
  %v5717 = vrot.slane %v5491, 3
  %v5718 = vsel %vm374, %v5716, %v5717
  %v5719 = vrot.slane %v5492, 3
  %v5720 = vrot.slane %v5493, 3
  %v5721 = vsel %vm374, %v5719, %v5720
  %v5722 = vrot.slane %v5494, 3
  %v5723 = vrot.slane %v5495, 3
  %v5724 = vsel %vm374, %v5722, %v5723
  %v5725 = vrot.slane %v5496, 3
  %v5726 = vrot.slane %v5497, 3
  %v5727 = vsel %vm374, %v5725, %v5726
  %v5728 = vrot.slane %v5498, 3
  %v5729 = vrot.slane %v5499, 3
  %v5730 = vsel %vm374, %v5728, %v5729
  %v5731 = vrot.slane %v5500, 3
  %v5732 = vrot.slane %v5501, 3
  %v5733 = vsel %vm374, %v5731, %v5732
  %v5734 = vrot.slane %v5502, 3
  %v5735 = vrot.slane %v5503, 3
  %v5736 = vsel %vm374, %v5734, %v5735
  %v5737 = vrot.slane %v5504, 3
  %v5738 = vrot.slane %v5505, 3
  %v5739 = vsel %vm374, %v5737, %v5738
  %v5740 = vrot.slane %v5506, 3
  %v5741 = vrot.slane %v5507, 3
  %v5742 = vsel %vm374, %v5740, %v5741
  %v5743 = vrot.slane %v5508, 3
  %v5744 = vrot.slane %v5509, 3
  %v5745 = vsel %vm374, %v5743, %v5744
  %v5746 = vrot.slane %v5510, 3
  %v5747 = vrot.slane %v5511, 3
  %v5748 = vsel %vm374, %v5746, %v5747
  %v5749 = vrot.slane %v5512, 3
  %v5750 = vrot.slane %v5513, 3
  %v5751 = vsel %vm374, %v5749, %v5750
  %v5752 = vrot.slane %v5514, 3
  %v5753 = vrot.slane %v5515, 3
  %v5754 = vsel %vm374, %v5752, %v5753
  %v5755 = vrot.slane %v5516, 3
  %v5756 = vrot.slane %v5517, 3
  %v5757 = vsel %vm374, %v5755, %v5756
  %v5774 = vmax.f32 %v5694, %v5712
  %v5775 = vmax.f32 %v5695, %v5715
  %v5776 = vmax.f32 %v5696, %v5718
  %v5777 = vmax.f32 %v5697, %v5721
  %v5778 = vmax.f32 %v5698, %v5724
  %v5779 = vmax.f32 %v5699, %v5727
  %v5780 = vmax.f32 %v5700, %v5730
  %v5781 = vmax.f32 %v5701, %v5733
  %v5782 = vmax.f32 %v5702, %v5736
  %v5783 = vmax.f32 %v5703, %v5739
  %v5784 = vmax.f32 %v5704, %v5742
  %v5785 = vmax.f32 %v5705, %v5745
  %v5786 = vmax.f32 %v5706, %v5748
  %v5787 = vmax.f32 %v5707, %v5751
  %v5788 = vmax.f32 %v5708, %v5754
  %v5789 = vmax.f32 %v5709, %v5757
  %v5790 = vrot.slane %v5486, 4
  %v5791 = vrot.slane %v5487, 4
  %v5792 = vsel %vm1873, %v5790, %v5791
  %v5793 = vrot.slane %v5488, 4
  %v5794 = vrot.slane %v5489, 4
  %v5795 = vsel %vm1873, %v5793, %v5794
  %v5796 = vrot.slane %v5490, 4
  %v5797 = vrot.slane %v5491, 4
  %v5798 = vsel %vm1873, %v5796, %v5797
  %v5799 = vrot.slane %v5492, 4
  %v5800 = vrot.slane %v5493, 4
  %v5801 = vsel %vm1873, %v5799, %v5800
  %v5802 = vrot.slane %v5494, 4
  %v5803 = vrot.slane %v5495, 4
  %v5804 = vsel %vm1873, %v5802, %v5803
  %v5805 = vrot.slane %v5496, 4
  %v5806 = vrot.slane %v5497, 4
  %v5807 = vsel %vm1873, %v5805, %v5806
  %v5808 = vrot.slane %v5498, 4
  %v5809 = vrot.slane %v5499, 4
  %v5810 = vsel %vm1873, %v5808, %v5809
  %v5811 = vrot.slane %v5500, 4
  %v5812 = vrot.slane %v5501, 4
  %v5813 = vsel %vm1873, %v5811, %v5812
  %v5814 = vrot.slane %v5502, 4
  %v5815 = vrot.slane %v5503, 4
  %v5816 = vsel %vm1873, %v5814, %v5815
  %v5817 = vrot.slane %v5504, 4
  %v5818 = vrot.slane %v5505, 4
  %v5819 = vsel %vm1873, %v5817, %v5818
  %v5820 = vrot.slane %v5506, 4
  %v5821 = vrot.slane %v5507, 4
  %v5822 = vsel %vm1873, %v5820, %v5821
  %v5823 = vrot.slane %v5508, 4
  %v5824 = vrot.slane %v5509, 4
  %v5825 = vsel %vm1873, %v5823, %v5824
  %v5826 = vrot.slane %v5510, 4
  %v5827 = vrot.slane %v5511, 4
  %v5828 = vsel %vm1873, %v5826, %v5827
  %v5829 = vrot.slane %v5512, 4
  %v5830 = vrot.slane %v5513, 4
  %v5831 = vsel %vm1873, %v5829, %v5830
  %v5832 = vrot.slane %v5514, 4
  %v5833 = vrot.slane %v5515, 4
  %v5834 = vsel %vm1873, %v5832, %v5833
  %v5835 = vrot.slane %v5516, 4
  %v5836 = vrot.slane %v5517, 4
  %v5837 = vsel %vm1873, %v5835, %v5836
  %v5854 = vmax.f32 %v5774, %v5792
  %v5855 = vmax.f32 %v5775, %v5795
  %v5856 = vmax.f32 %v5776, %v5798
  %v5857 = vmax.f32 %v5777, %v5801
  %v5858 = vmax.f32 %v5778, %v5804
  %v5859 = vmax.f32 %v5779, %v5807
  %v5860 = vmax.f32 %v5780, %v5810
  %v5861 = vmax.f32 %v5781, %v5813
  %v5862 = vmax.f32 %v5782, %v5816
  %v5863 = vmax.f32 %v5783, %v5819
  %v5864 = vmax.f32 %v5784, %v5822
  %v5865 = vmax.f32 %v5785, %v5825
  %v5866 = vmax.f32 %v5786, %v5828
  %v5867 = vmax.f32 %v5787, %v5831
  %v5868 = vmax.f32 %v5788, %v5834
  %v5869 = vmax.f32 %v5789, %v5837
  %v5870 = vld [vmem:[%s16] sm:$0xf]
  %v5871 = vpack.c.bf16 %v3882, %v3881
  %v5872 = vpack.c.bf16 %v3884, %v3883
  %v5873 = vpack.c.bf16 %v3886, %v3885
  %v5874 = vpack.c.bf16 %v3888, %v3887
  %v5875 = vpack.c.bf16 %v3890, %v3889
  %v5876 = vpack.c.bf16 %v3892, %v3891
  %v5877 = vpack.c.bf16 %v3894, %v3893
  %v5878 = vpack.c.bf16 %v3896, %v3895
  %v5879 = vld [vmem:[%s17] sm:$0xf]
  %v5880 = vpack.c.bf16 %v4543, %v4542
  %v5881 = vpack.c.bf16 %v4545, %v4544
  %v5882 = vpack.c.bf16 %v4547, %v4546
  %v5883 = vpack.c.bf16 %v4549, %v4548
  %v5884 = vpack.c.bf16 %v4551, %v4550
  %v5885 = vpack.c.bf16 %v4553, %v4552
  %v5886 = vpack.c.bf16 %v4555, %v4554
  %v5887 = vpack.c.bf16 %v4557, %v4556
  %v5889 = vsel %vm934, %v5880, 0
  %v5892 = vsel %vm934, %v5881, 0
  %v5895 = vsel %vm934, %v5882, 0
  %v5898 = vsel %vm934, %v5883, 0
  %v5901 = vsel %vm934, %v5884, 0
  %v5904 = vsel %vm934, %v5885, 0
  %v5907 = vsel %vm934, %v5886, 0
  %v5910 = vsel %vm934, %v5887, 0
  %v5913 = vsel %vm1873, %v5879, 0
  %5915 = vmatpush.bf16.msra.mxu0 0
  %5916 = vmatpush.bf16.msra.mxu0 0
  %5917 = vmatpush.bf16.msra.mxu0 0
  %5918 = vmatpush.bf16.msra.mxu0 0
  %5919 = vmatpush.bf16.msra.mxu0 0
  %5920 = vmatpush.bf16.msra.mxu0 0
  %5921 = vmatpush.bf16.msra.mxu0 0
  %5922 = vmatpush.bf16.msra.mxu0 %v5913
  %5923 = vmatmul.bf16.gmra.mxu0 %v5889
  %v5924 = vpop.f32.mrf.mxu0
  %v5925 = vadd.f32 0.0, %v5924
  %v5926 = vpop.f32.mrf.mxu0
  %v5927 = vadd.f32 0.0, %v5926
  %5928 = vmatmul.bf16.gmra.mxu0 %v5892
  %v5929 = vpop.f32.mrf.mxu0
  %v5930 = vadd.f32 0.0, %v5929
  %v5931 = vpop.f32.mrf.mxu0
  %v5932 = vadd.f32 0.0, %v5931
  %5933 = vmatmul.bf16.gmra.mxu0 %v5895
  %v5934 = vpop.f32.mrf.mxu0
  %v5935 = vadd.f32 0.0, %v5934
  %v5936 = vpop.f32.mrf.mxu0
  %v5937 = vadd.f32 0.0, %v5936
  %5938 = vmatmul.bf16.gmra.mxu0 %v5898
  %v5939 = vpop.f32.mrf.mxu0
  %v5940 = vadd.f32 0.0, %v5939
  %v5941 = vpop.f32.mrf.mxu0
  %v5942 = vadd.f32 0.0, %v5941
  %5943 = vmatmul.bf16.gmra.mxu0 %v5901
  %v5944 = vpop.f32.mrf.mxu0
  %v5945 = vadd.f32 0.0, %v5944
  %v5946 = vpop.f32.mrf.mxu0
  %v5947 = vadd.f32 0.0, %v5946
  %5948 = vmatmul.bf16.gmra.mxu0 %v5904
  %v5949 = vpop.f32.mrf.mxu0
  %v5950 = vadd.f32 0.0, %v5949
  %v5951 = vpop.f32.mrf.mxu0
  %v5952 = vadd.f32 0.0, %v5951
  %5953 = vmatmul.bf16.gmra.mxu0 %v5907
  %v5954 = vpop.f32.mrf.mxu0
  %v5955 = vadd.f32 0.0, %v5954
  %v5956 = vpop.f32.mrf.mxu0
  %v5957 = vadd.f32 0.0, %v5956
  %5958 = vmatmul.bf16.gmra.mxu0 %v5910
  %v5959 = vpop.f32.mrf.mxu0
  %v5960 = vadd.f32 0.0, %v5959
  %v5961 = vpop.f32.mrf.mxu0
  %v5962 = vadd.f32 0.0, %v5961
  %5963 = vdwg.mxu0
  %v5965 = vsel %vm934, %v5871, 0
  %v5968 = vsel %vm934, %v5872, 0
  %v5971 = vsel %vm934, %v5873, 0
  %v5974 = vsel %vm934, %v5874, 0
  %v5977 = vsel %vm934, %v5875, 0
  %v5980 = vsel %vm934, %v5876, 0
  %v5983 = vsel %vm934, %v5877, 0
  %v5986 = vsel %vm934, %v5878, 0
  %v5989 = vsel %vm1873, %v5870, 0
  %5991 = vmatpush.bf16.msra.mxu0 0
  %5992 = vmatpush.bf16.msra.mxu0 0
  %5993 = vmatpush.bf16.msra.mxu0 0
  %5994 = vmatpush.bf16.msra.mxu0 0
  %5995 = vmatpush.bf16.msra.mxu0 0
  %5996 = vmatpush.bf16.msra.mxu0 0
  %5997 = vmatpush.bf16.msra.mxu0 0
  %5998 = vmatpush.bf16.msra.mxu0 %v5989
  %5999 = vmatmul.bf16.gmra.mxu0 %v5965
  %v6000 = vpop.f32.mrf.mxu0
  %v6001 = vadd.f32 %v5925, %v6000
  %v6002 = vpop.f32.mrf.mxu0
  %v6003 = vadd.f32 %v5927, %v6002
  %6004 = vmatmul.bf16.gmra.mxu0 %v5968
  %v6005 = vpop.f32.mrf.mxu0
  %v6006 = vadd.f32 %v5930, %v6005
  %v6007 = vpop.f32.mrf.mxu0
  %v6008 = vadd.f32 %v5932, %v6007
  %6009 = vmatmul.bf16.gmra.mxu0 %v5971
  %v6010 = vpop.f32.mrf.mxu0
  %v6011 = vadd.f32 %v5935, %v6010
  %v6012 = vpop.f32.mrf.mxu0
  %v6013 = vadd.f32 %v5937, %v6012
  %6014 = vmatmul.bf16.gmra.mxu0 %v5974
  %v6015 = vpop.f32.mrf.mxu0
  %v6016 = vadd.f32 %v5940, %v6015
  %v6017 = vpop.f32.mrf.mxu0
  %v6018 = vadd.f32 %v5942, %v6017
  %6019 = vmatmul.bf16.gmra.mxu0 %v5977
  %v6020 = vpop.f32.mrf.mxu0
  %v6021 = vadd.f32 %v5945, %v6020
  %v6022 = vpop.f32.mrf.mxu0
  %v6023 = vadd.f32 %v5947, %v6022
  %6024 = vmatmul.bf16.gmra.mxu0 %v5980
  %v6025 = vpop.f32.mrf.mxu0
  %v6026 = vadd.f32 %v5950, %v6025
  %v6027 = vpop.f32.mrf.mxu0
  %v6028 = vadd.f32 %v5952, %v6027
  %6029 = vmatmul.bf16.gmra.mxu0 %v5983
  %v6030 = vpop.f32.mrf.mxu0
  %v6031 = vadd.f32 %v5955, %v6030
  %v6032 = vpop.f32.mrf.mxu0
  %v6033 = vadd.f32 %v5957, %v6032
  %6034 = vmatmul.bf16.gmra.mxu0 %v5986
  %v6035 = vpop.f32.mrf.mxu0
  %v6036 = vadd.f32 %v5960, %v6035
  %v6037 = vpop.f32.mrf.mxu0
  %v6038 = vadd.f32 %v5962, %v6037
  %6039 = vdwg.mxu0
  %v6040 = vld [vmem:[%s18] sm:$0xf]
  %v6041 = vpack.c.bf16 %v5199, %v5198
  %v6042 = vpack.c.bf16 %v5201, %v5200
  %v6043 = vpack.c.bf16 %v5203, %v5202
  %v6044 = vpack.c.bf16 %v5205, %v5204
  %v6045 = vpack.c.bf16 %v5207, %v5206
  %v6046 = vpack.c.bf16 %v5209, %v5208
  %v6047 = vpack.c.bf16 %v5211, %v5210
  %v6048 = vpack.c.bf16 %v5213, %v5212
  %v6050 = vsel %vm934, %v6041, 0
  %v6053 = vsel %vm934, %v6042, 0
  %v6056 = vsel %vm934, %v6043, 0
  %v6059 = vsel %vm934, %v6044, 0
  %v6062 = vsel %vm934, %v6045, 0
  %v6065 = vsel %vm934, %v6046, 0
  %v6068 = vsel %vm934, %v6047, 0
  %v6071 = vsel %vm934, %v6048, 0
  %v6074 = vsel %vm1873, %v6040, 0
  %6076 = vmatpush.bf16.msra.mxu0 0
  %6077 = vmatpush.bf16.msra.mxu0 0
  %6078 = vmatpush.bf16.msra.mxu0 0
  %6079 = vmatpush.bf16.msra.mxu0 0
  %6080 = vmatpush.bf16.msra.mxu0 0
  %6081 = vmatpush.bf16.msra.mxu0 0
  %6082 = vmatpush.bf16.msra.mxu0 0
  %6083 = vmatpush.bf16.msra.mxu0 %v6074
  %6084 = vmatmul.bf16.gmra.mxu0 %v6050
  %v6085 = vpop.f32.mrf.mxu0
  %v6086 = vadd.f32 0.0, %v6085
  %v6087 = vpop.f32.mrf.mxu0
  %v6088 = vadd.f32 0.0, %v6087
  %6089 = vmatmul.bf16.gmra.mxu0 %v6053
  %v6090 = vpop.f32.mrf.mxu0
  %v6091 = vadd.f32 0.0, %v6090
  %v6092 = vpop.f32.mrf.mxu0
  %v6093 = vadd.f32 0.0, %v6092
  %6094 = vmatmul.bf16.gmra.mxu0 %v6056
  %v6095 = vpop.f32.mrf.mxu0
  %v6096 = vadd.f32 0.0, %v6095
  %v6097 = vpop.f32.mrf.mxu0
  %v6098 = vadd.f32 0.0, %v6097
  %6099 = vmatmul.bf16.gmra.mxu0 %v6059
  %v6100 = vpop.f32.mrf.mxu0
  %v6101 = vadd.f32 0.0, %v6100
  %v6102 = vpop.f32.mrf.mxu0
  %v6103 = vadd.f32 0.0, %v6102
  %6104 = vmatmul.bf16.gmra.mxu0 %v6062
  %v6105 = vpop.f32.mrf.mxu0
  %v6106 = vadd.f32 0.0, %v6105
  %v6107 = vpop.f32.mrf.mxu0
  %v6108 = vadd.f32 0.0, %v6107
  %6109 = vmatmul.bf16.gmra.mxu0 %v6065
  %v6110 = vpop.f32.mrf.mxu0
  %v6111 = vadd.f32 0.0, %v6110
  %v6112 = vpop.f32.mrf.mxu0
  %v6113 = vadd.f32 0.0, %v6112
  %6114 = vmatmul.bf16.gmra.mxu0 %v6068
  %v6115 = vpop.f32.mrf.mxu0
  %v6116 = vadd.f32 0.0, %v6115
  %v6117 = vpop.f32.mrf.mxu0
  %v6118 = vadd.f32 0.0, %v6117
  %6119 = vmatmul.bf16.gmra.mxu0 %v6071
  %v6120 = vpop.f32.mrf.mxu0
  %v6121 = vadd.f32 0.0, %v6120
  %v6122 = vpop.f32.mrf.mxu0
  %v6123 = vadd.f32 0.0, %v6122
  %6124 = vdwg.mxu0
  %v6125 = vadd.f32 %v6001, %v6086
  %v6126 = vadd.f32 %v6003, %v6088
  %v6127 = vadd.f32 %v6006, %v6091
  %v6128 = vadd.f32 %v6008, %v6093
  %v6129 = vadd.f32 %v6011, %v6096
  %v6130 = vadd.f32 %v6013, %v6098
  %v6131 = vadd.f32 %v6016, %v6101
  %v6132 = vadd.f32 %v6018, %v6103
  %v6133 = vadd.f32 %v6021, %v6106
  %v6134 = vadd.f32 %v6023, %v6108
  %v6135 = vadd.f32 %v6026, %v6111
  %v6136 = vadd.f32 %v6028, %v6113
  %v6137 = vadd.f32 %v6031, %v6116
  %v6138 = vadd.f32 %v6033, %v6118
  %v6139 = vadd.f32 %v6036, %v6121
  %v6140 = vadd.f32 %v6038, %v6123
  %v6141 = vld [vmem:[%s19] sm:$0xf]
  %v6142 = vpack.c.bf16 %v5855, %v5854
  %v6143 = vpack.c.bf16 %v5857, %v5856
  %v6144 = vpack.c.bf16 %v5859, %v5858
  %v6145 = vpack.c.bf16 %v5861, %v5860
  %v6146 = vpack.c.bf16 %v5863, %v5862
  %v6147 = vpack.c.bf16 %v5865, %v5864
  %v6148 = vpack.c.bf16 %v5867, %v5866
  %v6149 = vpack.c.bf16 %v5869, %v5868
  %v6151 = vsel %vm934, %v6142, 0
  %v6154 = vsel %vm934, %v6143, 0
  %v6157 = vsel %vm934, %v6144, 0
  %v6160 = vsel %vm934, %v6145, 0
  %v6163 = vsel %vm934, %v6146, 0
  %v6166 = vsel %vm934, %v6147, 0
  %v6169 = vsel %vm934, %v6148, 0
  %v6172 = vsel %vm934, %v6149, 0
  %v6175 = vsel %vm1873, %v6141, 0
  %6177 = vmatpush.bf16.msra.mxu0 0
  %6178 = vmatpush.bf16.msra.mxu0 0
  %6179 = vmatpush.bf16.msra.mxu0 0
  %6180 = vmatpush.bf16.msra.mxu0 0
  %6181 = vmatpush.bf16.msra.mxu0 0
  %6182 = vmatpush.bf16.msra.mxu0 0
  %6183 = vmatpush.bf16.msra.mxu0 0
  %6184 = vmatpush.bf16.msra.mxu0 %v6175
  %6185 = vmatmul.bf16.gmra.mxu0 %v6151
  %v6186 = vpop.f32.mrf.mxu0
  %v6187 = vadd.f32 0.0, %v6186
  %v6188 = vpop.f32.mrf.mxu0
  %v6189 = vadd.f32 0.0, %v6188
  %6190 = vmatmul.bf16.gmra.mxu0 %v6154
  %v6191 = vpop.f32.mrf.mxu0
  %v6192 = vadd.f32 0.0, %v6191
  %v6193 = vpop.f32.mrf.mxu0
  %v6194 = vadd.f32 0.0, %v6193
  %6195 = vmatmul.bf16.gmra.mxu0 %v6157
  %v6196 = vpop.f32.mrf.mxu0
  %v6197 = vadd.f32 0.0, %v6196
  %v6198 = vpop.f32.mrf.mxu0
  %v6199 = vadd.f32 0.0, %v6198
  %6200 = vmatmul.bf16.gmra.mxu0 %v6160
  %v6201 = vpop.f32.mrf.mxu0
  %v6202 = vadd.f32 0.0, %v6201
  %v6203 = vpop.f32.mrf.mxu0
  %v6204 = vadd.f32 0.0, %v6203
  %6205 = vmatmul.bf16.gmra.mxu0 %v6163
  %v6206 = vpop.f32.mrf.mxu0
  %v6207 = vadd.f32 0.0, %v6206
  %v6208 = vpop.f32.mrf.mxu0
  %v6209 = vadd.f32 0.0, %v6208
  %6210 = vmatmul.bf16.gmra.mxu0 %v6166
  %v6211 = vpop.f32.mrf.mxu0
  %v6212 = vadd.f32 0.0, %v6211
  %v6213 = vpop.f32.mrf.mxu0
  %v6214 = vadd.f32 0.0, %v6213
  %6215 = vmatmul.bf16.gmra.mxu0 %v6169
  %v6216 = vpop.f32.mrf.mxu0
  %v6217 = vadd.f32 0.0, %v6216
  %v6218 = vpop.f32.mrf.mxu0
  %v6219 = vadd.f32 0.0, %v6218
  %6220 = vmatmul.bf16.gmra.mxu0 %v6172
  %v6221 = vpop.f32.mrf.mxu0
  %v6222 = vadd.f32 0.0, %v6221
  %v6223 = vpop.f32.mrf.mxu0
  %v6224 = vadd.f32 0.0, %v6223
  %6225 = vdwg.mxu0
  %v6226 = vadd.f32 %v6125, %v6187
  %v6227 = vadd.f32 %v6126, %v6189
  %v6228 = vadd.f32 %v6127, %v6192
  %v6229 = vadd.f32 %v6128, %v6194
  %v6230 = vadd.f32 %v6129, %v6197
  %v6231 = vadd.f32 %v6130, %v6199
  %v6232 = vadd.f32 %v6131, %v6202
  %v6233 = vadd.f32 %v6132, %v6204
  %v6234 = vadd.f32 %v6133, %v6207
  %v6235 = vadd.f32 %v6134, %v6209
  %v6236 = vadd.f32 %v6135, %v6212
  %v6237 = vadd.f32 %v6136, %v6214
  %v6238 = vadd.f32 %v6137, %v6217
  %v6239 = vadd.f32 %v6138, %v6219
  %v6240 = vadd.f32 %v6139, %v6222
  %v6241 = vadd.f32 %v6140, %v6224
  %v6242 = vld [vmem:[%s20] sm:$0x1]
  %v6244 = vperm.slane %v6242, 0
  %v6246 = vadd.f32 %v6226, %v6244
  %v6247 = vadd.f32 %v6227, %v6244
  %v6248 = vadd.f32 %v6228, %v6244
  %v6249 = vadd.f32 %v6229, %v6244
  %v6250 = vadd.f32 %v6230, %v6244
  %v6251 = vadd.f32 %v6231, %v6244
  %v6252 = vadd.f32 %v6232, %v6244
  %v6253 = vadd.f32 %v6233, %v6244
  %v6254 = vadd.f32 %v6234, %v6244
  %v6255 = vadd.f32 %v6235, %v6244
  %v6256 = vadd.f32 %v6236, %v6244
  %v6257 = vadd.f32 %v6237, %v6244
  %v6258 = vadd.f32 %v6238, %v6244
  %v6259 = vadd.f32 %v6239, %v6244
  %v6260 = vadd.f32 %v6240, %v6244
  %v6261 = vadd.f32 %v6241, %v6244
  %v6262 = vsub.f32 0.0, %v6246
  %v6263 = vsub.f32 0.0, %v6247
  %v6264 = vsub.f32 0.0, %v6248
  %v6265 = vsub.f32 0.0, %v6249
  %v6266 = vsub.f32 0.0, %v6250
  %v6267 = vsub.f32 0.0, %v6251
  %v6268 = vsub.f32 0.0, %v6252
  %v6269 = vsub.f32 0.0, %v6253
  %v6270 = vsub.f32 0.0, %v6254
  %v6271 = vsub.f32 0.0, %v6255
  %v6272 = vsub.f32 0.0, %v6256
  %v6273 = vsub.f32 0.0, %v6257
  %v6274 = vsub.f32 0.0, %v6258
  %v6275 = vsub.f32 0.0, %v6259
  %v6276 = vsub.f32 0.0, %v6260
  %v6277 = vsub.f32 0.0, %v6261
  %v6278 = vmul.f32 %v6262, 1.442695
  %v6279 = vpow.pop %v6278
  %v6280 = vmul.f32 %v6263, 1.442695
  %v6281 = vpow.pop %v6280
  %v6282 = vmul.f32 %v6264, 1.442695
  %v6283 = vpow.pop %v6282
  %v6284 = vmul.f32 %v6265, 1.442695
  %v6285 = vpow.pop %v6284
  %v6286 = vmul.f32 %v6266, 1.442695
  %v6287 = vpow.pop %v6286
  %v6288 = vmul.f32 %v6267, 1.442695
  %v6289 = vpow.pop %v6288
  %v6290 = vmul.f32 %v6268, 1.442695
  %v6291 = vpow.pop %v6290
  %v6292 = vmul.f32 %v6269, 1.442695
  %v6293 = vpow.pop %v6292
  %v6294 = vmul.f32 %v6270, 1.442695
  %v6295 = vpow.pop %v6294
  %v6296 = vmul.f32 %v6271, 1.442695
  %v6297 = vpow.pop %v6296
  %v6298 = vmul.f32 %v6272, 1.442695
  %v6299 = vpow.pop %v6298
  %v6300 = vmul.f32 %v6273, 1.442695
  %v6301 = vpow.pop %v6300
  %v6302 = vmul.f32 %v6274, 1.442695
  %v6303 = vpow.pop %v6302
  %v6304 = vmul.f32 %v6275, 1.442695
  %v6305 = vpow.pop %v6304
  %v6306 = vmul.f32 %v6276, 1.442695
  %v6307 = vpow.pop %v6306
  %v6308 = vmul.f32 %v6277, 1.442695
  %v6309 = vpow.pop %v6308
  %v6310 = vadd.f32 %v6279, 1.0
  %v6311 = vadd.f32 %v6281, 1.0
  %v6312 = vadd.f32 %v6283, 1.0
  %v6313 = vadd.f32 %v6285, 1.0
  %v6314 = vadd.f32 %v6287, 1.0
  %v6315 = vadd.f32 %v6289, 1.0
  %v6316 = vadd.f32 %v6291, 1.0
  %v6317 = vadd.f32 %v6293, 1.0
  %v6318 = vadd.f32 %v6295, 1.0
  %v6319 = vadd.f32 %v6297, 1.0
  %v6320 = vadd.f32 %v6299, 1.0
  %v6321 = vadd.f32 %v6301, 1.0
  %v6322 = vadd.f32 %v6303, 1.0
  %v6323 = vadd.f32 %v6305, 1.0
  %v6324 = vadd.f32 %v6307, 1.0
  %v6325 = vadd.f32 %v6309, 1.0
  %v6326 = vrcp.pop %v6310
  %v6327 = vrcp.pop %v6311
  %v6328 = vrcp.pop %v6312
  %v6329 = vrcp.pop %v6313
  %v6330 = vrcp.pop %v6314
  %v6331 = vrcp.pop %v6315
  %v6332 = vrcp.pop %v6316
  %v6333 = vrcp.pop %v6317
  %v6334 = vrcp.pop %v6318
  %v6335 = vrcp.pop %v6319
  %v6336 = vrcp.pop %v6320
  %v6337 = vrcp.pop %v6321
  %v6338 = vrcp.pop %v6322
  %v6339 = vrcp.pop %v6323
  %v6340 = vrcp.pop %v6324
  %v6341 = vrcp.pop %v6325
  %v6342 = vmul.f32 %v6246, %v6326
  %v6343 = vmul.f32 %v6247, %v6327
  %v6344 = vmul.f32 %v6248, %v6328
  %v6345 = vmul.f32 %v6249, %v6329
  %v6346 = vmul.f32 %v6250, %v6330
  %v6347 = vmul.f32 %v6251, %v6331
  %v6348 = vmul.f32 %v6252, %v6332
  %v6349 = vmul.f32 %v6253, %v6333
  %v6350 = vmul.f32 %v6254, %v6334
  %v6351 = vmul.f32 %v6255, %v6335
  %v6352 = vmul.f32 %v6256, %v6336
  %v6353 = vmul.f32 %v6257, %v6337
  %v6354 = vmul.f32 %v6258, %v6338
  %v6355 = vmul.f32 %v6259, %v6339
  %v6356 = vmul.f32 %v6260, %v6340
  %v6357 = vmul.f32 %v6261, %v6341
  %v6358 = vld [vmem:[%s21] sm:$0xf]
  %v6359 = vld [vmem:[%s21 + $0x4] sm:$0xf]
  %v6360 = vpack.c.bf16 %v6343, %v6342
  %v6361 = vpack.c.bf16 %v6345, %v6344
  %v6362 = vpack.c.bf16 %v6347, %v6346
  %v6363 = vpack.c.bf16 %v6349, %v6348
  %v6364 = vpack.c.bf16 %v6351, %v6350
  %v6365 = vpack.c.bf16 %v6353, %v6352
  %v6366 = vpack.c.bf16 %v6355, %v6354
  %v6367 = vpack.c.bf16 %v6357, %v6356
  %v6368 = vld [vmem:[%s22] sm:$0x1]
  %v6370 = vperm.slane %v6368, 0
  %v6374 = vunpack.c.l.b16 %v6358
  %v6375 = vunpack.c.l.b16 %v6359
  %v6376 = vpack.c.b16 %v6375, %v6374
  %v6379 = vsel %vm2042, %v6360, 0
  %v6382 = vsel %vm2042, %v6361, 0
  %v6385 = vsel %vm2042, %v6362, 0
  %v6388 = vsel %vm2042, %v6363, 0
  %v6391 = vsel %vm2042, %v6364, 0
  %v6394 = vsel %vm2042, %v6365, 0
  %v6397 = vsel %vm2042, %v6366, 0
  %v6400 = vsel %vm2042, %v6367, 0
  %6402 = vmatpush.bf16.msra.mxu0 0
  %6403 = vmatpush.bf16.msra.mxu0 0
  %6404 = vmatpush.bf16.msra.mxu0 0
  %6405 = vmatpush.bf16.msra.mxu0 0
  %6406 = vmatpush.bf16.msra.mxu0 0
  %6407 = vmatpush.bf16.msra.mxu0 0
  %6408 = vmatpush.bf16.msra.mxu0 0
  %6409 = vmatpush.bf16.msra.mxu0 %v6376
  %6410 = vmatmul.bf16.gmra.mxu0 %v6379
  %v6411 = vpop.f32.mrf.mxu0
  %v6412 = vadd.f32 %v6370, %v6411
  %v6413 = vpop.f32.mrf.mxu0
  %v6414 = vadd.f32 %v6370, %v6413
  %6415 = vmatmul.bf16.gmra.mxu0 %v6382
  %v6416 = vpop.f32.mrf.mxu0
  %v6417 = vadd.f32 %v6370, %v6416
  %v6418 = vpop.f32.mrf.mxu0
  %v6419 = vadd.f32 %v6370, %v6418
  %6420 = vmatmul.bf16.gmra.mxu0 %v6385
  %v6421 = vpop.f32.mrf.mxu0
  %v6422 = vadd.f32 %v6370, %v6421
  %v6423 = vpop.f32.mrf.mxu0
  %v6424 = vadd.f32 %v6370, %v6423
  %6425 = vmatmul.bf16.gmra.mxu0 %v6388
  %v6426 = vpop.f32.mrf.mxu0
  %v6427 = vadd.f32 %v6370, %v6426
  %v6428 = vpop.f32.mrf.mxu0
  %v6429 = vadd.f32 %v6370, %v6428
  %6430 = vmatmul.bf16.gmra.mxu0 %v6391
  %v6431 = vpop.f32.mrf.mxu0
  %v6432 = vadd.f32 %v6370, %v6431
  %v6433 = vpop.f32.mrf.mxu0
  %v6434 = vadd.f32 %v6370, %v6433
  %6435 = vmatmul.bf16.gmra.mxu0 %v6394
  %v6436 = vpop.f32.mrf.mxu0
  %v6437 = vadd.f32 %v6370, %v6436
  %v6438 = vpop.f32.mrf.mxu0
  %v6439 = vadd.f32 %v6370, %v6438
  %6440 = vmatmul.bf16.gmra.mxu0 %v6397
  %v6441 = vpop.f32.mrf.mxu0
  %v6442 = vadd.f32 %v6370, %v6441
  %v6443 = vpop.f32.mrf.mxu0
  %v6444 = vadd.f32 %v6370, %v6443
  %6445 = vmatmul.bf16.gmra.mxu0 %v6400
  %v6446 = vpop.f32.mrf.mxu0
  %v6447 = vadd.f32 %v6370, %v6446
  %v6448 = vpop.f32.mrf.mxu0
  %v6449 = vadd.f32 %v6370, %v6448
  %6450 = vdwg.mxu0
  %v6451 = vsub.f32 0.0, %v6412
  %v6452 = vsub.f32 0.0, %v6414
  %v6453 = vsub.f32 0.0, %v6417
  %v6454 = vsub.f32 0.0, %v6419
  %v6455 = vsub.f32 0.0, %v6422
  %v6456 = vsub.f32 0.0, %v6424
  %v6457 = vsub.f32 0.0, %v6427
  %v6458 = vsub.f32 0.0, %v6429
  %v6459 = vsub.f32 0.0, %v6432
  %v6460 = vsub.f32 0.0, %v6434
  %v6461 = vsub.f32 0.0, %v6437
  %v6462 = vsub.f32 0.0, %v6439
  %v6463 = vsub.f32 0.0, %v6442
  %v6464 = vsub.f32 0.0, %v6444
  %v6465 = vsub.f32 0.0, %v6447
  %v6466 = vsub.f32 0.0, %v6449
  %v6467 = vmul.f32 %v6451, 1.442695
  %v6468 = vpow.pop %v6467
  %v6469 = vmul.f32 %v6452, 1.442695
  %v6470 = vpow.pop %v6469
  %v6471 = vmul.f32 %v6453, 1.442695
  %v6472 = vpow.pop %v6471
  %v6473 = vmul.f32 %v6454, 1.442695
  %v6474 = vpow.pop %v6473
  %v6475 = vmul.f32 %v6455, 1.442695
  %v6476 = vpow.pop %v6475
  %v6477 = vmul.f32 %v6456, 1.442695
  %v6478 = vpow.pop %v6477
  %v6479 = vmul.f32 %v6457, 1.442695
  %v6480 = vpow.pop %v6479
  %v6481 = vmul.f32 %v6458, 1.442695
  %v6482 = vpow.pop %v6481
  %v6483 = vmul.f32 %v6459, 1.442695
  %v6484 = vpow.pop %v6483
  %v6485 = vmul.f32 %v6460, 1.442695
  %v6486 = vpow.pop %v6485
  %v6487 = vmul.f32 %v6461, 1.442695
  %v6488 = vpow.pop %v6487
  %v6489 = vmul.f32 %v6462, 1.442695
  %v6490 = vpow.pop %v6489
  %v6491 = vmul.f32 %v6463, 1.442695
  %v6492 = vpow.pop %v6491
  %v6493 = vmul.f32 %v6464, 1.442695
  %v6494 = vpow.pop %v6493
  %v6495 = vmul.f32 %v6465, 1.442695
  %v6496 = vpow.pop %v6495
  %v6497 = vmul.f32 %v6466, 1.442695
  %v6498 = vpow.pop %v6497
  %v6499 = vadd.f32 %v6468, 1.0
  %v6500 = vadd.f32 %v6470, 1.0
  %v6501 = vadd.f32 %v6472, 1.0
  %v6502 = vadd.f32 %v6474, 1.0
  %v6503 = vadd.f32 %v6476, 1.0
  %v6504 = vadd.f32 %v6478, 1.0
  %v6505 = vadd.f32 %v6480, 1.0
  %v6506 = vadd.f32 %v6482, 1.0
  %v6507 = vadd.f32 %v6484, 1.0
  %v6508 = vadd.f32 %v6486, 1.0
  %v6509 = vadd.f32 %v6488, 1.0
  %v6510 = vadd.f32 %v6490, 1.0
  %v6511 = vadd.f32 %v6492, 1.0
  %v6512 = vadd.f32 %v6494, 1.0
  %v6513 = vadd.f32 %v6496, 1.0
  %v6514 = vadd.f32 %v6498, 1.0
  %v6515 = vrcp.pop %v6499
  %v6516 = vmul.f32 %v6499, %v6515
  %v6517 = vsub.f32 1.0, %v6516
  %v6518 = vmul.f32 %v6515, %v6517
  %v6519 = vadd.f32 %v6515, %v6518
  %vm6520 = vweird.f32 %v6499
  %vm6521 = vweird.f32 %v6515
  %vm6522 = vmor %vm6520, %vm6521
  %v6523 = vsel %vm6522, %v6515, %v6519
  %v6524 = vand.u32 2147483647, %v6499
  %vm6525 = vcmp.eq.f32.partialorder %v6524, 8.507059e+37
  %v6526 = vand.u32 %v6499, 2147483648
  %v6527 = vor.u32 1.1754944e-38, %v6526
  %v6528 = vsel %vm6525, %v6527, %v6523
  %v6529 = vmul.f32 1.0, %v6528
  %v6530 = vrcp.pop %v6500
  %v6531 = vmul.f32 %v6500, %v6530
  %v6532 = vsub.f32 1.0, %v6531
  %v6533 = vmul.f32 %v6530, %v6532
  %v6534 = vadd.f32 %v6530, %v6533
  %vm6535 = vweird.f32 %v6500
  %vm6536 = vweird.f32 %v6530
  %vm6537 = vmor %vm6535, %vm6536
  %v6538 = vsel %vm6537, %v6530, %v6534
  %v6539 = vand.u32 2147483647, %v6500
  %vm6540 = vcmp.eq.f32.partialorder %v6539, 8.507059e+37
  %v6541 = vand.u32 %v6500, 2147483648
  %v6542 = vor.u32 1.1754944e-38, %v6541
  %v6543 = vsel %vm6540, %v6542, %v6538
  %v6544 = vmul.f32 1.0, %v6543
  %v6545 = vrcp.pop %v6501
  %v6546 = vmul.f32 %v6501, %v6545
  %v6547 = vsub.f32 1.0, %v6546
  %v6548 = vmul.f32 %v6545, %v6547
  %v6549 = vadd.f32 %v6545, %v6548
  %vm6550 = vweird.f32 %v6501
  %vm6551 = vweird.f32 %v6545
  %vm6552 = vmor %vm6550, %vm6551
  %v6553 = vsel %vm6552, %v6545, %v6549
  %v6554 = vand.u32 2147483647, %v6501
  %vm6555 = vcmp.eq.f32.partialorder %v6554, 8.507059e+37
  %v6556 = vand.u32 %v6501, 2147483648
  %v6557 = vor.u32 1.1754944e-38, %v6556
  %v6558 = vsel %vm6555, %v6557, %v6553
  %v6559 = vmul.f32 1.0, %v6558
  %v6560 = vrcp.pop %v6502
  %v6561 = vmul.f32 %v6502, %v6560
  %v6562 = vsub.f32 1.0, %v6561
  %v6563 = vmul.f32 %v6560, %v6562
  %v6564 = vadd.f32 %v6560, %v6563
  %vm6565 = vweird.f32 %v6502
  %vm6566 = vweird.f32 %v6560
  %vm6567 = vmor %vm6565, %vm6566
  %v6568 = vsel %vm6567, %v6560, %v6564
  %v6569 = vand.u32 2147483647, %v6502
  %vm6570 = vcmp.eq.f32.partialorder %v6569, 8.507059e+37
  %v6571 = vand.u32 %v6502, 2147483648
  %v6572 = vor.u32 1.1754944e-38, %v6571
  %v6573 = vsel %vm6570, %v6572, %v6568
  %v6574 = vmul.f32 1.0, %v6573
  %v6575 = vrcp.pop %v6503
  %v6576 = vmul.f32 %v6503, %v6575
  %v6577 = vsub.f32 1.0, %v6576
  %v6578 = vmul.f32 %v6575, %v6577
  %v6579 = vadd.f32 %v6575, %v6578
  %vm6580 = vweird.f32 %v6503
  %vm6581 = vweird.f32 %v6575
  %vm6582 = vmor %vm6580, %vm6581
  %v6583 = vsel %vm6582, %v6575, %v6579
  %v6584 = vand.u32 2147483647, %v6503
  %vm6585 = vcmp.eq.f32.partialorder %v6584, 8.507059e+37
  %v6586 = vand.u32 %v6503, 2147483648
  %v6587 = vor.u32 1.1754944e-38, %v6586
  %v6588 = vsel %vm6585, %v6587, %v6583
  %v6589 = vmul.f32 1.0, %v6588
  %v6590 = vrcp.pop %v6504
  %v6591 = vmul.f32 %v6504, %v6590
  %v6592 = vsub.f32 1.0, %v6591
  %v6593 = vmul.f32 %v6590, %v6592
  %v6594 = vadd.f32 %v6590, %v6593
  %vm6595 = vweird.f32 %v6504
  %vm6596 = vweird.f32 %v6590
  %vm6597 = vmor %vm6595, %vm6596
  %v6598 = vsel %vm6597, %v6590, %v6594
  %v6599 = vand.u32 2147483647, %v6504
  %vm6600 = vcmp.eq.f32.partialorder %v6599, 8.507059e+37
  %v6601 = vand.u32 %v6504, 2147483648
  %v6602 = vor.u32 1.1754944e-38, %v6601
  %v6603 = vsel %vm6600, %v6602, %v6598
  %v6604 = vmul.f32 1.0, %v6603
  %v6605 = vrcp.pop %v6505
  %v6606 = vmul.f32 %v6505, %v6605
  %v6607 = vsub.f32 1.0, %v6606
  %v6608 = vmul.f32 %v6605, %v6607
  %v6609 = vadd.f32 %v6605, %v6608
  %vm6610 = vweird.f32 %v6505
  %vm6611 = vweird.f32 %v6605
  %vm6612 = vmor %vm6610, %vm6611
  %v6613 = vsel %vm6612, %v6605, %v6609
  %v6614 = vand.u32 2147483647, %v6505
  %vm6615 = vcmp.eq.f32.partialorder %v6614, 8.507059e+37
  %v6616 = vand.u32 %v6505, 2147483648
  %v6617 = vor.u32 1.1754944e-38, %v6616
  %v6618 = vsel %vm6615, %v6617, %v6613
  %v6619 = vmul.f32 1.0, %v6618
  %v6620 = vrcp.pop %v6506
  %v6621 = vmul.f32 %v6506, %v6620
  %v6622 = vsub.f32 1.0, %v6621
  %v6623 = vmul.f32 %v6620, %v6622
  %v6624 = vadd.f32 %v6620, %v6623
  %vm6625 = vweird.f32 %v6506
  %vm6626 = vweird.f32 %v6620
  %vm6627 = vmor %vm6625, %vm6626
  %v6628 = vsel %vm6627, %v6620, %v6624
  %v6629 = vand.u32 2147483647, %v6506
  %vm6630 = vcmp.eq.f32.partialorder %v6629, 8.507059e+37
  %v6631 = vand.u32 %v6506, 2147483648
  %v6632 = vor.u32 1.1754944e-38, %v6631
  %v6633 = vsel %vm6630, %v6632, %v6628
  %v6634 = vmul.f32 1.0, %v6633
  %v6635 = vrcp.pop %v6507
  %v6636 = vmul.f32 %v6507, %v6635
  %v6637 = vsub.f32 1.0, %v6636
  %v6638 = vmul.f32 %v6635, %v6637
  %v6639 = vadd.f32 %v6635, %v6638
  %vm6640 = vweird.f32 %v6507
  %vm6641 = vweird.f32 %v6635
  %vm6642 = vmor %vm6640, %vm6641
  %v6643 = vsel %vm6642, %v6635, %v6639
  %v6644 = vand.u32 2147483647, %v6507
  %vm6645 = vcmp.eq.f32.partialorder %v6644, 8.507059e+37
  %v6646 = vand.u32 %v6507, 2147483648
  %v6647 = vor.u32 1.1754944e-38, %v6646
  %v6648 = vsel %vm6645, %v6647, %v6643
  %v6649 = vmul.f32 1.0, %v6648
  %v6650 = vrcp.pop %v6508
  %v6651 = vmul.f32 %v6508, %v6650
  %v6652 = vsub.f32 1.0, %v6651
  %v6653 = vmul.f32 %v6650, %v6652
  %v6654 = vadd.f32 %v6650, %v6653
  %vm6655 = vweird.f32 %v6508
  %vm6656 = vweird.f32 %v6650
  %vm6657 = vmor %vm6655, %vm6656
  %v6658 = vsel %vm6657, %v6650, %v6654
  %v6659 = vand.u32 2147483647, %v6508
  %vm6660 = vcmp.eq.f32.partialorder %v6659, 8.507059e+37
  %v6661 = vand.u32 %v6508, 2147483648
  %v6662 = vor.u32 1.1754944e-38, %v6661
  %v6663 = vsel %vm6660, %v6662, %v6658
  %v6664 = vmul.f32 1.0, %v6663
  %v6665 = vrcp.pop %v6509
  %v6666 = vmul.f32 %v6509, %v6665
  %v6667 = vsub.f32 1.0, %v6666
  %v6668 = vmul.f32 %v6665, %v6667
  %v6669 = vadd.f32 %v6665, %v6668
  %vm6670 = vweird.f32 %v6509
  %vm6671 = vweird.f32 %v6665
  %vm6672 = vmor %vm6670, %vm6671
  %v6673 = vsel %vm6672, %v6665, %v6669
  %v6674 = vand.u32 2147483647, %v6509
  %vm6675 = vcmp.eq.f32.partialorder %v6674, 8.507059e+37
  %v6676 = vand.u32 %v6509, 2147483648
  %v6677 = vor.u32 1.1754944e-38, %v6676
  %v6678 = vsel %vm6675, %v6677, %v6673
  %v6679 = vmul.f32 1.0, %v6678
  %v6680 = vrcp.pop %v6510
  %v6681 = vmul.f32 %v6510, %v6680
  %v6682 = vsub.f32 1.0, %v6681
  %v6683 = vmul.f32 %v6680, %v6682
  %v6684 = vadd.f32 %v6680, %v6683
  %vm6685 = vweird.f32 %v6510
  %vm6686 = vweird.f32 %v6680
  %vm6687 = vmor %vm6685, %vm6686
  %v6688 = vsel %vm6687, %v6680, %v6684
  %v6689 = vand.u32 2147483647, %v6510
  %vm6690 = vcmp.eq.f32.partialorder %v6689, 8.507059e+37
  %v6691 = vand.u32 %v6510, 2147483648
  %v6692 = vor.u32 1.1754944e-38, %v6691
  %v6693 = vsel %vm6690, %v6692, %v6688
  %v6694 = vmul.f32 1.0, %v6693
  %v6695 = vrcp.pop %v6511
  %v6696 = vmul.f32 %v6511, %v6695
  %v6697 = vsub.f32 1.0, %v6696
  %v6698 = vmul.f32 %v6695, %v6697
  %v6699 = vadd.f32 %v6695, %v6698
  %vm6700 = vweird.f32 %v6511
  %vm6701 = vweird.f32 %v6695
  %vm6702 = vmor %vm6700, %vm6701
  %v6703 = vsel %vm6702, %v6695, %v6699
  %v6704 = vand.u32 2147483647, %v6511
  %vm6705 = vcmp.eq.f32.partialorder %v6704, 8.507059e+37
  %v6706 = vand.u32 %v6511, 2147483648
  %v6707 = vor.u32 1.1754944e-38, %v6706
  %v6708 = vsel %vm6705, %v6707, %v6703
  %v6709 = vmul.f32 1.0, %v6708
  %v6710 = vrcp.pop %v6512
  %v6711 = vmul.f32 %v6512, %v6710
  %v6712 = vsub.f32 1.0, %v6711
  %v6713 = vmul.f32 %v6710, %v6712
  %v6714 = vadd.f32 %v6710, %v6713
  %vm6715 = vweird.f32 %v6512
  %vm6716 = vweird.f32 %v6710
  %vm6717 = vmor %vm6715, %vm6716
  %v6718 = vsel %vm6717, %v6710, %v6714
  %v6719 = vand.u32 2147483647, %v6512
  %vm6720 = vcmp.eq.f32.partialorder %v6719, 8.507059e+37
  %v6721 = vand.u32 %v6512, 2147483648
  %v6722 = vor.u32 1.1754944e-38, %v6721
  %v6723 = vsel %vm6720, %v6722, %v6718
  %v6724 = vmul.f32 1.0, %v6723
  %v6725 = vrcp.pop %v6513
  %v6726 = vmul.f32 %v6513, %v6725
  %v6727 = vsub.f32 1.0, %v6726
  %v6728 = vmul.f32 %v6725, %v6727
  %v6729 = vadd.f32 %v6725, %v6728
  %vm6730 = vweird.f32 %v6513
  %vm6731 = vweird.f32 %v6725
  %vm6732 = vmor %vm6730, %vm6731
  %v6733 = vsel %vm6732, %v6725, %v6729
  %v6734 = vand.u32 2147483647, %v6513
  %vm6735 = vcmp.eq.f32.partialorder %v6734, 8.507059e+37
  %v6736 = vand.u32 %v6513, 2147483648
  %v6737 = vor.u32 1.1754944e-38, %v6736
  %v6738 = vsel %vm6735, %v6737, %v6733
  %v6739 = vmul.f32 1.0, %v6738
  %v6740 = vrcp.pop %v6514
  %v6741 = vmul.f32 %v6514, %v6740
  %v6742 = vsub.f32 1.0, %v6741
  %v6743 = vmul.f32 %v6740, %v6742
  %v6744 = vadd.f32 %v6740, %v6743
  %vm6745 = vweird.f32 %v6514
  %vm6746 = vweird.f32 %v6740
  %vm6747 = vmor %vm6745, %vm6746
  %v6748 = vsel %vm6747, %v6740, %v6744
  %v6749 = vand.u32 2147483647, %v6514
  %vm6750 = vcmp.eq.f32.partialorder %v6749, 8.507059e+37
  %v6751 = vand.u32 %v6514, 2147483648
  %v6752 = vor.u32 1.1754944e-38, %v6751
  %v6753 = vsel %vm6750, %v6752, %v6748
  %v6754 = vmul.f32 1.0, %v6753
  %vm6755 = vcmask 171008
  %6756 = vst.msk [vmem:[%s23] sm:$0xff] %vm6755, %v6529
  %6757 = vst.msk [vmem:[%s23 + $0x8] sm:$0xff] %vm6755, %v6544
  %6758 = vst.msk [vmem:[%s23 + $0x10] sm:$0xff] %vm6755, %v6559
  %6759 = vst.msk [vmem:[%s23 + $0x18] sm:$0xff] %vm6755, %v6574
  %6760 = vst.msk [vmem:[%s23 + $0x20] sm:$0xff] %vm6755, %v6589
  %6761 = vst.msk [vmem:[%s23 + $0x28] sm:$0xff] %vm6755, %v6604
  %6762 = vst.msk [vmem:[%s23 + $0x30] sm:$0xff] %vm6755, %v6619
  %6763 = vst.msk [vmem:[%s23 + $0x38] sm:$0xff] %vm6755, %v6634
  %6764 = vst.msk [vmem:[%s23 + $0x40] sm:$0xff] %vm6755, %v6649
  %6765 = vst.msk [vmem:[%s23 + $0x48] sm:$0xff] %vm6755, %v6664
  %6766 = vst.msk [vmem:[%s23 + $0x50] sm:$0xff] %vm6755, %v6679
  %6767 = vst.msk [vmem:[%s23 + $0x58] sm:$0xff] %vm6755, %v6694
  %6768 = vst.msk [vmem:[%s23 + $0x60] sm:$0xff] %vm6755, %v6709
  %6769 = vst.msk [vmem:[%s23 + $0x68] sm:$0xff] %vm6755, %v6724
  %6770 = vst.msk [vmem:[%s23 + $0x70] sm:$0xff] %vm6755, %v6739
  %6771 = vst.msk [vmem:[%s23 + $0x78] sm:$0xff] %vm6755, %v6754
  // Predicated region
  $region98: #{yolov5_forward.1} parent=0 // pred_check
    _
  $region99: #{yolov5_forward.1} parent=0 // pred_check_branch
    %6773 = sbr.rel (0) target = $region101
  $region100: #{yolov5_forward.1} parent=0 // pred_region
    _
  $region101: #{yolov5_forward.1} parent=0 // pred_fallthru
    _
  // Predicated region
  $region102: #{yolov5_forward.1} parent=0 // pred_check
    _
  $region103: #{yolov5_forward.1} parent=0 // pred_check_branch
    %6775 = sbr.rel (0) target = $region105
  $region104: #{yolov5_forward.1} parent=0 // pred_region
    _
  $region105: #{yolov5_forward.1} parent=0 // pred_fallthru
    _

</llo_original>
